<compile_context>
chip_gen: v7x
topology: tpu7x:2x2x1
jax: 0.10.0
libtpu: 0.0.40
codegen_flags: <defaults>
</compile_context>

<pallas_src>
import jax
import jax.numpy as jnp
from jax import lax
from jax.experimental import pallas as pl
from jax.experimental.pallas import tpu as pltpu

# ---------------------------------------------------------------------------
# Static geometry (MNIST 28x28, the fc layer of the module requires this).
H0 = W0 = 28
PAD = 2
H1, W1 = H0 + 2 * PAD - 2, W0 + 2 * PAD - 2          # conv1 output: 30 x 30
P1 = H1 // 2                                          # pooled1:      15 x 15
WB2 = 20                                              # padded conv2-input row width (even)
HB2 = 20                                              # rows in the conv2-input buffer (19 + slack)
H2 = W2 = P1 + 2 * PAD - 2                            # conv2 output: 17 x 17
M2 = H2 * WB2                                         # conv2 matmul M (junk cols discarded)
P2 = 8                                                # pooled2: 8 x 8 (floor pooling of 17)
C1, C2 = 16, 32                                       # real channel counts
NCLS_PAD = 128                                        # lane-dense logits


# ------------------------------- the kernel --------------------------------

def _convnet_kernel(x_ref, w1_ref, s1_ref, w2_ref, s2_ref, wfc_ref, bfc_ref,
                    o_ref,
                    acc1_ref, hm1_ref, a1_ref, acc2_ref, hm2_ref, p2_ref):
    """Whole ConvNet forward for ONE image, resident in VMEM.

    x_ref   : (1, 900, 16) bf16  conv1 im2col (9 real taps in K, built once in the wrapper)
    w1_ref  : (16, 16)     bf16  conv1 weight (tap, cout), BN1 scale folded
    s1_ref  : (1, 16)      f32   BN1 shift (includes conv1 bias)
    w2_ref  : (9, 16, 32)  bf16  conv2 weight per tap (cin, cout), BN2 scale folded
    s2_ref  : (1, 32)      f32   BN2 shift (includes conv2 bias)
    wfc_ref : (32, 64, 128) f32  fc weight, permuted to (channel, position, class)
    bfc_ref : (1, 128)     f32   fc bias (classes padded to 128)
    o_ref   : (1, 1, 128)  f32   logits (classes padded to 128)
    """
    f32 = jnp.float32

    # ---- layer 1: conv(3x3, pad 2) as ONE large-M im2col matmul + BN + ReLU ----
    # M=900 (all 30x30 output pixels), K=16 (9 real taps), f32 accumulation.
    a1 = jnp.dot(x_ref[0], w1_ref[...], preferred_element_type=f32)        # (900, 16)
    a1 = jnp.maximum(a1 + s1_ref[...], 0.0)        # shift broadcast applied ONCE
    acc1_ref[...] = a1

    # ---- maxpool1 2x2 ----
    # Horizontal: even/odd output columns via two stride-2 reads (row width 30 is even,
    # so column parity is preserved across the flattened row axis).
    hm1_ref[...] = jnp.maximum(acc1_ref[pl.ds(0, 450, stride=2), :],
                               acc1_ref[pl.ds(1, 450, stride=2), :])       # (450, 16) = (y*15+j, c)

    # Vertical + scatter into the zero-padded conv2 input buffer (rows flattened,
    # logical layout (HB2, WB2, C1); interior 15x15 sits at rows/cols 2..16).
    a1_ref[...] = jnp.zeros_like(a1_ref)
    for i in range(P1):                                                     # 15 pooled rows, unrolled
        top = hm1_ref[pl.ds((2 * i) * P1, P1), :]
        bot = hm1_ref[pl.ds((2 * i + 1) * P1, P1), :]
        a1_ref[pl.ds((i + 2) * WB2 + 2, P1), :] = \
            jnp.maximum(top, bot).astype(a1_ref.dtype)

    # ---- layer 2: conv(3x3, pad 2) as 9 chained matmuls (one per tap) ----
    # Each tap's lhs is a contiguous (340, 16) slice of the flattened padded input
    # (junk columns 17..19 of each row are computed and later discarded).  All nine
    # matmuls feed the SAME accumulator back-to-back; each weight tile is read once.
    acc2 = jnp.dot(a1_ref[pl.ds(0, M2), :], w2_ref[0], preferred_element_type=f32)
    for t in range(1, 9):
        start = (t // 3) * WB2 + (t % 3)
        acc2 = acc2 + jnp.dot(a1_ref[pl.ds(start, M2), :], w2_ref[t],
                              preferred_element_type=f32)                  # (340, 32)
    acc2 = jnp.maximum(acc2 + s2_ref[...], 0.0)
    acc2_ref[...] = acc2

    # ---- maxpool2 2x2 (floor: uses conv rows/cols 0..15 only) ----
    hm2_ref[...] = jnp.maximum(acc2_ref[pl.ds(0, 170, stride=2), :],
                               acc2_ref[pl.ds(1, 170, stride=2), :])       # (170, 32) = (y*10+j, c)
    for i in range(P2):                                                     # 8 pooled rows, unrolled
        top = hm2_ref[pl.ds((2 * i) * 10, 10), :]
        bot = hm2_ref[pl.ds((2 * i + 1) * 10, 10), :]
        p2_ref[pl.ds(i * P2, P2), :] = jnp.maximum(top, bot)[0:P2, :]       # (8, 32)

    # ---- fc (fused epilogue): logits[n] = sum_{k,c} pooled[k,c] * Wfc[c,k,n] ----
    # 32 VPU broadcast-MACs over channels, then one sublane reduction over the 64
    # positions.  Weight stays resident in VMEM; no HBM writeback of activations.
    pooled = p2_ref[...]                                                    # (64, 32) f32
    facc = jnp.zeros((P2 * P2, NCLS_PAD), f32)
    for c in range(C2):                                                     # 32, unrolled
        facc = facc + pooled[:, c:c + 1] * wfc_ref[c]
    o_ref[0] = jnp.sum(facc, axis=0, keepdims=True) + bfc_ref[...]          # (1, 128)


# -------------------------------- wrapper -----------------------------------

def convnet_forward(prep, x_nchw, num_classes=10):
    """x_nchw: (B, 1, 28, 28) float32.  Returns (B, num_classes) float32 logits."""
    B = x_nchw.shape[0]

    # One-time input prep (on the NETWORK input only - no inter-layer relayouts):
    # zero-pad and fold the nine 3x3 taps into the K dim (im2col), pad K 9 -> 16.
    x = x_nchw[:, 0, :, :].astype(jnp.float32)                              # (B, 28, 28)
    xp = jnp.pad(x, ((0, 0), (PAD, PAD), (PAD, PAD)))                       # (B, 32, 32)
    taps = [xp[:, dy:dy + H1, dx:dx + W1].reshape(B, H1 * W1)
            for dy in range(3) for dx in range(3)]
    xcol = jnp.stack(taps, axis=-1)                                         # (B, 900, 9)
    xcol = jnp.pad(xcol, ((0, 0), (0, 0), (0, 16 - 9))).astype(jnp.bfloat16)

    out = pl.pallas_call(
        _convnet_kernel,
        out_shape=jax.ShapeDtypeStruct((B, 1, NCLS_PAD), jnp.float32),
        grid=(B,),
        in_specs=[
            pl.BlockSpec((1, H1 * W1, 16), lambda b: (b, 0, 0)),   # im2col'd image
            pl.BlockSpec((16, C1), lambda b: (0, 0)),              # w1 (resident)
            pl.BlockSpec((1, C1), lambda b: (0, 0)),               # shift1
            pl.BlockSpec((9, C1, C2), lambda b: (0, 0, 0)),        # w2 (resident)
            pl.BlockSpec((1, C2), lambda b: (0, 0)),               # shift2
            pl.BlockSpec((C2, P2 * P2, NCLS_PAD), lambda b: (0, 0, 0)),  # fc weight (resident)
            pl.BlockSpec((1, NCLS_PAD), lambda b: (0, 0)),         # fc bias
        ],
        out_specs=pl.BlockSpec((1, 1, NCLS_PAD), lambda b: (b, 0, 0)),
        scratch_shapes=[
            pltpu.VMEM((H1 * W1, C1), jnp.float32),    # conv1 activation (pre-pool)
            pltpu.VMEM((H1 * P1, C1), jnp.float32),    # conv1 horizontal-pool result
            pltpu.VMEM((HB2 * WB2, C1), jnp.bfloat16), # zero-padded conv2 input (flattened rows)
            pltpu.VMEM((M2, C2), jnp.float32),         # conv2 activation (pre-pool)
            pltpu.VMEM((H2 * 10, C2), jnp.float32),    # conv2 horizontal-pool result
            pltpu.VMEM((P2 * P2, C2), jnp.float32),    # pooled conv2 output = fc input
        ],
        compiler_params=pltpu.CompilerParams(dimension_semantics=("parallel",)),
    )(xcol, prep['w1'], prep['s1'], prep['w2'], prep['s2'], prep['wfc'], prep['bfc'])

    return out[:, 0, :num_classes]


# ------------------------ one-time parameter prep ---------------------------

def prepare_params(params, eps=1e-5, num_classes=10):
    """Fold eval-mode BN into the conv weights, permute to kernel layouts, cast."""
    f32 = jnp.float32

    scale1 = params['bn1_gamma'] / jnp.sqrt(params['bn1_var'] + eps)        # (16,)
    shift1 = params['bn1_beta'] + (params['conv1_b'] - params['bn1_mean']) * scale1
    # conv1_w: (16, 1, 3, 3) -> (tap=dy*3+dx, cout), BN scale folded, K padded 9->16.
    w1 = jnp.transpose(params['conv1_w'][:, 0], (1, 2, 0)).reshape(9, C1) * scale1[None, :]
    w1 = jnp.pad(w1, ((0, 16 - 9), (0, 0))).astype(jnp.bfloat16)            # (16, 16)
    s1 = shift1.reshape(1, C1).astype(f32)

    scale2 = params['bn2_gamma'] / jnp.sqrt(params['bn2_var'] + eps)        # (32,)
    shift2 = params['bn2_beta'] + (params['conv2_b'] - params['bn2_mean']) * scale2
    # conv2_w: (32, 16, 3, 3) -> (tap, cin, cout), BN scale folded.
    w2 = jnp.transpose(params['conv2_w'], (2, 3, 1, 0)).reshape(9, C1, C2) * scale2[None, None, :]
    w2 = w2.astype(jnp.bfloat16)
    s2 = shift2.reshape(1, C2).astype(f32)

    # fc: PyTorch flattens NCHW as index c*64 + h*8 + w; kernel indexes pooled2 as
    # (k = h*8 + w, c).  Permute to (c, k, n) and pad classes to 128 lanes.
    wfc = params['fc_w'].reshape(num_classes, C2, P2, P2)                   # (n, c, h, w)
    wfc = jnp.transpose(wfc, (1, 2, 3, 0)).reshape(C2, P2 * P2, num_classes)
    wfc = jnp.pad(wfc, ((0, 0), (0, 0), (0, NCLS_PAD - num_classes))).astype(f32)
    bfc = jnp.pad(params['fc_b'], (0, NCLS_PAD - num_classes)).reshape(1, NCLS_PAD).astype(f32)

    return {'w1': w1, 's1': s1, 'w2': w2, 's2': s2, 'wfc': wfc, 'bfc': bfc}


# --------------------------- pure-JAX reference -----------------------------

def convnet_reference(params, x_nchw, eps=1e-5):
    hp = jax.lax.Precision.HIGHEST

    def conv(x, w, b):
        y = jax.lax.conv_general_dilated(
            x, w, (1, 1), [(2, 2), (2, 2)],
            dimension_numbers=('NCHW', 'OIHW', 'NCHW'), precision=hp)
        return y + b[None, :, None, None]

    def bn(x, g, bta, m, v):
        inv = g / jnp.sqrt(v + eps)
        return (x - m[None, :, None, None]) * inv[None, :, None, None] \
            + bta[None, :, None, None]

    def pool(x):
        B, C, H, W = x.shape
        Ho, Wo = H // 2, W // 2
        return x[:, :, :2 * Ho, :2 * Wo].reshape(B, C, Ho, 2, Wo, 2).max(axis=(3, 5))

    x = conv(x_nchw, params['conv1_w'], params['conv1_b'])
    x = bn(x, params['bn1_gamma'], params['bn1_beta'], params['bn1_mean'], params['bn1_var'])
    x = jnp.maximum(pool(x), 0.0)
    x = conv(x, params['conv2_w'], params['conv2_b'])
    x = bn(x, params['bn2_gamma'], params['bn2_beta'], params['bn2_mean'], params['bn2_var'])
    x = jnp.maximum(pool(x), 0.0)
    x = x.reshape(x.shape[0], -1)
    return jnp.dot(x, params['fc_w'].T, precision=hp) + params['fc_b']


# ------------------------------- params -------------------------------------

def init_params(key, num_classes=10):
    ks = jax.random.split(key, 14)
    f32 = jnp.float32
    return {
        'conv1_w': 0.1 * jax.random.normal(ks[0], (16, 1, 3, 3), f32),
        'conv1_b': 0.1 * jax.random.normal(ks[1], (16,), f32),
        'bn1_gamma': 1.0 + 0.1 * jax.random.normal(ks[2], (16,), f32),
        'bn1_beta': 0.1 * jax.random.normal(ks[3], (16,), f32),
        'bn1_mean': 0.1 * jax.random.normal(ks[4], (16,), f32),
        'bn1_var': jnp.abs(1.0 + 0.1 * jax.random.normal(ks[5], (16,), f32)),
        'conv2_w': 0.1 * jax.random.normal(ks[6], (32, 16, 3, 3), f32),
        'conv2_b': 0.1 * jax.random.normal(ks[7], (32,), f32),
        'bn2_gamma': 1.0 + 0.1 * jax.random.normal(ks[8], (32,), f32),
        'bn2_beta': 0.1 * jax.random.normal(ks[9], (32,), f32),
        'bn2_mean': 0.1 * jax.random.normal(ks[10], (32,), f32),
        'bn2_var': jnp.abs(1.0 + 0.1 * jax.random.normal(ks[11], (32,), f32)),
        'fc_w': 0.05 * jax.random.normal(ks[12], (num_classes, 8 * 8 * 32), f32),
        'fc_b': 0.05 * jax.random.normal(ks[13], (num_classes,), f32),
    }


# -------------------------------- main ---------------------------------------

if __name__ == "__main__":
    key = jax.random.PRNGKey(0)
    k_param, k_x = jax.random.split(key)
    params = init_params(k_param, num_classes=10)
    prep = prepare_params(params, num_classes=10)   # one-time weight prep

    # MNIST-shaped input (required by the 8*8*32 fc layer): (B=2, C=1, 28, 28)
    x = jax.random.normal(k_x, (2, 1, 28, 28), jnp.float32)

    out = jax.jit(convnet_forward)(prep, x)
    out = jax.block_until_ready(out)
    assert out.shape == (2, 10), out.shape

    ref = jax.block_until_ready(convnet_reference(params, x))
    assert jnp.allclose(out, ref, rtol=2e-2, atol=2e-2), \
        f"max abs err {jnp.max(jnp.abs(out - ref))}"

    print("KERNEL_OK")
</pallas_src>

<mosaic_0001>
module attributes {stable_mosaic.version = 11 : i64} {
  func.func @_convnet_kernel(%arg0: i32, %arg1: memref<1x900x16xbf16, #tpu.memory_space<vmem>>, %arg2: memref<16x16xbf16, #tpu.memory_space<vmem>>, %arg3: memref<1x16xf32, #tpu.memory_space<vmem>>, %arg4: memref<9x16x32xbf16, #tpu.memory_space<vmem>>, %arg5: memref<1x32xf32, #tpu.memory_space<vmem>>, %arg6: memref<32x64x128xf32, #tpu.memory_space<vmem>>, %arg7: memref<1x128xf32, #tpu.memory_space<vmem>>, %arg8: memref<1x1x128xf32, #tpu.memory_space<vmem>>, %arg9: memref<900x16xf32, #tpu.memory_space<vmem>>, %arg10: memref<450x16xf32, #tpu.memory_space<vmem>>, %arg11: memref<400x16xbf16, #tpu.memory_space<vmem>>, %arg12: memref<340x32xf32, #tpu.memory_space<vmem>>, %arg13: memref<170x32xf32, #tpu.memory_space<vmem>>, %arg14: memref<64x32xf32, #tpu.memory_space<vmem>>) attributes {dimension_semantics = [#tpu.dimension_semantics<parallel>], iteration_bounds = array<i64: 2>, scalar_prefetch = 0 : i64, scratch_operands = 6 : i64, tpu.core_type = #tpu.core_type<tc>, window_params = [{transform_indices = @transform_0, window_bounds = array<i64: 1, 900, 16>}, {pipeline_mode = #tpu.pipeline_mode<synchronous>, transform_indices = @transform_1, window_bounds = array<i64: 16, 16>}, {pipeline_mode = #tpu.pipeline_mode<synchronous>, transform_indices = @transform_2, window_bounds = array<i64: 1, 16>}, {pipeline_mode = #tpu.pipeline_mode<synchronous>, transform_indices = @transform_3, window_bounds = array<i64: 9, 16, 32>}, {pipeline_mode = #tpu.pipeline_mode<synchronous>, transform_indices = @transform_4, window_bounds = array<i64: 1, 32>}, {pipeline_mode = #tpu.pipeline_mode<synchronous>, transform_indices = @transform_5, window_bounds = array<i64: 32, 64, 128>}, {pipeline_mode = #tpu.pipeline_mode<synchronous>, transform_indices = @transform_6, window_bounds = array<i64: 1, 128>}, {transform_indices = @transform_7, window_bounds = array<i64: 1, 1, 128>}]} {
    %c0 = arith.constant 0 : index
    %c0_0 = arith.constant 0 : index
    %c0_1 = arith.constant 0 : index
    %0 = vector.load %arg1[%c0, %c0_0, %c0_1] : memref<1x900x16xbf16, #tpu.memory_space<vmem>>, vector<1x900x16xbf16>
    %1 = vector.shape_cast %0 : vector<1x900x16xbf16> to vector<900x16xbf16>
    %c0_2 = arith.constant 0 : index
    %c0_3 = arith.constant 0 : index
    %2 = vector.load %arg2[%c0_2, %c0_3] : memref<16x16xbf16, #tpu.memory_space<vmem>>, vector<16x16xbf16>
    %cst = arith.constant dense<0.000000e+00> : vector<900x16xf32>
    %3 = tpu.matmul %1, %2, %cst {dimension_numbers = #tpu.dot_dimension_numbers<[1], [0], [0], [1], [0, 0, 1, 1], [], []>} : vector<900x16xbf16>, vector<16x16xbf16>, vector<900x16xf32> -> vector<900x16xf32>
    %c0_4 = arith.constant 0 : index
    %c0_5 = arith.constant 0 : index
    %4 = vector.load %arg3[%c0_4, %c0_5] : memref<1x16xf32, #tpu.memory_space<vmem>>, vector<1x16xf32>
    %5 = vector.broadcast %4 : vector<1x16xf32> to vector<900x16xf32>
    %6 = arith.addf %3, %5 : vector<900x16xf32>
    %cst_6 = arith.constant 0.000000e+00 : f32
    %7 = vector.broadcast %cst_6 : f32 to vector<900x16xf32>
    %8 = arith.maximumf %6, %7 : vector<900x16xf32>
    %c0_7 = arith.constant 0 : index
    %c0_8 = arith.constant 0 : index
    %9 = vector.load %arg9[%c0_7, %c0_8] : memref<900x16xf32, #tpu.memory_space<vmem>>, vector<900x16xf32>
    tpu.vector_store %arg9[%c0_7, %c0_8], %8 {strides = array<i32>} : memref<900x16xf32, #tpu.memory_space<vmem>>, vector<900x16xf32>,
    %c0_9 = arith.constant 0 : index
    %c0_10 = arith.constant 0 : index
    %10 = tpu.strided_load %arg9[%c0_9, %c0_10] {strides = array<i32: 2, 1>} : memref<900x16xf32, #tpu.memory_space<vmem>>, vector<450x16xf32>
    %c1 = arith.constant 1 : index
    %c0_11 = arith.constant 0 : index
    %11 = tpu.strided_load %arg9[%c1, %c0_11] {strides = array<i32: 2, 1>} : memref<900x16xf32, #tpu.memory_space<vmem>>, vector<450x16xf32>
    %12 = arith.maximumf %10, %11 : vector<450x16xf32>
    %c0_12 = arith.constant 0 : index
    %c0_13 = arith.constant 0 : index
    %13 = vector.load %arg10[%c0_12, %c0_13] : memref<450x16xf32, #tpu.memory_space<vmem>>, vector<450x16xf32>
    tpu.vector_store %arg10[%c0_12, %c0_13], %12 {strides = array<i32>} : memref<450x16xf32, #tpu.memory_space<vmem>>, vector<450x16xf32>,
    %cst_14 = arith.constant 0.000000e+00 : bf16
    %14 = vector.broadcast %cst_14 : bf16 to vector<400x16xbf16>
    %c0_15 = arith.constant 0 : index
    %c0_16 = arith.constant 0 : index
    %15 = vector.load %arg11[%c0_15, %c0_16] : memref<400x16xbf16, #tpu.memory_space<vmem>>, vector<400x16xbf16>
    tpu.vector_store %arg11[%c0_15, %c0_16], %14 {strides = array<i32>} : memref<400x16xbf16, #tpu.memory_space<vmem>>, vector<400x16xbf16>,
    %c0_17 = arith.constant 0 : index
    %c0_18 = arith.constant 0 : index
    %16 = vector.load %arg10[%c0_17, %c0_18] : memref<450x16xf32, #tpu.memory_space<vmem>>, vector<15x16xf32>
    %c15 = arith.constant 15 : index
    %c0_19 = arith.constant 0 : index
    %17 = vector.load %arg10[%c15, %c0_19] : memref<450x16xf32, #tpu.memory_space<vmem>>, vector<15x16xf32>
    %18 = arith.maximumf %16, %17 : vector<15x16xf32>
    %19 = arith.truncf %18 : vector<15x16xf32> to vector<15x16xbf16>
    %c42 = arith.constant 42 : index
    %c0_20 = arith.constant 0 : index
    %20 = vector.load %arg11[%c42, %c0_20] : memref<400x16xbf16, #tpu.memory_space<vmem>>, vector<15x16xbf16>
    tpu.vector_store %arg11[%c42, %c0_20], %19 {strides = array<i32>} : memref<400x16xbf16, #tpu.memory_space<vmem>>, vector<15x16xbf16>,
    %c30 = arith.constant 30 : index
    %c0_21 = arith.constant 0 : index
    %21 = vector.load %arg10[%c30, %c0_21] : memref<450x16xf32, #tpu.memory_space<vmem>>, vector<15x16xf32>
    %c45 = arith.constant 45 : index
    %c0_22 = arith.constant 0 : index
    %22 = vector.load %arg10[%c45, %c0_22] : memref<450x16xf32, #tpu.memory_space<vmem>>, vector<15x16xf32>
    %23 = arith.maximumf %21, %22 : vector<15x16xf32>
    %24 = arith.truncf %23 : vector<15x16xf32> to vector<15x16xbf16>
    %c62 = arith.constant 62 : index
    %c0_23 = arith.constant 0 : index
    %25 = vector.load %arg11[%c62, %c0_23] : memref<400x16xbf16, #tpu.memory_space<vmem>>, vector<15x16xbf16>
    tpu.vector_store %arg11[%c62, %c0_23], %24 {strides = array<i32>} : memref<400x16xbf16, #tpu.memory_space<vmem>>, vector<15x16xbf16>,
    %c60 = arith.constant 60 : index
    %c0_24 = arith.constant 0 : index
    %26 = vector.load %arg10[%c60, %c0_24] : memref<450x16xf32, #tpu.memory_space<vmem>>, vector<15x16xf32>
    %c75 = arith.constant 75 : index
    %c0_25 = arith.constant 0 : index
    %27 = vector.load %arg10[%c75, %c0_25] : memref<450x16xf32, #tpu.memory_space<vmem>>, vector<15x16xf32>
    %28 = arith.maximumf %26, %27 : vector<15x16xf32>
    %29 = arith.truncf %28 : vector<15x16xf32> to vector<15x16xbf16>
    %c82 = arith.constant 82 : index
    %c0_26 = arith.constant 0 : index
    %30 = vector.load %arg11[%c82, %c0_26] : memref<400x16xbf16, #tpu.memory_space<vmem>>, vector<15x16xbf16>
    tpu.vector_store %arg11[%c82, %c0_26], %29 {strides = array<i32>} : memref<400x16xbf16, #tpu.memory_space<vmem>>, vector<15x16xbf16>,
    %c90 = arith.constant 90 : index
    %c0_27 = arith.constant 0 : index
    %31 = vector.load %arg10[%c90, %c0_27] : memref<450x16xf32, #tpu.memory_space<vmem>>, vector<15x16xf32>
    %c105 = arith.constant 105 : index
    %c0_28 = arith.constant 0 : index
    %32 = vector.load %arg10[%c105, %c0_28] : memref<450x16xf32, #tpu.memory_space<vmem>>, vector<15x16xf32>
    %33 = arith.maximumf %31, %32 : vector<15x16xf32>
    %34 = arith.truncf %33 : vector<15x16xf32> to vector<15x16xbf16>
    %c102 = arith.constant 102 : index
    %c0_29 = arith.constant 0 : index
    %35 = vector.load %arg11[%c102, %c0_29] : memref<400x16xbf16, #tpu.memory_space<vmem>>, vector<15x16xbf16>
    tpu.vector_store %arg11[%c102, %c0_29], %34 {strides = array<i32>} : memref<400x16xbf16, #tpu.memory_space<vmem>>, vector<15x16xbf16>,
    %c120 = arith.constant 120 : index
    %c0_30 = arith.constant 0 : index
    %36 = vector.load %arg10[%c120, %c0_30] : memref<450x16xf32, #tpu.memory_space<vmem>>, vector<15x16xf32>
    %c135 = arith.constant 135 : index
    %c0_31 = arith.constant 0 : index
    %37 = vector.load %arg10[%c135, %c0_31] : memref<450x16xf32, #tpu.memory_space<vmem>>, vector<15x16xf32>
    %38 = arith.maximumf %36, %37 : vector<15x16xf32>
    %39 = arith.truncf %38 : vector<15x16xf32> to vector<15x16xbf16>
    %c122 = arith.constant 122 : index
    %c0_32 = arith.constant 0 : index
    %40 = vector.load %arg11[%c122, %c0_32] : memref<400x16xbf16, #tpu.memory_space<vmem>>, vector<15x16xbf16>
    tpu.vector_store %arg11[%c122, %c0_32], %39 {strides = array<i32>} : memref<400x16xbf16, #tpu.memory_space<vmem>>, vector<15x16xbf16>,
    %c150 = arith.constant 150 : index
    %c0_33 = arith.constant 0 : index
    %41 = vector.load %arg10[%c150, %c0_33] : memref<450x16xf32, #tpu.memory_space<vmem>>, vector<15x16xf32>
    %c165 = arith.constant 165 : index
    %c0_34 = arith.constant 0 : index
    %42 = vector.load %arg10[%c165, %c0_34] : memref<450x16xf32, #tpu.memory_space<vmem>>, vector<15x16xf32>
    %43 = arith.maximumf %41, %42 : vector<15x16xf32>
    %44 = arith.truncf %43 : vector<15x16xf32> to vector<15x16xbf16>
    %c142 = arith.constant 142 : index
    %c0_35 = arith.constant 0 : index
    %45 = vector.load %arg11[%c142, %c0_35] : memref<400x16xbf16, #tpu.memory_space<vmem>>, vector<15x16xbf16>
    tpu.vector_store %arg11[%c142, %c0_35], %44 {strides = array<i32>} : memref<400x16xbf16, #tpu.memory_space<vmem>>, vector<15x16xbf16>,
    %c180 = arith.constant 180 : index
    %c0_36 = arith.constant 0 : index
    %46 = vector.load %arg10[%c180, %c0_36] : memref<450x16xf32, #tpu.memory_space<vmem>>, vector<15x16xf32>
    %c195 = arith.constant 195 : index
    %c0_37 = arith.constant 0 : index
    %47 = vector.load %arg10[%c195, %c0_37] : memref<450x16xf32, #tpu.memory_space<vmem>>, vector<15x16xf32>
    %48 = arith.maximumf %46, %47 : vector<15x16xf32>
    %49 = arith.truncf %48 : vector<15x16xf32> to vector<15x16xbf16>
    %c162 = arith.constant 162 : index
    %c0_38 = arith.constant 0 : index
    %50 = vector.load %arg11[%c162, %c0_38] : memref<400x16xbf16, #tpu.memory_space<vmem>>, vector<15x16xbf16>
    tpu.vector_store %arg11[%c162, %c0_38], %49 {strides = array<i32>} : memref<400x16xbf16, #tpu.memory_space<vmem>>, vector<15x16xbf16>,
    %c210 = arith.constant 210 : index
    %c0_39 = arith.constant 0 : index
    %51 = vector.load %arg10[%c210, %c0_39] : memref<450x16xf32, #tpu.memory_space<vmem>>, vector<15x16xf32>
    %c225 = arith.constant 225 : index
    %c0_40 = arith.constant 0 : index
    %52 = vector.load %arg10[%c225, %c0_40] : memref<450x16xf32, #tpu.memory_space<vmem>>, vector<15x16xf32>
    %53 = arith.maximumf %51, %52 : vector<15x16xf32>
    %54 = arith.truncf %53 : vector<15x16xf32> to vector<15x16xbf16>
    %c182 = arith.constant 182 : index
    %c0_41 = arith.constant 0 : index
    %55 = vector.load %arg11[%c182, %c0_41] : memref<400x16xbf16, #tpu.memory_space<vmem>>, vector<15x16xbf16>
    tpu.vector_store %arg11[%c182, %c0_41], %54 {strides = array<i32>} : memref<400x16xbf16, #tpu.memory_space<vmem>>, vector<15x16xbf16>,
    %c240 = arith.constant 240 : index
    %c0_42 = arith.constant 0 : index
    %56 = vector.load %arg10[%c240, %c0_42] : memref<450x16xf32, #tpu.memory_space<vmem>>, vector<15x16xf32>
    %c255 = arith.constant 255 : index
    %c0_43 = arith.constant 0 : index
    %57 = vector.load %arg10[%c255, %c0_43] : memref<450x16xf32, #tpu.memory_space<vmem>>, vector<15x16xf32>
    %58 = arith.maximumf %56, %57 : vector<15x16xf32>
    %59 = arith.truncf %58 : vector<15x16xf32> to vector<15x16xbf16>
    %c202 = arith.constant 202 : index
    %c0_44 = arith.constant 0 : index
    %60 = vector.load %arg11[%c202, %c0_44] : memref<400x16xbf16, #tpu.memory_space<vmem>>, vector<15x16xbf16>
    tpu.vector_store %arg11[%c202, %c0_44], %59 {strides = array<i32>} : memref<400x16xbf16, #tpu.memory_space<vmem>>, vector<15x16xbf16>,
    %c270 = arith.constant 270 : index
    %c0_45 = arith.constant 0 : index
    %61 = vector.load %arg10[%c270, %c0_45] : memref<450x16xf32, #tpu.memory_space<vmem>>, vector<15x16xf32>
    %c285 = arith.constant 285 : index
    %c0_46 = arith.constant 0 : index
    %62 = vector.load %arg10[%c285, %c0_46] : memref<450x16xf32, #tpu.memory_space<vmem>>, vector<15x16xf32>
    %63 = arith.maximumf %61, %62 : vector<15x16xf32>
    %64 = arith.truncf %63 : vector<15x16xf32> to vector<15x16xbf16>
    %c222 = arith.constant 222 : index
    %c0_47 = arith.constant 0 : index
    %65 = vector.load %arg11[%c222, %c0_47] : memref<400x16xbf16, #tpu.memory_space<vmem>>, vector<15x16xbf16>
    tpu.vector_store %arg11[%c222, %c0_47], %64 {strides = array<i32>} : memref<400x16xbf16, #tpu.memory_space<vmem>>, vector<15x16xbf16>,
    %c300 = arith.constant 300 : index
    %c0_48 = arith.constant 0 : index
    %66 = vector.load %arg10[%c300, %c0_48] : memref<450x16xf32, #tpu.memory_space<vmem>>, vector<15x16xf32>
    %c315 = arith.constant 315 : index
    %c0_49 = arith.constant 0 : index
    %67 = vector.load %arg10[%c315, %c0_49] : memref<450x16xf32, #tpu.memory_space<vmem>>, vector<15x16xf32>
    %68 = arith.maximumf %66, %67 : vector<15x16xf32>
    %69 = arith.truncf %68 : vector<15x16xf32> to vector<15x16xbf16>
    %c242 = arith.constant 242 : index
    %c0_50 = arith.constant 0 : index
    %70 = vector.load %arg11[%c242, %c0_50] : memref<400x16xbf16, #tpu.memory_space<vmem>>, vector<15x16xbf16>
    tpu.vector_store %arg11[%c242, %c0_50], %69 {strides = array<i32>} : memref<400x16xbf16, #tpu.memory_space<vmem>>, vector<15x16xbf16>,
    %c330 = arith.constant 330 : index
    %c0_51 = arith.constant 0 : index
    %71 = vector.load %arg10[%c330, %c0_51] : memref<450x16xf32, #tpu.memory_space<vmem>>, vector<15x16xf32>
    %c345 = arith.constant 345 : index
    %c0_52 = arith.constant 0 : index
    %72 = vector.load %arg10[%c345, %c0_52] : memref<450x16xf32, #tpu.memory_space<vmem>>, vector<15x16xf32>
    %73 = arith.maximumf %71, %72 : vector<15x16xf32>
    %74 = arith.truncf %73 : vector<15x16xf32> to vector<15x16xbf16>
    %c262 = arith.constant 262 : index
    %c0_53 = arith.constant 0 : index
    %75 = vector.load %arg11[%c262, %c0_53] : memref<400x16xbf16, #tpu.memory_space<vmem>>, vector<15x16xbf16>
    tpu.vector_store %arg11[%c262, %c0_53], %74 {strides = array<i32>} : memref<400x16xbf16, #tpu.memory_space<vmem>>, vector<15x16xbf16>,
    %c360 = arith.constant 360 : index
    %c0_54 = arith.constant 0 : index
    %76 = vector.load %arg10[%c360, %c0_54] : memref<450x16xf32, #tpu.memory_space<vmem>>, vector<15x16xf32>
    %c375 = arith.constant 375 : index
    %c0_55 = arith.constant 0 : index
    %77 = vector.load %arg10[%c375, %c0_55] : memref<450x16xf32, #tpu.memory_space<vmem>>, vector<15x16xf32>
    %78 = arith.maximumf %76, %77 : vector<15x16xf32>
    %79 = arith.truncf %78 : vector<15x16xf32> to vector<15x16xbf16>
    %c282 = arith.constant 282 : index
    %c0_56 = arith.constant 0 : index
    %80 = vector.load %arg11[%c282, %c0_56] : memref<400x16xbf16, #tpu.memory_space<vmem>>, vector<15x16xbf16>
    tpu.vector_store %arg11[%c282, %c0_56], %79 {strides = array<i32>} : memref<400x16xbf16, #tpu.memory_space<vmem>>, vector<15x16xbf16>,
    %c390 = arith.constant 390 : index
    %c0_57 = arith.constant 0 : index
    %81 = vector.load %arg10[%c390, %c0_57] : memref<450x16xf32, #tpu.memory_space<vmem>>, vector<15x16xf32>
    %c405 = arith.constant 405 : index
    %c0_58 = arith.constant 0 : index
    %82 = vector.load %arg10[%c405, %c0_58] : memref<450x16xf32, #tpu.memory_space<vmem>>, vector<15x16xf32>
    %83 = arith.maximumf %81, %82 : vector<15x16xf32>
    %84 = arith.truncf %83 : vector<15x16xf32> to vector<15x16xbf16>
    %c302 = arith.constant 302 : index
    %c0_59 = arith.constant 0 : index
    %85 = vector.load %arg11[%c302, %c0_59] : memref<400x16xbf16, #tpu.memory_space<vmem>>, vector<15x16xbf16>
    tpu.vector_store %arg11[%c302, %c0_59], %84 {strides = array<i32>} : memref<400x16xbf16, #tpu.memory_space<vmem>>, vector<15x16xbf16>,
    %c420 = arith.constant 420 : index
    %c0_60 = arith.constant 0 : index
    %86 = vector.load %arg10[%c420, %c0_60] : memref<450x16xf32, #tpu.memory_space<vmem>>, vector<15x16xf32>
    %c435 = arith.constant 435 : index
    %c0_61 = arith.constant 0 : index
    %87 = vector.load %arg10[%c435, %c0_61] : memref<450x16xf32, #tpu.memory_space<vmem>>, vector<15x16xf32>
    %88 = arith.maximumf %86, %87 : vector<15x16xf32>
    %89 = arith.truncf %88 : vector<15x16xf32> to vector<15x16xbf16>
    %c322 = arith.constant 322 : index
    %c0_62 = arith.constant 0 : index
    %90 = vector.load %arg11[%c322, %c0_62] : memref<400x16xbf16, #tpu.memory_space<vmem>>, vector<15x16xbf16>
    tpu.vector_store %arg11[%c322, %c0_62], %89 {strides = array<i32>} : memref<400x16xbf16, #tpu.memory_space<vmem>>, vector<15x16xbf16>,
    %c0_63 = arith.constant 0 : index
    %c0_64 = arith.constant 0 : index
    %91 = vector.load %arg11[%c0_63, %c0_64] : memref<400x16xbf16, #tpu.memory_space<vmem>>, vector<340x16xbf16>
    %c0_65 = arith.constant 0 : index
    %c0_66 = arith.constant 0 : index
    %c0_67 = arith.constant 0 : index
    %92 = vector.load %arg4[%c0_65, %c0_66, %c0_67] : memref<9x16x32xbf16, #tpu.memory_space<vmem>>, vector<1x16x32xbf16>
    %93 = vector.shape_cast %92 : vector<1x16x32xbf16> to vector<16x32xbf16>
    %cst_68 = arith.constant dense<0.000000e+00> : vector<340x32xf32>
    %94 = tpu.matmul %91, %93, %cst_68 {dimension_numbers = #tpu.dot_dimension_numbers<[1], [0], [0], [1], [0, 0, 1, 1], [], []>} : vector<340x16xbf16>, vector<16x32xbf16>, vector<340x32xf32> -> vector<340x32xf32>
    %c1_69 = arith.constant 1 : index
    %c0_70 = arith.constant 0 : index
    %95 = vector.load %arg11[%c1_69, %c0_70] : memref<400x16xbf16, #tpu.memory_space<vmem>>, vector<340x16xbf16>
    %c1_71 = arith.constant 1 : index
    %c0_72 = arith.constant 0 : index
    %c0_73 = arith.constant 0 : index
    %96 = vector.load %arg4[%c1_71, %c0_72, %c0_73] : memref<9x16x32xbf16, #tpu.memory_space<vmem>>, vector<1x16x32xbf16>
    %97 = vector.shape_cast %96 : vector<1x16x32xbf16> to vector<16x32xbf16>
    %cst_74 = arith.constant dense<0.000000e+00> : vector<340x32xf32>
    %98 = tpu.matmul %95, %97, %cst_74 {dimension_numbers = #tpu.dot_dimension_numbers<[1], [0], [0], [1], [0, 0, 1, 1], [], []>} : vector<340x16xbf16>, vector<16x32xbf16>, vector<340x32xf32> -> vector<340x32xf32>
    %99 = arith.addf %94, %98 : vector<340x32xf32>
    %c2 = arith.constant 2 : index
    %c0_75 = arith.constant 0 : index
    %100 = vector.load %arg11[%c2, %c0_75] : memref<400x16xbf16, #tpu.memory_space<vmem>>, vector<340x16xbf16>
    %c2_76 = arith.constant 2 : index
    %c0_77 = arith.constant 0 : index
    %c0_78 = arith.constant 0 : index
    %101 = vector.load %arg4[%c2_76, %c0_77, %c0_78] : memref<9x16x32xbf16, #tpu.memory_space<vmem>>, vector<1x16x32xbf16>
    %102 = vector.shape_cast %101 : vector<1x16x32xbf16> to vector<16x32xbf16>
    %cst_79 = arith.constant dense<0.000000e+00> : vector<340x32xf32>
    %103 = tpu.matmul %100, %102, %cst_79 {dimension_numbers = #tpu.dot_dimension_numbers<[1], [0], [0], [1], [0, 0, 1, 1], [], []>} : vector<340x16xbf16>, vector<16x32xbf16>, vector<340x32xf32> -> vector<340x32xf32>
    %104 = arith.addf %99, %103 : vector<340x32xf32>
    %c20 = arith.constant 20 : index
    %c0_80 = arith.constant 0 : index
    %105 = vector.load %arg11[%c20, %c0_80] : memref<400x16xbf16, #tpu.memory_space<vmem>>, vector<340x16xbf16>
    %c3 = arith.constant 3 : index
    %c0_81 = arith.constant 0 : index
    %c0_82 = arith.constant 0 : index
    %106 = vector.load %arg4[%c3, %c0_81, %c0_82] : memref<9x16x32xbf16, #tpu.memory_space<vmem>>, vector<1x16x32xbf16>
    %107 = vector.shape_cast %106 : vector<1x16x32xbf16> to vector<16x32xbf16>
    %cst_83 = arith.constant dense<0.000000e+00> : vector<340x32xf32>
    %108 = tpu.matmul %105, %107, %cst_83 {dimension_numbers = #tpu.dot_dimension_numbers<[1], [0], [0], [1], [0, 0, 1, 1], [], []>} : vector<340x16xbf16>, vector<16x32xbf16>, vector<340x32xf32> -> vector<340x32xf32>
    %109 = arith.addf %104, %108 : vector<340x32xf32>
    %c21 = arith.constant 21 : index
    %c0_84 = arith.constant 0 : index
    %110 = vector.load %arg11[%c21, %c0_84] : memref<400x16xbf16, #tpu.memory_space<vmem>>, vector<340x16xbf16>
    %c4 = arith.constant 4 : index
    %c0_85 = arith.constant 0 : index
    %c0_86 = arith.constant 0 : index
    %111 = vector.load %arg4[%c4, %c0_85, %c0_86] : memref<9x16x32xbf16, #tpu.memory_space<vmem>>, vector<1x16x32xbf16>
    %112 = vector.shape_cast %111 : vector<1x16x32xbf16> to vector<16x32xbf16>
    %cst_87 = arith.constant dense<0.000000e+00> : vector<340x32xf32>
    %113 = tpu.matmul %110, %112, %cst_87 {dimension_numbers = #tpu.dot_dimension_numbers<[1], [0], [0], [1], [0, 0, 1, 1], [], []>} : vector<340x16xbf16>, vector<16x32xbf16>, vector<340x32xf32> -> vector<340x32xf32>
    %114 = arith.addf %109, %113 : vector<340x32xf32>
    %c22 = arith.constant 22 : index
    %c0_88 = arith.constant 0 : index
    %115 = vector.load %arg11[%c22, %c0_88] : memref<400x16xbf16, #tpu.memory_space<vmem>>, vector<340x16xbf16>
    %c5 = arith.constant 5 : index
    %c0_89 = arith.constant 0 : index
    %c0_90 = arith.constant 0 : index
    %116 = vector.load %arg4[%c5, %c0_89, %c0_90] : memref<9x16x32xbf16, #tpu.memory_space<vmem>>, vector<1x16x32xbf16>
    %117 = vector.shape_cast %116 : vector<1x16x32xbf16> to vector<16x32xbf16>
    %cst_91 = arith.constant dense<0.000000e+00> : vector<340x32xf32>
    %118 = tpu.matmul %115, %117, %cst_91 {dimension_numbers = #tpu.dot_dimension_numbers<[1], [0], [0], [1], [0, 0, 1, 1], [], []>} : vector<340x16xbf16>, vector<16x32xbf16>, vector<340x32xf32> -> vector<340x32xf32>
    %119 = arith.addf %114, %118 : vector<340x32xf32>
    %c40 = arith.constant 40 : index
    %c0_92 = arith.constant 0 : index
    %120 = vector.load %arg11[%c40, %c0_92] : memref<400x16xbf16, #tpu.memory_space<vmem>>, vector<340x16xbf16>
    %c6 = arith.constant 6 : index
    %c0_93 = arith.constant 0 : index
    %c0_94 = arith.constant 0 : index
    %121 = vector.load %arg4[%c6, %c0_93, %c0_94] : memref<9x16x32xbf16, #tpu.memory_space<vmem>>, vector<1x16x32xbf16>
    %122 = vector.shape_cast %121 : vector<1x16x32xbf16> to vector<16x32xbf16>
    %cst_95 = arith.constant dense<0.000000e+00> : vector<340x32xf32>
    %123 = tpu.matmul %120, %122, %cst_95 {dimension_numbers = #tpu.dot_dimension_numbers<[1], [0], [0], [1], [0, 0, 1, 1], [], []>} : vector<340x16xbf16>, vector<16x32xbf16>, vector<340x32xf32> -> vector<340x32xf32>
    %124 = arith.addf %119, %123 : vector<340x32xf32>
    %c41 = arith.constant 41 : index
    %c0_96 = arith.constant 0 : index
    %125 = vector.load %arg11[%c41, %c0_96] : memref<400x16xbf16, #tpu.memory_space<vmem>>, vector<340x16xbf16>
    %c7 = arith.constant 7 : index
    %c0_97 = arith.constant 0 : index
    %c0_98 = arith.constant 0 : index
    %126 = vector.load %arg4[%c7, %c0_97, %c0_98] : memref<9x16x32xbf16, #tpu.memory_space<vmem>>, vector<1x16x32xbf16>
    %127 = vector.shape_cast %126 : vector<1x16x32xbf16> to vector<16x32xbf16>
    %cst_99 = arith.constant dense<0.000000e+00> : vector<340x32xf32>
    %128 = tpu.matmul %125, %127, %cst_99 {dimension_numbers = #tpu.dot_dimension_numbers<[1], [0], [0], [1], [0, 0, 1, 1], [], []>} : vector<340x16xbf16>, vector<16x32xbf16>, vector<340x32xf32> -> vector<340x32xf32>
    %129 = arith.addf %124, %128 : vector<340x32xf32>
    %c42_100 = arith.constant 42 : index
    %c0_101 = arith.constant 0 : index
    %130 = vector.load %arg11[%c42_100, %c0_101] : memref<400x16xbf16, #tpu.memory_space<vmem>>, vector<340x16xbf16>
    %c8 = arith.constant 8 : index
    %c0_102 = arith.constant 0 : index
    %c0_103 = arith.constant 0 : index
    %131 = vector.load %arg4[%c8, %c0_102, %c0_103] : memref<9x16x32xbf16, #tpu.memory_space<vmem>>, vector<1x16x32xbf16>
    %132 = vector.shape_cast %131 : vector<1x16x32xbf16> to vector<16x32xbf16>
    %cst_104 = arith.constant dense<0.000000e+00> : vector<340x32xf32>
    %133 = tpu.matmul %130, %132, %cst_104 {dimension_numbers = #tpu.dot_dimension_numbers<[1], [0], [0], [1], [0, 0, 1, 1], [], []>} : vector<340x16xbf16>, vector<16x32xbf16>, vector<340x32xf32> -> vector<340x32xf32>
    %134 = arith.addf %129, %133 : vector<340x32xf32>
    %c0_105 = arith.constant 0 : index
    %c0_106 = arith.constant 0 : index
    %135 = vector.load %arg5[%c0_105, %c0_106] : memref<1x32xf32, #tpu.memory_space<vmem>>, vector<1x32xf32>
    %136 = vector.broadcast %135 : vector<1x32xf32> to vector<340x32xf32>
    %137 = arith.addf %134, %136 : vector<340x32xf32>
    %cst_107 = arith.constant 0.000000e+00 : f32
    %138 = vector.broadcast %cst_107 : f32 to vector<340x32xf32>
    %139 = arith.maximumf %137, %138 : vector<340x32xf32>
    %c0_108 = arith.constant 0 : index
    %c0_109 = arith.constant 0 : index
    %140 = vector.load %arg12[%c0_108, %c0_109] : memref<340x32xf32, #tpu.memory_space<vmem>>, vector<340x32xf32>
    tpu.vector_store %arg12[%c0_108, %c0_109], %139 {strides = array<i32>} : memref<340x32xf32, #tpu.memory_space<vmem>>, vector<340x32xf32>,
    %c0_110 = arith.constant 0 : index
    %c0_111 = arith.constant 0 : index
    %141 = tpu.strided_load %arg12[%c0_110, %c0_111] {strides = array<i32: 2, 1>} : memref<340x32xf32, #tpu.memory_space<vmem>>, vector<170x32xf32>
    %c1_112 = arith.constant 1 : index
    %c0_113 = arith.constant 0 : index
    %142 = tpu.strided_load %arg12[%c1_112, %c0_113] {strides = array<i32: 2, 1>} : memref<340x32xf32, #tpu.memory_space<vmem>>, vector<170x32xf32>
    %143 = arith.maximumf %141, %142 : vector<170x32xf32>
    %c0_114 = arith.constant 0 : index
    %c0_115 = arith.constant 0 : index
    %144 = vector.load %arg13[%c0_114, %c0_115] : memref<170x32xf32, #tpu.memory_space<vmem>>, vector<170x32xf32>
    tpu.vector_store %arg13[%c0_114, %c0_115], %143 {strides = array<i32>} : memref<170x32xf32, #tpu.memory_space<vmem>>, vector<170x32xf32>,
    %c0_116 = arith.constant 0 : index
    %c0_117 = arith.constant 0 : index
    %145 = vector.load %arg13[%c0_116, %c0_117] : memref<170x32xf32, #tpu.memory_space<vmem>>, vector<10x32xf32>
    %c10 = arith.constant 10 : index
    %c0_118 = arith.constant 0 : index
    %146 = vector.load %arg13[%c10, %c0_118] : memref<170x32xf32, #tpu.memory_space<vmem>>, vector<10x32xf32>
    %147 = arith.maximumf %145, %146 : vector<10x32xf32>
    %148 = vector.extract_strided_slice %147 {offsets = [0, 0], sizes = [8, 32], strides = [1, 1]} : vector<10x32xf32> to vector<8x32xf32>
    %c0_119 = arith.constant 0 : index
    %c0_120 = arith.constant 0 : index
    %149 = vector.load %arg14[%c0_119, %c0_120] : memref<64x32xf32, #tpu.memory_space<vmem>>, vector<8x32xf32>
    tpu.vector_store %arg14[%c0_119, %c0_120], %148 {strides = array<i32>} : memref<64x32xf32, #tpu.memory_space<vmem>>, vector<8x32xf32>,
    %c20_121 = arith.constant 20 : index
    %c0_122 = arith.constant 0 : index
    %150 = vector.load %arg13[%c20_121, %c0_122] : memref<170x32xf32, #tpu.memory_space<vmem>>, vector<10x32xf32>
    %c30_123 = arith.constant 30 : index
    %c0_124 = arith.constant 0 : index
    %151 = vector.load %arg13[%c30_123, %c0_124] : memref<170x32xf32, #tpu.memory_space<vmem>>, vector<10x32xf32>
    %152 = arith.maximumf %150, %151 : vector<10x32xf32>
    %153 = vector.extract_strided_slice %152 {offsets = [0, 0], sizes = [8, 32], strides = [1, 1]} : vector<10x32xf32> to vector<8x32xf32>
    %c8_125 = arith.constant 8 : index
    %c0_126 = arith.constant 0 : index
    %154 = vector.load %arg14[%c8_125, %c0_126] : memref<64x32xf32, #tpu.memory_space<vmem>>, vector<8x32xf32>
    tpu.vector_store %arg14[%c8_125, %c0_126], %153 {strides = array<i32>} : memref<64x32xf32, #tpu.memory_space<vmem>>, vector<8x32xf32>,
    %c40_127 = arith.constant 40 : index
    %c0_128 = arith.constant 0 : index
    %155 = vector.load %arg13[%c40_127, %c0_128] : memref<170x32xf32, #tpu.memory_space<vmem>>, vector<10x32xf32>
    %c50 = arith.constant 50 : index
    %c0_129 = arith.constant 0 : index
    %156 = vector.load %arg13[%c50, %c0_129] : memref<170x32xf32, #tpu.memory_space<vmem>>, vector<10x32xf32>
    %157 = arith.maximumf %155, %156 : vector<10x32xf32>
    %158 = vector.extract_strided_slice %157 {offsets = [0, 0], sizes = [8, 32], strides = [1, 1]} : vector<10x32xf32> to vector<8x32xf32>
    %c16 = arith.constant 16 : index
    %c0_130 = arith.constant 0 : index
    %159 = vector.load %arg14[%c16, %c0_130] : memref<64x32xf32, #tpu.memory_space<vmem>>, vector<8x32xf32>
    tpu.vector_store %arg14[%c16, %c0_130], %158 {strides = array<i32>} : memref<64x32xf32, #tpu.memory_space<vmem>>, vector<8x32xf32>,
    %c60_131 = arith.constant 60 : index
    %c0_132 = arith.constant 0 : index
    %160 = vector.load %arg13[%c60_131, %c0_132] : memref<170x32xf32, #tpu.memory_space<vmem>>, vector<10x32xf32>
    %c70 = arith.constant 70 : index
    %c0_133 = arith.constant 0 : index
    %161 = vector.load %arg13[%c70, %c0_133] : memref<170x32xf32, #tpu.memory_space<vmem>>, vector<10x32xf32>
    %162 = arith.maximumf %160, %161 : vector<10x32xf32>
    %163 = vector.extract_strided_slice %162 {offsets = [0, 0], sizes = [8, 32], strides = [1, 1]} : vector<10x32xf32> to vector<8x32xf32>
    %c24 = arith.constant 24 : index
    %c0_134 = arith.constant 0 : index
    %164 = vector.load %arg14[%c24, %c0_134] : memref<64x32xf32, #tpu.memory_space<vmem>>, vector<8x32xf32>
    tpu.vector_store %arg14[%c24, %c0_134], %163 {strides = array<i32>} : memref<64x32xf32, #tpu.memory_space<vmem>>, vector<8x32xf32>,
    %c80 = arith.constant 80 : index
    %c0_135 = arith.constant 0 : index
    %165 = vector.load %arg13[%c80, %c0_135] : memref<170x32xf32, #tpu.memory_space<vmem>>, vector<10x32xf32>
    %c90_136 = arith.constant 90 : index
    %c0_137 = arith.constant 0 : index
    %166 = vector.load %arg13[%c90_136, %c0_137] : memref<170x32xf32, #tpu.memory_space<vmem>>, vector<10x32xf32>
    %167 = arith.maximumf %165, %166 : vector<10x32xf32>
    %168 = vector.extract_strided_slice %167 {offsets = [0, 0], sizes = [8, 32], strides = [1, 1]} : vector<10x32xf32> to vector<8x32xf32>
    %c32 = arith.constant 32 : index
    %c0_138 = arith.constant 0 : index
    %169 = vector.load %arg14[%c32, %c0_138] : memref<64x32xf32, #tpu.memory_space<vmem>>, vector<8x32xf32>
    tpu.vector_store %arg14[%c32, %c0_138], %168 {strides = array<i32>} : memref<64x32xf32, #tpu.memory_space<vmem>>, vector<8x32xf32>,
    %c100 = arith.constant 100 : index
    %c0_139 = arith.constant 0 : index
    %170 = vector.load %arg13[%c100, %c0_139] : memref<170x32xf32, #tpu.memory_space<vmem>>, vector<10x32xf32>
    %c110 = arith.constant 110 : index
    %c0_140 = arith.constant 0 : index
    %171 = vector.load %arg13[%c110, %c0_140] : memref<170x32xf32, #tpu.memory_space<vmem>>, vector<10x32xf32>
    %172 = arith.maximumf %170, %171 : vector<10x32xf32>
    %173 = vector.extract_strided_slice %172 {offsets = [0, 0], sizes = [8, 32], strides = [1, 1]} : vector<10x32xf32> to vector<8x32xf32>
    %c40_141 = arith.constant 40 : index
    %c0_142 = arith.constant 0 : index
    %174 = vector.load %arg14[%c40_141, %c0_142] : memref<64x32xf32, #tpu.memory_space<vmem>>, vector<8x32xf32>
    tpu.vector_store %arg14[%c40_141, %c0_142], %173 {strides = array<i32>} : memref<64x32xf32, #tpu.memory_space<vmem>>, vector<8x32xf32>,
    %c120_143 = arith.constant 120 : index
    %c0_144 = arith.constant 0 : index
    %175 = vector.load %arg13[%c120_143, %c0_144] : memref<170x32xf32, #tpu.memory_space<vmem>>, vector<10x32xf32>
    %c130 = arith.constant 130 : index
    %c0_145 = arith.constant 0 : index
    %176 = vector.load %arg13[%c130, %c0_145] : memref<170x32xf32, #tpu.memory_space<vmem>>, vector<10x32xf32>
    %177 = arith.maximumf %175, %176 : vector<10x32xf32>
    %178 = vector.extract_strided_slice %177 {offsets = [0, 0], sizes = [8, 32], strides = [1, 1]} : vector<10x32xf32> to vector<8x32xf32>
    %c48 = arith.constant 48 : index
    %c0_146 = arith.constant 0 : index
    %179 = vector.load %arg14[%c48, %c0_146] : memref<64x32xf32, #tpu.memory_space<vmem>>, vector<8x32xf32>
    tpu.vector_store %arg14[%c48, %c0_146], %178 {strides = array<i32>} : memref<64x32xf32, #tpu.memory_space<vmem>>, vector<8x32xf32>,
    %c140 = arith.constant 140 : index
    %c0_147 = arith.constant 0 : index
    %180 = vector.load %arg13[%c140, %c0_147] : memref<170x32xf32, #tpu.memory_space<vmem>>, vector<10x32xf32>
    %c150_148 = arith.constant 150 : index
    %c0_149 = arith.constant 0 : index
    %181 = vector.load %arg13[%c150_148, %c0_149] : memref<170x32xf32, #tpu.memory_space<vmem>>, vector<10x32xf32>
    %182 = arith.maximumf %180, %181 : vector<10x32xf32>
    %183 = vector.extract_strided_slice %182 {offsets = [0, 0], sizes = [8, 32], strides = [1, 1]} : vector<10x32xf32> to vector<8x32xf32>
    %c56 = arith.constant 56 : index
    %c0_150 = arith.constant 0 : index
    %184 = vector.load %arg14[%c56, %c0_150] : memref<64x32xf32, #tpu.memory_space<vmem>>, vector<8x32xf32>
    tpu.vector_store %arg14[%c56, %c0_150], %183 {strides = array<i32>} : memref<64x32xf32, #tpu.memory_space<vmem>>, vector<8x32xf32>,
    %c0_151 = arith.constant 0 : index
    %c0_152 = arith.constant 0 : index
    %185 = vector.load %arg14[%c0_151, %c0_152] : memref<64x32xf32, #tpu.memory_space<vmem>>, vector<64x32xf32>
    %cst_153 = arith.constant 0.000000e+00 : f32
    %186 = vector.broadcast %cst_153 : f32 to vector<64x128xf32>
    %187 = vector.extract_strided_slice %185 {offsets = [0, 0], sizes = [64, 1], strides = [1, 1]} : vector<64x32xf32> to vector<64x1xf32>
    %c0_154 = arith.constant 0 : index
    %c0_155 = arith.constant 0 : index
    %c0_156 = arith.constant 0 : index
    %188 = vector.load %arg6[%c0_154, %c0_155, %c0_156] : memref<32x64x128xf32, #tpu.memory_space<vmem>>, vector<1x64x128xf32>
    %189 = vector.shape_cast %188 : vector<1x64x128xf32> to vector<64x128xf32>
    %190 = vector.broadcast %187 : vector<64x1xf32> to vector<64x128xf32>
    %191 = arith.mulf %190, %189 : vector<64x128xf32>
    %192 = arith.addf %186, %191 : vector<64x128xf32>
    %193 = vector.extract_strided_slice %185 {offsets = [0, 1], sizes = [64, 1], strides = [1, 1]} : vector<64x32xf32> to vector<64x1xf32>
    %c1_157 = arith.constant 1 : index
    %c0_158 = arith.constant 0 : index
    %c0_159 = arith.constant 0 : index
    %194 = vector.load %arg6[%c1_157, %c0_158, %c0_159] : memref<32x64x128xf32, #tpu.memory_space<vmem>>, vector<1x64x128xf32>
    %195 = vector.shape_cast %194 : vector<1x64x128xf32> to vector<64x128xf32>
    %196 = vector.broadcast %193 : vector<64x1xf32> to vector<64x128xf32>
    %197 = arith.mulf %196, %195 : vector<64x128xf32>
    %198 = arith.addf %192, %197 : vector<64x128xf32>
    %199 = vector.extract_strided_slice %185 {offsets = [0, 2], sizes = [64, 1], strides = [1, 1]} : vector<64x32xf32> to vector<64x1xf32>
    %c2_160 = arith.constant 2 : index
    %c0_161 = arith.constant 0 : index
    %c0_162 = arith.constant 0 : index
    %200 = vector.load %arg6[%c2_160, %c0_161, %c0_162] : memref<32x64x128xf32, #tpu.memory_space<vmem>>, vector<1x64x128xf32>
    %201 = vector.shape_cast %200 : vector<1x64x128xf32> to vector<64x128xf32>
    %202 = vector.broadcast %199 : vector<64x1xf32> to vector<64x128xf32>
    %203 = arith.mulf %202, %201 : vector<64x128xf32>
    %204 = arith.addf %198, %203 : vector<64x128xf32>
    %205 = vector.extract_strided_slice %185 {offsets = [0, 3], sizes = [64, 1], strides = [1, 1]} : vector<64x32xf32> to vector<64x1xf32>
    %c3_163 = arith.constant 3 : index
    %c0_164 = arith.constant 0 : index
    %c0_165 = arith.constant 0 : index
    %206 = vector.load %arg6[%c3_163, %c0_164, %c0_165] : memref<32x64x128xf32, #tpu.memory_space<vmem>>, vector<1x64x128xf32>
    %207 = vector.shape_cast %206 : vector<1x64x128xf32> to vector<64x128xf32>
    %208 = vector.broadcast %205 : vector<64x1xf32> to vector<64x128xf32>
    %209 = arith.mulf %208, %207 : vector<64x128xf32>
    %210 = arith.addf %204, %209 : vector<64x128xf32>
    %211 = vector.extract_strided_slice %185 {offsets = [0, 4], sizes = [64, 1], strides = [1, 1]} : vector<64x32xf32> to vector<64x1xf32>
    %c4_166 = arith.constant 4 : index
    %c0_167 = arith.constant 0 : index
    %c0_168 = arith.constant 0 : index
    %212 = vector.load %arg6[%c4_166, %c0_167, %c0_168] : memref<32x64x128xf32, #tpu.memory_space<vmem>>, vector<1x64x128xf32>
    %213 = vector.shape_cast %212 : vector<1x64x128xf32> to vector<64x128xf32>
    %214 = vector.broadcast %211 : vector<64x1xf32> to vector<64x128xf32>
    %215 = arith.mulf %214, %213 : vector<64x128xf32>
    %216 = arith.addf %210, %215 : vector<64x128xf32>
    %217 = vector.extract_strided_slice %185 {offsets = [0, 5], sizes = [64, 1], strides = [1, 1]} : vector<64x32xf32> to vector<64x1xf32>
    %c5_169 = arith.constant 5 : index
    %c0_170 = arith.constant 0 : index
    %c0_171 = arith.constant 0 : index
    %218 = vector.load %arg6[%c5_169, %c0_170, %c0_171] : memref<32x64x128xf32, #tpu.memory_space<vmem>>, vector<1x64x128xf32>
    %219 = vector.shape_cast %218 : vector<1x64x128xf32> to vector<64x128xf32>
    %220 = vector.broadcast %217 : vector<64x1xf32> to vector<64x128xf32>
    %221 = arith.mulf %220, %219 : vector<64x128xf32>
    %222 = arith.addf %216, %221 : vector<64x128xf32>
    %223 = vector.extract_strided_slice %185 {offsets = [0, 6], sizes = [64, 1], strides = [1, 1]} : vector<64x32xf32> to vector<64x1xf32>
    %c6_172 = arith.constant 6 : index
    %c0_173 = arith.constant 0 : index
    %c0_174 = arith.constant 0 : index
    %224 = vector.load %arg6[%c6_172, %c0_173, %c0_174] : memref<32x64x128xf32, #tpu.memory_space<vmem>>, vector<1x64x128xf32>
    %225 = vector.shape_cast %224 : vector<1x64x128xf32> to vector<64x128xf32>
    %226 = vector.broadcast %223 : vector<64x1xf32> to vector<64x128xf32>
    %227 = arith.mulf %226, %225 : vector<64x128xf32>
    %228 = arith.addf %222, %227 : vector<64x128xf32>
    %229 = vector.extract_strided_slice %185 {offsets = [0, 7], sizes = [64, 1], strides = [1, 1]} : vector<64x32xf32> to vector<64x1xf32>
    %c7_175 = arith.constant 7 : index
    %c0_176 = arith.constant 0 : index
    %c0_177 = arith.constant 0 : index
    %230 = vector.load %arg6[%c7_175, %c0_176, %c0_177] : memref<32x64x128xf32, #tpu.memory_space<vmem>>, vector<1x64x128xf32>
    %231 = vector.shape_cast %230 : vector<1x64x128xf32> to vector<64x128xf32>
    %232 = vector.broadcast %229 : vector<64x1xf32> to vector<64x128xf32>
    %233 = arith.mulf %232, %231 : vector<64x128xf32>
    %234 = arith.addf %228, %233 : vector<64x128xf32>
    %235 = vector.extract_strided_slice %185 {offsets = [0, 8], sizes = [64, 1], strides = [1, 1]} : vector<64x32xf32> to vector<64x1xf32>
    %c8_178 = arith.constant 8 : index
    %c0_179 = arith.constant 0 : index
    %c0_180 = arith.constant 0 : index
    %236 = vector.load %arg6[%c8_178, %c0_179, %c0_180] : memref<32x64x128xf32, #tpu.memory_space<vmem>>, vector<1x64x128xf32>
    %237 = vector.shape_cast %236 : vector<1x64x128xf32> to vector<64x128xf32>
    %238 = vector.broadcast %235 : vector<64x1xf32> to vector<64x128xf32>
    %239 = arith.mulf %238, %237 : vector<64x128xf32>
    %240 = arith.addf %234, %239 : vector<64x128xf32>
    %241 = vector.extract_strided_slice %185 {offsets = [0, 9], sizes = [64, 1], strides = [1, 1]} : vector<64x32xf32> to vector<64x1xf32>
    %c9 = arith.constant 9 : index
    %c0_181 = arith.constant 0 : index
    %c0_182 = arith.constant 0 : index
    %242 = vector.load %arg6[%c9, %c0_181, %c0_182] : memref<32x64x128xf32, #tpu.memory_space<vmem>>, vector<1x64x128xf32>
    %243 = vector.shape_cast %242 : vector<1x64x128xf32> to vector<64x128xf32>
    %244 = vector.broadcast %241 : vector<64x1xf32> to vector<64x128xf32>
    %245 = arith.mulf %244, %243 : vector<64x128xf32>
    %246 = arith.addf %240, %245 : vector<64x128xf32>
    %247 = vector.extract_strided_slice %185 {offsets = [0, 10], sizes = [64, 1], strides = [1, 1]} : vector<64x32xf32> to vector<64x1xf32>
    %c10_183 = arith.constant 10 : index
    %c0_184 = arith.constant 0 : index
    %c0_185 = arith.constant 0 : index
    %248 = vector.load %arg6[%c10_183, %c0_184, %c0_185] : memref<32x64x128xf32, #tpu.memory_space<vmem>>, vector<1x64x128xf32>
    %249 = vector.shape_cast %248 : vector<1x64x128xf32> to vector<64x128xf32>
    %250 = vector.broadcast %247 : vector<64x1xf32> to vector<64x128xf32>
    %251 = arith.mulf %250, %249 : vector<64x128xf32>
    %252 = arith.addf %246, %251 : vector<64x128xf32>
    %253 = vector.extract_strided_slice %185 {offsets = [0, 11], sizes = [64, 1], strides = [1, 1]} : vector<64x32xf32> to vector<64x1xf32>
    %c11 = arith.constant 11 : index
    %c0_186 = arith.constant 0 : index
    %c0_187 = arith.constant 0 : index
    %254 = vector.load %arg6[%c11, %c0_186, %c0_187] : memref<32x64x128xf32, #tpu.memory_space<vmem>>, vector<1x64x128xf32>
    %255 = vector.shape_cast %254 : vector<1x64x128xf32> to vector<64x128xf32>
    %256 = vector.broadcast %253 : vector<64x1xf32> to vector<64x128xf32>
    %257 = arith.mulf %256, %255 : vector<64x128xf32>
    %258 = arith.addf %252, %257 : vector<64x128xf32>
    %259 = vector.extract_strided_slice %185 {offsets = [0, 12], sizes = [64, 1], strides = [1, 1]} : vector<64x32xf32> to vector<64x1xf32>
    %c12 = arith.constant 12 : index
    %c0_188 = arith.constant 0 : index
    %c0_189 = arith.constant 0 : index
    %260 = vector.load %arg6[%c12, %c0_188, %c0_189] : memref<32x64x128xf32, #tpu.memory_space<vmem>>, vector<1x64x128xf32>
    %261 = vector.shape_cast %260 : vector<1x64x128xf32> to vector<64x128xf32>
    %262 = vector.broadcast %259 : vector<64x1xf32> to vector<64x128xf32>
    %263 = arith.mulf %262, %261 : vector<64x128xf32>
    %264 = arith.addf %258, %263 : vector<64x128xf32>
    %265 = vector.extract_strided_slice %185 {offsets = [0, 13], sizes = [64, 1], strides = [1, 1]} : vector<64x32xf32> to vector<64x1xf32>
    %c13 = arith.constant 13 : index
    %c0_190 = arith.constant 0 : index
    %c0_191 = arith.constant 0 : index
    %266 = vector.load %arg6[%c13, %c0_190, %c0_191] : memref<32x64x128xf32, #tpu.memory_space<vmem>>, vector<1x64x128xf32>
    %267 = vector.shape_cast %266 : vector<1x64x128xf32> to vector<64x128xf32>
    %268 = vector.broadcast %265 : vector<64x1xf32> to vector<64x128xf32>
    %269 = arith.mulf %268, %267 : vector<64x128xf32>
    %270 = arith.addf %264, %269 : vector<64x128xf32>
    %271 = vector.extract_strided_slice %185 {offsets = [0, 14], sizes = [64, 1], strides = [1, 1]} : vector<64x32xf32> to vector<64x1xf32>
    %c14 = arith.constant 14 : index
    %c0_192 = arith.constant 0 : index
    %c0_193 = arith.constant 0 : index
    %272 = vector.load %arg6[%c14, %c0_192, %c0_193] : memref<32x64x128xf32, #tpu.memory_space<vmem>>, vector<1x64x128xf32>
    %273 = vector.shape_cast %272 : vector<1x64x128xf32> to vector<64x128xf32>
    %274 = vector.broadcast %271 : vector<64x1xf32> to vector<64x128xf32>
    %275 = arith.mulf %274, %273 : vector<64x128xf32>
    %276 = arith.addf %270, %275 : vector<64x128xf32>
    %277 = vector.extract_strided_slice %185 {offsets = [0, 15], sizes = [64, 1], strides = [1, 1]} : vector<64x32xf32> to vector<64x1xf32>
    %c15_194 = arith.constant 15 : index
    %c0_195 = arith.constant 0 : index
    %c0_196 = arith.constant 0 : index
    %278 = vector.load %arg6[%c15_194, %c0_195, %c0_196] : memref<32x64x128xf32, #tpu.memory_space<vmem>>, vector<1x64x128xf32>
    %279 = vector.shape_cast %278 : vector<1x64x128xf32> to vector<64x128xf32>
    %280 = vector.broadcast %277 : vector<64x1xf32> to vector<64x128xf32>
    %281 = arith.mulf %280, %279 : vector<64x128xf32>
    %282 = arith.addf %276, %281 : vector<64x128xf32>
    %283 = vector.extract_strided_slice %185 {offsets = [0, 16], sizes = [64, 1], strides = [1, 1]} : vector<64x32xf32> to vector<64x1xf32>
    %c16_197 = arith.constant 16 : index
    %c0_198 = arith.constant 0 : index
    %c0_199 = arith.constant 0 : index
    %284 = vector.load %arg6[%c16_197, %c0_198, %c0_199] : memref<32x64x128xf32, #tpu.memory_space<vmem>>, vector<1x64x128xf32>
    %285 = vector.shape_cast %284 : vector<1x64x128xf32> to vector<64x128xf32>
    %286 = vector.broadcast %283 : vector<64x1xf32> to vector<64x128xf32>
    %287 = arith.mulf %286, %285 : vector<64x128xf32>
    %288 = arith.addf %282, %287 : vector<64x128xf32>
    %289 = vector.extract_strided_slice %185 {offsets = [0, 17], sizes = [64, 1], strides = [1, 1]} : vector<64x32xf32> to vector<64x1xf32>
    %c17 = arith.constant 17 : index
    %c0_200 = arith.constant 0 : index
    %c0_201 = arith.constant 0 : index
    %290 = vector.load %arg6[%c17, %c0_200, %c0_201] : memref<32x64x128xf32, #tpu.memory_space<vmem>>, vector<1x64x128xf32>
    %291 = vector.shape_cast %290 : vector<1x64x128xf32> to vector<64x128xf32>
    %292 = vector.broadcast %289 : vector<64x1xf32> to vector<64x128xf32>
    %293 = arith.mulf %292, %291 : vector<64x128xf32>
    %294 = arith.addf %288, %293 : vector<64x128xf32>
    %295 = vector.extract_strided_slice %185 {offsets = [0, 18], sizes = [64, 1], strides = [1, 1]} : vector<64x32xf32> to vector<64x1xf32>
    %c18 = arith.constant 18 : index
    %c0_202 = arith.constant 0 : index
    %c0_203 = arith.constant 0 : index
    %296 = vector.load %arg6[%c18, %c0_202, %c0_203] : memref<32x64x128xf32, #tpu.memory_space<vmem>>, vector<1x64x128xf32>
    %297 = vector.shape_cast %296 : vector<1x64x128xf32> to vector<64x128xf32>
    %298 = vector.broadcast %295 : vector<64x1xf32> to vector<64x128xf32>
    %299 = arith.mulf %298, %297 : vector<64x128xf32>
    %300 = arith.addf %294, %299 : vector<64x128xf32>
    %301 = vector.extract_strided_slice %185 {offsets = [0, 19], sizes = [64, 1], strides = [1, 1]} : vector<64x32xf32> to vector<64x1xf32>
    %c19 = arith.constant 19 : index
    %c0_204 = arith.constant 0 : index
    %c0_205 = arith.constant 0 : index
    %302 = vector.load %arg6[%c19, %c0_204, %c0_205] : memref<32x64x128xf32, #tpu.memory_space<vmem>>, vector<1x64x128xf32>
    %303 = vector.shape_cast %302 : vector<1x64x128xf32> to vector<64x128xf32>
    %304 = vector.broadcast %301 : vector<64x1xf32> to vector<64x128xf32>
    %305 = arith.mulf %304, %303 : vector<64x128xf32>
    %306 = arith.addf %300, %305 : vector<64x128xf32>
    %307 = vector.extract_strided_slice %185 {offsets = [0, 20], sizes = [64, 1], strides = [1, 1]} : vector<64x32xf32> to vector<64x1xf32>
    %c20_206 = arith.constant 20 : index
    %c0_207 = arith.constant 0 : index
    %c0_208 = arith.constant 0 : index
    %308 = vector.load %arg6[%c20_206, %c0_207, %c0_208] : memref<32x64x128xf32, #tpu.memory_space<vmem>>, vector<1x64x128xf32>
    %309 = vector.shape_cast %308 : vector<1x64x128xf32> to vector<64x128xf32>
    %310 = vector.broadcast %307 : vector<64x1xf32> to vector<64x128xf32>
    %311 = arith.mulf %310, %309 : vector<64x128xf32>
    %312 = arith.addf %306, %311 : vector<64x128xf32>
    %313 = vector.extract_strided_slice %185 {offsets = [0, 21], sizes = [64, 1], strides = [1, 1]} : vector<64x32xf32> to vector<64x1xf32>
    %c21_209 = arith.constant 21 : index
    %c0_210 = arith.constant 0 : index
    %c0_211 = arith.constant 0 : index
    %314 = vector.load %arg6[%c21_209, %c0_210, %c0_211] : memref<32x64x128xf32, #tpu.memory_space<vmem>>, vector<1x64x128xf32>
    %315 = vector.shape_cast %314 : vector<1x64x128xf32> to vector<64x128xf32>
    %316 = vector.broadcast %313 : vector<64x1xf32> to vector<64x128xf32>
    %317 = arith.mulf %316, %315 : vector<64x128xf32>
    %318 = arith.addf %312, %317 : vector<64x128xf32>
    %319 = vector.extract_strided_slice %185 {offsets = [0, 22], sizes = [64, 1], strides = [1, 1]} : vector<64x32xf32> to vector<64x1xf32>
    %c22_212 = arith.constant 22 : index
    %c0_213 = arith.constant 0 : index
    %c0_214 = arith.constant 0 : index
    %320 = vector.load %arg6[%c22_212, %c0_213, %c0_214] : memref<32x64x128xf32, #tpu.memory_space<vmem>>, vector<1x64x128xf32>
    %321 = vector.shape_cast %320 : vector<1x64x128xf32> to vector<64x128xf32>
    %322 = vector.broadcast %319 : vector<64x1xf32> to vector<64x128xf32>
    %323 = arith.mulf %322, %321 : vector<64x128xf32>
    %324 = arith.addf %318, %323 : vector<64x128xf32>
    %325 = vector.extract_strided_slice %185 {offsets = [0, 23], sizes = [64, 1], strides = [1, 1]} : vector<64x32xf32> to vector<64x1xf32>
    %c23 = arith.constant 23 : index
    %c0_215 = arith.constant 0 : index
    %c0_216 = arith.constant 0 : index
    %326 = vector.load %arg6[%c23, %c0_215, %c0_216] : memref<32x64x128xf32, #tpu.memory_space<vmem>>, vector<1x64x128xf32>
    %327 = vector.shape_cast %326 : vector<1x64x128xf32> to vector<64x128xf32>
    %328 = vector.broadcast %325 : vector<64x1xf32> to vector<64x128xf32>
    %329 = arith.mulf %328, %327 : vector<64x128xf32>
    %330 = arith.addf %324, %329 : vector<64x128xf32>
    %331 = vector.extract_strided_slice %185 {offsets = [0, 24], sizes = [64, 1], strides = [1, 1]} : vector<64x32xf32> to vector<64x1xf32>
    %c24_217 = arith.constant 24 : index
    %c0_218 = arith.constant 0 : index
    %c0_219 = arith.constant 0 : index
    %332 = vector.load %arg6[%c24_217, %c0_218, %c0_219] : memref<32x64x128xf32, #tpu.memory_space<vmem>>, vector<1x64x128xf32>
    %333 = vector.shape_cast %332 : vector<1x64x128xf32> to vector<64x128xf32>
    %334 = vector.broadcast %331 : vector<64x1xf32> to vector<64x128xf32>
    %335 = arith.mulf %334, %333 : vector<64x128xf32>
    %336 = arith.addf %330, %335 : vector<64x128xf32>
    %337 = vector.extract_strided_slice %185 {offsets = [0, 25], sizes = [64, 1], strides = [1, 1]} : vector<64x32xf32> to vector<64x1xf32>
    %c25 = arith.constant 25 : index
    %c0_220 = arith.constant 0 : index
    %c0_221 = arith.constant 0 : index
    %338 = vector.load %arg6[%c25, %c0_220, %c0_221] : memref<32x64x128xf32, #tpu.memory_space<vmem>>, vector<1x64x128xf32>
    %339 = vector.shape_cast %338 : vector<1x64x128xf32> to vector<64x128xf32>
    %340 = vector.broadcast %337 : vector<64x1xf32> to vector<64x128xf32>
    %341 = arith.mulf %340, %339 : vector<64x128xf32>
    %342 = arith.addf %336, %341 : vector<64x128xf32>
    %343 = vector.extract_strided_slice %185 {offsets = [0, 26], sizes = [64, 1], strides = [1, 1]} : vector<64x32xf32> to vector<64x1xf32>
    %c26 = arith.constant 26 : index
    %c0_222 = arith.constant 0 : index
    %c0_223 = arith.constant 0 : index
    %344 = vector.load %arg6[%c26, %c0_222, %c0_223] : memref<32x64x128xf32, #tpu.memory_space<vmem>>, vector<1x64x128xf32>
    %345 = vector.shape_cast %344 : vector<1x64x128xf32> to vector<64x128xf32>
    %346 = vector.broadcast %343 : vector<64x1xf32> to vector<64x128xf32>
    %347 = arith.mulf %346, %345 : vector<64x128xf32>
    %348 = arith.addf %342, %347 : vector<64x128xf32>
    %349 = vector.extract_strided_slice %185 {offsets = [0, 27], sizes = [64, 1], strides = [1, 1]} : vector<64x32xf32> to vector<64x1xf32>
    %c27 = arith.constant 27 : index
    %c0_224 = arith.constant 0 : index
    %c0_225 = arith.constant 0 : index
    %350 = vector.load %arg6[%c27, %c0_224, %c0_225] : memref<32x64x128xf32, #tpu.memory_space<vmem>>, vector<1x64x128xf32>
    %351 = vector.shape_cast %350 : vector<1x64x128xf32> to vector<64x128xf32>
    %352 = vector.broadcast %349 : vector<64x1xf32> to vector<64x128xf32>
    %353 = arith.mulf %352, %351 : vector<64x128xf32>
    %354 = arith.addf %348, %353 : vector<64x128xf32>
    %355 = vector.extract_strided_slice %185 {offsets = [0, 28], sizes = [64, 1], strides = [1, 1]} : vector<64x32xf32> to vector<64x1xf32>
    %c28 = arith.constant 28 : index
    %c0_226 = arith.constant 0 : index
    %c0_227 = arith.constant 0 : index
    %356 = vector.load %arg6[%c28, %c0_226, %c0_227] : memref<32x64x128xf32, #tpu.memory_space<vmem>>, vector<1x64x128xf32>
    %357 = vector.shape_cast %356 : vector<1x64x128xf32> to vector<64x128xf32>
    %358 = vector.broadcast %355 : vector<64x1xf32> to vector<64x128xf32>
    %359 = arith.mulf %358, %357 : vector<64x128xf32>
    %360 = arith.addf %354, %359 : vector<64x128xf32>
    %361 = vector.extract_strided_slice %185 {offsets = [0, 29], sizes = [64, 1], strides = [1, 1]} : vector<64x32xf32> to vector<64x1xf32>
    %c29 = arith.constant 29 : index
    %c0_228 = arith.constant 0 : index
    %c0_229 = arith.constant 0 : index
    %362 = vector.load %arg6[%c29, %c0_228, %c0_229] : memref<32x64x128xf32, #tpu.memory_space<vmem>>, vector<1x64x128xf32>
    %363 = vector.shape_cast %362 : vector<1x64x128xf32> to vector<64x128xf32>
    %364 = vector.broadcast %361 : vector<64x1xf32> to vector<64x128xf32>
    %365 = arith.mulf %364, %363 : vector<64x128xf32>
    %366 = arith.addf %360, %365 : vector<64x128xf32>
    %367 = vector.extract_strided_slice %185 {offsets = [0, 30], sizes = [64, 1], strides = [1, 1]} : vector<64x32xf32> to vector<64x1xf32>
    %c30_230 = arith.constant 30 : index
    %c0_231 = arith.constant 0 : index
    %c0_232 = arith.constant 0 : index
    %368 = vector.load %arg6[%c30_230, %c0_231, %c0_232] : memref<32x64x128xf32, #tpu.memory_space<vmem>>, vector<1x64x128xf32>
    %369 = vector.shape_cast %368 : vector<1x64x128xf32> to vector<64x128xf32>
    %370 = vector.broadcast %367 : vector<64x1xf32> to vector<64x128xf32>
    %371 = arith.mulf %370, %369 : vector<64x128xf32>
    %372 = arith.addf %366, %371 : vector<64x128xf32>
    %373 = vector.extract_strided_slice %185 {offsets = [0, 31], sizes = [64, 1], strides = [1, 1]} : vector<64x32xf32> to vector<64x1xf32>
    %c31 = arith.constant 31 : index
    %c0_233 = arith.constant 0 : index
    %c0_234 = arith.constant 0 : index
    %374 = vector.load %arg6[%c31, %c0_233, %c0_234] : memref<32x64x128xf32, #tpu.memory_space<vmem>>, vector<1x64x128xf32>
    %375 = vector.shape_cast %374 : vector<1x64x128xf32> to vector<64x128xf32>
    %376 = vector.broadcast %373 : vector<64x1xf32> to vector<64x128xf32>
    %377 = arith.mulf %376, %375 : vector<64x128xf32>
    %378 = arith.addf %372, %377 : vector<64x128xf32>
    %cst_235 = arith.constant dense<0.000000e+00> : vector<128xf32>
    %379 = vector.multi_reduction <add>, %378, %cst_235 [0] : vector<64x128xf32> to vector<128xf32>
    %380 = vector.shape_cast %379 : vector<128xf32> to vector<1x128xf32>
    %c0_236 = arith.constant 0 : index
    %c0_237 = arith.constant 0 : index
    %381 = vector.load %arg7[%c0_236, %c0_237] : memref<1x128xf32, #tpu.memory_space<vmem>>, vector<1x128xf32>
    %382 = arith.addf %380, %381 : vector<1x128xf32>
    %c0_238 = arith.constant 0 : index
    %c0_239 = arith.constant 0 : index
    %c0_240 = arith.constant 0 : index
    %383 = vector.load %arg8[%c0_238, %c0_239, %c0_240] : memref<1x1x128xf32, #tpu.memory_space<vmem>>, vector<1x1x128xf32>
    %384 = vector.shape_cast %383 : vector<1x1x128xf32> to vector<1x128xf32>
    %385 = vector.shape_cast %382 : vector<1x128xf32> to vector<1x1x128xf32>
    tpu.vector_store %arg8[%c0_238, %c0_239, %c0_240], %385 {strides = array<i32>} : memref<1x1x128xf32, #tpu.memory_space<vmem>>, vector<1x1x128xf32>,
    return
  }
  func.func @transform_0(%arg0: i32) -> (i32, i32, i32) {
    %c0_i32 = arith.constant 0 : i32
    %c0_i32_0 = arith.constant 0 : i32
    %c0_i32_1 = arith.constant 0 : i32
    return %arg0, %c0_i32, %c0_i32_0 : i32, i32, i32
  }
  func.func @transform_1(%arg0: i32) -> (i32, i32) {
    %c0_i32 = arith.constant 0 : i32
    %c0_i32_0 = arith.constant 0 : i32
    %c0_i32_1 = arith.constant 0 : i32
    return %c0_i32, %c0_i32_0 : i32, i32
  }
  func.func @transform_2(%arg0: i32) -> (i32, i32) {
    %c0_i32 = arith.constant 0 : i32
    %c0_i32_0 = arith.constant 0 : i32
    %c0_i32_1 = arith.constant 0 : i32
    return %c0_i32, %c0_i32_0 : i32, i32
  }
  func.func @transform_3(%arg0: i32) -> (i32, i32, i32) {
    %c0_i32 = arith.constant 0 : i32
    %c0_i32_0 = arith.constant 0 : i32
    %c0_i32_1 = arith.constant 0 : i32
    %c0_i32_2 = arith.constant 0 : i32
    return %c0_i32, %c0_i32_0, %c0_i32_1 : i32, i32, i32
  }
  func.func @transform_4(%arg0: i32) -> (i32, i32) {
    %c0_i32 = arith.constant 0 : i32
    %c0_i32_0 = arith.constant 0 : i32
    %c0_i32_1 = arith.constant 0 : i32
    return %c0_i32, %c0_i32_0 : i32, i32
  }
  func.func @transform_5(%arg0: i32) -> (i32, i32, i32) {
    %c0_i32 = arith.constant 0 : i32
    %c0_i32_0 = arith.constant 0 : i32
    %c0_i32_1 = arith.constant 0 : i32
    %c0_i32_2 = arith.constant 0 : i32
    return %c0_i32, %c0_i32_0, %c0_i32_1 : i32, i32, i32
  }
  func.func @transform_6(%arg0: i32) -> (i32, i32) {
    %c0_i32 = arith.constant 0 : i32
    %c0_i32_0 = arith.constant 0 : i32
    %c0_i32_1 = arith.constant 0 : i32
    return %c0_i32, %c0_i32_0 : i32, i32
  }
  func.func @transform_7(%arg0: i32) -> (i32, i32, i32) {
    %c0_i32 = arith.constant 0 : i32
    %c0_i32_0 = arith.constant 0 : i32
    %c0_i32_1 = arith.constant 0 : i32
    return %arg0, %c0_i32, %c0_i32_0 : i32, i32, i32
  }
}

</mosaic_0001>

<llo_original>
// kernel: convnet_forward.1
$region0: #{convnet_forward.1}
  #allocation0 [shape = 'u32[]', space=smem, size = 0x4, offset = 0x4, fixed_abs, tag = 'smem constant byte address 0x4 - core index']
  #allocation1 [shape = 'u32[144,128]{1,0:T(1,128)}', space=vmem, size = 0x12000, scoped, tag = 'internal scratch']
  #allocation2 [shape = 'f32[900,16]{1,0:T(8,128)}', space=vmem, size = 0x71000, scoped, tag = 'scratch operand']
  #allocation3 [shape = 'f32[450,16]{1,0:T(8,128)}', space=vmem, size = 0x39000, scoped, tag = 'scratch operand']
  #allocation4 [shape = 'bf16[400,16]{1,0:T(16,128)(2,1)}', space=vmem, size = 0x19000, scoped, tag = 'scratch operand']
  #allocation5 [shape = 'f32[340,32]{1,0:T(8,128)}', space=vmem, size = 0x2b000, scoped, tag = 'scratch operand']
  #allocation6 [shape = 'f32[170,32]{1,0:T(8,128)}', space=vmem, size = 0x16000, scoped, tag = 'scratch operand']
  #allocation7 [shape = 'f32[64,32]{1,0:T(8,128)}', space=vmem, size = 0x8000, scoped, tag = 'scratch operand']
  %s0 = inlined_call_operand.vmem [shape: bf16[2,900,16], index: 0, kind: input, shape index: {}]
  %s1 = inlined_call_operand.vmem [shape: bf16[16,16], index: 1, kind: input, shape index: {}]
  %s2 = inlined_call_operand.vmem [shape: f32[1,16], index: 2, kind: input, shape index: {}]
  %s3 = inlined_call_operand.vmem [shape: bf16[9,16,32], index: 3, kind: input, shape index: {}]
  %s4 = inlined_call_operand.vmem [shape: f32[1,32], index: 4, kind: input, shape index: {}]
  %s5 = inlined_call_operand.vmem [shape: f32[32,64,128], index: 5, kind: input, shape index: {}]
  %s6 = inlined_call_operand.vmem [shape: f32[1,128], index: 6, kind: input, shape index: {}]
  %s7 = inlined_call_operand.hbm [shape: f32[2,1,128], index: 7, kind: output, shape index: {}]
  %s8 = sld [smem:[#allocation0]]
  $region61: #{convnet_forward.1} parent=0
    _
  %s10 = ssub.s32 1, %s8
  %s11 = scalar_select 0, %s10, %s8
  $region1: #{convnet_forward.1} parent=0
    #allocation8 [shape = 'u8[1024]{0}', space=vmem, size = 0x400, scoped, tag = 'output window, operand 0']
    #allocation9 [shape = 's32[2]{0}', space=sflag, size = 0x8, scoped, tag = 'scoped memory for convnet_forward.1']
    %12 = vsyncpa [#allocation9], 0
    %s13 = scalar_lea.sflag [#allocation9], 1
    %14 = vsyncpa %s13, 0
    loop: start=0, step=1, limit=4
    $region2: #{convnet_forward.1} parent=1 // loop_pre_header
      _
    $region3: #{convnet_forward.1} parent=1 // loop_header
      %s16 = sphi 0, %s20
      %p17 = scmp.ge.s32.totalorder %s16, 4
      %s26 = sphi 0, %s28
      %s29 = sphi 0, %s26
      %s30 = sphi 0, %s29
      %s46 = sphi 0, %s30
      %s50 = sphi 0, %s50
      %s52 = sphi 0, %s50
      %s53 = sphi 0, %s52
      %s67 = sphi 0, %s53
      %s71 = sphi 0, %s71
      %s73 = sphi 0, %s71
      %s74 = sphi 0, %s73
      %s88 = sphi 0, %s74
      %s92 = sphi 0, %s92
      %s94 = sphi 0, %s92
      %s95 = sphi 0, %s94
      %s109 = sphi 0, %s95
      %s113 = sphi 0, %s113
      %s115 = sphi 0, %s113
      %s116 = sphi 0, %s115
      %s130 = sphi 0, %s116
      %s134 = sphi 0, %s134
      %s136 = sphi 0, %s134
      %s137 = sphi 0, %s136
      %s151 = sphi 0, %s137
      %s155 = sphi 0, %s155
      %s157 = sphi 0, %s155
      %s158 = sphi 0, %s157
      %s172 = sphi 0, %s158
      %s178 = sphi 0, %s180
      %s181 = sphi 0, %s178
      %s182 = sphi 0, %s181
      %s198 = sphi 0, %s182
    $region4: #{convnet_forward.1} parent=1 // loop_header_branch
      %19 = sbr.rel (%p17) target = $region8
    $region5: #{convnet_forward.1} parent=1 // loop_body
      %s21 = ssub.s32 %s16, 1
      %s22 = ssub.s32 %s16, 2
      %s23 = sadd.s32 %s16, 1
      %s24 = ssub.s32 %s16, %s23
      %p25 = scmp.eq.s32.totalorder %s24, 0
      %s27 = sadd.s32 %s26, 1
      %s28 = scalar_select %p25, %s26, %s27
      %p31 = pneg %p25
      %p32 = scmp.eq.s32.totalorder %s16, 1
      %p33 = por %p31, %p32
      %p34 = scmp.ne.s32.totalorder %s26, %s29
      %p35 = scmp.eq.s32.totalorder %s16, 0
      %p36 = por %p34, %p35
      %p37 = scmp.ne.s32.totalorder %s26, %s29
      %p38 = scmp.eq.s32.totalorder %s21, 1
      %p39 = por %p37, %p38
      %p40 = scmp.ne.s32.totalorder %s29, %s30
      %p41 = scmp.eq.s32.totalorder %s21, 0
      %p42 = por %p40, %p41
      %p43 = scmp.ne.s32.totalorder %s29, %s30
      %p44 = scmp.eq.s32.totalorder %s22, 1
      %p45 = por %p43, %p44
      %p47 = scmp.ne.s32.totalorder %s30, %s46
      %p48 = scmp.eq.s32.totalorder %s22, 0
      %p49 = por %p47, %p48
      %s51 = sadd.s32 %s50, 1
      %p54 = scmp.eq.s32.totalorder %s16, 1
      %p55 = scmp.ne.s32.totalorder %s50, %s52
      %p56 = scmp.eq.s32.totalorder %s16, 0
      %p57 = por %p55, %p56
      %p58 = scmp.ne.s32.totalorder %s50, %s52
      %p59 = scmp.eq.s32.totalorder %s21, 1
      %p60 = por %p58, %p59
      %p61 = scmp.ne.s32.totalorder %s52, %s53
      %p62 = scmp.eq.s32.totalorder %s21, 0
      %p63 = por %p61, %p62
      %p64 = scmp.ne.s32.totalorder %s52, %s53
      %p65 = scmp.eq.s32.totalorder %s22, 1
      %p66 = por %p64, %p65
      %p68 = scmp.ne.s32.totalorder %s53, %s67
      %p69 = scmp.eq.s32.totalorder %s22, 0
      %p70 = por %p68, %p69
      %s72 = sadd.s32 %s71, 1
      %p75 = scmp.eq.s32.totalorder %s16, 1
      %p76 = scmp.ne.s32.totalorder %s71, %s73
      %p77 = scmp.eq.s32.totalorder %s16, 0
      %p78 = por %p76, %p77
      %p79 = scmp.ne.s32.totalorder %s71, %s73
      %p80 = scmp.eq.s32.totalorder %s21, 1
      %p81 = por %p79, %p80
      %p82 = scmp.ne.s32.totalorder %s73, %s74
      %p83 = scmp.eq.s32.totalorder %s21, 0
      %p84 = por %p82, %p83
      %p85 = scmp.ne.s32.totalorder %s73, %s74
      %p86 = scmp.eq.s32.totalorder %s22, 1
      %p87 = por %p85, %p86
      %p89 = scmp.ne.s32.totalorder %s74, %s88
      %p90 = scmp.eq.s32.totalorder %s22, 0
      %p91 = por %p89, %p90
      %s93 = sadd.s32 %s92, 1
      %p96 = scmp.eq.s32.totalorder %s16, 1
      %p97 = scmp.ne.s32.totalorder %s92, %s94
      %p98 = scmp.eq.s32.totalorder %s16, 0
      %p99 = por %p97, %p98
      %p100 = scmp.ne.s32.totalorder %s92, %s94
      %p101 = scmp.eq.s32.totalorder %s21, 1
      %p102 = por %p100, %p101
      %p103 = scmp.ne.s32.totalorder %s94, %s95
      %p104 = scmp.eq.s32.totalorder %s21, 0
      %p105 = por %p103, %p104
      %p106 = scmp.ne.s32.totalorder %s94, %s95
      %p107 = scmp.eq.s32.totalorder %s22, 1
      %p108 = por %p106, %p107
      %p110 = scmp.ne.s32.totalorder %s95, %s109
      %p111 = scmp.eq.s32.totalorder %s22, 0
      %p112 = por %p110, %p111
      %s114 = sadd.s32 %s113, 1
      %p117 = scmp.eq.s32.totalorder %s16, 1
      %p118 = scmp.ne.s32.totalorder %s113, %s115
      %p119 = scmp.eq.s32.totalorder %s16, 0
      %p120 = por %p118, %p119
      %p121 = scmp.ne.s32.totalorder %s113, %s115
      %p122 = scmp.eq.s32.totalorder %s21, 1
      %p123 = por %p121, %p122
      %p124 = scmp.ne.s32.totalorder %s115, %s116
      %p125 = scmp.eq.s32.totalorder %s21, 0
      %p126 = por %p124, %p125
      %p127 = scmp.ne.s32.totalorder %s115, %s116
      %p128 = scmp.eq.s32.totalorder %s22, 1
      %p129 = por %p127, %p128
      %p131 = scmp.ne.s32.totalorder %s116, %s130
      %p132 = scmp.eq.s32.totalorder %s22, 0
      %p133 = por %p131, %p132
      %s135 = sadd.s32 %s134, 1
      %p138 = scmp.eq.s32.totalorder %s16, 1
      %p139 = scmp.ne.s32.totalorder %s134, %s136
      %p140 = scmp.eq.s32.totalorder %s16, 0
      %p141 = por %p139, %p140
      %p142 = scmp.ne.s32.totalorder %s134, %s136
      %p143 = scmp.eq.s32.totalorder %s21, 1
      %p144 = por %p142, %p143
      %p145 = scmp.ne.s32.totalorder %s136, %s137
      %p146 = scmp.eq.s32.totalorder %s21, 0
      %p147 = por %p145, %p146
      %p148 = scmp.ne.s32.totalorder %s136, %s137
      %p149 = scmp.eq.s32.totalorder %s22, 1
      %p150 = por %p148, %p149
      %p152 = scmp.ne.s32.totalorder %s137, %s151
      %p153 = scmp.eq.s32.totalorder %s22, 0
      %p154 = por %p152, %p153
      %s156 = sadd.s32 %s155, 1
      %p159 = scmp.eq.s32.totalorder %s16, 1
      %p160 = scmp.ne.s32.totalorder %s155, %s157
      %p161 = scmp.eq.s32.totalorder %s16, 0
      %p162 = por %p160, %p161
      %p163 = scmp.ne.s32.totalorder %s155, %s157
      %p164 = scmp.eq.s32.totalorder %s21, 1
      %p165 = por %p163, %p164
      %p166 = scmp.ne.s32.totalorder %s157, %s158
      %p167 = scmp.eq.s32.totalorder %s21, 0
      %p168 = por %p166, %p167
      %p169 = scmp.ne.s32.totalorder %s157, %s158
      %p170 = scmp.eq.s32.totalorder %s22, 1
      %p171 = por %p169, %p170
      %p173 = scmp.ne.s32.totalorder %s158, %s172
      %p174 = scmp.eq.s32.totalorder %s22, 0
      %p175 = por %p173, %p174
      %s176 = ssub.s32 %s16, %s23
      %p177 = scmp.eq.s32.totalorder %s176, 0
      %s179 = sadd.s32 %s178, 1
      %s180 = scalar_select %p177, %s178, %s179
      %p183 = pneg %p177
      %p184 = scmp.eq.s32.totalorder %s16, 1
      %p185 = por %p183, %p184
      %p186 = scmp.ne.s32.totalorder %s178, %s181
      %p187 = scmp.eq.s32.totalorder %s16, 0
      %p188 = por %p186, %p187
      %p189 = scmp.ne.s32.totalorder %s178, %s181
      %p190 = scmp.eq.s32.totalorder %s21, 1
      %p191 = por %p189, %p190
      %p192 = scmp.ne.s32.totalorder %s181, %s182
      %p193 = scmp.eq.s32.totalorder %s21, 0
      %p194 = por %p192, %p193
      %p195 = scmp.ne.s32.totalorder %s181, %s182
      %p196 = scmp.eq.s32.totalorder %s22, 1
      %p197 = por %p195, %p196
      %p199 = scmp.ne.s32.totalorder %s182, %s198
      %p200 = scmp.eq.s32.totalorder %s22, 0
      %p201 = por %p199, %p200
      %p202 = scmp.le.s32.totalorder 1, %s16
      %p203 = scmp.lt.s32.totalorder %s16, 3
      %p204 = pnand %p202, %p203
      %p205 = pneg %p204
      // Predicated region
      $region9: #{convnet_forward.1} parent=5 // pred_check
        _
      $region10: #{convnet_forward.1} parent=5 // pred_check_branch
        %207 = sbr.rel (%p204) target = $region12
      $region11: #{convnet_forward.1} parent=5 // pred_region
        %s208 = ssub.s32 %s16, 1
        // Predicated region
        $region13: #{convnet_forward.1} parent=11 // pred_check
          %p209 = pneg %p63
        $region14: #{convnet_forward.1} parent=11 // pred_check_branch
          %211 = sbr.rel (%p209) target = $region16
        $region15: #{convnet_forward.1} parent=11 // pred_region
          _
        $region16: #{convnet_forward.1} parent=11 // pred_fallthru
          _
        // Predicated region
        $region17: #{convnet_forward.1} parent=11 // pred_check
          %p212 = pneg %p84
        $region18: #{convnet_forward.1} parent=11 // pred_check_branch
          %214 = sbr.rel (%p212) target = $region20
        $region19: #{convnet_forward.1} parent=11 // pred_region
          _
        $region20: #{convnet_forward.1} parent=11 // pred_fallthru
          _
        // Predicated region
        $region21: #{convnet_forward.1} parent=11 // pred_check
          %p215 = pneg %p105
        $region22: #{convnet_forward.1} parent=11 // pred_check_branch
          %217 = sbr.rel (%p215) target = $region24
        $region23: #{convnet_forward.1} parent=11 // pred_region
          _
        $region24: #{convnet_forward.1} parent=11 // pred_fallthru
          _
        // Predicated region
        $region25: #{convnet_forward.1} parent=11 // pred_check
          %p218 = pneg %p126
        $region26: #{convnet_forward.1} parent=11 // pred_check_branch
          %220 = sbr.rel (%p218) target = $region28
        $region27: #{convnet_forward.1} parent=11 // pred_region
          _
        $region28: #{convnet_forward.1} parent=11 // pred_fallthru
          _
        // Predicated region
        $region29: #{convnet_forward.1} parent=11 // pred_check
          %p221 = pneg %p147
        $region30: #{convnet_forward.1} parent=11 // pred_check_branch
          %223 = sbr.rel (%p221) target = $region32
        $region31: #{convnet_forward.1} parent=11 // pred_region
          _
        $region32: #{convnet_forward.1} parent=11 // pred_fallthru
          _
        // Predicated region
        $region33: #{convnet_forward.1} parent=11 // pred_check
          %p224 = pneg %p168
        $region34: #{convnet_forward.1} parent=11 // pred_check_branch
          %226 = sbr.rel (%p224) target = $region36
        $region35: #{convnet_forward.1} parent=11 // pred_region
          _
        $region36: #{convnet_forward.1} parent=11 // pred_fallthru
          _
      $region12: #{convnet_forward.1} parent=5 // pred_fallthru
        _
      %p227 = scmp.lt.s32.totalorder %s16, 2
      // Predicated region
      $region37: #{convnet_forward.1} parent=5 // pred_check
        %p228 = pneg %p227
      $region38: #{convnet_forward.1} parent=5 // pred_check_branch
        %230 = sbr.rel (%p228) target = $region40
      $region39: #{convnet_forward.1} parent=5 // pred_region
        // Predicated region
        $region41: #{convnet_forward.1} parent=39 // pred_check
          %p231 = pneg %p36
        $region42: #{convnet_forward.1} parent=39 // pred_check_branch
          %233 = sbr.rel (%p231) target = $region44
        $region43: #{convnet_forward.1} parent=39 // pred_region
          %p234 = scmp.lt.s32.totalorder %s16, 1
          %s235 = scalar_select %p234, %s16, 1
          %s236 = smul.addr %s235, 113
          %s237 = smul.addr %s236, 4
          %s238 = scalar_lea.vmem %s0, %s237
        $region44: #{convnet_forward.1} parent=39 // pred_fallthru
          _
      $region40: #{convnet_forward.1} parent=5 // pred_fallthru
        _
      %p239 = scmp.le.s32.totalorder 1, %s16
      %p240 = scmp.lt.s32.totalorder %s16, 3
      %p241 = pnand %p239, %p240
      %p242 = pneg %p241
      // Predicated region
      $region45: #{convnet_forward.1} parent=5 // pred_check
        _
      $region46: #{convnet_forward.1} parent=5 // pred_check_branch
        %244 = sbr.rel (%p241) target = $region48
      $region47: #{convnet_forward.1} parent=5 // pred_region
        %s245 = ssub.s32 %s16, 1
        %p246 = scmp.lt.s32.totalorder %s21, 1
        %s247 = scalar_select %p246, %s21, 1
        %s248 = smul.addr %s247, 113
        %s249 = smul.addr %s248, 4
        %s250 = scalar_lea.vmem %s0, %s249
        %p251 = pneg %p42
        %p252 = pneg %p39
        %p253 = pneg %p63
        %p254 = pneg %p60
        %p255 = pneg %p84
        %p256 = pneg %p81
        %p257 = pneg %p105
        %p258 = pneg %p102
        %p259 = pneg %p126
        %p260 = pneg %p123
        %p261 = pneg %p147
        %p262 = pneg %p144
        %p263 = pneg %p168
        %p264 = pneg %p165
        %p265 = pneg %p194
        %p266 = pneg %p191
        %s267 = sand.u32 %s181, 1
        %s268 = scalar_lea.sflag [#allocation9], %s267
        %s269 = sand.u32 %s181, 1
        %s270 = scalar_lea.vmem [#allocation8], %s269
        %p271 = scmp.lt.s32.totalorder %s21, 1
        %s272 = scalar_select %p271, %s21, 1
        %s273 = smul.addr %s272, 113
        %s274 = smul.addr %s273, 4
        %s275 = scalar_lea.vmem %s0, %s274
        %v277 = vld [vmem:[%s275] sm:$0xf]
        %v278 = vld [vmem:[%s275 + $0x4] sm:$0xf]
        %v279 = vld [vmem:[%s275 + $0x8] sm:$0xf]
        %v280 = vld [vmem:[%s275 + $0xc] sm:$0xf]
        %v281 = vld [vmem:[%s275 + $0x10] sm:$0xf]
        %v282 = vld [vmem:[%s275 + $0x14] sm:$0xf]
        %v283 = vld [vmem:[%s275 + $0x18] sm:$0xf]
        %v284 = vld [vmem:[%s275 + $0x1c] sm:$0xf]
        %v285 = vld [vmem:[%s275 + $0x20] sm:$0xf]
        %v286 = vld [vmem:[%s275 + $0x24] sm:$0xf]
        %v287 = vld [vmem:[%s275 + $0x28] sm:$0xf]
        %v288 = vld [vmem:[%s275 + $0x2c] sm:$0xf]
        %v289 = vld [vmem:[%s275 + $0x30] sm:$0xf]
        %v290 = vld [vmem:[%s275 + $0x34] sm:$0xf]
        %v291 = vld [vmem:[%s275 + $0x38] sm:$0xf]
        %v292 = vld [vmem:[%s275 + $0x3c] sm:$0xf]
        %v293 = vld [vmem:[%s275 + $0x40] sm:$0xf]
        %v294 = vld [vmem:[%s275 + $0x44] sm:$0xf]
        %v295 = vld [vmem:[%s275 + $0x48] sm:$0xf]
        %v296 = vld [vmem:[%s275 + $0x4c] sm:$0xf]
        %v297 = vld [vmem:[%s275 + $0x50] sm:$0xf]
        %v298 = vld [vmem:[%s275 + $0x54] sm:$0xf]
        %v299 = vld [vmem:[%s275 + $0x58] sm:$0xf]
        %v300 = vld [vmem:[%s275 + $0x5c] sm:$0xf]
        %v301 = vld [vmem:[%s275 + $0x60] sm:$0xf]
        %v302 = vld [vmem:[%s275 + $0x64] sm:$0xf]
        %v303 = vld [vmem:[%s275 + $0x68] sm:$0xf]
        %v304 = vld [vmem:[%s275 + $0x6c] sm:$0xf]
        %v305 = vld [vmem:[%s275 + $0x70] sm:$0xf]
        %v306 = vld [vmem:[%s275 + $0x74] sm:$0xf]
        %v307 = vld [vmem:[%s275 + $0x78] sm:$0xf]
        %v308 = vld [vmem:[%s275 + $0x7c] sm:$0xf]
        %v309 = vld [vmem:[%s275 + $0x80] sm:$0xf]
        %v310 = vld [vmem:[%s275 + $0x84] sm:$0xf]
        %v311 = vld [vmem:[%s275 + $0x88] sm:$0xf]
        %v312 = vld [vmem:[%s275 + $0x8c] sm:$0xf]
        %v313 = vld [vmem:[%s275 + $0x90] sm:$0xf]
        %v314 = vld [vmem:[%s275 + $0x94] sm:$0xf]
        %v315 = vld [vmem:[%s275 + $0x98] sm:$0xf]
        %v316 = vld [vmem:[%s275 + $0x9c] sm:$0xf]
        %v317 = vld [vmem:[%s275 + $0xa0] sm:$0xf]
        %v318 = vld [vmem:[%s275 + $0xa4] sm:$0xf]
        %v319 = vld [vmem:[%s275 + $0xa8] sm:$0xf]
        %v320 = vld [vmem:[%s275 + $0xac] sm:$0xf]
        %v321 = vld [vmem:[%s275 + $0xb0] sm:$0xf]
        %v322 = vld [vmem:[%s275 + $0xb4] sm:$0xf]
        %v323 = vld [vmem:[%s275 + $0xb8] sm:$0xf]
        %v324 = vld [vmem:[%s275 + $0xbc] sm:$0xf]
        %v325 = vld [vmem:[%s275 + $0xc0] sm:$0xf]
        %v326 = vld [vmem:[%s275 + $0xc4] sm:$0xf]
        %v327 = vld [vmem:[%s275 + $0xc8] sm:$0xf]
        %v328 = vld [vmem:[%s275 + $0xcc] sm:$0xf]
        %v329 = vld [vmem:[%s275 + $0xd0] sm:$0xf]
        %v330 = vld [vmem:[%s275 + $0xd4] sm:$0xf]
        %v331 = vld [vmem:[%s275 + $0xd8] sm:$0xf]
        %v332 = vld [vmem:[%s275 + $0xdc] sm:$0xf]
        %v333 = vld [vmem:[%s275 + $0xe0] sm:$0xf]
        %v334 = vld [vmem:[%s275 + $0xe4] sm:$0xf]
        %v335 = vld [vmem:[%s275 + $0xe8] sm:$0xf]
        %v336 = vld [vmem:[%s275 + $0xec] sm:$0xf]
        %v337 = vld [vmem:[%s275 + $0xf0] sm:$0xf]
        %v338 = vld [vmem:[%s275 + $0xf4] sm:$0xf]
        %v339 = vld [vmem:[%s275 + $0xf8] sm:$0xf]
        %v340 = vld [vmem:[%s275 + $0xfc] sm:$0xf]
        %v341 = vld [vmem:[%s275 + $0x100] sm:$0xf]
        %v342 = vld [vmem:[%s275 + $0x104] sm:$0xf]
        %v343 = vld [vmem:[%s275 + $0x108] sm:$0xf]
        %v344 = vld [vmem:[%s275 + $0x10c] sm:$0xf]
        %v345 = vld [vmem:[%s275 + $0x110] sm:$0xf]
        %v346 = vld [vmem:[%s275 + $0x114] sm:$0xf]
        %v347 = vld [vmem:[%s275 + $0x118] sm:$0xf]
        %v348 = vld [vmem:[%s275 + $0x11c] sm:$0xf]
        %v349 = vld [vmem:[%s275 + $0x120] sm:$0xf]
        %v350 = vld [vmem:[%s275 + $0x124] sm:$0xf]
        %v351 = vld [vmem:[%s275 + $0x128] sm:$0xf]
        %v352 = vld [vmem:[%s275 + $0x12c] sm:$0xf]
        %v353 = vld [vmem:[%s275 + $0x130] sm:$0xf]
        %v354 = vld [vmem:[%s275 + $0x134] sm:$0xf]
        %v355 = vld [vmem:[%s275 + $0x138] sm:$0xf]
        %v356 = vld [vmem:[%s275 + $0x13c] sm:$0xf]
        %v357 = vld [vmem:[%s275 + $0x140] sm:$0xf]
        %v358 = vld [vmem:[%s275 + $0x144] sm:$0xf]
        %v359 = vld [vmem:[%s275 + $0x148] sm:$0xf]
        %v360 = vld [vmem:[%s275 + $0x14c] sm:$0xf]
        %v361 = vld [vmem:[%s275 + $0x150] sm:$0xf]
        %v362 = vld [vmem:[%s275 + $0x154] sm:$0xf]
        %v363 = vld [vmem:[%s275 + $0x158] sm:$0xf]
        %v364 = vld [vmem:[%s275 + $0x15c] sm:$0xf]
        %v365 = vld [vmem:[%s275 + $0x160] sm:$0xf]
        %v366 = vld [vmem:[%s275 + $0x164] sm:$0xf]
        %v367 = vld [vmem:[%s275 + $0x168] sm:$0xf]
        %v368 = vld [vmem:[%s275 + $0x16c] sm:$0xf]
        %v369 = vld [vmem:[%s275 + $0x170] sm:$0xf]
        %v370 = vld [vmem:[%s275 + $0x174] sm:$0xf]
        %v371 = vld [vmem:[%s275 + $0x178] sm:$0xf]
        %v372 = vld [vmem:[%s275 + $0x17c] sm:$0xf]
        %v373 = vld [vmem:[%s275 + $0x180] sm:$0xf]
        %v374 = vld [vmem:[%s275 + $0x184] sm:$0xf]
        %v375 = vld [vmem:[%s275 + $0x188] sm:$0xf]
        %v376 = vld [vmem:[%s275 + $0x18c] sm:$0xf]
        %v377 = vld [vmem:[%s275 + $0x190] sm:$0xf]
        %v378 = vld [vmem:[%s275 + $0x194] sm:$0xf]
        %v379 = vld [vmem:[%s275 + $0x198] sm:$0xf]
        %v380 = vld [vmem:[%s275 + $0x19c] sm:$0xf]
        %v381 = vld [vmem:[%s275 + $0x1a0] sm:$0xf]
        %v382 = vld [vmem:[%s275 + $0x1a4] sm:$0xf]
        %v383 = vld [vmem:[%s275 + $0x1a8] sm:$0xf]
        %v384 = vld [vmem:[%s275 + $0x1ac] sm:$0xf]
        %v385 = vld [vmem:[%s275 + $0x1b0] sm:$0xf]
        %v386 = vld [vmem:[%s275 + $0x1b4] sm:$0xf]
        %v387 = vld [vmem:[%s275 + $0x1b8] sm:$0xf]
        %v388 = vld [vmem:[%s275 + $0x1bc] sm:$0xf]
        %v389 = vld [vmem:[%s275 + $0x1c0] sm:$0x3]
        %v390 = vld [vmem:[%s1] sm:$0xf]
        %v391 = vld [vmem:[%s1 + $0x4] sm:$0xf]
        %v392 = vld [vmem:[%s2] sm:$0x1]
        %v394 = vlaneseq
        %v395 = vshrl.u32 %v394, 7
        %v396 = vsub.s32 0, %v395
        %v397 = vrot.slane %v392, %v396
        %v512 = vunpack.c.l.b16 %v277
        %v513 = vunpack.c.l.b16 %v278
        %v514 = vunpack.c.l.b16 %v279
        %v515 = vunpack.c.l.b16 %v280
        %v516 = vunpack.c.l.b16 %v281
        %v517 = vunpack.c.l.b16 %v282
        %v518 = vunpack.c.l.b16 %v283
        %v519 = vunpack.c.l.b16 %v284
        %v520 = vunpack.c.l.b16 %v285
        %v521 = vunpack.c.l.b16 %v286
        %v522 = vunpack.c.l.b16 %v287
        %v523 = vunpack.c.l.b16 %v288
        %v524 = vunpack.c.l.b16 %v289
        %v525 = vunpack.c.l.b16 %v290
        %v526 = vunpack.c.l.b16 %v291
        %v527 = vunpack.c.l.b16 %v292
        %v528 = vunpack.c.l.b16 %v293
        %v529 = vunpack.c.l.b16 %v294
        %v530 = vunpack.c.l.b16 %v295
        %v531 = vunpack.c.l.b16 %v296
        %v532 = vunpack.c.l.b16 %v297
        %v533 = vunpack.c.l.b16 %v298
        %v534 = vunpack.c.l.b16 %v299
        %v535 = vunpack.c.l.b16 %v300
        %v536 = vunpack.c.l.b16 %v301
        %v537 = vunpack.c.l.b16 %v302
        %v538 = vunpack.c.l.b16 %v303
        %v539 = vunpack.c.l.b16 %v304
        %v540 = vunpack.c.l.b16 %v305
        %v541 = vunpack.c.l.b16 %v306
        %v542 = vunpack.c.l.b16 %v307
        %v543 = vunpack.c.l.b16 %v308
        %v544 = vunpack.c.l.b16 %v309
        %v545 = vunpack.c.l.b16 %v310
        %v546 = vunpack.c.l.b16 %v311
        %v547 = vunpack.c.l.b16 %v312
        %v548 = vunpack.c.l.b16 %v313
        %v549 = vunpack.c.l.b16 %v314
        %v550 = vunpack.c.l.b16 %v315
        %v551 = vunpack.c.l.b16 %v316
        %v552 = vunpack.c.l.b16 %v317
        %v553 = vunpack.c.l.b16 %v318
        %v554 = vunpack.c.l.b16 %v319
        %v555 = vunpack.c.l.b16 %v320
        %v556 = vunpack.c.l.b16 %v321
        %v557 = vunpack.c.l.b16 %v322
        %v558 = vunpack.c.l.b16 %v323
        %v559 = vunpack.c.l.b16 %v324
        %v560 = vunpack.c.l.b16 %v325
        %v561 = vunpack.c.l.b16 %v326
        %v562 = vunpack.c.l.b16 %v327
        %v563 = vunpack.c.l.b16 %v328
        %v564 = vunpack.c.l.b16 %v329
        %v565 = vunpack.c.l.b16 %v330
        %v566 = vunpack.c.l.b16 %v331
        %v567 = vunpack.c.l.b16 %v332
        %v568 = vunpack.c.l.b16 %v333
        %v569 = vunpack.c.l.b16 %v334
        %v570 = vunpack.c.l.b16 %v335
        %v571 = vunpack.c.l.b16 %v336
        %v572 = vunpack.c.l.b16 %v337
        %v573 = vunpack.c.l.b16 %v338
        %v574 = vunpack.c.l.b16 %v339
        %v575 = vunpack.c.l.b16 %v340
        %v576 = vunpack.c.l.b16 %v341
        %v577 = vunpack.c.l.b16 %v342
        %v578 = vunpack.c.l.b16 %v343
        %v579 = vunpack.c.l.b16 %v344
        %v580 = vunpack.c.l.b16 %v345
        %v581 = vunpack.c.l.b16 %v346
        %v582 = vunpack.c.l.b16 %v347
        %v583 = vunpack.c.l.b16 %v348
        %v584 = vunpack.c.l.b16 %v349
        %v585 = vunpack.c.l.b16 %v350
        %v586 = vunpack.c.l.b16 %v351
        %v587 = vunpack.c.l.b16 %v352
        %v588 = vunpack.c.l.b16 %v353
        %v589 = vunpack.c.l.b16 %v354
        %v590 = vunpack.c.l.b16 %v355
        %v591 = vunpack.c.l.b16 %v356
        %v592 = vunpack.c.l.b16 %v357
        %v593 = vunpack.c.l.b16 %v358
        %v594 = vunpack.c.l.b16 %v359
        %v595 = vunpack.c.l.b16 %v360
        %v596 = vunpack.c.l.b16 %v361
        %v597 = vunpack.c.l.b16 %v362
        %v598 = vunpack.c.l.b16 %v363
        %v599 = vunpack.c.l.b16 %v364
        %v600 = vunpack.c.l.b16 %v365
        %v601 = vunpack.c.l.b16 %v366
        %v602 = vunpack.c.l.b16 %v367
        %v603 = vunpack.c.l.b16 %v368
        %v604 = vunpack.c.l.b16 %v369
        %v605 = vunpack.c.l.b16 %v370
        %v606 = vunpack.c.l.b16 %v371
        %v607 = vunpack.c.l.b16 %v372
        %v608 = vunpack.c.l.b16 %v373
        %v609 = vunpack.c.l.b16 %v374
        %v610 = vunpack.c.l.b16 %v375
        %v611 = vunpack.c.l.b16 %v376
        %v612 = vunpack.c.l.b16 %v377
        %v613 = vunpack.c.l.b16 %v378
        %v614 = vunpack.c.l.b16 %v379
        %v615 = vunpack.c.l.b16 %v380
        %v616 = vunpack.c.l.b16 %v381
        %v617 = vunpack.c.l.b16 %v382
        %v618 = vunpack.c.l.b16 %v383
        %v619 = vunpack.c.l.b16 %v384
        %v620 = vunpack.c.l.b16 %v385
        %v621 = vunpack.c.l.b16 %v386
        %v622 = vunpack.c.l.b16 %v387
        %v623 = vunpack.c.l.b16 %v388
        %v624 = vunpack.c.l.b16 %v389
        %v625 = vpack.c.b16 %v513, %v512
        %v626 = vpack.c.b16 %v515, %v514
        %v627 = vpack.c.b16 %v517, %v516
        %v628 = vpack.c.b16 %v519, %v518
        %v629 = vpack.c.b16 %v521, %v520
        %v630 = vpack.c.b16 %v523, %v522
        %v631 = vpack.c.b16 %v525, %v524
        %v632 = vpack.c.b16 %v527, %v526
        %v633 = vpack.c.b16 %v529, %v528
        %v634 = vpack.c.b16 %v531, %v530
        %v635 = vpack.c.b16 %v533, %v532
        %v636 = vpack.c.b16 %v535, %v534
        %v637 = vpack.c.b16 %v537, %v536
        %v638 = vpack.c.b16 %v539, %v538
        %v639 = vpack.c.b16 %v541, %v540
        %v640 = vpack.c.b16 %v543, %v542
        %v641 = vpack.c.b16 %v545, %v544
        %v642 = vpack.c.b16 %v547, %v546
        %v643 = vpack.c.b16 %v549, %v548
        %v644 = vpack.c.b16 %v551, %v550
        %v645 = vpack.c.b16 %v553, %v552
        %v646 = vpack.c.b16 %v555, %v554
        %v647 = vpack.c.b16 %v557, %v556
        %v648 = vpack.c.b16 %v559, %v558
        %v649 = vpack.c.b16 %v561, %v560
        %v650 = vpack.c.b16 %v563, %v562
        %v651 = vpack.c.b16 %v565, %v564
        %v652 = vpack.c.b16 %v567, %v566
        %v653 = vpack.c.b16 %v569, %v568
        %v654 = vpack.c.b16 %v571, %v570
        %v655 = vpack.c.b16 %v573, %v572
        %v656 = vpack.c.b16 %v575, %v574
        %v657 = vpack.c.b16 %v577, %v576
        %v658 = vpack.c.b16 %v579, %v578
        %v659 = vpack.c.b16 %v581, %v580
        %v660 = vpack.c.b16 %v583, %v582
        %v661 = vpack.c.b16 %v585, %v584
        %v662 = vpack.c.b16 %v587, %v586
        %v663 = vpack.c.b16 %v589, %v588
        %v664 = vpack.c.b16 %v591, %v590
        %v665 = vpack.c.b16 %v593, %v592
        %v666 = vpack.c.b16 %v595, %v594
        %v667 = vpack.c.b16 %v597, %v596
        %v668 = vpack.c.b16 %v599, %v598
        %v669 = vpack.c.b16 %v601, %v600
        %v670 = vpack.c.b16 %v603, %v602
        %v671 = vpack.c.b16 %v605, %v604
        %v672 = vpack.c.b16 %v607, %v606
        %v673 = vpack.c.b16 %v609, %v608
        %v674 = vpack.c.b16 %v611, %v610
        %v675 = vpack.c.b16 %v613, %v612
        %v676 = vpack.c.b16 %v615, %v614
        %v677 = vpack.c.b16 %v617, %v616
        %v678 = vpack.c.b16 %v619, %v618
        %v679 = vpack.c.b16 %v621, %v620
        %v680 = vpack.c.b16 %v623, %v622
        %v681 = vpack.c.b16 %v624, %v624
        %v684 = vunpack.c.l.b16 %v390
        %v685 = vunpack.c.l.b16 %v391
        %v686 = vpack.c.b16 %v685, %v684
        %vm688 = vcmask 130048
        %v690 = vsel %vm688, %v625, 0
        %v693 = vsel %vm688, %v626, 0
        %v696 = vsel %vm688, %v627, 0
        %v699 = vsel %vm688, %v628, 0
        %v702 = vsel %vm688, %v629, 0
        %v705 = vsel %vm688, %v630, 0
        %v708 = vsel %vm688, %v631, 0
        %v711 = vsel %vm688, %v632, 0
        %v714 = vsel %vm688, %v633, 0
        %v717 = vsel %vm688, %v634, 0
        %v720 = vsel %vm688, %v635, 0
        %v723 = vsel %vm688, %v636, 0
        %v726 = vsel %vm688, %v637, 0
        %v729 = vsel %vm688, %v638, 0
        %v732 = vsel %vm688, %v639, 0
        %v735 = vsel %vm688, %v640, 0
        %v738 = vsel %vm688, %v641, 0
        %v741 = vsel %vm688, %v642, 0
        %v744 = vsel %vm688, %v643, 0
        %v747 = vsel %vm688, %v644, 0
        %v750 = vsel %vm688, %v645, 0
        %v753 = vsel %vm688, %v646, 0
        %v756 = vsel %vm688, %v647, 0
        %v759 = vsel %vm688, %v648, 0
        %v762 = vsel %vm688, %v649, 0
        %v765 = vsel %vm688, %v650, 0
        %v768 = vsel %vm688, %v651, 0
        %v771 = vsel %vm688, %v652, 0
        %v774 = vsel %vm688, %v653, 0
        %v777 = vsel %vm688, %v654, 0
        %v780 = vsel %vm688, %v655, 0
        %v783 = vsel %vm688, %v656, 0
        %v786 = vsel %vm688, %v657, 0
        %v789 = vsel %vm688, %v658, 0
        %v792 = vsel %vm688, %v659, 0
        %v795 = vsel %vm688, %v660, 0
        %v798 = vsel %vm688, %v661, 0
        %v801 = vsel %vm688, %v662, 0
        %v804 = vsel %vm688, %v663, 0
        %v807 = vsel %vm688, %v664, 0
        %v810 = vsel %vm688, %v665, 0
        %v813 = vsel %vm688, %v666, 0
        %v816 = vsel %vm688, %v667, 0
        %v819 = vsel %vm688, %v668, 0
        %v822 = vsel %vm688, %v669, 0
        %v825 = vsel %vm688, %v670, 0
        %v828 = vsel %vm688, %v671, 0
        %v831 = vsel %vm688, %v672, 0
        %v834 = vsel %vm688, %v673, 0
        %v837 = vsel %vm688, %v674, 0
        %v840 = vsel %vm688, %v675, 0
        %v843 = vsel %vm688, %v676, 0
        %v846 = vsel %vm688, %v677, 0
        %v849 = vsel %vm688, %v678, 0
        %v852 = vsel %vm688, %v679, 0
        %v855 = vsel %vm688, %v680, 0
        %v858 = vsel %vm688, %v681, 0
        %860 = vmatprep.subr.bf16.mxu0 0
        %861 = vmatpush1.bf16.msra.mxu0 %v686
        %862 = vmatprep.subr.bf16.mxu0 0
        %863 = vmatpush1.bf16.msra.mxu0 0
        %864 = vmatprep.subr.bf16.mxu0 0
        %865 = vmatpush1.bf16.msra.mxu0 0
        %866 = vmatprep.subr.bf16.mxu0 0
        %867 = vmatpush1.bf16.msra.mxu0 0
        %868 = vmatprep.subr.bf16.mxu0 0
        %869 = vmatpush1.bf16.msra.mxu0 0
        %870 = vmatprep.subr.bf16.mxu0 0
        %871 = vmatpush1.bf16.msra.mxu0 0
        %872 = vmatprep.subr.bf16.mxu0 0
        %873 = vmatpush1.bf16.msra.mxu0 0
        %874 = vmatprep.subr.bf16.mxu0 0
        %875 = vmatpush1.bf16.msra.mxu0 0
        %876 = vmatprep.subr.bf16.mxu0 0
        %877 = vmatpush1.bf16.msra.mxu0 0
        %878 = vmatprep.subr.bf16.mxu0 0
        %879 = vmatpush1.bf16.msra.mxu0 0
        %880 = vmatprep.subr.bf16.mxu0 0
        %881 = vmatpush1.bf16.msra.mxu0 0
        %882 = vmatprep.subr.bf16.mxu0 0
        %883 = vmatpush1.bf16.msra.mxu0 0
        %884 = vmatprep.subr.bf16.mxu0 0
        %885 = vmatpush1.bf16.msra.mxu0 0
        %886 = vmatprep.subr.bf16.mxu0 0
        %887 = vmatpush1.bf16.msra.mxu0 0
        %888 = vmatprep.subr.bf16.mxu0 0
        %889 = vmatpush1.bf16.msra.mxu0 0
        %890 = vmatprep.subr.bf16.mxu0 0
        %891 = vmatpush1.bf16.msra.mxu0 0
        %892 = vmatprep.mubr.bf16.mxu0 0
        %893 = vmatmul.mubr.bf16.gmra.mrb[0].mxu0 %v690
        %v894 = vpop.f32.mrb[0].mxu0
        %v895 = vadd.f32 %v397, %v894
        %v896 = vpop.f32.mrb[0].mxu0
        %v897 = vpop.f32.mrb[0].mxu0
        %v898 = vadd.f32 %v397, %v897
        %v899 = vpop.f32.mrb[0].mxu0
        %900 = vmatprep.mubr.bf16.mxu0 0
        %901 = vmatmul.mubr.bf16.gmra.mrb[0].mxu0 %v693
        %v902 = vpop.f32.mrb[0].mxu0
        %v903 = vadd.f32 %v397, %v902
        %v904 = vpop.f32.mrb[0].mxu0
        %v905 = vpop.f32.mrb[0].mxu0
        %v906 = vadd.f32 %v397, %v905
        %v907 = vpop.f32.mrb[0].mxu0
        %908 = vmatprep.mubr.bf16.mxu0 0
        %909 = vmatmul.mubr.bf16.gmra.mrb[0].mxu0 %v696
        %v910 = vpop.f32.mrb[0].mxu0
        %v911 = vadd.f32 %v397, %v910
        %v912 = vpop.f32.mrb[0].mxu0
        %v913 = vpop.f32.mrb[0].mxu0
        %v914 = vadd.f32 %v397, %v913
        %v915 = vpop.f32.mrb[0].mxu0
        %916 = vmatprep.mubr.bf16.mxu0 0
        %917 = vmatmul.mubr.bf16.gmra.mrb[0].mxu0 %v699
        %v918 = vpop.f32.mrb[0].mxu0
        %v919 = vadd.f32 %v397, %v918
        %v920 = vpop.f32.mrb[0].mxu0
        %v921 = vpop.f32.mrb[0].mxu0
        %v922 = vadd.f32 %v397, %v921
        %v923 = vpop.f32.mrb[0].mxu0
        %924 = vmatprep.mubr.bf16.mxu0 0
        %925 = vmatmul.mubr.bf16.gmra.mrb[0].mxu0 %v702
        %v926 = vpop.f32.mrb[0].mxu0
        %v927 = vadd.f32 %v397, %v926
        %v928 = vpop.f32.mrb[0].mxu0
        %v929 = vpop.f32.mrb[0].mxu0
        %v930 = vadd.f32 %v397, %v929
        %v931 = vpop.f32.mrb[0].mxu0
        %932 = vmatprep.mubr.bf16.mxu0 0
        %933 = vmatmul.mubr.bf16.gmra.mrb[0].mxu0 %v705
        %v934 = vpop.f32.mrb[0].mxu0
        %v935 = vadd.f32 %v397, %v934
        %v936 = vpop.f32.mrb[0].mxu0
        %v937 = vpop.f32.mrb[0].mxu0
        %v938 = vadd.f32 %v397, %v937
        %v939 = vpop.f32.mrb[0].mxu0
        %940 = vmatprep.mubr.bf16.mxu0 0
        %941 = vmatmul.mubr.bf16.gmra.mrb[0].mxu0 %v708
        %v942 = vpop.f32.mrb[0].mxu0
        %v943 = vadd.f32 %v397, %v942
        %v944 = vpop.f32.mrb[0].mxu0
        %v945 = vpop.f32.mrb[0].mxu0
        %v946 = vadd.f32 %v397, %v945
        %v947 = vpop.f32.mrb[0].mxu0
        %948 = vmatprep.mubr.bf16.mxu0 0
        %949 = vmatmul.mubr.bf16.gmra.mrb[0].mxu0 %v711
        %v950 = vpop.f32.mrb[0].mxu0
        %v951 = vadd.f32 %v397, %v950
        %v952 = vpop.f32.mrb[0].mxu0
        %v953 = vpop.f32.mrb[0].mxu0
        %v954 = vadd.f32 %v397, %v953
        %v955 = vpop.f32.mrb[0].mxu0
        %956 = vmatprep.mubr.bf16.mxu0 0
        %957 = vmatmul.mubr.bf16.gmra.mrb[0].mxu0 %v714
        %v958 = vpop.f32.mrb[0].mxu0
        %v959 = vadd.f32 %v397, %v958
        %v960 = vpop.f32.mrb[0].mxu0
        %v961 = vpop.f32.mrb[0].mxu0
        %v962 = vadd.f32 %v397, %v961
        %v963 = vpop.f32.mrb[0].mxu0
        %964 = vmatprep.mubr.bf16.mxu0 0
        %965 = vmatmul.mubr.bf16.gmra.mrb[0].mxu0 %v717
        %v966 = vpop.f32.mrb[0].mxu0
        %v967 = vadd.f32 %v397, %v966
        %v968 = vpop.f32.mrb[0].mxu0
        %v969 = vpop.f32.mrb[0].mxu0
        %v970 = vadd.f32 %v397, %v969
        %v971 = vpop.f32.mrb[0].mxu0
        %972 = vmatprep.mubr.bf16.mxu0 0
        %973 = vmatmul.mubr.bf16.gmra.mrb[0].mxu0 %v720
        %v974 = vpop.f32.mrb[0].mxu0
        %v975 = vadd.f32 %v397, %v974
        %v976 = vpop.f32.mrb[0].mxu0
        %v977 = vpop.f32.mrb[0].mxu0
        %v978 = vadd.f32 %v397, %v977
        %v979 = vpop.f32.mrb[0].mxu0
        %980 = vmatprep.mubr.bf16.mxu0 0
        %981 = vmatmul.mubr.bf16.gmra.mrb[0].mxu0 %v723
        %v982 = vpop.f32.mrb[0].mxu0
        %v983 = vadd.f32 %v397, %v982
        %v984 = vpop.f32.mrb[0].mxu0
        %v985 = vpop.f32.mrb[0].mxu0
        %v986 = vadd.f32 %v397, %v985
        %v987 = vpop.f32.mrb[0].mxu0
        %988 = vmatprep.mubr.bf16.mxu0 0
        %989 = vmatmul.mubr.bf16.gmra.mrb[0].mxu0 %v726
        %v990 = vpop.f32.mrb[0].mxu0
        %v991 = vadd.f32 %v397, %v990
        %v992 = vpop.f32.mrb[0].mxu0
        %v993 = vpop.f32.mrb[0].mxu0
        %v994 = vadd.f32 %v397, %v993
        %v995 = vpop.f32.mrb[0].mxu0
        %996 = vmatprep.mubr.bf16.mxu0 0
        %997 = vmatmul.mubr.bf16.gmra.mrb[0].mxu0 %v729
        %v998 = vpop.f32.mrb[0].mxu0
        %v999 = vadd.f32 %v397, %v998
        %v1000 = vpop.f32.mrb[0].mxu0
        %v1001 = vpop.f32.mrb[0].mxu0
        %v1002 = vadd.f32 %v397, %v1001
        %v1003 = vpop.f32.mrb[0].mxu0
        %1004 = vmatprep.mubr.bf16.mxu0 0
        %1005 = vmatmul.mubr.bf16.gmra.mrb[0].mxu0 %v732
        %v1006 = vpop.f32.mrb[0].mxu0
        %v1007 = vadd.f32 %v397, %v1006
        %v1008 = vpop.f32.mrb[0].mxu0
        %v1009 = vpop.f32.mrb[0].mxu0
        %v1010 = vadd.f32 %v397, %v1009
        %v1011 = vpop.f32.mrb[0].mxu0
        %1012 = vmatprep.mubr.bf16.mxu0 0
        %1013 = vmatmul.mubr.bf16.gmra.mrb[0].mxu0 %v735
        %v1014 = vpop.f32.mrb[0].mxu0
        %v1015 = vadd.f32 %v397, %v1014
        %v1016 = vpop.f32.mrb[0].mxu0
        %v1017 = vpop.f32.mrb[0].mxu0
        %v1018 = vadd.f32 %v397, %v1017
        %v1019 = vpop.f32.mrb[0].mxu0
        %1020 = vmatprep.mubr.bf16.mxu0 0
        %1021 = vmatmul.mubr.bf16.gmra.mrb[0].mxu0 %v738
        %v1022 = vpop.f32.mrb[0].mxu0
        %v1023 = vadd.f32 %v397, %v1022
        %v1024 = vpop.f32.mrb[0].mxu0
        %v1025 = vpop.f32.mrb[0].mxu0
        %v1026 = vadd.f32 %v397, %v1025
        %v1027 = vpop.f32.mrb[0].mxu0
        %1028 = vmatprep.mubr.bf16.mxu0 0
        %1029 = vmatmul.mubr.bf16.gmra.mrb[0].mxu0 %v741
        %v1030 = vpop.f32.mrb[0].mxu0
        %v1031 = vadd.f32 %v397, %v1030
        %v1032 = vpop.f32.mrb[0].mxu0
        %v1033 = vpop.f32.mrb[0].mxu0
        %v1034 = vadd.f32 %v397, %v1033
        %v1035 = vpop.f32.mrb[0].mxu0
        %1036 = vmatprep.mubr.bf16.mxu0 0
        %1037 = vmatmul.mubr.bf16.gmra.mrb[0].mxu0 %v744
        %v1038 = vpop.f32.mrb[0].mxu0
        %v1039 = vadd.f32 %v397, %v1038
        %v1040 = vpop.f32.mrb[0].mxu0
        %v1041 = vpop.f32.mrb[0].mxu0
        %v1042 = vadd.f32 %v397, %v1041
        %v1043 = vpop.f32.mrb[0].mxu0
        %1044 = vmatprep.mubr.bf16.mxu0 0
        %1045 = vmatmul.mubr.bf16.gmra.mrb[0].mxu0 %v747
        %v1046 = vpop.f32.mrb[0].mxu0
        %v1047 = vadd.f32 %v397, %v1046
        %v1048 = vpop.f32.mrb[0].mxu0
        %v1049 = vpop.f32.mrb[0].mxu0
        %v1050 = vadd.f32 %v397, %v1049
        %v1051 = vpop.f32.mrb[0].mxu0
        %1052 = vmatprep.mubr.bf16.mxu0 0
        %1053 = vmatmul.mubr.bf16.gmra.mrb[0].mxu0 %v750
        %v1054 = vpop.f32.mrb[0].mxu0
        %v1055 = vadd.f32 %v397, %v1054
        %v1056 = vpop.f32.mrb[0].mxu0
        %v1057 = vpop.f32.mrb[0].mxu0
        %v1058 = vadd.f32 %v397, %v1057
        %v1059 = vpop.f32.mrb[0].mxu0
        %1060 = vmatprep.mubr.bf16.mxu0 0
        %1061 = vmatmul.mubr.bf16.gmra.mrb[0].mxu0 %v753
        %v1062 = vpop.f32.mrb[0].mxu0
        %v1063 = vadd.f32 %v397, %v1062
        %v1064 = vpop.f32.mrb[0].mxu0
        %v1065 = vpop.f32.mrb[0].mxu0
        %v1066 = vadd.f32 %v397, %v1065
        %v1067 = vpop.f32.mrb[0].mxu0
        %1068 = vmatprep.mubr.bf16.mxu0 0
        %1069 = vmatmul.mubr.bf16.gmra.mrb[0].mxu0 %v756
        %v1070 = vpop.f32.mrb[0].mxu0
        %v1071 = vadd.f32 %v397, %v1070
        %v1072 = vpop.f32.mrb[0].mxu0
        %v1073 = vpop.f32.mrb[0].mxu0
        %v1074 = vadd.f32 %v397, %v1073
        %v1075 = vpop.f32.mrb[0].mxu0
        %1076 = vmatprep.mubr.bf16.mxu0 0
        %1077 = vmatmul.mubr.bf16.gmra.mrb[0].mxu0 %v759
        %v1078 = vpop.f32.mrb[0].mxu0
        %v1079 = vadd.f32 %v397, %v1078
        %v1080 = vpop.f32.mrb[0].mxu0
        %v1081 = vpop.f32.mrb[0].mxu0
        %v1082 = vadd.f32 %v397, %v1081
        %v1083 = vpop.f32.mrb[0].mxu0
        %1084 = vmatprep.mubr.bf16.mxu0 0
        %1085 = vmatmul.mubr.bf16.gmra.mrb[0].mxu0 %v762
        %v1086 = vpop.f32.mrb[0].mxu0
        %v1087 = vadd.f32 %v397, %v1086
        %v1088 = vpop.f32.mrb[0].mxu0
        %v1089 = vpop.f32.mrb[0].mxu0
        %v1090 = vadd.f32 %v397, %v1089
        %v1091 = vpop.f32.mrb[0].mxu0
        %1092 = vmatprep.mubr.bf16.mxu0 0
        %1093 = vmatmul.mubr.bf16.gmra.mrb[0].mxu0 %v765
        %v1094 = vpop.f32.mrb[0].mxu0
        %v1095 = vadd.f32 %v397, %v1094
        %v1096 = vpop.f32.mrb[0].mxu0
        %v1097 = vpop.f32.mrb[0].mxu0
        %v1098 = vadd.f32 %v397, %v1097
        %v1099 = vpop.f32.mrb[0].mxu0
        %1100 = vmatprep.mubr.bf16.mxu0 0
        %1101 = vmatmul.mubr.bf16.gmra.mrb[0].mxu0 %v768
        %v1102 = vpop.f32.mrb[0].mxu0
        %v1103 = vadd.f32 %v397, %v1102
        %v1104 = vpop.f32.mrb[0].mxu0
        %v1105 = vpop.f32.mrb[0].mxu0
        %v1106 = vadd.f32 %v397, %v1105
        %v1107 = vpop.f32.mrb[0].mxu0
        %1108 = vmatprep.mubr.bf16.mxu0 0
        %1109 = vmatmul.mubr.bf16.gmra.mrb[0].mxu0 %v771
        %v1110 = vpop.f32.mrb[0].mxu0
        %v1111 = vadd.f32 %v397, %v1110
        %v1112 = vpop.f32.mrb[0].mxu0
        %v1113 = vpop.f32.mrb[0].mxu0
        %v1114 = vadd.f32 %v397, %v1113
        %v1115 = vpop.f32.mrb[0].mxu0
        %1116 = vmatprep.mubr.bf16.mxu0 0
        %1117 = vmatmul.mubr.bf16.gmra.mrb[0].mxu0 %v774
        %v1118 = vpop.f32.mrb[0].mxu0
        %v1119 = vadd.f32 %v397, %v1118
        %v1120 = vpop.f32.mrb[0].mxu0
        %v1121 = vpop.f32.mrb[0].mxu0
        %v1122 = vadd.f32 %v397, %v1121
        %v1123 = vpop.f32.mrb[0].mxu0
        %1124 = vmatprep.mubr.bf16.mxu0 0
        %1125 = vmatmul.mubr.bf16.gmra.mrb[0].mxu0 %v777
        %v1126 = vpop.f32.mrb[0].mxu0
        %v1127 = vadd.f32 %v397, %v1126
        %v1128 = vpop.f32.mrb[0].mxu0
        %v1129 = vpop.f32.mrb[0].mxu0
        %v1130 = vadd.f32 %v397, %v1129
        %v1131 = vpop.f32.mrb[0].mxu0
        %1132 = vmatprep.mubr.bf16.mxu0 0
        %1133 = vmatmul.mubr.bf16.gmra.mrb[0].mxu0 %v780
        %v1134 = vpop.f32.mrb[0].mxu0
        %v1135 = vadd.f32 %v397, %v1134
        %v1136 = vpop.f32.mrb[0].mxu0
        %v1137 = vpop.f32.mrb[0].mxu0
        %v1138 = vadd.f32 %v397, %v1137
        %v1139 = vpop.f32.mrb[0].mxu0
        %1140 = vmatprep.mubr.bf16.mxu0 0
        %1141 = vmatmul.mubr.bf16.gmra.mrb[0].mxu0 %v783
        %v1142 = vpop.f32.mrb[0].mxu0
        %v1143 = vadd.f32 %v397, %v1142
        %v1144 = vpop.f32.mrb[0].mxu0
        %v1145 = vpop.f32.mrb[0].mxu0
        %v1146 = vadd.f32 %v397, %v1145
        %v1147 = vpop.f32.mrb[0].mxu0
        %1148 = vmatprep.mubr.bf16.mxu0 0
        %1149 = vmatmul.mubr.bf16.gmra.mrb[0].mxu0 %v786
        %v1150 = vpop.f32.mrb[0].mxu0
        %v1151 = vadd.f32 %v397, %v1150
        %v1152 = vpop.f32.mrb[0].mxu0
        %v1153 = vpop.f32.mrb[0].mxu0
        %v1154 = vadd.f32 %v397, %v1153
        %v1155 = vpop.f32.mrb[0].mxu0
        %1156 = vmatprep.mubr.bf16.mxu0 0
        %1157 = vmatmul.mubr.bf16.gmra.mrb[0].mxu0 %v789
        %v1158 = vpop.f32.mrb[0].mxu0
        %v1159 = vadd.f32 %v397, %v1158
        %v1160 = vpop.f32.mrb[0].mxu0
        %v1161 = vpop.f32.mrb[0].mxu0
        %v1162 = vadd.f32 %v397, %v1161
        %v1163 = vpop.f32.mrb[0].mxu0
        %1164 = vmatprep.mubr.bf16.mxu0 0
        %1165 = vmatmul.mubr.bf16.gmra.mrb[0].mxu0 %v792
        %v1166 = vpop.f32.mrb[0].mxu0
        %v1167 = vadd.f32 %v397, %v1166
        %v1168 = vpop.f32.mrb[0].mxu0
        %v1169 = vpop.f32.mrb[0].mxu0
        %v1170 = vadd.f32 %v397, %v1169
        %v1171 = vpop.f32.mrb[0].mxu0
        %1172 = vmatprep.mubr.bf16.mxu0 0
        %1173 = vmatmul.mubr.bf16.gmra.mrb[0].mxu0 %v795
        %v1174 = vpop.f32.mrb[0].mxu0
        %v1175 = vadd.f32 %v397, %v1174
        %v1176 = vpop.f32.mrb[0].mxu0
        %v1177 = vpop.f32.mrb[0].mxu0
        %v1178 = vadd.f32 %v397, %v1177
        %v1179 = vpop.f32.mrb[0].mxu0
        %1180 = vmatprep.mubr.bf16.mxu0 0
        %1181 = vmatmul.mubr.bf16.gmra.mrb[0].mxu0 %v798
        %v1182 = vpop.f32.mrb[0].mxu0
        %v1183 = vadd.f32 %v397, %v1182
        %v1184 = vpop.f32.mrb[0].mxu0
        %v1185 = vpop.f32.mrb[0].mxu0
        %v1186 = vadd.f32 %v397, %v1185
        %v1187 = vpop.f32.mrb[0].mxu0
        %1188 = vmatprep.mubr.bf16.mxu0 0
        %1189 = vmatmul.mubr.bf16.gmra.mrb[0].mxu0 %v801
        %v1190 = vpop.f32.mrb[0].mxu0
        %v1191 = vadd.f32 %v397, %v1190
        %v1192 = vpop.f32.mrb[0].mxu0
        %v1193 = vpop.f32.mrb[0].mxu0
        %v1194 = vadd.f32 %v397, %v1193
        %v1195 = vpop.f32.mrb[0].mxu0
        %1196 = vmatprep.mubr.bf16.mxu0 0
        %1197 = vmatmul.mubr.bf16.gmra.mrb[0].mxu0 %v804
        %v1198 = vpop.f32.mrb[0].mxu0
        %v1199 = vadd.f32 %v397, %v1198
        %v1200 = vpop.f32.mrb[0].mxu0
        %v1201 = vpop.f32.mrb[0].mxu0
        %v1202 = vadd.f32 %v397, %v1201
        %v1203 = vpop.f32.mrb[0].mxu0
        %1204 = vmatprep.mubr.bf16.mxu0 0
        %1205 = vmatmul.mubr.bf16.gmra.mrb[0].mxu0 %v807
        %v1206 = vpop.f32.mrb[0].mxu0
        %v1207 = vadd.f32 %v397, %v1206
        %v1208 = vpop.f32.mrb[0].mxu0
        %v1209 = vpop.f32.mrb[0].mxu0
        %v1210 = vadd.f32 %v397, %v1209
        %v1211 = vpop.f32.mrb[0].mxu0
        %1212 = vmatprep.mubr.bf16.mxu0 0
        %1213 = vmatmul.mubr.bf16.gmra.mrb[0].mxu0 %v810
        %v1214 = vpop.f32.mrb[0].mxu0
        %v1215 = vadd.f32 %v397, %v1214
        %v1216 = vpop.f32.mrb[0].mxu0
        %v1217 = vpop.f32.mrb[0].mxu0
        %v1218 = vadd.f32 %v397, %v1217
        %v1219 = vpop.f32.mrb[0].mxu0
        %1220 = vmatprep.mubr.bf16.mxu0 0
        %1221 = vmatmul.mubr.bf16.gmra.mrb[0].mxu0 %v813
        %v1222 = vpop.f32.mrb[0].mxu0
        %v1223 = vadd.f32 %v397, %v1222
        %v1224 = vpop.f32.mrb[0].mxu0
        %v1225 = vpop.f32.mrb[0].mxu0
        %v1226 = vadd.f32 %v397, %v1225
        %v1227 = vpop.f32.mrb[0].mxu0
        %1228 = vmatprep.mubr.bf16.mxu0 0
        %1229 = vmatmul.mubr.bf16.gmra.mrb[0].mxu0 %v816
        %v1230 = vpop.f32.mrb[0].mxu0
        %v1231 = vadd.f32 %v397, %v1230
        %v1232 = vpop.f32.mrb[0].mxu0
        %v1233 = vpop.f32.mrb[0].mxu0
        %v1234 = vadd.f32 %v397, %v1233
        %v1235 = vpop.f32.mrb[0].mxu0
        %1236 = vmatprep.mubr.bf16.mxu0 0
        %1237 = vmatmul.mubr.bf16.gmra.mrb[0].mxu0 %v819
        %v1238 = vpop.f32.mrb[0].mxu0
        %v1239 = vadd.f32 %v397, %v1238
        %v1240 = vpop.f32.mrb[0].mxu0
        %v1241 = vpop.f32.mrb[0].mxu0
        %v1242 = vadd.f32 %v397, %v1241
        %v1243 = vpop.f32.mrb[0].mxu0
        %1244 = vmatprep.mubr.bf16.mxu0 0
        %1245 = vmatmul.mubr.bf16.gmra.mrb[0].mxu0 %v822
        %v1246 = vpop.f32.mrb[0].mxu0
        %v1247 = vadd.f32 %v397, %v1246
        %v1248 = vpop.f32.mrb[0].mxu0
        %v1249 = vpop.f32.mrb[0].mxu0
        %v1250 = vadd.f32 %v397, %v1249
        %v1251 = vpop.f32.mrb[0].mxu0
        %1252 = vmatprep.mubr.bf16.mxu0 0
        %1253 = vmatmul.mubr.bf16.gmra.mrb[0].mxu0 %v825
        %v1254 = vpop.f32.mrb[0].mxu0
        %v1255 = vadd.f32 %v397, %v1254
        %v1256 = vpop.f32.mrb[0].mxu0
        %v1257 = vpop.f32.mrb[0].mxu0
        %v1258 = vadd.f32 %v397, %v1257
        %v1259 = vpop.f32.mrb[0].mxu0
        %1260 = vmatprep.mubr.bf16.mxu0 0
        %1261 = vmatmul.mubr.bf16.gmra.mrb[0].mxu0 %v828
        %v1262 = vpop.f32.mrb[0].mxu0
        %v1263 = vadd.f32 %v397, %v1262
        %v1264 = vpop.f32.mrb[0].mxu0
        %v1265 = vpop.f32.mrb[0].mxu0
        %v1266 = vadd.f32 %v397, %v1265
        %v1267 = vpop.f32.mrb[0].mxu0
        %1268 = vmatprep.mubr.bf16.mxu0 0
        %1269 = vmatmul.mubr.bf16.gmra.mrb[0].mxu0 %v831
        %v1270 = vpop.f32.mrb[0].mxu0
        %v1271 = vadd.f32 %v397, %v1270
        %v1272 = vpop.f32.mrb[0].mxu0
        %v1273 = vpop.f32.mrb[0].mxu0
        %v1274 = vadd.f32 %v397, %v1273
        %v1275 = vpop.f32.mrb[0].mxu0
        %1276 = vmatprep.mubr.bf16.mxu0 0
        %1277 = vmatmul.mubr.bf16.gmra.mrb[0].mxu0 %v834
        %v1278 = vpop.f32.mrb[0].mxu0
        %v1279 = vadd.f32 %v397, %v1278
        %v1280 = vpop.f32.mrb[0].mxu0
        %v1281 = vpop.f32.mrb[0].mxu0
        %v1282 = vadd.f32 %v397, %v1281
        %v1283 = vpop.f32.mrb[0].mxu0
        %1284 = vmatprep.mubr.bf16.mxu0 0
        %1285 = vmatmul.mubr.bf16.gmra.mrb[0].mxu0 %v837
        %v1286 = vpop.f32.mrb[0].mxu0
        %v1287 = vadd.f32 %v397, %v1286
        %v1288 = vpop.f32.mrb[0].mxu0
        %v1289 = vpop.f32.mrb[0].mxu0
        %v1290 = vadd.f32 %v397, %v1289
        %v1291 = vpop.f32.mrb[0].mxu0
        %1292 = vmatprep.mubr.bf16.mxu0 0
        %1293 = vmatmul.mubr.bf16.gmra.mrb[0].mxu0 %v840
        %v1294 = vpop.f32.mrb[0].mxu0
        %v1295 = vadd.f32 %v397, %v1294
        %v1296 = vpop.f32.mrb[0].mxu0
        %v1297 = vpop.f32.mrb[0].mxu0
        %v1298 = vadd.f32 %v397, %v1297
        %v1299 = vpop.f32.mrb[0].mxu0
        %1300 = vmatprep.mubr.bf16.mxu0 0
        %1301 = vmatmul.mubr.bf16.gmra.mrb[0].mxu0 %v843
        %v1302 = vpop.f32.mrb[0].mxu0
        %v1303 = vadd.f32 %v397, %v1302
        %v1304 = vpop.f32.mrb[0].mxu0
        %v1305 = vpop.f32.mrb[0].mxu0
        %v1306 = vadd.f32 %v397, %v1305
        %v1307 = vpop.f32.mrb[0].mxu0
        %1308 = vmatprep.mubr.bf16.mxu0 0
        %1309 = vmatmul.mubr.bf16.gmra.mrb[0].mxu0 %v846
        %v1310 = vpop.f32.mrb[0].mxu0
        %v1311 = vadd.f32 %v397, %v1310
        %v1312 = vpop.f32.mrb[0].mxu0
        %v1313 = vpop.f32.mrb[0].mxu0
        %v1314 = vadd.f32 %v397, %v1313
        %v1315 = vpop.f32.mrb[0].mxu0
        %1316 = vmatprep.mubr.bf16.mxu0 0
        %1317 = vmatmul.mubr.bf16.gmra.mrb[0].mxu0 %v849
        %v1318 = vpop.f32.mrb[0].mxu0
        %v1319 = vadd.f32 %v397, %v1318
        %v1320 = vpop.f32.mrb[0].mxu0
        %v1321 = vpop.f32.mrb[0].mxu0
        %v1322 = vadd.f32 %v397, %v1321
        %v1323 = vpop.f32.mrb[0].mxu0
        %1324 = vmatprep.mubr.bf16.mxu0 0
        %1325 = vmatmul.mubr.bf16.gmra.mrb[0].mxu0 %v852
        %v1326 = vpop.f32.mrb[0].mxu0
        %v1327 = vadd.f32 %v397, %v1326
        %v1328 = vpop.f32.mrb[0].mxu0
        %v1329 = vpop.f32.mrb[0].mxu0
        %v1330 = vadd.f32 %v397, %v1329
        %v1331 = vpop.f32.mrb[0].mxu0
        %1332 = vmatprep.mubr.bf16.mxu0 0
        %1333 = vmatmul.mubr.bf16.gmra.mrb[0].mxu0 %v855
        %v1334 = vpop.f32.mrb[0].mxu0
        %v1335 = vadd.f32 %v397, %v1334
        %v1336 = vpop.f32.mrb[0].mxu0
        %v1337 = vpop.f32.mrb[0].mxu0
        %v1338 = vadd.f32 %v397, %v1337
        %v1339 = vpop.f32.mrb[0].mxu0
        %1340 = vmatprep.mubr.bf16.mxu0 0
        %1341 = vmatmul.mubr.bf16.gmra.mrb[0].mxu0 %v858
        %v1342 = vpop.f32.mrb[0].mxu0
        %v1343 = vadd.f32 %v397, %v1342
        %v1344 = vpop.f32.mrb[0].mxu0
        %v1345 = vpop.f32.mrb[0].mxu0
        %v1346 = vpop.f32.mrb[0].mxu0
        %1347 = vdwg.mxu0
        %v1348 = vmax.f32 %v895, 0.0
        %v1349 = vmax.f32 %v898, 0.0
        %v1350 = vmax.f32 %v903, 0.0
        %v1351 = vmax.f32 %v906, 0.0
        %v1352 = vmax.f32 %v911, 0.0
        %v1353 = vmax.f32 %v914, 0.0
        %v1354 = vmax.f32 %v919, 0.0
        %v1355 = vmax.f32 %v922, 0.0
        %v1356 = vmax.f32 %v927, 0.0
        %v1357 = vmax.f32 %v930, 0.0
        %v1358 = vmax.f32 %v935, 0.0
        %v1359 = vmax.f32 %v938, 0.0
        %v1360 = vmax.f32 %v943, 0.0
        %v1361 = vmax.f32 %v946, 0.0
        %v1362 = vmax.f32 %v951, 0.0
        %v1363 = vmax.f32 %v954, 0.0
        %v1364 = vmax.f32 %v959, 0.0
        %v1365 = vmax.f32 %v962, 0.0
        %v1366 = vmax.f32 %v967, 0.0
        %v1367 = vmax.f32 %v970, 0.0
        %v1368 = vmax.f32 %v975, 0.0
        %v1369 = vmax.f32 %v978, 0.0
        %v1370 = vmax.f32 %v983, 0.0
        %v1371 = vmax.f32 %v986, 0.0
        %v1372 = vmax.f32 %v991, 0.0
        %v1373 = vmax.f32 %v994, 0.0
        %v1374 = vmax.f32 %v999, 0.0
        %v1375 = vmax.f32 %v1002, 0.0
        %v1376 = vmax.f32 %v1007, 0.0
        %v1377 = vmax.f32 %v1010, 0.0
        %v1378 = vmax.f32 %v1015, 0.0
        %v1379 = vmax.f32 %v1018, 0.0
        %v1380 = vmax.f32 %v1023, 0.0
        %v1381 = vmax.f32 %v1026, 0.0
        %v1382 = vmax.f32 %v1031, 0.0
        %v1383 = vmax.f32 %v1034, 0.0
        %v1384 = vmax.f32 %v1039, 0.0
        %v1385 = vmax.f32 %v1042, 0.0
        %v1386 = vmax.f32 %v1047, 0.0
        %v1387 = vmax.f32 %v1050, 0.0
        %v1388 = vmax.f32 %v1055, 0.0
        %v1389 = vmax.f32 %v1058, 0.0
        %v1390 = vmax.f32 %v1063, 0.0
        %v1391 = vmax.f32 %v1066, 0.0
        %v1392 = vmax.f32 %v1071, 0.0
        %v1393 = vmax.f32 %v1074, 0.0
        %v1394 = vmax.f32 %v1079, 0.0
        %v1395 = vmax.f32 %v1082, 0.0
        %v1396 = vmax.f32 %v1087, 0.0
        %v1397 = vmax.f32 %v1090, 0.0
        %v1398 = vmax.f32 %v1095, 0.0
        %v1399 = vmax.f32 %v1098, 0.0
        %v1400 = vmax.f32 %v1103, 0.0
        %v1401 = vmax.f32 %v1106, 0.0
        %v1402 = vmax.f32 %v1111, 0.0
        %v1403 = vmax.f32 %v1114, 0.0
        %v1404 = vmax.f32 %v1119, 0.0
        %v1405 = vmax.f32 %v1122, 0.0
        %v1406 = vmax.f32 %v1127, 0.0
        %v1407 = vmax.f32 %v1130, 0.0
        %v1408 = vmax.f32 %v1135, 0.0
        %v1409 = vmax.f32 %v1138, 0.0
        %v1410 = vmax.f32 %v1143, 0.0
        %v1411 = vmax.f32 %v1146, 0.0
        %v1412 = vmax.f32 %v1151, 0.0
        %v1413 = vmax.f32 %v1154, 0.0
        %v1414 = vmax.f32 %v1159, 0.0
        %v1415 = vmax.f32 %v1162, 0.0
        %v1416 = vmax.f32 %v1167, 0.0
        %v1417 = vmax.f32 %v1170, 0.0
        %v1418 = vmax.f32 %v1175, 0.0
        %v1419 = vmax.f32 %v1178, 0.0
        %v1420 = vmax.f32 %v1183, 0.0
        %v1421 = vmax.f32 %v1186, 0.0
        %v1422 = vmax.f32 %v1191, 0.0
        %v1423 = vmax.f32 %v1194, 0.0
        %v1424 = vmax.f32 %v1199, 0.0
        %v1425 = vmax.f32 %v1202, 0.0
        %v1426 = vmax.f32 %v1207, 0.0
        %v1427 = vmax.f32 %v1210, 0.0
        %v1428 = vmax.f32 %v1215, 0.0
        %v1429 = vmax.f32 %v1218, 0.0
        %v1430 = vmax.f32 %v1223, 0.0
        %v1431 = vmax.f32 %v1226, 0.0
        %v1432 = vmax.f32 %v1231, 0.0
        %v1433 = vmax.f32 %v1234, 0.0
        %v1434 = vmax.f32 %v1239, 0.0
        %v1435 = vmax.f32 %v1242, 0.0
        %v1436 = vmax.f32 %v1247, 0.0
        %v1437 = vmax.f32 %v1250, 0.0
        %v1438 = vmax.f32 %v1255, 0.0
        %v1439 = vmax.f32 %v1258, 0.0
        %v1440 = vmax.f32 %v1263, 0.0
        %v1441 = vmax.f32 %v1266, 0.0
        %v1442 = vmax.f32 %v1271, 0.0
        %v1443 = vmax.f32 %v1274, 0.0
        %v1444 = vmax.f32 %v1279, 0.0
        %v1445 = vmax.f32 %v1282, 0.0
        %v1446 = vmax.f32 %v1287, 0.0
        %v1447 = vmax.f32 %v1290, 0.0
        %v1448 = vmax.f32 %v1295, 0.0
        %v1449 = vmax.f32 %v1298, 0.0
        %v1450 = vmax.f32 %v1303, 0.0
        %v1451 = vmax.f32 %v1306, 0.0
        %v1452 = vmax.f32 %v1311, 0.0
        %v1453 = vmax.f32 %v1314, 0.0
        %v1454 = vmax.f32 %v1319, 0.0
        %v1455 = vmax.f32 %v1322, 0.0
        %v1456 = vmax.f32 %v1327, 0.0
        %v1457 = vmax.f32 %v1330, 0.0
        %v1458 = vmax.f32 %v1335, 0.0
        %v1459 = vmax.f32 %v1338, 0.0
        %v1460 = vmax.f32 %v1343, 0.0
        %1461 = vst.msk [vmem:[#allocation2] sm:$0xff] %vm688, %v1348
        %1462 = vst.msk [vmem:[#allocation2 + $0x8] sm:$0xff] %vm688, %v1349
        %1463 = vst.msk [vmem:[#allocation2 + $0x10] sm:$0xff] %vm688, %v1350
        %1464 = vst.msk [vmem:[#allocation2 + $0x18] sm:$0xff] %vm688, %v1351
        %1465 = vst.msk [vmem:[#allocation2 + $0x20] sm:$0xff] %vm688, %v1352
        %1466 = vst.msk [vmem:[#allocation2 + $0x28] sm:$0xff] %vm688, %v1353
        %1467 = vst.msk [vmem:[#allocation2 + $0x30] sm:$0xff] %vm688, %v1354
        %1468 = vst.msk [vmem:[#allocation2 + $0x38] sm:$0xff] %vm688, %v1355
        %1469 = vst.msk [vmem:[#allocation2 + $0x40] sm:$0xff] %vm688, %v1356
        %1470 = vst.msk [vmem:[#allocation2 + $0x48] sm:$0xff] %vm688, %v1357
        %1471 = vst.msk [vmem:[#allocation2 + $0x50] sm:$0xff] %vm688, %v1358
        %1472 = vst.msk [vmem:[#allocation2 + $0x58] sm:$0xff] %vm688, %v1359
        %1473 = vst.msk [vmem:[#allocation2 + $0x60] sm:$0xff] %vm688, %v1360
        %1474 = vst.msk [vmem:[#allocation2 + $0x68] sm:$0xff] %vm688, %v1361
        %1475 = vst.msk [vmem:[#allocation2 + $0x70] sm:$0xff] %vm688, %v1362
        %1476 = vst.msk [vmem:[#allocation2 + $0x78] sm:$0xff] %vm688, %v1363
        %1477 = vst.msk [vmem:[#allocation2 + $0x80] sm:$0xff] %vm688, %v1364
        %1478 = vst.msk [vmem:[#allocation2 + $0x88] sm:$0xff] %vm688, %v1365
        %1479 = vst.msk [vmem:[#allocation2 + $0x90] sm:$0xff] %vm688, %v1366
        %1480 = vst.msk [vmem:[#allocation2 + $0x98] sm:$0xff] %vm688, %v1367
        %1481 = vst.msk [vmem:[#allocation2 + $0xa0] sm:$0xff] %vm688, %v1368
        %1482 = vst.msk [vmem:[#allocation2 + $0xa8] sm:$0xff] %vm688, %v1369
        %1483 = vst.msk [vmem:[#allocation2 + $0xb0] sm:$0xff] %vm688, %v1370
        %1484 = vst.msk [vmem:[#allocation2 + $0xb8] sm:$0xff] %vm688, %v1371
        %1485 = vst.msk [vmem:[#allocation2 + $0xc0] sm:$0xff] %vm688, %v1372
        %1486 = vst.msk [vmem:[#allocation2 + $0xc8] sm:$0xff] %vm688, %v1373
        %1487 = vst.msk [vmem:[#allocation2 + $0xd0] sm:$0xff] %vm688, %v1374
        %1488 = vst.msk [vmem:[#allocation2 + $0xd8] sm:$0xff] %vm688, %v1375
        %1489 = vst.msk [vmem:[#allocation2 + $0xe0] sm:$0xff] %vm688, %v1376
        %1490 = vst.msk [vmem:[#allocation2 + $0xe8] sm:$0xff] %vm688, %v1377
        %1491 = vst.msk [vmem:[#allocation2 + $0xf0] sm:$0xff] %vm688, %v1378
        %1492 = vst.msk [vmem:[#allocation2 + $0xf8] sm:$0xff] %vm688, %v1379
        %1493 = vst.msk [vmem:[#allocation2 + $0x100] sm:$0xff] %vm688, %v1380
        %1494 = vst.msk [vmem:[#allocation2 + $0x108] sm:$0xff] %vm688, %v1381
        %1495 = vst.msk [vmem:[#allocation2 + $0x110] sm:$0xff] %vm688, %v1382
        %1496 = vst.msk [vmem:[#allocation2 + $0x118] sm:$0xff] %vm688, %v1383
        %1497 = vst.msk [vmem:[#allocation2 + $0x120] sm:$0xff] %vm688, %v1384
        %1498 = vst.msk [vmem:[#allocation2 + $0x128] sm:$0xff] %vm688, %v1385
        %1499 = vst.msk [vmem:[#allocation2 + $0x130] sm:$0xff] %vm688, %v1386
        %1500 = vst.msk [vmem:[#allocation2 + $0x138] sm:$0xff] %vm688, %v1387
        %1501 = vst.msk [vmem:[#allocation2 + $0x140] sm:$0xff] %vm688, %v1388
        %1502 = vst.msk [vmem:[#allocation2 + $0x148] sm:$0xff] %vm688, %v1389
        %1503 = vst.msk [vmem:[#allocation2 + $0x150] sm:$0xff] %vm688, %v1390
        %1504 = vst.msk [vmem:[#allocation2 + $0x158] sm:$0xff] %vm688, %v1391
        %1505 = vst.msk [vmem:[#allocation2 + $0x160] sm:$0xff] %vm688, %v1392
        %1506 = vst.msk [vmem:[#allocation2 + $0x168] sm:$0xff] %vm688, %v1393
        %1507 = vst.msk [vmem:[#allocation2 + $0x170] sm:$0xff] %vm688, %v1394
        %1508 = vst.msk [vmem:[#allocation2 + $0x178] sm:$0xff] %vm688, %v1395
        %1509 = vst.msk [vmem:[#allocation2 + $0x180] sm:$0xff] %vm688, %v1396
        %1510 = vst.msk [vmem:[#allocation2 + $0x188] sm:$0xff] %vm688, %v1397
        %1511 = vst.msk [vmem:[#allocation2 + $0x190] sm:$0xff] %vm688, %v1398
        %1512 = vst.msk [vmem:[#allocation2 + $0x198] sm:$0xff] %vm688, %v1399
        %1513 = vst.msk [vmem:[#allocation2 + $0x1a0] sm:$0xff] %vm688, %v1400
        %1514 = vst.msk [vmem:[#allocation2 + $0x1a8] sm:$0xff] %vm688, %v1401
        %1515 = vst.msk [vmem:[#allocation2 + $0x1b0] sm:$0xff] %vm688, %v1402
        %1516 = vst.msk [vmem:[#allocation2 + $0x1b8] sm:$0xff] %vm688, %v1403
        %1517 = vst.msk [vmem:[#allocation2 + $0x1c0] sm:$0xff] %vm688, %v1404
        %1518 = vst.msk [vmem:[#allocation2 + $0x1c8] sm:$0xff] %vm688, %v1405
        %1519 = vst.msk [vmem:[#allocation2 + $0x1d0] sm:$0xff] %vm688, %v1406
        %1520 = vst.msk [vmem:[#allocation2 + $0x1d8] sm:$0xff] %vm688, %v1407
        %1521 = vst.msk [vmem:[#allocation2 + $0x1e0] sm:$0xff] %vm688, %v1408
        %1522 = vst.msk [vmem:[#allocation2 + $0x1e8] sm:$0xff] %vm688, %v1409
        %1523 = vst.msk [vmem:[#allocation2 + $0x1f0] sm:$0xff] %vm688, %v1410
        %1524 = vst.msk [vmem:[#allocation2 + $0x1f8] sm:$0xff] %vm688, %v1411
        %1525 = vst.msk [vmem:[#allocation2 + $0x200] sm:$0xff] %vm688, %v1412
        %1526 = vst.msk [vmem:[#allocation2 + $0x208] sm:$0xff] %vm688, %v1413
        %1527 = vst.msk [vmem:[#allocation2 + $0x210] sm:$0xff] %vm688, %v1414
        %1528 = vst.msk [vmem:[#allocation2 + $0x218] sm:$0xff] %vm688, %v1415
        %1529 = vst.msk [vmem:[#allocation2 + $0x220] sm:$0xff] %vm688, %v1416
        %1530 = vst.msk [vmem:[#allocation2 + $0x228] sm:$0xff] %vm688, %v1417
        %1531 = vst.msk [vmem:[#allocation2 + $0x230] sm:$0xff] %vm688, %v1418
        %1532 = vst.msk [vmem:[#allocation2 + $0x238] sm:$0xff] %vm688, %v1419
        %1533 = vst.msk [vmem:[#allocation2 + $0x240] sm:$0xff] %vm688, %v1420
        %1534 = vst.msk [vmem:[#allocation2 + $0x248] sm:$0xff] %vm688, %v1421
        %1535 = vst.msk [vmem:[#allocation2 + $0x250] sm:$0xff] %vm688, %v1422
        %1536 = vst.msk [vmem:[#allocation2 + $0x258] sm:$0xff] %vm688, %v1423
        %1537 = vst.msk [vmem:[#allocation2 + $0x260] sm:$0xff] %vm688, %v1424
        %1538 = vst.msk [vmem:[#allocation2 + $0x268] sm:$0xff] %vm688, %v1425
        %1539 = vst.msk [vmem:[#allocation2 + $0x270] sm:$0xff] %vm688, %v1426
        %1540 = vst.msk [vmem:[#allocation2 + $0x278] sm:$0xff] %vm688, %v1427
        %1541 = vst.msk [vmem:[#allocation2 + $0x280] sm:$0xff] %vm688, %v1428
        %1542 = vst.msk [vmem:[#allocation2 + $0x288] sm:$0xff] %vm688, %v1429
        %1543 = vst.msk [vmem:[#allocation2 + $0x290] sm:$0xff] %vm688, %v1430
        %1544 = vst.msk [vmem:[#allocation2 + $0x298] sm:$0xff] %vm688, %v1431
        %1545 = vst.msk [vmem:[#allocation2 + $0x2a0] sm:$0xff] %vm688, %v1432
        %1546 = vst.msk [vmem:[#allocation2 + $0x2a8] sm:$0xff] %vm688, %v1433
        %1547 = vst.msk [vmem:[#allocation2 + $0x2b0] sm:$0xff] %vm688, %v1434
        %1548 = vst.msk [vmem:[#allocation2 + $0x2b8] sm:$0xff] %vm688, %v1435
        %1549 = vst.msk [vmem:[#allocation2 + $0x2c0] sm:$0xff] %vm688, %v1436
        %1550 = vst.msk [vmem:[#allocation2 + $0x2c8] sm:$0xff] %vm688, %v1437
        %1551 = vst.msk [vmem:[#allocation2 + $0x2d0] sm:$0xff] %vm688, %v1438
        %1552 = vst.msk [vmem:[#allocation2 + $0x2d8] sm:$0xff] %vm688, %v1439
        %1553 = vst.msk [vmem:[#allocation2 + $0x2e0] sm:$0xff] %vm688, %v1440
        %1554 = vst.msk [vmem:[#allocation2 + $0x2e8] sm:$0xff] %vm688, %v1441
        %1555 = vst.msk [vmem:[#allocation2 + $0x2f0] sm:$0xff] %vm688, %v1442
        %1556 = vst.msk [vmem:[#allocation2 + $0x2f8] sm:$0xff] %vm688, %v1443
        %1557 = vst.msk [vmem:[#allocation2 + $0x300] sm:$0xff] %vm688, %v1444
        %1558 = vst.msk [vmem:[#allocation2 + $0x308] sm:$0xff] %vm688, %v1445
        %1559 = vst.msk [vmem:[#allocation2 + $0x310] sm:$0xff] %vm688, %v1446
        %1560 = vst.msk [vmem:[#allocation2 + $0x318] sm:$0xff] %vm688, %v1447
        %1561 = vst.msk [vmem:[#allocation2 + $0x320] sm:$0xff] %vm688, %v1448
        %1562 = vst.msk [vmem:[#allocation2 + $0x328] sm:$0xff] %vm688, %v1449
        %1563 = vst.msk [vmem:[#allocation2 + $0x330] sm:$0xff] %vm688, %v1450
        %1564 = vst.msk [vmem:[#allocation2 + $0x338] sm:$0xff] %vm688, %v1451
        %1565 = vst.msk [vmem:[#allocation2 + $0x340] sm:$0xff] %vm688, %v1452
        %1566 = vst.msk [vmem:[#allocation2 + $0x348] sm:$0xff] %vm688, %v1453
        %1567 = vst.msk [vmem:[#allocation2 + $0x350] sm:$0xff] %vm688, %v1454
        %1568 = vst.msk [vmem:[#allocation2 + $0x358] sm:$0xff] %vm688, %v1455
        %1569 = vst.msk [vmem:[#allocation2 + $0x360] sm:$0xff] %vm688, %v1456
        %1570 = vst.msk [vmem:[#allocation2 + $0x368] sm:$0xff] %vm688, %v1457
        %1571 = vst.msk [vmem:[#allocation2 + $0x370] sm:$0xff] %vm688, %v1458
        %1572 = vst.msk [vmem:[#allocation2 + $0x378] sm:$0xff] %vm688, %v1459
        %vm1573 = vcmask 125952
        %1574 = vst.msk [vmem:[#allocation2 + $0x380] sm:$0xf] %vm1573, %v1460
        %v1575 = vld [vmem:[#allocation2] ss:$2 sm:$0xff]
        %s1576 = scalar_lea.vmem [#allocation2], 16
        %v1577 = vld [vmem:[%s1576] ss:$2 sm:$0xff]
        %s1578 = scalar_lea.vmem [#allocation2], 32
        %v1579 = vld [vmem:[%s1578] ss:$2 sm:$0xff]
        %s1580 = scalar_lea.vmem [#allocation2], 48
        %v1581 = vld [vmem:[%s1580] ss:$2 sm:$0xff]
        %s1582 = scalar_lea.vmem [#allocation2], 64
        %v1583 = vld [vmem:[%s1582] ss:$2 sm:$0xff]
        %s1584 = scalar_lea.vmem [#allocation2], 80
        %v1585 = vld [vmem:[%s1584] ss:$2 sm:$0xff]
        %s1586 = scalar_lea.vmem [#allocation2], 96
        %v1587 = vld [vmem:[%s1586] ss:$2 sm:$0xff]
        %s1588 = scalar_lea.vmem [#allocation2], 112
        %v1589 = vld [vmem:[%s1588] ss:$2 sm:$0xff]
        %s1590 = scalar_lea.vmem [#allocation2], 128
        %v1591 = vld [vmem:[%s1590] ss:$2 sm:$0xff]
        %s1592 = scalar_lea.vmem [#allocation2], 144
        %v1593 = vld [vmem:[%s1592] ss:$2 sm:$0xff]
        %s1594 = scalar_lea.vmem [#allocation2], 160
        %v1595 = vld [vmem:[%s1594] ss:$2 sm:$0xff]
        %s1596 = scalar_lea.vmem [#allocation2], 176
        %v1597 = vld [vmem:[%s1596] ss:$2 sm:$0xff]
        %s1598 = scalar_lea.vmem [#allocation2], 192
        %v1599 = vld [vmem:[%s1598] ss:$2 sm:$0xff]
        %s1600 = scalar_lea.vmem [#allocation2], 208
        %v1601 = vld [vmem:[%s1600] ss:$2 sm:$0xff]
        %s1602 = scalar_lea.vmem [#allocation2], 224
        %v1603 = vld [vmem:[%s1602] ss:$2 sm:$0xff]
        %s1604 = scalar_lea.vmem [#allocation2], 240
        %v1605 = vld [vmem:[%s1604] ss:$2 sm:$0xff]
        %s1606 = scalar_lea.vmem [#allocation2], 256
        %v1607 = vld [vmem:[%s1606] ss:$2 sm:$0xff]
        %s1608 = scalar_lea.vmem [#allocation2], 272
        %v1609 = vld [vmem:[%s1608] ss:$2 sm:$0xff]
        %s1610 = scalar_lea.vmem [#allocation2], 288
        %v1611 = vld [vmem:[%s1610] ss:$2 sm:$0xff]
        %s1612 = scalar_lea.vmem [#allocation2], 304
        %v1613 = vld [vmem:[%s1612] ss:$2 sm:$0xff]
        %s1614 = scalar_lea.vmem [#allocation2], 320
        %v1615 = vld [vmem:[%s1614] ss:$2 sm:$0xff]
        %s1616 = scalar_lea.vmem [#allocation2], 336
        %v1617 = vld [vmem:[%s1616] ss:$2 sm:$0xff]
        %s1618 = scalar_lea.vmem [#allocation2], 352
        %v1619 = vld [vmem:[%s1618] ss:$2 sm:$0xff]
        %s1620 = scalar_lea.vmem [#allocation2], 368
        %v1621 = vld [vmem:[%s1620] ss:$2 sm:$0xff]
        %s1622 = scalar_lea.vmem [#allocation2], 384
        %v1623 = vld [vmem:[%s1622] ss:$2 sm:$0xff]
        %s1624 = scalar_lea.vmem [#allocation2], 400
        %v1625 = vld [vmem:[%s1624] ss:$2 sm:$0xff]
        %s1626 = scalar_lea.vmem [#allocation2], 416
        %v1627 = vld [vmem:[%s1626] ss:$2 sm:$0xff]
        %s1628 = scalar_lea.vmem [#allocation2], 432
        %v1629 = vld [vmem:[%s1628] ss:$2 sm:$0xff]
        %s1630 = scalar_lea.vmem [#allocation2], 448
        %v1631 = vld [vmem:[%s1630] ss:$2 sm:$0xff]
        %s1632 = scalar_lea.vmem [#allocation2], 464
        %v1633 = vld [vmem:[%s1632] ss:$2 sm:$0xff]
        %s1634 = scalar_lea.vmem [#allocation2], 480
        %v1635 = vld [vmem:[%s1634] ss:$2 sm:$0xff]
        %s1636 = scalar_lea.vmem [#allocation2], 496
        %v1637 = vld [vmem:[%s1636] ss:$2 sm:$0xff]
        %s1638 = scalar_lea.vmem [#allocation2], 512
        %v1639 = vld [vmem:[%s1638] ss:$2 sm:$0xff]
        %s1640 = scalar_lea.vmem [#allocation2], 528
        %v1641 = vld [vmem:[%s1640] ss:$2 sm:$0xff]
        %s1642 = scalar_lea.vmem [#allocation2], 544
        %v1643 = vld [vmem:[%s1642] ss:$2 sm:$0xff]
        %s1644 = scalar_lea.vmem [#allocation2], 560
        %v1645 = vld [vmem:[%s1644] ss:$2 sm:$0xff]
        %s1646 = scalar_lea.vmem [#allocation2], 576
        %v1647 = vld [vmem:[%s1646] ss:$2 sm:$0xff]
        %s1648 = scalar_lea.vmem [#allocation2], 592
        %v1649 = vld [vmem:[%s1648] ss:$2 sm:$0xff]
        %s1650 = scalar_lea.vmem [#allocation2], 608
        %v1651 = vld [vmem:[%s1650] ss:$2 sm:$0xff]
        %s1652 = scalar_lea.vmem [#allocation2], 624
        %v1653 = vld [vmem:[%s1652] ss:$2 sm:$0xff]
        %s1654 = scalar_lea.vmem [#allocation2], 640
        %v1655 = vld [vmem:[%s1654] ss:$2 sm:$0xff]
        %s1656 = scalar_lea.vmem [#allocation2], 656
        %v1657 = vld [vmem:[%s1656] ss:$2 sm:$0xff]
        %s1658 = scalar_lea.vmem [#allocation2], 672
        %v1659 = vld [vmem:[%s1658] ss:$2 sm:$0xff]
        %s1660 = scalar_lea.vmem [#allocation2], 688
        %v1661 = vld [vmem:[%s1660] ss:$2 sm:$0xff]
        %s1662 = scalar_lea.vmem [#allocation2], 704
        %v1663 = vld [vmem:[%s1662] ss:$2 sm:$0xff]
        %s1664 = scalar_lea.vmem [#allocation2], 720
        %v1665 = vld [vmem:[%s1664] ss:$2 sm:$0xff]
        %s1666 = scalar_lea.vmem [#allocation2], 736
        %v1667 = vld [vmem:[%s1666] ss:$2 sm:$0xff]
        %s1668 = scalar_lea.vmem [#allocation2], 752
        %v1669 = vld [vmem:[%s1668] ss:$2 sm:$0xff]
        %s1670 = scalar_lea.vmem [#allocation2], 768
        %v1671 = vld [vmem:[%s1670] ss:$2 sm:$0xff]
        %s1672 = scalar_lea.vmem [#allocation2], 784
        %v1673 = vld [vmem:[%s1672] ss:$2 sm:$0xff]
        %s1674 = scalar_lea.vmem [#allocation2], 800
        %v1675 = vld [vmem:[%s1674] ss:$2 sm:$0xff]
        %s1676 = scalar_lea.vmem [#allocation2], 816
        %v1677 = vld [vmem:[%s1676] ss:$2 sm:$0xff]
        %s1678 = scalar_lea.vmem [#allocation2], 832
        %v1679 = vld [vmem:[%s1678] ss:$2 sm:$0xff]
        %s1680 = scalar_lea.vmem [#allocation2], 848
        %v1681 = vld [vmem:[%s1680] ss:$2 sm:$0xff]
        %s1682 = scalar_lea.vmem [#allocation2], 864
        %v1683 = vld [vmem:[%s1682] ss:$2 sm:$0xff]
        %s1684 = scalar_lea.vmem [#allocation2], 880
        %v1685 = vld [vmem:[%s1684] ss:$2 sm:$0xff]
        %s1686 = scalar_lea.vmem [#allocation2], 896
        %v1687 = vld [vmem:[%s1686] ss:$2 sm:$0x3]
        %s1688 = scalar_lea.vmem [#allocation2], 1
        %v1689 = vld [vmem:[%s1688] ss:$2 sm:$0xff]
        %s1690 = scalar_lea.vmem [#allocation2], 17
        %v1691 = vld [vmem:[%s1690] ss:$2 sm:$0xff]
        %s1692 = scalar_lea.vmem [#allocation2], 33
        %v1693 = vld [vmem:[%s1692] ss:$2 sm:$0xff]
        %s1694 = scalar_lea.vmem [#allocation2], 49
        %v1695 = vld [vmem:[%s1694] ss:$2 sm:$0xff]
        %s1696 = scalar_lea.vmem [#allocation2], 65
        %v1697 = vld [vmem:[%s1696] ss:$2 sm:$0xff]
        %s1698 = scalar_lea.vmem [#allocation2], 81
        %v1699 = vld [vmem:[%s1698] ss:$2 sm:$0xff]
        %s1700 = scalar_lea.vmem [#allocation2], 97
        %v1701 = vld [vmem:[%s1700] ss:$2 sm:$0xff]
        %s1702 = scalar_lea.vmem [#allocation2], 113
        %v1703 = vld [vmem:[%s1702] ss:$2 sm:$0xff]
        %s1704 = scalar_lea.vmem [#allocation2], 129
        %v1705 = vld [vmem:[%s1704] ss:$2 sm:$0xff]
        %s1706 = scalar_lea.vmem [#allocation2], 145
        %v1707 = vld [vmem:[%s1706] ss:$2 sm:$0xff]
        %s1708 = scalar_lea.vmem [#allocation2], 161
        %v1709 = vld [vmem:[%s1708] ss:$2 sm:$0xff]
        %s1710 = scalar_lea.vmem [#allocation2], 177
        %v1711 = vld [vmem:[%s1710] ss:$2 sm:$0xff]
        %s1712 = scalar_lea.vmem [#allocation2], 193
        %v1713 = vld [vmem:[%s1712] ss:$2 sm:$0xff]
        %s1714 = scalar_lea.vmem [#allocation2], 209
        %v1715 = vld [vmem:[%s1714] ss:$2 sm:$0xff]
        %s1716 = scalar_lea.vmem [#allocation2], 225
        %v1717 = vld [vmem:[%s1716] ss:$2 sm:$0xff]
        %s1718 = scalar_lea.vmem [#allocation2], 241
        %v1719 = vld [vmem:[%s1718] ss:$2 sm:$0xff]
        %s1720 = scalar_lea.vmem [#allocation2], 257
        %v1721 = vld [vmem:[%s1720] ss:$2 sm:$0xff]
        %s1722 = scalar_lea.vmem [#allocation2], 273
        %v1723 = vld [vmem:[%s1722] ss:$2 sm:$0xff]
        %s1724 = scalar_lea.vmem [#allocation2], 289
        %v1725 = vld [vmem:[%s1724] ss:$2 sm:$0xff]
        %s1726 = scalar_lea.vmem [#allocation2], 305
        %v1727 = vld [vmem:[%s1726] ss:$2 sm:$0xff]
        %s1728 = scalar_lea.vmem [#allocation2], 321
        %v1729 = vld [vmem:[%s1728] ss:$2 sm:$0xff]
        %s1730 = scalar_lea.vmem [#allocation2], 337
        %v1731 = vld [vmem:[%s1730] ss:$2 sm:$0xff]
        %s1732 = scalar_lea.vmem [#allocation2], 353
        %v1733 = vld [vmem:[%s1732] ss:$2 sm:$0xff]
        %s1734 = scalar_lea.vmem [#allocation2], 369
        %v1735 = vld [vmem:[%s1734] ss:$2 sm:$0xff]
        %s1736 = scalar_lea.vmem [#allocation2], 385
        %v1737 = vld [vmem:[%s1736] ss:$2 sm:$0xff]
        %s1738 = scalar_lea.vmem [#allocation2], 401
        %v1739 = vld [vmem:[%s1738] ss:$2 sm:$0xff]
        %s1740 = scalar_lea.vmem [#allocation2], 417
        %v1741 = vld [vmem:[%s1740] ss:$2 sm:$0xff]
        %s1742 = scalar_lea.vmem [#allocation2], 433
        %v1743 = vld [vmem:[%s1742] ss:$2 sm:$0xff]
        %s1744 = scalar_lea.vmem [#allocation2], 449
        %v1745 = vld [vmem:[%s1744] ss:$2 sm:$0xff]
        %s1746 = scalar_lea.vmem [#allocation2], 465
        %v1747 = vld [vmem:[%s1746] ss:$2 sm:$0xff]
        %s1748 = scalar_lea.vmem [#allocation2], 481
        %v1749 = vld [vmem:[%s1748] ss:$2 sm:$0xff]
        %s1750 = scalar_lea.vmem [#allocation2], 497
        %v1751 = vld [vmem:[%s1750] ss:$2 sm:$0xff]
        %s1752 = scalar_lea.vmem [#allocation2], 513
        %v1753 = vld [vmem:[%s1752] ss:$2 sm:$0xff]
        %s1754 = scalar_lea.vmem [#allocation2], 529
        %v1755 = vld [vmem:[%s1754] ss:$2 sm:$0xff]
        %s1756 = scalar_lea.vmem [#allocation2], 545
        %v1757 = vld [vmem:[%s1756] ss:$2 sm:$0xff]
        %s1758 = scalar_lea.vmem [#allocation2], 561
        %v1759 = vld [vmem:[%s1758] ss:$2 sm:$0xff]
        %s1760 = scalar_lea.vmem [#allocation2], 577
        %v1761 = vld [vmem:[%s1760] ss:$2 sm:$0xff]
        %s1762 = scalar_lea.vmem [#allocation2], 593
        %v1763 = vld [vmem:[%s1762] ss:$2 sm:$0xff]
        %s1764 = scalar_lea.vmem [#allocation2], 609
        %v1765 = vld [vmem:[%s1764] ss:$2 sm:$0xff]
        %s1766 = scalar_lea.vmem [#allocation2], 625
        %v1767 = vld [vmem:[%s1766] ss:$2 sm:$0xff]
        %s1768 = scalar_lea.vmem [#allocation2], 641
        %v1769 = vld [vmem:[%s1768] ss:$2 sm:$0xff]
        %s1770 = scalar_lea.vmem [#allocation2], 657
        %v1771 = vld [vmem:[%s1770] ss:$2 sm:$0xff]
        %s1772 = scalar_lea.vmem [#allocation2], 673
        %v1773 = vld [vmem:[%s1772] ss:$2 sm:$0xff]
        %s1774 = scalar_lea.vmem [#allocation2], 689
        %v1775 = vld [vmem:[%s1774] ss:$2 sm:$0xff]
        %s1776 = scalar_lea.vmem [#allocation2], 705
        %v1777 = vld [vmem:[%s1776] ss:$2 sm:$0xff]
        %s1778 = scalar_lea.vmem [#allocation2], 721
        %v1779 = vld [vmem:[%s1778] ss:$2 sm:$0xff]
        %s1780 = scalar_lea.vmem [#allocation2], 737
        %v1781 = vld [vmem:[%s1780] ss:$2 sm:$0xff]
        %s1782 = scalar_lea.vmem [#allocation2], 753
        %v1783 = vld [vmem:[%s1782] ss:$2 sm:$0xff]
        %s1784 = scalar_lea.vmem [#allocation2], 769
        %v1785 = vld [vmem:[%s1784] ss:$2 sm:$0xff]
        %s1786 = scalar_lea.vmem [#allocation2], 785
        %v1787 = vld [vmem:[%s1786] ss:$2 sm:$0xff]
        %s1788 = scalar_lea.vmem [#allocation2], 801
        %v1789 = vld [vmem:[%s1788] ss:$2 sm:$0xff]
        %s1790 = scalar_lea.vmem [#allocation2], 817
        %v1791 = vld [vmem:[%s1790] ss:$2 sm:$0xff]
        %s1792 = scalar_lea.vmem [#allocation2], 833
        %v1793 = vld [vmem:[%s1792] ss:$2 sm:$0xff]
        %s1794 = scalar_lea.vmem [#allocation2], 849
        %v1795 = vld [vmem:[%s1794] ss:$2 sm:$0xff]
        %s1796 = scalar_lea.vmem [#allocation2], 865
        %v1797 = vld [vmem:[%s1796] ss:$2 sm:$0xff]
        %s1798 = scalar_lea.vmem [#allocation2], 881
        %v1799 = vld [vmem:[%s1798] ss:$2 sm:$0xff]
        %s1800 = scalar_lea.vmem [#allocation2], 897
        %v1801 = vld [vmem:[%s1800] ss:$2 sm:$0x3]
        %v1802 = vmax.f32 %v1575, %v1689
        %v1803 = vmax.f32 %v1577, %v1691
        %v1804 = vmax.f32 %v1579, %v1693
        %v1805 = vmax.f32 %v1581, %v1695
        %v1806 = vmax.f32 %v1583, %v1697
        %v1807 = vmax.f32 %v1585, %v1699
        %v1808 = vmax.f32 %v1587, %v1701
        %v1809 = vmax.f32 %v1589, %v1703
        %v1810 = vmax.f32 %v1591, %v1705
        %v1811 = vmax.f32 %v1593, %v1707
        %v1812 = vmax.f32 %v1595, %v1709
        %v1813 = vmax.f32 %v1597, %v1711
        %v1814 = vmax.f32 %v1599, %v1713
        %v1815 = vmax.f32 %v1601, %v1715
        %v1816 = vmax.f32 %v1603, %v1717
        %v1817 = vmax.f32 %v1605, %v1719
        %v1818 = vmax.f32 %v1607, %v1721
        %v1819 = vmax.f32 %v1609, %v1723
        %v1820 = vmax.f32 %v1611, %v1725
        %v1821 = vmax.f32 %v1613, %v1727
        %v1822 = vmax.f32 %v1615, %v1729
        %v1823 = vmax.f32 %v1617, %v1731
        %v1824 = vmax.f32 %v1619, %v1733
        %v1825 = vmax.f32 %v1621, %v1735
        %v1826 = vmax.f32 %v1623, %v1737
        %v1827 = vmax.f32 %v1625, %v1739
        %v1828 = vmax.f32 %v1627, %v1741
        %v1829 = vmax.f32 %v1629, %v1743
        %v1830 = vmax.f32 %v1631, %v1745
        %v1831 = vmax.f32 %v1633, %v1747
        %v1832 = vmax.f32 %v1635, %v1749
        %v1833 = vmax.f32 %v1637, %v1751
        %v1834 = vmax.f32 %v1639, %v1753
        %v1835 = vmax.f32 %v1641, %v1755
        %v1836 = vmax.f32 %v1643, %v1757
        %v1837 = vmax.f32 %v1645, %v1759
        %v1838 = vmax.f32 %v1647, %v1761
        %v1839 = vmax.f32 %v1649, %v1763
        %v1840 = vmax.f32 %v1651, %v1765
        %v1841 = vmax.f32 %v1653, %v1767
        %v1842 = vmax.f32 %v1655, %v1769
        %v1843 = vmax.f32 %v1657, %v1771
        %v1844 = vmax.f32 %v1659, %v1773
        %v1845 = vmax.f32 %v1661, %v1775
        %v1846 = vmax.f32 %v1663, %v1777
        %v1847 = vmax.f32 %v1665, %v1779
        %v1848 = vmax.f32 %v1667, %v1781
        %v1849 = vmax.f32 %v1669, %v1783
        %v1850 = vmax.f32 %v1671, %v1785
        %v1851 = vmax.f32 %v1673, %v1787
        %v1852 = vmax.f32 %v1675, %v1789
        %v1853 = vmax.f32 %v1677, %v1791
        %v1854 = vmax.f32 %v1679, %v1793
        %v1855 = vmax.f32 %v1681, %v1795
        %v1856 = vmax.f32 %v1683, %v1797
        %v1857 = vmax.f32 %v1685, %v1799
        %v1858 = vmax.f32 %v1687, %v1801
        %1859 = vst.msk [vmem:[#allocation3] sm:$0xff] %vm688, %v1802
        %1860 = vst.msk [vmem:[#allocation3 + $0x8] sm:$0xff] %vm688, %v1803
        %1861 = vst.msk [vmem:[#allocation3 + $0x10] sm:$0xff] %vm688, %v1804
        %1862 = vst.msk [vmem:[#allocation3 + $0x18] sm:$0xff] %vm688, %v1805
        %1863 = vst.msk [vmem:[#allocation3 + $0x20] sm:$0xff] %vm688, %v1806
        %1864 = vst.msk [vmem:[#allocation3 + $0x28] sm:$0xff] %vm688, %v1807
        %1865 = vst.msk [vmem:[#allocation3 + $0x30] sm:$0xff] %vm688, %v1808
        %1866 = vst.msk [vmem:[#allocation3 + $0x38] sm:$0xff] %vm688, %v1809
        %1867 = vst.msk [vmem:[#allocation3 + $0x40] sm:$0xff] %vm688, %v1810
        %1868 = vst.msk [vmem:[#allocation3 + $0x48] sm:$0xff] %vm688, %v1811
        %1869 = vst.msk [vmem:[#allocation3 + $0x50] sm:$0xff] %vm688, %v1812
        %1870 = vst.msk [vmem:[#allocation3 + $0x58] sm:$0xff] %vm688, %v1813
        %1871 = vst.msk [vmem:[#allocation3 + $0x60] sm:$0xff] %vm688, %v1814
        %1872 = vst.msk [vmem:[#allocation3 + $0x68] sm:$0xff] %vm688, %v1815
        %1873 = vst.msk [vmem:[#allocation3 + $0x70] sm:$0xff] %vm688, %v1816
        %1874 = vst.msk [vmem:[#allocation3 + $0x78] sm:$0xff] %vm688, %v1817
        %1875 = vst.msk [vmem:[#allocation3 + $0x80] sm:$0xff] %vm688, %v1818
        %1876 = vst.msk [vmem:[#allocation3 + $0x88] sm:$0xff] %vm688, %v1819
        %1877 = vst.msk [vmem:[#allocation3 + $0x90] sm:$0xff] %vm688, %v1820
        %1878 = vst.msk [vmem:[#allocation3 + $0x98] sm:$0xff] %vm688, %v1821
        %1879 = vst.msk [vmem:[#allocation3 + $0xa0] sm:$0xff] %vm688, %v1822
        %1880 = vst.msk [vmem:[#allocation3 + $0xa8] sm:$0xff] %vm688, %v1823
        %1881 = vst.msk [vmem:[#allocation3 + $0xb0] sm:$0xff] %vm688, %v1824
        %1882 = vst.msk [vmem:[#allocation3 + $0xb8] sm:$0xff] %vm688, %v1825
        %1883 = vst.msk [vmem:[#allocation3 + $0xc0] sm:$0xff] %vm688, %v1826
        %1884 = vst.msk [vmem:[#allocation3 + $0xc8] sm:$0xff] %vm688, %v1827
        %1885 = vst.msk [vmem:[#allocation3 + $0xd0] sm:$0xff] %vm688, %v1828
        %1886 = vst.msk [vmem:[#allocation3 + $0xd8] sm:$0xff] %vm688, %v1829
        %1887 = vst.msk [vmem:[#allocation3 + $0xe0] sm:$0xff] %vm688, %v1830
        %1888 = vst.msk [vmem:[#allocation3 + $0xe8] sm:$0xff] %vm688, %v1831
        %1889 = vst.msk [vmem:[#allocation3 + $0xf0] sm:$0xff] %vm688, %v1832
        %1890 = vst.msk [vmem:[#allocation3 + $0xf8] sm:$0xff] %vm688, %v1833
        %1891 = vst.msk [vmem:[#allocation3 + $0x100] sm:$0xff] %vm688, %v1834
        %1892 = vst.msk [vmem:[#allocation3 + $0x108] sm:$0xff] %vm688, %v1835
        %1893 = vst.msk [vmem:[#allocation3 + $0x110] sm:$0xff] %vm688, %v1836
        %1894 = vst.msk [vmem:[#allocation3 + $0x118] sm:$0xff] %vm688, %v1837
        %1895 = vst.msk [vmem:[#allocation3 + $0x120] sm:$0xff] %vm688, %v1838
        %1896 = vst.msk [vmem:[#allocation3 + $0x128] sm:$0xff] %vm688, %v1839
        %1897 = vst.msk [vmem:[#allocation3 + $0x130] sm:$0xff] %vm688, %v1840
        %1898 = vst.msk [vmem:[#allocation3 + $0x138] sm:$0xff] %vm688, %v1841
        %1899 = vst.msk [vmem:[#allocation3 + $0x140] sm:$0xff] %vm688, %v1842
        %1900 = vst.msk [vmem:[#allocation3 + $0x148] sm:$0xff] %vm688, %v1843
        %1901 = vst.msk [vmem:[#allocation3 + $0x150] sm:$0xff] %vm688, %v1844
        %1902 = vst.msk [vmem:[#allocation3 + $0x158] sm:$0xff] %vm688, %v1845
        %1903 = vst.msk [vmem:[#allocation3 + $0x160] sm:$0xff] %vm688, %v1846
        %1904 = vst.msk [vmem:[#allocation3 + $0x168] sm:$0xff] %vm688, %v1847
        %1905 = vst.msk [vmem:[#allocation3 + $0x170] sm:$0xff] %vm688, %v1848
        %1906 = vst.msk [vmem:[#allocation3 + $0x178] sm:$0xff] %vm688, %v1849
        %1907 = vst.msk [vmem:[#allocation3 + $0x180] sm:$0xff] %vm688, %v1850
        %1908 = vst.msk [vmem:[#allocation3 + $0x188] sm:$0xff] %vm688, %v1851
        %1909 = vst.msk [vmem:[#allocation3 + $0x190] sm:$0xff] %vm688, %v1852
        %1910 = vst.msk [vmem:[#allocation3 + $0x198] sm:$0xff] %vm688, %v1853
        %1911 = vst.msk [vmem:[#allocation3 + $0x1a0] sm:$0xff] %vm688, %v1854
        %1912 = vst.msk [vmem:[#allocation3 + $0x1a8] sm:$0xff] %vm688, %v1855
        %1913 = vst.msk [vmem:[#allocation3 + $0x1b0] sm:$0xff] %vm688, %v1856
        %1914 = vst.msk [vmem:[#allocation3 + $0x1b8] sm:$0xff] %vm688, %v1857
        %vm1915 = vcmask 123904
        %1916 = vst.msk [vmem:[#allocation3 + $0x1c0] sm:$0x3] %vm1915, %v1858
        %1917 = vst.msk [vmem:[#allocation4] sm:$0xff] %vm688, 0
        %1918 = vst.msk [vmem:[#allocation4 + $0x8] sm:$0xff] %vm688, 0
        %1919 = vst.msk [vmem:[#allocation4 + $0x10] sm:$0xff] %vm688, 0
        %1920 = vst.msk [vmem:[#allocation4 + $0x18] sm:$0xff] %vm688, 0
        %1921 = vst.msk [vmem:[#allocation4 + $0x20] sm:$0xff] %vm688, 0
        %1922 = vst.msk [vmem:[#allocation4 + $0x28] sm:$0xff] %vm688, 0
        %1923 = vst.msk [vmem:[#allocation4 + $0x30] sm:$0xff] %vm688, 0
        %1924 = vst.msk [vmem:[#allocation4 + $0x38] sm:$0xff] %vm688, 0
        %1925 = vst.msk [vmem:[#allocation4 + $0x40] sm:$0xff] %vm688, 0
        %1926 = vst.msk [vmem:[#allocation4 + $0x48] sm:$0xff] %vm688, 0
        %1927 = vst.msk [vmem:[#allocation4 + $0x50] sm:$0xff] %vm688, 0
        %1928 = vst.msk [vmem:[#allocation4 + $0x58] sm:$0xff] %vm688, 0
        %1929 = vst.msk [vmem:[#allocation4 + $0x60] sm:$0xff] %vm688, 0
        %1930 = vst.msk [vmem:[#allocation4 + $0x68] sm:$0xff] %vm688, 0
        %1931 = vst.msk [vmem:[#allocation4 + $0x70] sm:$0xff] %vm688, 0
        %1932 = vst.msk [vmem:[#allocation4 + $0x78] sm:$0xff] %vm688, 0
        %1933 = vst.msk [vmem:[#allocation4 + $0x80] sm:$0xff] %vm688, 0
        %1934 = vst.msk [vmem:[#allocation4 + $0x88] sm:$0xff] %vm688, 0
        %1935 = vst.msk [vmem:[#allocation4 + $0x90] sm:$0xff] %vm688, 0
        %1936 = vst.msk [vmem:[#allocation4 + $0x98] sm:$0xff] %vm688, 0
        %1937 = vst.msk [vmem:[#allocation4 + $0xa0] sm:$0xff] %vm688, 0
        %1938 = vst.msk [vmem:[#allocation4 + $0xa8] sm:$0xff] %vm688, 0
        %1939 = vst.msk [vmem:[#allocation4 + $0xb0] sm:$0xff] %vm688, 0
        %1940 = vst.msk [vmem:[#allocation4 + $0xb8] sm:$0xff] %vm688, 0
        %1941 = vst.msk [vmem:[#allocation4 + $0xc0] sm:$0xff] %vm688, 0
        %v1942 = vld [vmem:[#allocation3] sm:$0xff]
        %v1943 = vld [vmem:[#allocation3 + $0x8] sm:$0x7f]
        %v1944 = vld [vmem:[#allocation3 + $0xf] sm:$0xff]
        %v1945 = vld [vmem:[#allocation3 + $0x17] sm:$0x7f]
        %v1946 = vmax.f32 %v1942, %v1944
        %v1947 = vmax.f32 %v1943, %v1945
        %v1948 = vpack.c.bf16 %v1947, %v1946
        %v1950 = vrot.slane %v1948, 3
        %vm1952 = vcmask 130053
        %1953 = vst.msk [vmem:[#allocation4 + $0x10] sm:$0xe0] %vm1952, %v1950
        %vm1954 = vcmask 126976
        %vm1955 = vsmask.f32 4352
        %vm1956 = vmand %vm1954, %vm1955
        %v1957 = vld [vmem:[#allocation4 + $0x18] sm:$0x1f]
        %v1958 = vsel %vm1956, %v1950, %v1957
        %1959 = vst [vmem:[#allocation4 + $0x18] sm:$0x1f] %v1958
        %v1960 = vld [vmem:[#allocation3 + $0x1e] sm:$0xff]
        %v1961 = vld [vmem:[#allocation3 + $0x26] sm:$0x7f]
        %v1962 = vld [vmem:[#allocation3 + $0x2d] sm:$0xff]
        %v1963 = vld [vmem:[#allocation3 + $0x35] sm:$0x7f]
        %v1964 = vmax.f32 %v1960, %v1962
        %v1965 = vmax.f32 %v1961, %v1963
        %v1966 = vpack.c.bf16 %v1965, %v1964
        %v1968 = vrot.slane %v1966, 1
        %vm1970 = vcmask 130055
        %1971 = vst.msk [vmem:[#allocation4 + $0x18] sm:$0x80] %vm1970, %v1968
        %vm1972 = vcmask 129024
        %vm1973 = vsmask.f32 6400
        %vm1974 = vmand %vm1972, %vm1973
        %v1975 = vld [vmem:[#allocation4 + $0x20] sm:$0x7f]
        %v1976 = vsel %vm1974, %v1968, %v1975
        %1977 = vst [vmem:[#allocation4 + $0x20] sm:$0x7f] %v1976
        %v1978 = vld [vmem:[#allocation3 + $0x3c] sm:$0xff]
        %v1979 = vld [vmem:[#allocation3 + $0x44] sm:$0x7f]
        %v1980 = vld [vmem:[#allocation3 + $0x4b] sm:$0xff]
        %v1981 = vld [vmem:[#allocation3 + $0x53] sm:$0x7f]
        %v1982 = vmax.f32 %v1978, %v1980
        %v1983 = vmax.f32 %v1979, %v1981
        %v1984 = vpack.c.bf16 %v1983, %v1982
        %v1986 = vrot.slane %v1984, 7
        %vm1988 = vcmask 130049
        %1989 = vst.msk [vmem:[#allocation4 + $0x28] sm:$0xfe] %vm1988, %v1986
        %vm1990 = vcmask 122880
        %vm1991 = vsmask.f32 256
        %vm1992 = vmand %vm1990, %vm1991
        %v1993 = vld [vmem:[#allocation4 + $0x30] sm:$0x1]
        %v1994 = vsel %vm1992, %v1986, %v1993
        %1995 = vst [vmem:[#allocation4 + $0x30] sm:$0x1] %v1994
        %v1996 = vld [vmem:[#allocation3 + $0x5a] sm:$0xff]
        %v1997 = vld [vmem:[#allocation3 + $0x62] sm:$0x7f]
        %v1998 = vld [vmem:[#allocation3 + $0x69] sm:$0xff]
        %v1999 = vld [vmem:[#allocation3 + $0x71] sm:$0x7f]
        %v2000 = vmax.f32 %v1996, %v1998
        %v2001 = vmax.f32 %v1997, %v1999
        %v2002 = vpack.c.bf16 %v2001, %v2000
        %v2004 = vrot.slane %v2002, 5
        %vm2006 = vcmask 130051
        %2007 = vst.msk [vmem:[#allocation4 + $0x30] sm:$0xf8] %vm2006, %v2004
        %vm2008 = vcmask 124928
        %vm2009 = vsmask.f32 2304
        %vm2010 = vmand %vm2008, %vm2009
        %v2011 = vld [vmem:[#allocation4 + $0x38] sm:$0x7]
        %v2012 = vsel %vm2010, %v2004, %v2011
        %2013 = vst [vmem:[#allocation4 + $0x38] sm:$0x7] %v2012
        %v2014 = vld [vmem:[#allocation3 + $0x78] sm:$0xff]
        %v2015 = vld [vmem:[#allocation3 + $0x80] sm:$0x7f]
        %v2016 = vld [vmem:[#allocation3 + $0x87] sm:$0xff]
        %v2017 = vld [vmem:[#allocation3 + $0x8f] sm:$0x7f]
        %v2018 = vmax.f32 %v2014, %v2016
        %v2019 = vmax.f32 %v2015, %v2017
        %v2020 = vpack.c.bf16 %v2019, %v2018
        %v2022 = vrot.slane %v2020, 3
        %2024 = vst.msk [vmem:[#allocation4 + $0x38] sm:$0xe0] %vm1952, %v2022
        %v2025 = vld [vmem:[#allocation4 + $0x40] sm:$0x1f]
        %v2026 = vsel %vm1956, %v2022, %v2025
        %2027 = vst [vmem:[#allocation4 + $0x40] sm:$0x1f] %v2026
        %v2028 = vld [vmem:[#allocation3 + $0x96] sm:$0xff]
        %v2029 = vld [vmem:[#allocation3 + $0x9e] sm:$0x7f]
        %v2030 = vld [vmem:[#allocation3 + $0xa5] sm:$0xff]
        %v2031 = vld [vmem:[#allocation3 + $0xad] sm:$0x7f]
        %v2032 = vmax.f32 %v2028, %v2030
        %v2033 = vmax.f32 %v2029, %v2031
        %v2034 = vpack.c.bf16 %v2033, %v2032
        %v2036 = vrot.slane %v2034, 1
        %2038 = vst.msk [vmem:[#allocation4 + $0x40] sm:$0x80] %vm1970, %v2036
        %v2039 = vld [vmem:[#allocation4 + $0x48] sm:$0x7f]
        %v2040 = vsel %vm1974, %v2036, %v2039
        %2041 = vst [vmem:[#allocation4 + $0x48] sm:$0x7f] %v2040
        %v2042 = vld [vmem:[#allocation3 + $0xb4] sm:$0xff]
        %v2043 = vld [vmem:[#allocation3 + $0xbc] sm:$0x7f]
        %v2044 = vld [vmem:[#allocation3 + $0xc3] sm:$0xff]
        %v2045 = vld [vmem:[#allocation3 + $0xcb] sm:$0x7f]
        %v2046 = vmax.f32 %v2042, %v2044
        %v2047 = vmax.f32 %v2043, %v2045
        %v2048 = vpack.c.bf16 %v2047, %v2046
        %v2050 = vrot.slane %v2048, 7
        %2052 = vst.msk [vmem:[#allocation4 + $0x50] sm:$0xfe] %vm1988, %v2050
        %v2053 = vld [vmem:[#allocation4 + $0x58] sm:$0x1]
        %v2054 = vsel %vm1992, %v2050, %v2053
        %2055 = vst [vmem:[#allocation4 + $0x58] sm:$0x1] %v2054
        %v2056 = vld [vmem:[#allocation3 + $0xd2] sm:$0xff]
        %v2057 = vld [vmem:[#allocation3 + $0xda] sm:$0x7f]
        %v2058 = vld [vmem:[#allocation3 + $0xe1] sm:$0xff]
        %v2059 = vld [vmem:[#allocation3 + $0xe9] sm:$0x7f]
        %v2060 = vmax.f32 %v2056, %v2058
        %v2061 = vmax.f32 %v2057, %v2059
        %v2062 = vpack.c.bf16 %v2061, %v2060
        %v2064 = vrot.slane %v2062, 5
        %2066 = vst.msk [vmem:[#allocation4 + $0x58] sm:$0xf8] %vm2006, %v2064
        %v2067 = vld [vmem:[#allocation4 + $0x60] sm:$0x7]
        %v2068 = vsel %vm2010, %v2064, %v2067
        %2069 = vst [vmem:[#allocation4 + $0x60] sm:$0x7] %v2068
        %v2070 = vld [vmem:[#allocation3 + $0xf0] sm:$0xff]
        %v2071 = vld [vmem:[#allocation3 + $0xf8] sm:$0x7f]
        %v2072 = vld [vmem:[#allocation3 + $0xff] sm:$0xff]
        %v2073 = vld [vmem:[#allocation3 + $0x107] sm:$0x7f]
        %v2074 = vmax.f32 %v2070, %v2072
        %v2075 = vmax.f32 %v2071, %v2073
        %v2076 = vpack.c.bf16 %v2075, %v2074
        %v2078 = vrot.slane %v2076, 3
        %2080 = vst.msk [vmem:[#allocation4 + $0x60] sm:$0xe0] %vm1952, %v2078
        %v2081 = vld [vmem:[#allocation4 + $0x68] sm:$0x1f]
        %v2082 = vsel %vm1956, %v2078, %v2081
        %2083 = vst [vmem:[#allocation4 + $0x68] sm:$0x1f] %v2082
        %v2084 = vld [vmem:[#allocation3 + $0x10e] sm:$0xff]
        %v2085 = vld [vmem:[#allocation3 + $0x116] sm:$0x7f]
        %v2086 = vld [vmem:[#allocation3 + $0x11d] sm:$0xff]
        %v2087 = vld [vmem:[#allocation3 + $0x125] sm:$0x7f]
        %v2088 = vmax.f32 %v2084, %v2086
        %v2089 = vmax.f32 %v2085, %v2087
        %v2090 = vpack.c.bf16 %v2089, %v2088
        %v2092 = vrot.slane %v2090, 1
        %2094 = vst.msk [vmem:[#allocation4 + $0x68] sm:$0x80] %vm1970, %v2092
        %v2095 = vld [vmem:[#allocation4 + $0x70] sm:$0x7f]
        %v2096 = vsel %vm1974, %v2092, %v2095
        %2097 = vst [vmem:[#allocation4 + $0x70] sm:$0x7f] %v2096
        %v2098 = vld [vmem:[#allocation3 + $0x12c] sm:$0xff]
        %v2099 = vld [vmem:[#allocation3 + $0x134] sm:$0x7f]
        %v2100 = vld [vmem:[#allocation3 + $0x13b] sm:$0xff]
        %v2101 = vld [vmem:[#allocation3 + $0x143] sm:$0x7f]
        %v2102 = vmax.f32 %v2098, %v2100
        %v2103 = vmax.f32 %v2099, %v2101
        %v2104 = vpack.c.bf16 %v2103, %v2102
        %v2106 = vrot.slane %v2104, 7
        %2108 = vst.msk [vmem:[#allocation4 + $0x78] sm:$0xfe] %vm1988, %v2106
        %v2109 = vld [vmem:[#allocation4 + $0x80] sm:$0x1]
        %v2110 = vsel %vm1992, %v2106, %v2109
        %2111 = vst [vmem:[#allocation4 + $0x80] sm:$0x1] %v2110
        %v2112 = vld [vmem:[#allocation3 + $0x14a] sm:$0xff]
        %v2113 = vld [vmem:[#allocation3 + $0x152] sm:$0x7f]
        %v2114 = vld [vmem:[#allocation3 + $0x159] sm:$0xff]
        %v2115 = vld [vmem:[#allocation3 + $0x161] sm:$0x7f]
        %v2116 = vmax.f32 %v2112, %v2114
        %v2117 = vmax.f32 %v2113, %v2115
        %v2118 = vpack.c.bf16 %v2117, %v2116
        %v2120 = vrot.slane %v2118, 5
        %2122 = vst.msk [vmem:[#allocation4 + $0x80] sm:$0xf8] %vm2006, %v2120
        %v2123 = vld [vmem:[#allocation4 + $0x88] sm:$0x7]
        %v2124 = vsel %vm2010, %v2120, %v2123
        %2125 = vst [vmem:[#allocation4 + $0x88] sm:$0x7] %v2124
        %v2126 = vld [vmem:[#allocation3 + $0x168] sm:$0xff]
        %v2127 = vld [vmem:[#allocation3 + $0x170] sm:$0x7f]
        %v2128 = vld [vmem:[#allocation3 + $0x177] sm:$0xff]
        %v2129 = vld [vmem:[#allocation3 + $0x17f] sm:$0x7f]
        %v2130 = vmax.f32 %v2126, %v2128
        %v2131 = vmax.f32 %v2127, %v2129
        %v2132 = vpack.c.bf16 %v2131, %v2130
        %v2134 = vrot.slane %v2132, 3
        %2136 = vst.msk [vmem:[#allocation4 + $0x88] sm:$0xe0] %vm1952, %v2134
        %v2137 = vld [vmem:[#allocation4 + $0x90] sm:$0x1f]
        %v2138 = vsel %vm1956, %v2134, %v2137
        %2139 = vst [vmem:[#allocation4 + $0x90] sm:$0x1f] %v2138
        %v2140 = vld [vmem:[#allocation3 + $0x186] sm:$0xff]
        %v2141 = vld [vmem:[#allocation3 + $0x18e] sm:$0x7f]
        %v2142 = vld [vmem:[#allocation3 + $0x195] sm:$0xff]
        %v2143 = vld [vmem:[#allocation3 + $0x19d] sm:$0x7f]
        %v2144 = vmax.f32 %v2140, %v2142
        %v2145 = vmax.f32 %v2141, %v2143
        %v2146 = vpack.c.bf16 %v2145, %v2144
        %v2148 = vrot.slane %v2146, 1
        %2150 = vst.msk [vmem:[#allocation4 + $0x90] sm:$0x80] %vm1970, %v2148
        %v2151 = vld [vmem:[#allocation4 + $0x98] sm:$0x7f]
        %v2152 = vsel %vm1974, %v2148, %v2151
        %2153 = vst [vmem:[#allocation4 + $0x98] sm:$0x7f] %v2152
        %v2154 = vld [vmem:[#allocation3 + $0x1a4] sm:$0xff]
        %v2155 = vld [vmem:[#allocation3 + $0x1ac] sm:$0x7f]
        %v2156 = vld [vmem:[#allocation3 + $0x1b3] sm:$0xff]
        %v2157 = vld [vmem:[#allocation3 + $0x1bb] sm:$0x7f]
        %v2158 = vmax.f32 %v2154, %v2156
        %v2159 = vmax.f32 %v2155, %v2157
        %v2160 = vpack.c.bf16 %v2159, %v2158
        %v2162 = vrot.slane %v2160, 7
        %2164 = vst.msk [vmem:[#allocation4 + $0xa0] sm:$0xfe] %vm1988, %v2162
        %v2165 = vld [vmem:[#allocation4 + $0xa8] sm:$0x1]
        %v2166 = vsel %vm1992, %v2162, %v2165
        %2167 = vst [vmem:[#allocation4 + $0xa8] sm:$0x1] %v2166
        %v2168 = vld [vmem:[#allocation4] sm:$0xff]
        %v2169 = vld [vmem:[#allocation4 + $0x8] sm:$0xff]
        %v2170 = vld [vmem:[#allocation4 + $0x10] sm:$0xff]
        %v2171 = vld [vmem:[#allocation4 + $0x18] sm:$0xff]
        %v2172 = vld [vmem:[#allocation4 + $0x20] sm:$0xff]
        %v2173 = vld [vmem:[#allocation4 + $0x28] sm:$0xff]
        %v2174 = vld [vmem:[#allocation4 + $0x30] sm:$0xff]
        %v2175 = vld [vmem:[#allocation4 + $0x38] sm:$0xff]
        %v2176 = vld [vmem:[#allocation4 + $0x40] sm:$0xff]
        %v2177 = vld [vmem:[#allocation4 + $0x48] sm:$0xff]
        %v2178 = vld [vmem:[#allocation4 + $0x50] sm:$0xff]
        %v2179 = vld [vmem:[#allocation4 + $0x58] sm:$0xff]
        %v2180 = vld [vmem:[#allocation4 + $0x60] sm:$0xff]
        %v2181 = vld [vmem:[#allocation4 + $0x68] sm:$0xff]
        %v2182 = vld [vmem:[#allocation4 + $0x70] sm:$0xff]
        %v2183 = vld [vmem:[#allocation4 + $0x78] sm:$0xff]
        %v2184 = vld [vmem:[#allocation4 + $0x80] sm:$0xff]
        %v2185 = vld [vmem:[#allocation4 + $0x88] sm:$0xff]
        %v2186 = vld [vmem:[#allocation4 + $0x90] sm:$0xff]
        %v2187 = vld [vmem:[#allocation4 + $0x98] sm:$0xff]
        %v2188 = vld [vmem:[#allocation4 + $0xa0] sm:$0xff]
        %v2189 = vld [vmem:[#allocation4 + $0xa8] sm:$0x3]
        %v2190 = vld [vmem:[%s3] sm:$0xf]
        %v2191 = vld [vmem:[%s3 + $0x4] sm:$0xf]
        %v2192 = vld [vmem:[#allocation4 + $0xa8] sm:$0x7]
        %s2193 = scalar_lea.vmem %s3, 8
        %v2194 = vld [vmem:[%s2193] sm:$0xf]
        %v2195 = vld [vmem:[%s2193 + $0x4] sm:$0xf]
        %vm2196 = vsmask.f32 7424
        %v2198 = vshrl.u32 %v2168, 16
        %v2200 = vshll.u32 %v2168, 16
        %v2202 = vrot.slane %v2200, 1
        %v2203 = vor.u32 %v2198, %v2202
        %v2205 = vshll.u32 %v2169, 16
        %v2207 = vrot.slane %v2205, 1
        %v2208 = vsel %vm2196, %v2203, %v2207
        %v2209 = vshrl.u32 %v2169, 16
        %v2211 = vor.u32 %v2209, %v2207
        %v2213 = vshll.u32 %v2170, 16
        %v2215 = vrot.slane %v2213, 1
        %v2216 = vsel %vm2196, %v2211, %v2215
        %v2217 = vshrl.u32 %v2170, 16
        %v2219 = vor.u32 %v2217, %v2215
        %v2221 = vshll.u32 %v2171, 16
        %v2223 = vrot.slane %v2221, 1
        %v2224 = vsel %vm2196, %v2219, %v2223
        %v2225 = vshrl.u32 %v2171, 16
        %v2227 = vor.u32 %v2225, %v2223
        %v2229 = vshll.u32 %v2172, 16
        %v2231 = vrot.slane %v2229, 1
        %v2232 = vsel %vm2196, %v2227, %v2231
        %v2233 = vshrl.u32 %v2172, 16
        %v2235 = vor.u32 %v2233, %v2231
        %v2237 = vshll.u32 %v2173, 16
        %v2239 = vrot.slane %v2237, 1
        %v2240 = vsel %vm2196, %v2235, %v2239
        %v2241 = vshrl.u32 %v2173, 16
        %v2243 = vor.u32 %v2241, %v2239
        %v2245 = vshll.u32 %v2174, 16
        %v2247 = vrot.slane %v2245, 1
        %v2248 = vsel %vm2196, %v2243, %v2247
        %v2249 = vshrl.u32 %v2174, 16
        %v2251 = vor.u32 %v2249, %v2247
        %v2253 = vshll.u32 %v2175, 16
        %v2255 = vrot.slane %v2253, 1
        %v2256 = vsel %vm2196, %v2251, %v2255
        %v2257 = vshrl.u32 %v2175, 16
        %v2259 = vor.u32 %v2257, %v2255
        %v2261 = vshll.u32 %v2176, 16
        %v2263 = vrot.slane %v2261, 1
        %v2264 = vsel %vm2196, %v2259, %v2263
        %v2265 = vshrl.u32 %v2176, 16
        %v2267 = vor.u32 %v2265, %v2263
        %v2269 = vshll.u32 %v2177, 16
        %v2271 = vrot.slane %v2269, 1
        %v2272 = vsel %vm2196, %v2267, %v2271
        %v2273 = vshrl.u32 %v2177, 16
        %v2275 = vor.u32 %v2273, %v2271
        %v2277 = vshll.u32 %v2178, 16
        %v2279 = vrot.slane %v2277, 1
        %v2280 = vsel %vm2196, %v2275, %v2279
        %v2281 = vshrl.u32 %v2178, 16
        %v2283 = vor.u32 %v2281, %v2279
        %v2285 = vshll.u32 %v2179, 16
        %v2287 = vrot.slane %v2285, 1
        %v2288 = vsel %vm2196, %v2283, %v2287
        %v2289 = vshrl.u32 %v2179, 16
        %v2291 = vor.u32 %v2289, %v2287
        %v2293 = vshll.u32 %v2180, 16
        %v2295 = vrot.slane %v2293, 1
        %v2296 = vsel %vm2196, %v2291, %v2295
        %v2297 = vshrl.u32 %v2180, 16
        %v2299 = vor.u32 %v2297, %v2295
        %v2301 = vshll.u32 %v2181, 16
        %v2303 = vrot.slane %v2301, 1
        %v2304 = vsel %vm2196, %v2299, %v2303
        %v2305 = vshrl.u32 %v2181, 16
        %v2307 = vor.u32 %v2305, %v2303
        %v2309 = vshll.u32 %v2182, 16
        %v2311 = vrot.slane %v2309, 1
        %v2312 = vsel %vm2196, %v2307, %v2311
        %v2313 = vshrl.u32 %v2182, 16
        %v2315 = vor.u32 %v2313, %v2311
        %v2317 = vshll.u32 %v2183, 16
        %v2319 = vrot.slane %v2317, 1
        %v2320 = vsel %vm2196, %v2315, %v2319
        %v2321 = vshrl.u32 %v2183, 16
        %v2323 = vor.u32 %v2321, %v2319
        %v2325 = vshll.u32 %v2184, 16
        %v2327 = vrot.slane %v2325, 1
        %v2328 = vsel %vm2196, %v2323, %v2327
        %v2329 = vshrl.u32 %v2184, 16
        %v2331 = vor.u32 %v2329, %v2327
        %v2333 = vshll.u32 %v2185, 16
        %v2335 = vrot.slane %v2333, 1
        %v2336 = vsel %vm2196, %v2331, %v2335
        %v2337 = vshrl.u32 %v2185, 16
        %v2339 = vor.u32 %v2337, %v2335
        %v2341 = vshll.u32 %v2186, 16
        %v2343 = vrot.slane %v2341, 1
        %v2344 = vsel %vm2196, %v2339, %v2343
        %v2345 = vshrl.u32 %v2186, 16
        %v2347 = vor.u32 %v2345, %v2343
        %v2349 = vshll.u32 %v2187, 16
        %v2351 = vrot.slane %v2349, 1
        %v2352 = vsel %vm2196, %v2347, %v2351
        %v2353 = vshrl.u32 %v2187, 16
        %v2355 = vor.u32 %v2353, %v2351
        %v2357 = vshll.u32 %v2188, 16
        %v2359 = vrot.slane %v2357, 1
        %v2360 = vsel %vm2196, %v2355, %v2359
        %v2361 = vshrl.u32 %v2188, 16
        %v2363 = vor.u32 %v2361, %v2359
        %v2365 = vshll.u32 %v2192, 16
        %v2367 = vrot.slane %v2365, 1
        %v2368 = vsel %vm2196, %v2363, %v2367
        %v2369 = vshrl.u32 %v2192, 16
        %v2371 = vor.u32 %v2369, %v2367
        %v2374 = vunpack.c.l.b16 %v2194
        %v2375 = vunpack.c.l.b16 %v2195
        %v2376 = vpack.c.b16 %v2375, %v2374
        %v2379 = vsel %vm688, %v2208, 0
        %v2382 = vsel %vm688, %v2216, 0
        %v2385 = vsel %vm688, %v2224, 0
        %v2388 = vsel %vm688, %v2232, 0
        %v2391 = vsel %vm688, %v2240, 0
        %v2394 = vsel %vm688, %v2248, 0
        %v2397 = vsel %vm688, %v2256, 0
        %v2400 = vsel %vm688, %v2264, 0
        %v2403 = vsel %vm688, %v2272, 0
        %v2406 = vsel %vm688, %v2280, 0
        %v2409 = vsel %vm688, %v2288, 0
        %v2412 = vsel %vm688, %v2296, 0
        %v2415 = vsel %vm688, %v2304, 0
        %v2418 = vsel %vm688, %v2312, 0
        %v2421 = vsel %vm688, %v2320, 0
        %v2424 = vsel %vm688, %v2328, 0
        %v2427 = vsel %vm688, %v2336, 0
        %v2430 = vsel %vm688, %v2344, 0
        %v2433 = vsel %vm688, %v2352, 0
        %v2436 = vsel %vm688, %v2360, 0
        %v2439 = vsel %vm688, %v2368, 0
        %v2442 = vsel %vm688, %v2371, 0
        %2444 = vmatprep.subr.bf16.mxu0 0
        %2445 = vmatpush1.bf16.msra.mxu0 %v2376
        %2446 = vmatprep.subr.bf16.mxu0 0
        %2447 = vmatpush1.bf16.msra.mxu0 0
        %2448 = vmatprep.subr.bf16.mxu0 0
        %2449 = vmatpush1.bf16.msra.mxu0 0
        %2450 = vmatprep.subr.bf16.mxu0 0
        %2451 = vmatpush1.bf16.msra.mxu0 0
        %2452 = vmatprep.subr.bf16.mxu0 0
        %2453 = vmatpush1.bf16.msra.mxu0 0
        %2454 = vmatprep.subr.bf16.mxu0 0
        %2455 = vmatpush1.bf16.msra.mxu0 0
        %2456 = vmatprep.subr.bf16.mxu0 0
        %2457 = vmatpush1.bf16.msra.mxu0 0
        %2458 = vmatprep.subr.bf16.mxu0 0
        %2459 = vmatpush1.bf16.msra.mxu0 0
        %2460 = vmatprep.subr.bf16.mxu0 0
        %2461 = vmatpush1.bf16.msra.mxu0 0
        %2462 = vmatprep.subr.bf16.mxu0 0
        %2463 = vmatpush1.bf16.msra.mxu0 0
        %2464 = vmatprep.subr.bf16.mxu0 0
        %2465 = vmatpush1.bf16.msra.mxu0 0
        %2466 = vmatprep.subr.bf16.mxu0 0
        %2467 = vmatpush1.bf16.msra.mxu0 0
        %2468 = vmatprep.subr.bf16.mxu0 0
        %2469 = vmatpush1.bf16.msra.mxu0 0
        %2470 = vmatprep.subr.bf16.mxu0 0
        %2471 = vmatpush1.bf16.msra.mxu0 0
        %2472 = vmatprep.subr.bf16.mxu0 0
        %2473 = vmatpush1.bf16.msra.mxu0 0
        %2474 = vmatprep.subr.bf16.mxu0 0
        %2475 = vmatpush1.bf16.msra.mxu0 0
        %2476 = vmatprep.mubr.bf16.mxu0 0
        %2477 = vmatmul.mubr.bf16.gmra.mrb[0].mxu0 %v2379
        %v2478 = vpop.f32.mrb[0].mxu0
        %v2479 = vadd.f32 0.0, %v2478
        %v2480 = vpop.f32.mrb[0].mxu0
        %v2481 = vpop.f32.mrb[0].mxu0
        %v2482 = vadd.f32 0.0, %v2481
        %v2483 = vpop.f32.mrb[0].mxu0
        %2484 = vmatprep.mubr.bf16.mxu0 0
        %2485 = vmatmul.mubr.bf16.gmra.mrb[0].mxu0 %v2382
        %v2486 = vpop.f32.mrb[0].mxu0
        %v2487 = vadd.f32 0.0, %v2486
        %v2488 = vpop.f32.mrb[0].mxu0
        %v2489 = vpop.f32.mrb[0].mxu0
        %v2490 = vadd.f32 0.0, %v2489
        %v2491 = vpop.f32.mrb[0].mxu0
        %2492 = vmatprep.mubr.bf16.mxu0 0
        %2493 = vmatmul.mubr.bf16.gmra.mrb[0].mxu0 %v2385
        %v2494 = vpop.f32.mrb[0].mxu0
        %v2495 = vadd.f32 0.0, %v2494
        %v2496 = vpop.f32.mrb[0].mxu0
        %v2497 = vpop.f32.mrb[0].mxu0
        %v2498 = vadd.f32 0.0, %v2497
        %v2499 = vpop.f32.mrb[0].mxu0
        %2500 = vmatprep.mubr.bf16.mxu0 0
        %2501 = vmatmul.mubr.bf16.gmra.mrb[0].mxu0 %v2388
        %v2502 = vpop.f32.mrb[0].mxu0
        %v2503 = vadd.f32 0.0, %v2502
        %v2504 = vpop.f32.mrb[0].mxu0
        %v2505 = vpop.f32.mrb[0].mxu0
        %v2506 = vadd.f32 0.0, %v2505
        %v2507 = vpop.f32.mrb[0].mxu0
        %2508 = vmatprep.mubr.bf16.mxu0 0
        %2509 = vmatmul.mubr.bf16.gmra.mrb[0].mxu0 %v2391
        %v2510 = vpop.f32.mrb[0].mxu0
        %v2511 = vadd.f32 0.0, %v2510
        %v2512 = vpop.f32.mrb[0].mxu0
        %v2513 = vpop.f32.mrb[0].mxu0
        %v2514 = vadd.f32 0.0, %v2513
        %v2515 = vpop.f32.mrb[0].mxu0
        %2516 = vmatprep.mubr.bf16.mxu0 0
        %2517 = vmatmul.mubr.bf16.gmra.mrb[0].mxu0 %v2394
        %v2518 = vpop.f32.mrb[0].mxu0
        %v2519 = vadd.f32 0.0, %v2518
        %v2520 = vpop.f32.mrb[0].mxu0
        %v2521 = vpop.f32.mrb[0].mxu0
        %v2522 = vadd.f32 0.0, %v2521
        %v2523 = vpop.f32.mrb[0].mxu0
        %2524 = vmatprep.mubr.bf16.mxu0 0
        %2525 = vmatmul.mubr.bf16.gmra.mrb[0].mxu0 %v2397
        %v2526 = vpop.f32.mrb[0].mxu0
        %v2527 = vadd.f32 0.0, %v2526
        %v2528 = vpop.f32.mrb[0].mxu0
        %v2529 = vpop.f32.mrb[0].mxu0
        %v2530 = vadd.f32 0.0, %v2529
        %v2531 = vpop.f32.mrb[0].mxu0
        %2532 = vmatprep.mubr.bf16.mxu0 0
        %2533 = vmatmul.mubr.bf16.gmra.mrb[0].mxu0 %v2400
        %v2534 = vpop.f32.mrb[0].mxu0
        %v2535 = vadd.f32 0.0, %v2534
        %v2536 = vpop.f32.mrb[0].mxu0
        %v2537 = vpop.f32.mrb[0].mxu0
        %v2538 = vadd.f32 0.0, %v2537
        %v2539 = vpop.f32.mrb[0].mxu0
        %2540 = vmatprep.mubr.bf16.mxu0 0
        %2541 = vmatmul.mubr.bf16.gmra.mrb[0].mxu0 %v2403
        %v2542 = vpop.f32.mrb[0].mxu0
        %v2543 = vadd.f32 0.0, %v2542
        %v2544 = vpop.f32.mrb[0].mxu0
        %v2545 = vpop.f32.mrb[0].mxu0
        %v2546 = vadd.f32 0.0, %v2545
        %v2547 = vpop.f32.mrb[0].mxu0
        %2548 = vmatprep.mubr.bf16.mxu0 0
        %2549 = vmatmul.mubr.bf16.gmra.mrb[0].mxu0 %v2406
        %v2550 = vpop.f32.mrb[0].mxu0
        %v2551 = vadd.f32 0.0, %v2550
        %v2552 = vpop.f32.mrb[0].mxu0
        %v2553 = vpop.f32.mrb[0].mxu0
        %v2554 = vadd.f32 0.0, %v2553
        %v2555 = vpop.f32.mrb[0].mxu0
        %2556 = vmatprep.mubr.bf16.mxu0 0
        %2557 = vmatmul.mubr.bf16.gmra.mrb[0].mxu0 %v2409
        %v2558 = vpop.f32.mrb[0].mxu0
        %v2559 = vadd.f32 0.0, %v2558
        %v2560 = vpop.f32.mrb[0].mxu0
        %v2561 = vpop.f32.mrb[0].mxu0
        %v2562 = vadd.f32 0.0, %v2561
        %v2563 = vpop.f32.mrb[0].mxu0
        %2564 = vmatprep.mubr.bf16.mxu0 0
        %2565 = vmatmul.mubr.bf16.gmra.mrb[0].mxu0 %v2412
        %v2566 = vpop.f32.mrb[0].mxu0
        %v2567 = vadd.f32 0.0, %v2566
        %v2568 = vpop.f32.mrb[0].mxu0
        %v2569 = vpop.f32.mrb[0].mxu0
        %v2570 = vadd.f32 0.0, %v2569
        %v2571 = vpop.f32.mrb[0].mxu0
        %2572 = vmatprep.mubr.bf16.mxu0 0
        %2573 = vmatmul.mubr.bf16.gmra.mrb[0].mxu0 %v2415
        %v2574 = vpop.f32.mrb[0].mxu0
        %v2575 = vadd.f32 0.0, %v2574
        %v2576 = vpop.f32.mrb[0].mxu0
        %v2577 = vpop.f32.mrb[0].mxu0
        %v2578 = vadd.f32 0.0, %v2577
        %v2579 = vpop.f32.mrb[0].mxu0
        %2580 = vmatprep.mubr.bf16.mxu0 0
        %2581 = vmatmul.mubr.bf16.gmra.mrb[0].mxu0 %v2418
        %v2582 = vpop.f32.mrb[0].mxu0
        %v2583 = vadd.f32 0.0, %v2582
        %v2584 = vpop.f32.mrb[0].mxu0
        %v2585 = vpop.f32.mrb[0].mxu0
        %v2586 = vadd.f32 0.0, %v2585
        %v2587 = vpop.f32.mrb[0].mxu0
        %2588 = vmatprep.mubr.bf16.mxu0 0
        %2589 = vmatmul.mubr.bf16.gmra.mrb[0].mxu0 %v2421
        %v2590 = vpop.f32.mrb[0].mxu0
        %v2591 = vadd.f32 0.0, %v2590
        %v2592 = vpop.f32.mrb[0].mxu0
        %v2593 = vpop.f32.mrb[0].mxu0
        %v2594 = vadd.f32 0.0, %v2593
        %v2595 = vpop.f32.mrb[0].mxu0
        %2596 = vmatprep.mubr.bf16.mxu0 0
        %2597 = vmatmul.mubr.bf16.gmra.mrb[0].mxu0 %v2424
        %v2598 = vpop.f32.mrb[0].mxu0
        %v2599 = vadd.f32 0.0, %v2598
        %v2600 = vpop.f32.mrb[0].mxu0
        %v2601 = vpop.f32.mrb[0].mxu0
        %v2602 = vadd.f32 0.0, %v2601
        %v2603 = vpop.f32.mrb[0].mxu0
        %2604 = vmatprep.mubr.bf16.mxu0 0
        %2605 = vmatmul.mubr.bf16.gmra.mrb[0].mxu0 %v2427
        %v2606 = vpop.f32.mrb[0].mxu0
        %v2607 = vadd.f32 0.0, %v2606
        %v2608 = vpop.f32.mrb[0].mxu0
        %v2609 = vpop.f32.mrb[0].mxu0
        %v2610 = vadd.f32 0.0, %v2609
        %v2611 = vpop.f32.mrb[0].mxu0
        %2612 = vmatprep.mubr.bf16.mxu0 0
        %2613 = vmatmul.mubr.bf16.gmra.mrb[0].mxu0 %v2430
        %v2614 = vpop.f32.mrb[0].mxu0
        %v2615 = vadd.f32 0.0, %v2614
        %v2616 = vpop.f32.mrb[0].mxu0
        %v2617 = vpop.f32.mrb[0].mxu0
        %v2618 = vadd.f32 0.0, %v2617
        %v2619 = vpop.f32.mrb[0].mxu0
        %2620 = vmatprep.mubr.bf16.mxu0 0
        %2621 = vmatmul.mubr.bf16.gmra.mrb[0].mxu0 %v2433
        %v2622 = vpop.f32.mrb[0].mxu0
        %v2623 = vadd.f32 0.0, %v2622
        %v2624 = vpop.f32.mrb[0].mxu0
        %v2625 = vpop.f32.mrb[0].mxu0
        %v2626 = vadd.f32 0.0, %v2625
        %v2627 = vpop.f32.mrb[0].mxu0
        %2628 = vmatprep.mubr.bf16.mxu0 0
        %2629 = vmatmul.mubr.bf16.gmra.mrb[0].mxu0 %v2436
        %v2630 = vpop.f32.mrb[0].mxu0
        %v2631 = vadd.f32 0.0, %v2630
        %v2632 = vpop.f32.mrb[0].mxu0
        %v2633 = vpop.f32.mrb[0].mxu0
        %v2634 = vadd.f32 0.0, %v2633
        %v2635 = vpop.f32.mrb[0].mxu0
        %2636 = vmatprep.mubr.bf16.mxu0 0
        %2637 = vmatmul.mubr.bf16.gmra.mrb[0].mxu0 %v2439
        %v2638 = vpop.f32.mrb[0].mxu0
        %v2639 = vadd.f32 0.0, %v2638
        %v2640 = vpop.f32.mrb[0].mxu0
        %v2641 = vpop.f32.mrb[0].mxu0
        %v2642 = vadd.f32 0.0, %v2641
        %v2643 = vpop.f32.mrb[0].mxu0
        %2644 = vmatprep.mubr.bf16.mxu0 0
        %2645 = vmatmul.mubr.bf16.gmra.mrb[0].mxu0 %v2442
        %v2646 = vpop.f32.mrb[0].mxu0
        %v2647 = vadd.f32 0.0, %v2646
        %v2648 = vpop.f32.mrb[0].mxu0
        %v2649 = vpop.f32.mrb[0].mxu0
        %v2650 = vpop.f32.mrb[0].mxu0
        %2651 = vdwg.mxu0
        %v2654 = vunpack.c.l.b16 %v2190
        %v2655 = vunpack.c.l.b16 %v2191
        %v2656 = vpack.c.b16 %v2655, %v2654
        %v2658 = vsel %vm688, %v2168, 0
        %v2660 = vsel %vm688, %v2169, 0
        %v2662 = vsel %vm688, %v2170, 0
        %v2664 = vsel %vm688, %v2171, 0
        %v2666 = vsel %vm688, %v2172, 0
        %v2668 = vsel %vm688, %v2173, 0
        %v2670 = vsel %vm688, %v2174, 0
        %v2672 = vsel %vm688, %v2175, 0
        %v2674 = vsel %vm688, %v2176, 0
        %v2676 = vsel %vm688, %v2177, 0
        %v2678 = vsel %vm688, %v2178, 0
        %v2680 = vsel %vm688, %v2179, 0
        %v2682 = vsel %vm688, %v2180, 0
        %v2684 = vsel %vm688, %v2181, 0
        %v2686 = vsel %vm688, %v2182, 0
        %v2688 = vsel %vm688, %v2183, 0
        %v2690 = vsel %vm688, %v2184, 0
        %v2692 = vsel %vm688, %v2185, 0
        %v2694 = vsel %vm688, %v2186, 0
        %v2696 = vsel %vm688, %v2187, 0
        %v2698 = vsel %vm688, %v2188, 0
        %v2701 = vsel %vm688, %v2189, 0
        %2703 = vmatprep.subr.bf16.mxu0 0
        %2704 = vmatpush1.bf16.msra.mxu0 %v2656
        %2705 = vmatprep.subr.bf16.mxu0 0
        %2706 = vmatpush1.bf16.msra.mxu0 0
        %2707 = vmatprep.subr.bf16.mxu0 0
        %2708 = vmatpush1.bf16.msra.mxu0 0
        %2709 = vmatprep.subr.bf16.mxu0 0
        %2710 = vmatpush1.bf16.msra.mxu0 0
        %2711 = vmatprep.subr.bf16.mxu0 0
        %2712 = vmatpush1.bf16.msra.mxu0 0
        %2713 = vmatprep.subr.bf16.mxu0 0
        %2714 = vmatpush1.bf16.msra.mxu0 0
        %2715 = vmatprep.subr.bf16.mxu0 0
        %2716 = vmatpush1.bf16.msra.mxu0 0
        %2717 = vmatprep.subr.bf16.mxu0 0
        %2718 = vmatpush1.bf16.msra.mxu0 0
        %2719 = vmatprep.subr.bf16.mxu0 0
        %2720 = vmatpush1.bf16.msra.mxu0 0
        %2721 = vmatprep.subr.bf16.mxu0 0
        %2722 = vmatpush1.bf16.msra.mxu0 0
        %2723 = vmatprep.subr.bf16.mxu0 0
        %2724 = vmatpush1.bf16.msra.mxu0 0
        %2725 = vmatprep.subr.bf16.mxu0 0
        %2726 = vmatpush1.bf16.msra.mxu0 0
        %2727 = vmatprep.subr.bf16.mxu0 0
        %2728 = vmatpush1.bf16.msra.mxu0 0
        %2729 = vmatprep.subr.bf16.mxu0 0
        %2730 = vmatpush1.bf16.msra.mxu0 0
        %2731 = vmatprep.subr.bf16.mxu0 0
        %2732 = vmatpush1.bf16.msra.mxu0 0
        %2733 = vmatprep.subr.bf16.mxu0 0
        %2734 = vmatpush1.bf16.msra.mxu0 0
        %2735 = vmatprep.mubr.bf16.mxu0 0
        %2736 = vmatmul.mubr.bf16.gmra.mrb[0].mxu0 %v2658
        %v2737 = vpop.f32.mrb[0].mxu0
        %v2738 = vadd.f32 %v2479, %v2737
        %v2739 = vpop.f32.mrb[0].mxu0
        %v2740 = vpop.f32.mrb[0].mxu0
        %v2741 = vadd.f32 %v2482, %v2740
        %v2742 = vpop.f32.mrb[0].mxu0
        %2743 = vmatprep.mubr.bf16.mxu0 0
        %2744 = vmatmul.mubr.bf16.gmra.mrb[0].mxu0 %v2660
        %v2745 = vpop.f32.mrb[0].mxu0
        %v2746 = vadd.f32 %v2487, %v2745
        %v2747 = vpop.f32.mrb[0].mxu0
        %v2748 = vpop.f32.mrb[0].mxu0
        %v2749 = vadd.f32 %v2490, %v2748
        %v2750 = vpop.f32.mrb[0].mxu0
        %2751 = vmatprep.mubr.bf16.mxu0 0
        %2752 = vmatmul.mubr.bf16.gmra.mrb[0].mxu0 %v2662
        %v2753 = vpop.f32.mrb[0].mxu0
        %v2754 = vadd.f32 %v2495, %v2753
        %v2755 = vpop.f32.mrb[0].mxu0
        %v2756 = vpop.f32.mrb[0].mxu0
        %v2757 = vadd.f32 %v2498, %v2756
        %v2758 = vpop.f32.mrb[0].mxu0
        %2759 = vmatprep.mubr.bf16.mxu0 0
        %2760 = vmatmul.mubr.bf16.gmra.mrb[0].mxu0 %v2664
        %v2761 = vpop.f32.mrb[0].mxu0
        %v2762 = vadd.f32 %v2503, %v2761
        %v2763 = vpop.f32.mrb[0].mxu0
        %v2764 = vpop.f32.mrb[0].mxu0
        %v2765 = vadd.f32 %v2506, %v2764
        %v2766 = vpop.f32.mrb[0].mxu0
        %2767 = vmatprep.mubr.bf16.mxu0 0
        %2768 = vmatmul.mubr.bf16.gmra.mrb[0].mxu0 %v2666
        %v2769 = vpop.f32.mrb[0].mxu0
        %v2770 = vadd.f32 %v2511, %v2769
        %v2771 = vpop.f32.mrb[0].mxu0
        %v2772 = vpop.f32.mrb[0].mxu0
        %v2773 = vadd.f32 %v2514, %v2772
        %v2774 = vpop.f32.mrb[0].mxu0
        %2775 = vmatprep.mubr.bf16.mxu0 0
        %2776 = vmatmul.mubr.bf16.gmra.mrb[0].mxu0 %v2668
        %v2777 = vpop.f32.mrb[0].mxu0
        %v2778 = vadd.f32 %v2519, %v2777
        %v2779 = vpop.f32.mrb[0].mxu0
        %v2780 = vpop.f32.mrb[0].mxu0
        %v2781 = vadd.f32 %v2522, %v2780
        %v2782 = vpop.f32.mrb[0].mxu0
        %2783 = vmatprep.mubr.bf16.mxu0 0
        %2784 = vmatmul.mubr.bf16.gmra.mrb[0].mxu0 %v2670
        %v2785 = vpop.f32.mrb[0].mxu0
        %v2786 = vadd.f32 %v2527, %v2785
        %v2787 = vpop.f32.mrb[0].mxu0
        %v2788 = vpop.f32.mrb[0].mxu0
        %v2789 = vadd.f32 %v2530, %v2788
        %v2790 = vpop.f32.mrb[0].mxu0
        %2791 = vmatprep.mubr.bf16.mxu0 0
        %2792 = vmatmul.mubr.bf16.gmra.mrb[0].mxu0 %v2672
        %v2793 = vpop.f32.mrb[0].mxu0
        %v2794 = vadd.f32 %v2535, %v2793
        %v2795 = vpop.f32.mrb[0].mxu0
        %v2796 = vpop.f32.mrb[0].mxu0
        %v2797 = vadd.f32 %v2538, %v2796
        %v2798 = vpop.f32.mrb[0].mxu0
        %2799 = vmatprep.mubr.bf16.mxu0 0
        %2800 = vmatmul.mubr.bf16.gmra.mrb[0].mxu0 %v2674
        %v2801 = vpop.f32.mrb[0].mxu0
        %v2802 = vadd.f32 %v2543, %v2801
        %v2803 = vpop.f32.mrb[0].mxu0
        %v2804 = vpop.f32.mrb[0].mxu0
        %v2805 = vadd.f32 %v2546, %v2804
        %v2806 = vpop.f32.mrb[0].mxu0
        %2807 = vmatprep.mubr.bf16.mxu0 0
        %2808 = vmatmul.mubr.bf16.gmra.mrb[0].mxu0 %v2676
        %v2809 = vpop.f32.mrb[0].mxu0
        %v2810 = vadd.f32 %v2551, %v2809
        %v2811 = vpop.f32.mrb[0].mxu0
        %v2812 = vpop.f32.mrb[0].mxu0
        %v2813 = vadd.f32 %v2554, %v2812
        %v2814 = vpop.f32.mrb[0].mxu0
        %2815 = vmatprep.mubr.bf16.mxu0 0
        %2816 = vmatmul.mubr.bf16.gmra.mrb[0].mxu0 %v2678
        %v2817 = vpop.f32.mrb[0].mxu0
        %v2818 = vadd.f32 %v2559, %v2817
        %v2819 = vpop.f32.mrb[0].mxu0
        %v2820 = vpop.f32.mrb[0].mxu0
        %v2821 = vadd.f32 %v2562, %v2820
        %v2822 = vpop.f32.mrb[0].mxu0
        %2823 = vmatprep.mubr.bf16.mxu0 0
        %2824 = vmatmul.mubr.bf16.gmra.mrb[0].mxu0 %v2680
        %v2825 = vpop.f32.mrb[0].mxu0
        %v2826 = vadd.f32 %v2567, %v2825
        %v2827 = vpop.f32.mrb[0].mxu0
        %v2828 = vpop.f32.mrb[0].mxu0
        %v2829 = vadd.f32 %v2570, %v2828
        %v2830 = vpop.f32.mrb[0].mxu0
        %2831 = vmatprep.mubr.bf16.mxu0 0
        %2832 = vmatmul.mubr.bf16.gmra.mrb[0].mxu0 %v2682
        %v2833 = vpop.f32.mrb[0].mxu0
        %v2834 = vadd.f32 %v2575, %v2833
        %v2835 = vpop.f32.mrb[0].mxu0
        %v2836 = vpop.f32.mrb[0].mxu0
        %v2837 = vadd.f32 %v2578, %v2836
        %v2838 = vpop.f32.mrb[0].mxu0
        %2839 = vmatprep.mubr.bf16.mxu0 0
        %2840 = vmatmul.mubr.bf16.gmra.mrb[0].mxu0 %v2684
        %v2841 = vpop.f32.mrb[0].mxu0
        %v2842 = vadd.f32 %v2583, %v2841
        %v2843 = vpop.f32.mrb[0].mxu0
        %v2844 = vpop.f32.mrb[0].mxu0
        %v2845 = vadd.f32 %v2586, %v2844
        %v2846 = vpop.f32.mrb[0].mxu0
        %2847 = vmatprep.mubr.bf16.mxu0 0
        %2848 = vmatmul.mubr.bf16.gmra.mrb[0].mxu0 %v2686
        %v2849 = vpop.f32.mrb[0].mxu0
        %v2850 = vadd.f32 %v2591, %v2849
        %v2851 = vpop.f32.mrb[0].mxu0
        %v2852 = vpop.f32.mrb[0].mxu0
        %v2853 = vadd.f32 %v2594, %v2852
        %v2854 = vpop.f32.mrb[0].mxu0
        %2855 = vmatprep.mubr.bf16.mxu0 0
        %2856 = vmatmul.mubr.bf16.gmra.mrb[0].mxu0 %v2688
        %v2857 = vpop.f32.mrb[0].mxu0
        %v2858 = vadd.f32 %v2599, %v2857
        %v2859 = vpop.f32.mrb[0].mxu0
        %v2860 = vpop.f32.mrb[0].mxu0
        %v2861 = vadd.f32 %v2602, %v2860
        %v2862 = vpop.f32.mrb[0].mxu0
        %2863 = vmatprep.mubr.bf16.mxu0 0
        %2864 = vmatmul.mubr.bf16.gmra.mrb[0].mxu0 %v2690
        %v2865 = vpop.f32.mrb[0].mxu0
        %v2866 = vadd.f32 %v2607, %v2865
        %v2867 = vpop.f32.mrb[0].mxu0
        %v2868 = vpop.f32.mrb[0].mxu0
        %v2869 = vadd.f32 %v2610, %v2868
        %v2870 = vpop.f32.mrb[0].mxu0
        %2871 = vmatprep.mubr.bf16.mxu0 0
        %2872 = vmatmul.mubr.bf16.gmra.mrb[0].mxu0 %v2692
        %v2873 = vpop.f32.mrb[0].mxu0
        %v2874 = vadd.f32 %v2615, %v2873
        %v2875 = vpop.f32.mrb[0].mxu0
        %v2876 = vpop.f32.mrb[0].mxu0
        %v2877 = vadd.f32 %v2618, %v2876
        %v2878 = vpop.f32.mrb[0].mxu0
        %2879 = vmatprep.mubr.bf16.mxu0 0
        %2880 = vmatmul.mubr.bf16.gmra.mrb[0].mxu0 %v2694
        %v2881 = vpop.f32.mrb[0].mxu0
        %v2882 = vadd.f32 %v2623, %v2881
        %v2883 = vpop.f32.mrb[0].mxu0
        %v2884 = vpop.f32.mrb[0].mxu0
        %v2885 = vadd.f32 %v2626, %v2884
        %v2886 = vpop.f32.mrb[0].mxu0
        %2887 = vmatprep.mubr.bf16.mxu0 0
        %2888 = vmatmul.mubr.bf16.gmra.mrb[0].mxu0 %v2696
        %v2889 = vpop.f32.mrb[0].mxu0
        %v2890 = vadd.f32 %v2631, %v2889
        %v2891 = vpop.f32.mrb[0].mxu0
        %v2892 = vpop.f32.mrb[0].mxu0
        %v2893 = vadd.f32 %v2634, %v2892
        %v2894 = vpop.f32.mrb[0].mxu0
        %2895 = vmatprep.mubr.bf16.mxu0 0
        %2896 = vmatmul.mubr.bf16.gmra.mrb[0].mxu0 %v2698
        %v2897 = vpop.f32.mrb[0].mxu0
        %v2898 = vadd.f32 %v2639, %v2897
        %v2899 = vpop.f32.mrb[0].mxu0
        %v2900 = vpop.f32.mrb[0].mxu0
        %v2901 = vadd.f32 %v2642, %v2900
        %v2902 = vpop.f32.mrb[0].mxu0
        %2903 = vmatprep.mubr.bf16.mxu0 0
        %2904 = vmatmul.mubr.bf16.gmra.mrb[0].mxu0 %v2701
        %v2905 = vpop.f32.mrb[0].mxu0
        %v2906 = vadd.f32 %v2647, %v2905
        %v2907 = vpop.f32.mrb[0].mxu0
        %v2908 = vpop.f32.mrb[0].mxu0
        %v2909 = vpop.f32.mrb[0].mxu0
        %2910 = vdwg.mxu0
        %v2911 = vld [vmem:[#allocation4] sm:$0xfe]
        %s2912 = scalar_lea.vmem %s3, 16
        %v2913 = vld [vmem:[%s2912] sm:$0xf]
        %v2914 = vld [vmem:[%s2912 + $0x4] sm:$0xf]
        %vm2937 = vcmask 1046528
        %v2938 = vrot.slane %v2911, 1
        %v2939 = vrot.slane %v2169, 1
        %v2940 = vsel %vm2937, %v2938, %v2939
        %v2941 = vrot.slane %v2170, 1
        %v2942 = vsel %vm2937, %v2939, %v2941
        %v2943 = vrot.slane %v2171, 1
        %v2944 = vsel %vm2937, %v2941, %v2943
        %v2945 = vrot.slane %v2172, 1
        %v2946 = vsel %vm2937, %v2943, %v2945
        %v2947 = vrot.slane %v2173, 1
        %v2948 = vsel %vm2937, %v2945, %v2947
        %v2949 = vrot.slane %v2174, 1
        %v2950 = vsel %vm2937, %v2947, %v2949
        %v2951 = vrot.slane %v2175, 1
        %v2952 = vsel %vm2937, %v2949, %v2951
        %v2953 = vrot.slane %v2176, 1
        %v2954 = vsel %vm2937, %v2951, %v2953
        %v2955 = vrot.slane %v2177, 1
        %v2956 = vsel %vm2937, %v2953, %v2955
        %v2957 = vrot.slane %v2178, 1
        %v2958 = vsel %vm2937, %v2955, %v2957
        %v2959 = vrot.slane %v2179, 1
        %v2960 = vsel %vm2937, %v2957, %v2959
        %v2961 = vrot.slane %v2180, 1
        %v2962 = vsel %vm2937, %v2959, %v2961
        %v2963 = vrot.slane %v2181, 1
        %v2964 = vsel %vm2937, %v2961, %v2963
        %v2965 = vrot.slane %v2182, 1
        %v2966 = vsel %vm2937, %v2963, %v2965
        %v2967 = vrot.slane %v2183, 1
        %v2968 = vsel %vm2937, %v2965, %v2967
        %v2969 = vrot.slane %v2184, 1
        %v2970 = vsel %vm2937, %v2967, %v2969
        %v2971 = vrot.slane %v2185, 1
        %v2972 = vsel %vm2937, %v2969, %v2971
        %v2973 = vrot.slane %v2186, 1
        %v2974 = vsel %vm2937, %v2971, %v2973
        %v2975 = vrot.slane %v2187, 1
        %v2976 = vsel %vm2937, %v2973, %v2975
        %v2977 = vrot.slane %v2188, 1
        %v2978 = vsel %vm2937, %v2975, %v2977
        %v2979 = vrot.slane %v2192, 1
        %v2980 = vsel %vm2937, %v2977, %v2979
        %v2983 = vunpack.c.l.b16 %v2913
        %v2984 = vunpack.c.l.b16 %v2914
        %v2985 = vpack.c.b16 %v2984, %v2983
        %v2988 = vsel %vm688, %v2940, 0
        %v2991 = vsel %vm688, %v2942, 0
        %v2994 = vsel %vm688, %v2944, 0
        %v2997 = vsel %vm688, %v2946, 0
        %v3000 = vsel %vm688, %v2948, 0
        %v3003 = vsel %vm688, %v2950, 0
        %v3006 = vsel %vm688, %v2952, 0
        %v3009 = vsel %vm688, %v2954, 0
        %v3012 = vsel %vm688, %v2956, 0
        %v3015 = vsel %vm688, %v2958, 0
        %v3018 = vsel %vm688, %v2960, 0
        %v3021 = vsel %vm688, %v2962, 0
        %v3024 = vsel %vm688, %v2964, 0
        %v3027 = vsel %vm688, %v2966, 0
        %v3030 = vsel %vm688, %v2968, 0
        %v3033 = vsel %vm688, %v2970, 0
        %v3036 = vsel %vm688, %v2972, 0
        %v3039 = vsel %vm688, %v2974, 0
        %v3042 = vsel %vm688, %v2976, 0
        %v3045 = vsel %vm688, %v2978, 0
        %v3048 = vsel %vm688, %v2980, 0
        %v3051 = vsel %vm688, %v2979, 0
        %3053 = vmatprep.subr.bf16.mxu0 0
        %3054 = vmatpush1.bf16.msra.mxu0 %v2985
        %3055 = vmatprep.subr.bf16.mxu0 0
        %3056 = vmatpush1.bf16.msra.mxu0 0
        %3057 = vmatprep.subr.bf16.mxu0 0
        %3058 = vmatpush1.bf16.msra.mxu0 0
        %3059 = vmatprep.subr.bf16.mxu0 0
        %3060 = vmatpush1.bf16.msra.mxu0 0
        %3061 = vmatprep.subr.bf16.mxu0 0
        %3062 = vmatpush1.bf16.msra.mxu0 0
        %3063 = vmatprep.subr.bf16.mxu0 0
        %3064 = vmatpush1.bf16.msra.mxu0 0
        %3065 = vmatprep.subr.bf16.mxu0 0
        %3066 = vmatpush1.bf16.msra.mxu0 0
        %3067 = vmatprep.subr.bf16.mxu0 0
        %3068 = vmatpush1.bf16.msra.mxu0 0
        %3069 = vmatprep.subr.bf16.mxu0 0
        %3070 = vmatpush1.bf16.msra.mxu0 0
        %3071 = vmatprep.subr.bf16.mxu0 0
        %3072 = vmatpush1.bf16.msra.mxu0 0
        %3073 = vmatprep.subr.bf16.mxu0 0
        %3074 = vmatpush1.bf16.msra.mxu0 0
        %3075 = vmatprep.subr.bf16.mxu0 0
        %3076 = vmatpush1.bf16.msra.mxu0 0
        %3077 = vmatprep.subr.bf16.mxu0 0
        %3078 = vmatpush1.bf16.msra.mxu0 0
        %3079 = vmatprep.subr.bf16.mxu0 0
        %3080 = vmatpush1.bf16.msra.mxu0 0
        %3081 = vmatprep.subr.bf16.mxu0 0
        %3082 = vmatpush1.bf16.msra.mxu0 0
        %3083 = vmatprep.subr.bf16.mxu0 0
        %3084 = vmatpush1.bf16.msra.mxu0 0
        %3085 = vmatprep.mubr.bf16.mxu0 0
        %3086 = vmatmul.mubr.bf16.gmra.mrb[0].mxu0 %v2988
        %v3087 = vpop.f32.mrb[0].mxu0
        %v3088 = vadd.f32 0.0, %v3087
        %v3089 = vpop.f32.mrb[0].mxu0
        %v3090 = vpop.f32.mrb[0].mxu0
        %v3091 = vadd.f32 0.0, %v3090
        %v3092 = vpop.f32.mrb[0].mxu0
        %3093 = vmatprep.mubr.bf16.mxu0 0
        %3094 = vmatmul.mubr.bf16.gmra.mrb[0].mxu0 %v2991
        %v3095 = vpop.f32.mrb[0].mxu0
        %v3096 = vadd.f32 0.0, %v3095
        %v3097 = vpop.f32.mrb[0].mxu0
        %v3098 = vpop.f32.mrb[0].mxu0
        %v3099 = vadd.f32 0.0, %v3098
        %v3100 = vpop.f32.mrb[0].mxu0
        %3101 = vmatprep.mubr.bf16.mxu0 0
        %3102 = vmatmul.mubr.bf16.gmra.mrb[0].mxu0 %v2994
        %v3103 = vpop.f32.mrb[0].mxu0
        %v3104 = vadd.f32 0.0, %v3103
        %v3105 = vpop.f32.mrb[0].mxu0
        %v3106 = vpop.f32.mrb[0].mxu0
        %v3107 = vadd.f32 0.0, %v3106
        %v3108 = vpop.f32.mrb[0].mxu0
        %3109 = vmatprep.mubr.bf16.mxu0 0
        %3110 = vmatmul.mubr.bf16.gmra.mrb[0].mxu0 %v2997
        %v3111 = vpop.f32.mrb[0].mxu0
        %v3112 = vadd.f32 0.0, %v3111
        %v3113 = vpop.f32.mrb[0].mxu0
        %v3114 = vpop.f32.mrb[0].mxu0
        %v3115 = vadd.f32 0.0, %v3114
        %v3116 = vpop.f32.mrb[0].mxu0
        %3117 = vmatprep.mubr.bf16.mxu0 0
        %3118 = vmatmul.mubr.bf16.gmra.mrb[0].mxu0 %v3000
        %v3119 = vpop.f32.mrb[0].mxu0
        %v3120 = vadd.f32 0.0, %v3119
        %v3121 = vpop.f32.mrb[0].mxu0
        %v3122 = vpop.f32.mrb[0].mxu0
        %v3123 = vadd.f32 0.0, %v3122
        %v3124 = vpop.f32.mrb[0].mxu0
        %3125 = vmatprep.mubr.bf16.mxu0 0
        %3126 = vmatmul.mubr.bf16.gmra.mrb[0].mxu0 %v3003
        %v3127 = vpop.f32.mrb[0].mxu0
        %v3128 = vadd.f32 0.0, %v3127
        %v3129 = vpop.f32.mrb[0].mxu0
        %v3130 = vpop.f32.mrb[0].mxu0
        %v3131 = vadd.f32 0.0, %v3130
        %v3132 = vpop.f32.mrb[0].mxu0
        %3133 = vmatprep.mubr.bf16.mxu0 0
        %3134 = vmatmul.mubr.bf16.gmra.mrb[0].mxu0 %v3006
        %v3135 = vpop.f32.mrb[0].mxu0
        %v3136 = vadd.f32 0.0, %v3135
        %v3137 = vpop.f32.mrb[0].mxu0
        %v3138 = vpop.f32.mrb[0].mxu0
        %v3139 = vadd.f32 0.0, %v3138
        %v3140 = vpop.f32.mrb[0].mxu0
        %3141 = vmatprep.mubr.bf16.mxu0 0
        %3142 = vmatmul.mubr.bf16.gmra.mrb[0].mxu0 %v3009
        %v3143 = vpop.f32.mrb[0].mxu0
        %v3144 = vadd.f32 0.0, %v3143
        %v3145 = vpop.f32.mrb[0].mxu0
        %v3146 = vpop.f32.mrb[0].mxu0
        %v3147 = vadd.f32 0.0, %v3146
        %v3148 = vpop.f32.mrb[0].mxu0
        %3149 = vmatprep.mubr.bf16.mxu0 0
        %3150 = vmatmul.mubr.bf16.gmra.mrb[0].mxu0 %v3012
        %v3151 = vpop.f32.mrb[0].mxu0
        %v3152 = vadd.f32 0.0, %v3151
        %v3153 = vpop.f32.mrb[0].mxu0
        %v3154 = vpop.f32.mrb[0].mxu0
        %v3155 = vadd.f32 0.0, %v3154
        %v3156 = vpop.f32.mrb[0].mxu0
        %3157 = vmatprep.mubr.bf16.mxu0 0
        %3158 = vmatmul.mubr.bf16.gmra.mrb[0].mxu0 %v3015
        %v3159 = vpop.f32.mrb[0].mxu0
        %v3160 = vadd.f32 0.0, %v3159
        %v3161 = vpop.f32.mrb[0].mxu0
        %v3162 = vpop.f32.mrb[0].mxu0
        %v3163 = vadd.f32 0.0, %v3162
        %v3164 = vpop.f32.mrb[0].mxu0
        %3165 = vmatprep.mubr.bf16.mxu0 0
        %3166 = vmatmul.mubr.bf16.gmra.mrb[0].mxu0 %v3018
        %v3167 = vpop.f32.mrb[0].mxu0
        %v3168 = vadd.f32 0.0, %v3167
        %v3169 = vpop.f32.mrb[0].mxu0
        %v3170 = vpop.f32.mrb[0].mxu0
        %v3171 = vadd.f32 0.0, %v3170
        %v3172 = vpop.f32.mrb[0].mxu0
        %3173 = vmatprep.mubr.bf16.mxu0 0
        %3174 = vmatmul.mubr.bf16.gmra.mrb[0].mxu0 %v3021
        %v3175 = vpop.f32.mrb[0].mxu0
        %v3176 = vadd.f32 0.0, %v3175
        %v3177 = vpop.f32.mrb[0].mxu0
        %v3178 = vpop.f32.mrb[0].mxu0
        %v3179 = vadd.f32 0.0, %v3178
        %v3180 = vpop.f32.mrb[0].mxu0
        %3181 = vmatprep.mubr.bf16.mxu0 0
        %3182 = vmatmul.mubr.bf16.gmra.mrb[0].mxu0 %v3024
        %v3183 = vpop.f32.mrb[0].mxu0
        %v3184 = vadd.f32 0.0, %v3183
        %v3185 = vpop.f32.mrb[0].mxu0
        %v3186 = vpop.f32.mrb[0].mxu0
        %v3187 = vadd.f32 0.0, %v3186
        %v3188 = vpop.f32.mrb[0].mxu0
        %3189 = vmatprep.mubr.bf16.mxu0 0
        %3190 = vmatmul.mubr.bf16.gmra.mrb[0].mxu0 %v3027
        %v3191 = vpop.f32.mrb[0].mxu0
        %v3192 = vadd.f32 0.0, %v3191
        %v3193 = vpop.f32.mrb[0].mxu0
        %v3194 = vpop.f32.mrb[0].mxu0
        %v3195 = vadd.f32 0.0, %v3194
        %v3196 = vpop.f32.mrb[0].mxu0
        %3197 = vmatprep.mubr.bf16.mxu0 0
        %3198 = vmatmul.mubr.bf16.gmra.mrb[0].mxu0 %v3030
        %v3199 = vpop.f32.mrb[0].mxu0
        %v3200 = vadd.f32 0.0, %v3199
        %v3201 = vpop.f32.mrb[0].mxu0
        %v3202 = vpop.f32.mrb[0].mxu0
        %v3203 = vadd.f32 0.0, %v3202
        %v3204 = vpop.f32.mrb[0].mxu0
        %3205 = vmatprep.mubr.bf16.mxu0 0
        %3206 = vmatmul.mubr.bf16.gmra.mrb[0].mxu0 %v3033
        %v3207 = vpop.f32.mrb[0].mxu0
        %v3208 = vadd.f32 0.0, %v3207
        %v3209 = vpop.f32.mrb[0].mxu0
        %v3210 = vpop.f32.mrb[0].mxu0
        %v3211 = vadd.f32 0.0, %v3210
        %v3212 = vpop.f32.mrb[0].mxu0
        %3213 = vmatprep.mubr.bf16.mxu0 0
        %3214 = vmatmul.mubr.bf16.gmra.mrb[0].mxu0 %v3036
        %v3215 = vpop.f32.mrb[0].mxu0
        %v3216 = vadd.f32 0.0, %v3215
        %v3217 = vpop.f32.mrb[0].mxu0
        %v3218 = vpop.f32.mrb[0].mxu0
        %v3219 = vadd.f32 0.0, %v3218
        %v3220 = vpop.f32.mrb[0].mxu0
        %3221 = vmatprep.mubr.bf16.mxu0 0
        %3222 = vmatmul.mubr.bf16.gmra.mrb[0].mxu0 %v3039
        %v3223 = vpop.f32.mrb[0].mxu0
        %v3224 = vadd.f32 0.0, %v3223
        %v3225 = vpop.f32.mrb[0].mxu0
        %v3226 = vpop.f32.mrb[0].mxu0
        %v3227 = vadd.f32 0.0, %v3226
        %v3228 = vpop.f32.mrb[0].mxu0
        %3229 = vmatprep.mubr.bf16.mxu0 0
        %3230 = vmatmul.mubr.bf16.gmra.mrb[0].mxu0 %v3042
        %v3231 = vpop.f32.mrb[0].mxu0
        %v3232 = vadd.f32 0.0, %v3231
        %v3233 = vpop.f32.mrb[0].mxu0
        %v3234 = vpop.f32.mrb[0].mxu0
        %v3235 = vadd.f32 0.0, %v3234
        %v3236 = vpop.f32.mrb[0].mxu0
        %3237 = vmatprep.mubr.bf16.mxu0 0
        %3238 = vmatmul.mubr.bf16.gmra.mrb[0].mxu0 %v3045
        %v3239 = vpop.f32.mrb[0].mxu0
        %v3240 = vadd.f32 0.0, %v3239
        %v3241 = vpop.f32.mrb[0].mxu0
        %v3242 = vpop.f32.mrb[0].mxu0
        %v3243 = vadd.f32 0.0, %v3242
        %v3244 = vpop.f32.mrb[0].mxu0
        %3245 = vmatprep.mubr.bf16.mxu0 0
        %3246 = vmatmul.mubr.bf16.gmra.mrb[0].mxu0 %v3048
        %v3247 = vpop.f32.mrb[0].mxu0
        %v3248 = vadd.f32 0.0, %v3247
        %v3249 = vpop.f32.mrb[0].mxu0
        %v3250 = vpop.f32.mrb[0].mxu0
        %v3251 = vadd.f32 0.0, %v3250
        %v3252 = vpop.f32.mrb[0].mxu0
        %3253 = vmatprep.mubr.bf16.mxu0 0
        %3254 = vmatmul.mubr.bf16.gmra.mrb[0].mxu0 %v3051
        %v3255 = vpop.f32.mrb[0].mxu0
        %v3256 = vadd.f32 0.0, %v3255
        %v3257 = vpop.f32.mrb[0].mxu0
        %v3258 = vpop.f32.mrb[0].mxu0
        %v3259 = vpop.f32.mrb[0].mxu0
        %3260 = vdwg.mxu0
        %v3261 = vadd.f32 %v2738, %v3088
        %v3262 = vadd.f32 %v2741, %v3091
        %v3263 = vadd.f32 %v2746, %v3096
        %v3264 = vadd.f32 %v2749, %v3099
        %v3265 = vadd.f32 %v2754, %v3104
        %v3266 = vadd.f32 %v2757, %v3107
        %v3267 = vadd.f32 %v2762, %v3112
        %v3268 = vadd.f32 %v2765, %v3115
        %v3269 = vadd.f32 %v2770, %v3120
        %v3270 = vadd.f32 %v2773, %v3123
        %v3271 = vadd.f32 %v2778, %v3128
        %v3272 = vadd.f32 %v2781, %v3131
        %v3273 = vadd.f32 %v2786, %v3136
        %v3274 = vadd.f32 %v2789, %v3139
        %v3275 = vadd.f32 %v2794, %v3144
        %v3276 = vadd.f32 %v2797, %v3147
        %v3277 = vadd.f32 %v2802, %v3152
        %v3278 = vadd.f32 %v2805, %v3155
        %v3279 = vadd.f32 %v2810, %v3160
        %v3280 = vadd.f32 %v2813, %v3163
        %v3281 = vadd.f32 %v2818, %v3168
        %v3282 = vadd.f32 %v2821, %v3171
        %v3283 = vadd.f32 %v2826, %v3176
        %v3284 = vadd.f32 %v2829, %v3179
        %v3285 = vadd.f32 %v2834, %v3184
        %v3286 = vadd.f32 %v2837, %v3187
        %v3287 = vadd.f32 %v2842, %v3192
        %v3288 = vadd.f32 %v2845, %v3195
        %v3289 = vadd.f32 %v2850, %v3200
        %v3290 = vadd.f32 %v2853, %v3203
        %v3291 = vadd.f32 %v2858, %v3208
        %v3292 = vadd.f32 %v2861, %v3211
        %v3293 = vadd.f32 %v2866, %v3216
        %v3294 = vadd.f32 %v2869, %v3219
        %v3295 = vadd.f32 %v2874, %v3224
        %v3296 = vadd.f32 %v2877, %v3227
        %v3297 = vadd.f32 %v2882, %v3232
        %v3298 = vadd.f32 %v2885, %v3235
        %v3299 = vadd.f32 %v2890, %v3240
        %v3300 = vadd.f32 %v2893, %v3243
        %v3301 = vadd.f32 %v2898, %v3248
        %v3302 = vadd.f32 %v2901, %v3251
        %v3303 = vadd.f32 %v2906, %v3256
        %v3304 = vld [vmem:[#allocation4 + $0x8] sm:$0xfc]
        %v3305 = vld [vmem:[#allocation4 + $0x10] sm:$0xff]
        %v3306 = vld [vmem:[#allocation4 + $0x18] sm:$0xff]
        %v3307 = vld [vmem:[#allocation4 + $0x20] sm:$0xff]
        %v3308 = vld [vmem:[#allocation4 + $0x28] sm:$0xff]
        %v3309 = vld [vmem:[#allocation4 + $0x30] sm:$0xff]
        %v3310 = vld [vmem:[#allocation4 + $0x38] sm:$0xff]
        %v3311 = vld [vmem:[#allocation4 + $0x40] sm:$0xff]
        %v3312 = vld [vmem:[#allocation4 + $0x48] sm:$0xff]
        %v3313 = vld [vmem:[#allocation4 + $0x50] sm:$0xff]
        %v3314 = vld [vmem:[#allocation4 + $0x58] sm:$0xff]
        %v3315 = vld [vmem:[#allocation4 + $0x60] sm:$0xff]
        %v3316 = vld [vmem:[#allocation4 + $0x68] sm:$0xff]
        %v3317 = vld [vmem:[#allocation4 + $0x70] sm:$0xff]
        %v3318 = vld [vmem:[#allocation4 + $0x78] sm:$0xff]
        %v3319 = vld [vmem:[#allocation4 + $0x80] sm:$0xff]
        %v3320 = vld [vmem:[#allocation4 + $0x88] sm:$0xff]
        %v3321 = vld [vmem:[#allocation4 + $0x90] sm:$0xff]
        %v3322 = vld [vmem:[#allocation4 + $0x98] sm:$0xff]
        %v3323 = vld [vmem:[#allocation4 + $0xa0] sm:$0xff]
        %v3324 = vld [vmem:[#allocation4 + $0xa8] sm:$0xff]
        %v3325 = vld [vmem:[#allocation4 + $0xb0] sm:$0xf]
        %s3326 = scalar_lea.vmem %s3, 24
        %v3327 = vld [vmem:[%s3326] sm:$0xf]
        %v3328 = vld [vmem:[%s3326 + $0x4] sm:$0xf]
        %vm3351 = vcmask 1045504
        %v3352 = vrot.slane %v3304, 2
        %v3353 = vrot.slane %v3305, 2
        %v3354 = vsel %vm3351, %v3352, %v3353
        %v3355 = vrot.slane %v3306, 2
        %v3356 = vsel %vm3351, %v3353, %v3355
        %v3357 = vrot.slane %v3307, 2
        %v3358 = vsel %vm3351, %v3355, %v3357
        %v3359 = vrot.slane %v3308, 2
        %v3360 = vsel %vm3351, %v3357, %v3359
        %v3361 = vrot.slane %v3309, 2
        %v3362 = vsel %vm3351, %v3359, %v3361
        %v3363 = vrot.slane %v3310, 2
        %v3364 = vsel %vm3351, %v3361, %v3363
        %v3365 = vrot.slane %v3311, 2
        %v3366 = vsel %vm3351, %v3363, %v3365
        %v3367 = vrot.slane %v3312, 2
        %v3368 = vsel %vm3351, %v3365, %v3367
        %v3369 = vrot.slane %v3313, 2
        %v3370 = vsel %vm3351, %v3367, %v3369
        %v3371 = vrot.slane %v3314, 2
        %v3372 = vsel %vm3351, %v3369, %v3371
        %v3373 = vrot.slane %v3315, 2
        %v3374 = vsel %vm3351, %v3371, %v3373
        %v3375 = vrot.slane %v3316, 2
        %v3376 = vsel %vm3351, %v3373, %v3375
        %v3377 = vrot.slane %v3317, 2
        %v3378 = vsel %vm3351, %v3375, %v3377
        %v3379 = vrot.slane %v3318, 2
        %v3380 = vsel %vm3351, %v3377, %v3379
        %v3381 = vrot.slane %v3319, 2
        %v3382 = vsel %vm3351, %v3379, %v3381
        %v3383 = vrot.slane %v3320, 2
        %v3384 = vsel %vm3351, %v3381, %v3383
        %v3385 = vrot.slane %v3321, 2
        %v3386 = vsel %vm3351, %v3383, %v3385
        %v3387 = vrot.slane %v3322, 2
        %v3388 = vsel %vm3351, %v3385, %v3387
        %v3389 = vrot.slane %v3323, 2
        %v3390 = vsel %vm3351, %v3387, %v3389
        %v3391 = vrot.slane %v3324, 2
        %v3392 = vsel %vm3351, %v3389, %v3391
        %v3393 = vrot.slane %v3325, 2
        %v3394 = vsel %vm3351, %v3391, %v3393
        %v3397 = vunpack.c.l.b16 %v3327
        %v3398 = vunpack.c.l.b16 %v3328
        %v3399 = vpack.c.b16 %v3398, %v3397
        %v3402 = vsel %vm688, %v3354, 0
        %v3405 = vsel %vm688, %v3356, 0
        %v3408 = vsel %vm688, %v3358, 0
        %v3411 = vsel %vm688, %v3360, 0
        %v3414 = vsel %vm688, %v3362, 0
        %v3417 = vsel %vm688, %v3364, 0
        %v3420 = vsel %vm688, %v3366, 0
        %v3423 = vsel %vm688, %v3368, 0
        %v3426 = vsel %vm688, %v3370, 0
        %v3429 = vsel %vm688, %v3372, 0
        %v3432 = vsel %vm688, %v3374, 0
        %v3435 = vsel %vm688, %v3376, 0
        %v3438 = vsel %vm688, %v3378, 0
        %v3441 = vsel %vm688, %v3380, 0
        %v3444 = vsel %vm688, %v3382, 0
        %v3447 = vsel %vm688, %v3384, 0
        %v3450 = vsel %vm688, %v3386, 0
        %v3453 = vsel %vm688, %v3388, 0
        %v3456 = vsel %vm688, %v3390, 0
        %v3459 = vsel %vm688, %v3392, 0
        %v3462 = vsel %vm688, %v3394, 0
        %v3465 = vsel %vm688, %v3393, 0
        %3467 = vmatprep.subr.bf16.mxu0 0
        %3468 = vmatpush1.bf16.msra.mxu0 %v3399
        %3469 = vmatprep.subr.bf16.mxu0 0
        %3470 = vmatpush1.bf16.msra.mxu0 0
        %3471 = vmatprep.subr.bf16.mxu0 0
        %3472 = vmatpush1.bf16.msra.mxu0 0
        %3473 = vmatprep.subr.bf16.mxu0 0
        %3474 = vmatpush1.bf16.msra.mxu0 0
        %3475 = vmatprep.subr.bf16.mxu0 0
        %3476 = vmatpush1.bf16.msra.mxu0 0
        %3477 = vmatprep.subr.bf16.mxu0 0
        %3478 = vmatpush1.bf16.msra.mxu0 0
        %3479 = vmatprep.subr.bf16.mxu0 0
        %3480 = vmatpush1.bf16.msra.mxu0 0
        %3481 = vmatprep.subr.bf16.mxu0 0
        %3482 = vmatpush1.bf16.msra.mxu0 0
        %3483 = vmatprep.subr.bf16.mxu0 0
        %3484 = vmatpush1.bf16.msra.mxu0 0
        %3485 = vmatprep.subr.bf16.mxu0 0
        %3486 = vmatpush1.bf16.msra.mxu0 0
        %3487 = vmatprep.subr.bf16.mxu0 0
        %3488 = vmatpush1.bf16.msra.mxu0 0
        %3489 = vmatprep.subr.bf16.mxu0 0
        %3490 = vmatpush1.bf16.msra.mxu0 0
        %3491 = vmatprep.subr.bf16.mxu0 0
        %3492 = vmatpush1.bf16.msra.mxu0 0
        %3493 = vmatprep.subr.bf16.mxu0 0
        %3494 = vmatpush1.bf16.msra.mxu0 0
        %3495 = vmatprep.subr.bf16.mxu0 0
        %3496 = vmatpush1.bf16.msra.mxu0 0
        %3497 = vmatprep.subr.bf16.mxu0 0
        %3498 = vmatpush1.bf16.msra.mxu0 0
        %3499 = vmatprep.mubr.bf16.mxu0 0
        %3500 = vmatmul.mubr.bf16.gmra.mrb[0].mxu0 %v3402
        %v3501 = vpop.f32.mrb[0].mxu0
        %v3502 = vadd.f32 0.0, %v3501
        %v3503 = vpop.f32.mrb[0].mxu0
        %v3504 = vpop.f32.mrb[0].mxu0
        %v3505 = vadd.f32 0.0, %v3504
        %v3506 = vpop.f32.mrb[0].mxu0
        %3507 = vmatprep.mubr.bf16.mxu0 0
        %3508 = vmatmul.mubr.bf16.gmra.mrb[0].mxu0 %v3405
        %v3509 = vpop.f32.mrb[0].mxu0
        %v3510 = vadd.f32 0.0, %v3509
        %v3511 = vpop.f32.mrb[0].mxu0
        %v3512 = vpop.f32.mrb[0].mxu0
        %v3513 = vadd.f32 0.0, %v3512
        %v3514 = vpop.f32.mrb[0].mxu0
        %3515 = vmatprep.mubr.bf16.mxu0 0
        %3516 = vmatmul.mubr.bf16.gmra.mrb[0].mxu0 %v3408
        %v3517 = vpop.f32.mrb[0].mxu0
        %v3518 = vadd.f32 0.0, %v3517
        %v3519 = vpop.f32.mrb[0].mxu0
        %v3520 = vpop.f32.mrb[0].mxu0
        %v3521 = vadd.f32 0.0, %v3520
        %v3522 = vpop.f32.mrb[0].mxu0
        %3523 = vmatprep.mubr.bf16.mxu0 0
        %3524 = vmatmul.mubr.bf16.gmra.mrb[0].mxu0 %v3411
        %v3525 = vpop.f32.mrb[0].mxu0
        %v3526 = vadd.f32 0.0, %v3525
        %v3527 = vpop.f32.mrb[0].mxu0
        %v3528 = vpop.f32.mrb[0].mxu0
        %v3529 = vadd.f32 0.0, %v3528
        %v3530 = vpop.f32.mrb[0].mxu0
        %3531 = vmatprep.mubr.bf16.mxu0 0
        %3532 = vmatmul.mubr.bf16.gmra.mrb[0].mxu0 %v3414
        %v3533 = vpop.f32.mrb[0].mxu0
        %v3534 = vadd.f32 0.0, %v3533
        %v3535 = vpop.f32.mrb[0].mxu0
        %v3536 = vpop.f32.mrb[0].mxu0
        %v3537 = vadd.f32 0.0, %v3536
        %v3538 = vpop.f32.mrb[0].mxu0
        %3539 = vmatprep.mubr.bf16.mxu0 0
        %3540 = vmatmul.mubr.bf16.gmra.mrb[0].mxu0 %v3417
        %v3541 = vpop.f32.mrb[0].mxu0
        %v3542 = vadd.f32 0.0, %v3541
        %v3543 = vpop.f32.mrb[0].mxu0
        %v3544 = vpop.f32.mrb[0].mxu0
        %v3545 = vadd.f32 0.0, %v3544
        %v3546 = vpop.f32.mrb[0].mxu0
        %3547 = vmatprep.mubr.bf16.mxu0 0
        %3548 = vmatmul.mubr.bf16.gmra.mrb[0].mxu0 %v3420
        %v3549 = vpop.f32.mrb[0].mxu0
        %v3550 = vadd.f32 0.0, %v3549
        %v3551 = vpop.f32.mrb[0].mxu0
        %v3552 = vpop.f32.mrb[0].mxu0
        %v3553 = vadd.f32 0.0, %v3552
        %v3554 = vpop.f32.mrb[0].mxu0
        %3555 = vmatprep.mubr.bf16.mxu0 0
        %3556 = vmatmul.mubr.bf16.gmra.mrb[0].mxu0 %v3423
        %v3557 = vpop.f32.mrb[0].mxu0
        %v3558 = vadd.f32 0.0, %v3557
        %v3559 = vpop.f32.mrb[0].mxu0
        %v3560 = vpop.f32.mrb[0].mxu0
        %v3561 = vadd.f32 0.0, %v3560
        %v3562 = vpop.f32.mrb[0].mxu0
        %3563 = vmatprep.mubr.bf16.mxu0 0
        %3564 = vmatmul.mubr.bf16.gmra.mrb[0].mxu0 %v3426
        %v3565 = vpop.f32.mrb[0].mxu0
        %v3566 = vadd.f32 0.0, %v3565
        %v3567 = vpop.f32.mrb[0].mxu0
        %v3568 = vpop.f32.mrb[0].mxu0
        %v3569 = vadd.f32 0.0, %v3568
        %v3570 = vpop.f32.mrb[0].mxu0
        %3571 = vmatprep.mubr.bf16.mxu0 0
        %3572 = vmatmul.mubr.bf16.gmra.mrb[0].mxu0 %v3429
        %v3573 = vpop.f32.mrb[0].mxu0
        %v3574 = vadd.f32 0.0, %v3573
        %v3575 = vpop.f32.mrb[0].mxu0
        %v3576 = vpop.f32.mrb[0].mxu0
        %v3577 = vadd.f32 0.0, %v3576
        %v3578 = vpop.f32.mrb[0].mxu0
        %3579 = vmatprep.mubr.bf16.mxu0 0
        %3580 = vmatmul.mubr.bf16.gmra.mrb[0].mxu0 %v3432
        %v3581 = vpop.f32.mrb[0].mxu0
        %v3582 = vadd.f32 0.0, %v3581
        %v3583 = vpop.f32.mrb[0].mxu0
        %v3584 = vpop.f32.mrb[0].mxu0
        %v3585 = vadd.f32 0.0, %v3584
        %v3586 = vpop.f32.mrb[0].mxu0
        %3587 = vmatprep.mubr.bf16.mxu0 0
        %3588 = vmatmul.mubr.bf16.gmra.mrb[0].mxu0 %v3435
        %v3589 = vpop.f32.mrb[0].mxu0
        %v3590 = vadd.f32 0.0, %v3589
        %v3591 = vpop.f32.mrb[0].mxu0
        %v3592 = vpop.f32.mrb[0].mxu0
        %v3593 = vadd.f32 0.0, %v3592
        %v3594 = vpop.f32.mrb[0].mxu0
        %3595 = vmatprep.mubr.bf16.mxu0 0
        %3596 = vmatmul.mubr.bf16.gmra.mrb[0].mxu0 %v3438
        %v3597 = vpop.f32.mrb[0].mxu0
        %v3598 = vadd.f32 0.0, %v3597
        %v3599 = vpop.f32.mrb[0].mxu0
        %v3600 = vpop.f32.mrb[0].mxu0
        %v3601 = vadd.f32 0.0, %v3600
        %v3602 = vpop.f32.mrb[0].mxu0
        %3603 = vmatprep.mubr.bf16.mxu0 0
        %3604 = vmatmul.mubr.bf16.gmra.mrb[0].mxu0 %v3441
        %v3605 = vpop.f32.mrb[0].mxu0
        %v3606 = vadd.f32 0.0, %v3605
        %v3607 = vpop.f32.mrb[0].mxu0
        %v3608 = vpop.f32.mrb[0].mxu0
        %v3609 = vadd.f32 0.0, %v3608
        %v3610 = vpop.f32.mrb[0].mxu0
        %3611 = vmatprep.mubr.bf16.mxu0 0
        %3612 = vmatmul.mubr.bf16.gmra.mrb[0].mxu0 %v3444
        %v3613 = vpop.f32.mrb[0].mxu0
        %v3614 = vadd.f32 0.0, %v3613
        %v3615 = vpop.f32.mrb[0].mxu0
        %v3616 = vpop.f32.mrb[0].mxu0
        %v3617 = vadd.f32 0.0, %v3616
        %v3618 = vpop.f32.mrb[0].mxu0
        %3619 = vmatprep.mubr.bf16.mxu0 0
        %3620 = vmatmul.mubr.bf16.gmra.mrb[0].mxu0 %v3447
        %v3621 = vpop.f32.mrb[0].mxu0
        %v3622 = vadd.f32 0.0, %v3621
        %v3623 = vpop.f32.mrb[0].mxu0
        %v3624 = vpop.f32.mrb[0].mxu0
        %v3625 = vadd.f32 0.0, %v3624
        %v3626 = vpop.f32.mrb[0].mxu0
        %3627 = vmatprep.mubr.bf16.mxu0 0
        %3628 = vmatmul.mubr.bf16.gmra.mrb[0].mxu0 %v3450
        %v3629 = vpop.f32.mrb[0].mxu0
        %v3630 = vadd.f32 0.0, %v3629
        %v3631 = vpop.f32.mrb[0].mxu0
        %v3632 = vpop.f32.mrb[0].mxu0
        %v3633 = vadd.f32 0.0, %v3632
        %v3634 = vpop.f32.mrb[0].mxu0
        %3635 = vmatprep.mubr.bf16.mxu0 0
        %3636 = vmatmul.mubr.bf16.gmra.mrb[0].mxu0 %v3453
        %v3637 = vpop.f32.mrb[0].mxu0
        %v3638 = vadd.f32 0.0, %v3637
        %v3639 = vpop.f32.mrb[0].mxu0
        %v3640 = vpop.f32.mrb[0].mxu0
        %v3641 = vadd.f32 0.0, %v3640
        %v3642 = vpop.f32.mrb[0].mxu0
        %3643 = vmatprep.mubr.bf16.mxu0 0
        %3644 = vmatmul.mubr.bf16.gmra.mrb[0].mxu0 %v3456
        %v3645 = vpop.f32.mrb[0].mxu0
        %v3646 = vadd.f32 0.0, %v3645
        %v3647 = vpop.f32.mrb[0].mxu0
        %v3648 = vpop.f32.mrb[0].mxu0
        %v3649 = vadd.f32 0.0, %v3648
        %v3650 = vpop.f32.mrb[0].mxu0
        %3651 = vmatprep.mubr.bf16.mxu0 0
        %3652 = vmatmul.mubr.bf16.gmra.mrb[0].mxu0 %v3459
        %v3653 = vpop.f32.mrb[0].mxu0
        %v3654 = vadd.f32 0.0, %v3653
        %v3655 = vpop.f32.mrb[0].mxu0
        %v3656 = vpop.f32.mrb[0].mxu0
        %v3657 = vadd.f32 0.0, %v3656
        %v3658 = vpop.f32.mrb[0].mxu0
        %3659 = vmatprep.mubr.bf16.mxu0 0
        %3660 = vmatmul.mubr.bf16.gmra.mrb[0].mxu0 %v3462
        %v3661 = vpop.f32.mrb[0].mxu0
        %v3662 = vadd.f32 0.0, %v3661
        %v3663 = vpop.f32.mrb[0].mxu0
        %v3664 = vpop.f32.mrb[0].mxu0
        %v3665 = vadd.f32 0.0, %v3664
        %v3666 = vpop.f32.mrb[0].mxu0
        %3667 = vmatprep.mubr.bf16.mxu0 0
        %3668 = vmatmul.mubr.bf16.gmra.mrb[0].mxu0 %v3465
        %v3669 = vpop.f32.mrb[0].mxu0
        %v3670 = vadd.f32 0.0, %v3669
        %v3671 = vpop.f32.mrb[0].mxu0
        %v3672 = vpop.f32.mrb[0].mxu0
        %v3673 = vpop.f32.mrb[0].mxu0
        %3674 = vdwg.mxu0
        %v3675 = vadd.f32 %v3261, %v3502
        %v3676 = vadd.f32 %v3262, %v3505
        %v3677 = vadd.f32 %v3263, %v3510
        %v3678 = vadd.f32 %v3264, %v3513
        %v3679 = vadd.f32 %v3265, %v3518
        %v3680 = vadd.f32 %v3266, %v3521
        %v3681 = vadd.f32 %v3267, %v3526
        %v3682 = vadd.f32 %v3268, %v3529
        %v3683 = vadd.f32 %v3269, %v3534
        %v3684 = vadd.f32 %v3270, %v3537
        %v3685 = vadd.f32 %v3271, %v3542
        %v3686 = vadd.f32 %v3272, %v3545
        %v3687 = vadd.f32 %v3273, %v3550
        %v3688 = vadd.f32 %v3274, %v3553
        %v3689 = vadd.f32 %v3275, %v3558
        %v3690 = vadd.f32 %v3276, %v3561
        %v3691 = vadd.f32 %v3277, %v3566
        %v3692 = vadd.f32 %v3278, %v3569
        %v3693 = vadd.f32 %v3279, %v3574
        %v3694 = vadd.f32 %v3280, %v3577
        %v3695 = vadd.f32 %v3281, %v3582
        %v3696 = vadd.f32 %v3282, %v3585
        %v3697 = vadd.f32 %v3283, %v3590
        %v3698 = vadd.f32 %v3284, %v3593
        %v3699 = vadd.f32 %v3285, %v3598
        %v3700 = vadd.f32 %v3286, %v3601
        %v3701 = vadd.f32 %v3287, %v3606
        %v3702 = vadd.f32 %v3288, %v3609
        %v3703 = vadd.f32 %v3289, %v3614
        %v3704 = vadd.f32 %v3290, %v3617
        %v3705 = vadd.f32 %v3291, %v3622
        %v3706 = vadd.f32 %v3292, %v3625
        %v3707 = vadd.f32 %v3293, %v3630
        %v3708 = vadd.f32 %v3294, %v3633
        %v3709 = vadd.f32 %v3295, %v3638
        %v3710 = vadd.f32 %v3296, %v3641
        %v3711 = vadd.f32 %v3297, %v3646
        %v3712 = vadd.f32 %v3298, %v3649
        %v3713 = vadd.f32 %v3299, %v3654
        %v3714 = vadd.f32 %v3300, %v3657
        %v3715 = vadd.f32 %v3301, %v3662
        %v3716 = vadd.f32 %v3302, %v3665
        %v3717 = vadd.f32 %v3303, %v3670
        %v3718 = vld [vmem:[#allocation4 + $0xb0] sm:$0x1f]
        %s3719 = scalar_lea.vmem %s3, 32
        %v3720 = vld [vmem:[%s3719] sm:$0xf]
        %v3721 = vld [vmem:[%s3719 + $0x4] sm:$0xf]
        %vm3722 = vsmask.f32 5376
        %v3724 = vshrl.u32 %v3304, 16
        %v3726 = vrot.slane %v3724, 2
        %v3727 = vshll.u32 %v3304, 16
        %v3729 = vrot.slane %v3727, 3
        %v3730 = vor.u32 %v3726, %v3729
        %v3732 = vshrl.u32 %v3305, 16
        %v3734 = vrot.slane %v3732, 2
        %v3735 = vshll.u32 %v3305, 16
        %v3737 = vrot.slane %v3735, 3
        %v3738 = vor.u32 %v3734, %v3737
        %v3739 = vsel %vm3722, %v3730, %v3738
        %v3741 = vshrl.u32 %v3306, 16
        %v3743 = vrot.slane %v3741, 2
        %v3744 = vshll.u32 %v3306, 16
        %v3746 = vrot.slane %v3744, 3
        %v3747 = vor.u32 %v3743, %v3746
        %v3748 = vsel %vm3722, %v3738, %v3747
        %v3750 = vshrl.u32 %v3307, 16
        %v3752 = vrot.slane %v3750, 2
        %v3753 = vshll.u32 %v3307, 16
        %v3755 = vrot.slane %v3753, 3
        %v3756 = vor.u32 %v3752, %v3755
        %v3757 = vsel %vm3722, %v3747, %v3756
        %v3759 = vshrl.u32 %v3308, 16
        %v3761 = vrot.slane %v3759, 2
        %v3762 = vshll.u32 %v3308, 16
        %v3764 = vrot.slane %v3762, 3
        %v3765 = vor.u32 %v3761, %v3764
        %v3766 = vsel %vm3722, %v3756, %v3765
        %v3768 = vshrl.u32 %v3309, 16
        %v3770 = vrot.slane %v3768, 2
        %v3771 = vshll.u32 %v3309, 16
        %v3773 = vrot.slane %v3771, 3
        %v3774 = vor.u32 %v3770, %v3773
        %v3775 = vsel %vm3722, %v3765, %v3774
        %v3777 = vshrl.u32 %v3310, 16
        %v3779 = vrot.slane %v3777, 2
        %v3780 = vshll.u32 %v3310, 16
        %v3782 = vrot.slane %v3780, 3
        %v3783 = vor.u32 %v3779, %v3782
        %v3784 = vsel %vm3722, %v3774, %v3783
        %v3786 = vshrl.u32 %v3311, 16
        %v3788 = vrot.slane %v3786, 2
        %v3789 = vshll.u32 %v3311, 16
        %v3791 = vrot.slane %v3789, 3
        %v3792 = vor.u32 %v3788, %v3791
        %v3793 = vsel %vm3722, %v3783, %v3792
        %v3795 = vshrl.u32 %v3312, 16
        %v3797 = vrot.slane %v3795, 2
        %v3798 = vshll.u32 %v3312, 16
        %v3800 = vrot.slane %v3798, 3
        %v3801 = vor.u32 %v3797, %v3800
        %v3802 = vsel %vm3722, %v3792, %v3801
        %v3804 = vshrl.u32 %v3313, 16
        %v3806 = vrot.slane %v3804, 2
        %v3807 = vshll.u32 %v3313, 16
        %v3809 = vrot.slane %v3807, 3
        %v3810 = vor.u32 %v3806, %v3809
        %v3811 = vsel %vm3722, %v3801, %v3810
        %v3813 = vshrl.u32 %v3314, 16
        %v3815 = vrot.slane %v3813, 2
        %v3816 = vshll.u32 %v3314, 16
        %v3818 = vrot.slane %v3816, 3
        %v3819 = vor.u32 %v3815, %v3818
        %v3820 = vsel %vm3722, %v3810, %v3819
        %v3822 = vshrl.u32 %v3315, 16
        %v3824 = vrot.slane %v3822, 2
        %v3825 = vshll.u32 %v3315, 16
        %v3827 = vrot.slane %v3825, 3
        %v3828 = vor.u32 %v3824, %v3827
        %v3829 = vsel %vm3722, %v3819, %v3828
        %v3831 = vshrl.u32 %v3316, 16
        %v3833 = vrot.slane %v3831, 2
        %v3834 = vshll.u32 %v3316, 16
        %v3836 = vrot.slane %v3834, 3
        %v3837 = vor.u32 %v3833, %v3836
        %v3838 = vsel %vm3722, %v3828, %v3837
        %v3840 = vshrl.u32 %v3317, 16
        %v3842 = vrot.slane %v3840, 2
        %v3843 = vshll.u32 %v3317, 16
        %v3845 = vrot.slane %v3843, 3
        %v3846 = vor.u32 %v3842, %v3845
        %v3847 = vsel %vm3722, %v3837, %v3846
        %v3849 = vshrl.u32 %v3318, 16
        %v3851 = vrot.slane %v3849, 2
        %v3852 = vshll.u32 %v3318, 16
        %v3854 = vrot.slane %v3852, 3
        %v3855 = vor.u32 %v3851, %v3854
        %v3856 = vsel %vm3722, %v3846, %v3855
        %v3858 = vshrl.u32 %v3319, 16
        %v3860 = vrot.slane %v3858, 2
        %v3861 = vshll.u32 %v3319, 16
        %v3863 = vrot.slane %v3861, 3
        %v3864 = vor.u32 %v3860, %v3863
        %v3865 = vsel %vm3722, %v3855, %v3864
        %v3867 = vshrl.u32 %v3320, 16
        %v3869 = vrot.slane %v3867, 2
        %v3870 = vshll.u32 %v3320, 16
        %v3872 = vrot.slane %v3870, 3
        %v3873 = vor.u32 %v3869, %v3872
        %v3874 = vsel %vm3722, %v3864, %v3873
        %v3876 = vshrl.u32 %v3321, 16
        %v3878 = vrot.slane %v3876, 2
        %v3879 = vshll.u32 %v3321, 16
        %v3881 = vrot.slane %v3879, 3
        %v3882 = vor.u32 %v3878, %v3881
        %v3883 = vsel %vm3722, %v3873, %v3882
        %v3885 = vshrl.u32 %v3322, 16
        %v3887 = vrot.slane %v3885, 2
        %v3888 = vshll.u32 %v3322, 16
        %v3890 = vrot.slane %v3888, 3
        %v3891 = vor.u32 %v3887, %v3890
        %v3892 = vsel %vm3722, %v3882, %v3891
        %v3894 = vshrl.u32 %v3323, 16
        %v3896 = vrot.slane %v3894, 2
        %v3897 = vshll.u32 %v3323, 16
        %v3899 = vrot.slane %v3897, 3
        %v3900 = vor.u32 %v3896, %v3899
        %v3901 = vsel %vm3722, %v3891, %v3900
        %v3903 = vshrl.u32 %v3324, 16
        %v3905 = vrot.slane %v3903, 2
        %v3906 = vshll.u32 %v3324, 16
        %v3908 = vrot.slane %v3906, 3
        %v3909 = vor.u32 %v3905, %v3908
        %v3910 = vsel %vm3722, %v3900, %v3909
        %v3912 = vshrl.u32 %v3718, 16
        %v3914 = vrot.slane %v3912, 2
        %v3915 = vshll.u32 %v3718, 16
        %v3917 = vrot.slane %v3915, 3
        %v3918 = vor.u32 %v3914, %v3917
        %v3919 = vsel %vm3722, %v3909, %v3918
        %v3922 = vunpack.c.l.b16 %v3720
        %v3923 = vunpack.c.l.b16 %v3721
        %v3924 = vpack.c.b16 %v3923, %v3922
        %v3927 = vsel %vm688, %v3739, 0
        %v3930 = vsel %vm688, %v3748, 0
        %v3933 = vsel %vm688, %v3757, 0
        %v3936 = vsel %vm688, %v3766, 0
        %v3939 = vsel %vm688, %v3775, 0
        %v3942 = vsel %vm688, %v3784, 0
        %v3945 = vsel %vm688, %v3793, 0
        %v3948 = vsel %vm688, %v3802, 0
        %v3951 = vsel %vm688, %v3811, 0
        %v3954 = vsel %vm688, %v3820, 0
        %v3957 = vsel %vm688, %v3829, 0
        %v3960 = vsel %vm688, %v3838, 0
        %v3963 = vsel %vm688, %v3847, 0
        %v3966 = vsel %vm688, %v3856, 0
        %v3969 = vsel %vm688, %v3865, 0
        %v3972 = vsel %vm688, %v3874, 0
        %v3975 = vsel %vm688, %v3883, 0
        %v3978 = vsel %vm688, %v3892, 0
        %v3981 = vsel %vm688, %v3901, 0
        %v3984 = vsel %vm688, %v3910, 0
        %v3987 = vsel %vm688, %v3919, 0
        %v3990 = vsel %vm688, %v3918, 0
        %3992 = vmatprep.subr.bf16.mxu0 0
        %3993 = vmatpush1.bf16.msra.mxu0 %v3924
        %3994 = vmatprep.subr.bf16.mxu0 0
        %3995 = vmatpush1.bf16.msra.mxu0 0
        %3996 = vmatprep.subr.bf16.mxu0 0
        %3997 = vmatpush1.bf16.msra.mxu0 0
        %3998 = vmatprep.subr.bf16.mxu0 0
        %3999 = vmatpush1.bf16.msra.mxu0 0
        %4000 = vmatprep.subr.bf16.mxu0 0
        %4001 = vmatpush1.bf16.msra.mxu0 0
        %4002 = vmatprep.subr.bf16.mxu0 0
        %4003 = vmatpush1.bf16.msra.mxu0 0
        %4004 = vmatprep.subr.bf16.mxu0 0
        %4005 = vmatpush1.bf16.msra.mxu0 0
        %4006 = vmatprep.subr.bf16.mxu0 0
        %4007 = vmatpush1.bf16.msra.mxu0 0
        %4008 = vmatprep.subr.bf16.mxu0 0
        %4009 = vmatpush1.bf16.msra.mxu0 0
        %4010 = vmatprep.subr.bf16.mxu0 0
        %4011 = vmatpush1.bf16.msra.mxu0 0
        %4012 = vmatprep.subr.bf16.mxu0 0
        %4013 = vmatpush1.bf16.msra.mxu0 0
        %4014 = vmatprep.subr.bf16.mxu0 0
        %4015 = vmatpush1.bf16.msra.mxu0 0
        %4016 = vmatprep.subr.bf16.mxu0 0
        %4017 = vmatpush1.bf16.msra.mxu0 0
        %4018 = vmatprep.subr.bf16.mxu0 0
        %4019 = vmatpush1.bf16.msra.mxu0 0
        %4020 = vmatprep.subr.bf16.mxu0 0
        %4021 = vmatpush1.bf16.msra.mxu0 0
        %4022 = vmatprep.subr.bf16.mxu0 0
        %4023 = vmatpush1.bf16.msra.mxu0 0
        %4024 = vmatprep.mubr.bf16.mxu0 0
        %4025 = vmatmul.mubr.bf16.gmra.mrb[0].mxu0 %v3927
        %v4026 = vpop.f32.mrb[0].mxu0
        %v4027 = vadd.f32 0.0, %v4026
        %v4028 = vpop.f32.mrb[0].mxu0
        %v4029 = vpop.f32.mrb[0].mxu0
        %v4030 = vadd.f32 0.0, %v4029
        %v4031 = vpop.f32.mrb[0].mxu0
        %4032 = vmatprep.mubr.bf16.mxu0 0
        %4033 = vmatmul.mubr.bf16.gmra.mrb[0].mxu0 %v3930
        %v4034 = vpop.f32.mrb[0].mxu0
        %v4035 = vadd.f32 0.0, %v4034
        %v4036 = vpop.f32.mrb[0].mxu0
        %v4037 = vpop.f32.mrb[0].mxu0
        %v4038 = vadd.f32 0.0, %v4037
        %v4039 = vpop.f32.mrb[0].mxu0
        %4040 = vmatprep.mubr.bf16.mxu0 0
        %4041 = vmatmul.mubr.bf16.gmra.mrb[0].mxu0 %v3933
        %v4042 = vpop.f32.mrb[0].mxu0
        %v4043 = vadd.f32 0.0, %v4042
        %v4044 = vpop.f32.mrb[0].mxu0
        %v4045 = vpop.f32.mrb[0].mxu0
        %v4046 = vadd.f32 0.0, %v4045
        %v4047 = vpop.f32.mrb[0].mxu0
        %4048 = vmatprep.mubr.bf16.mxu0 0
        %4049 = vmatmul.mubr.bf16.gmra.mrb[0].mxu0 %v3936
        %v4050 = vpop.f32.mrb[0].mxu0
        %v4051 = vadd.f32 0.0, %v4050
        %v4052 = vpop.f32.mrb[0].mxu0
        %v4053 = vpop.f32.mrb[0].mxu0
        %v4054 = vadd.f32 0.0, %v4053
        %v4055 = vpop.f32.mrb[0].mxu0
        %4056 = vmatprep.mubr.bf16.mxu0 0
        %4057 = vmatmul.mubr.bf16.gmra.mrb[0].mxu0 %v3939
        %v4058 = vpop.f32.mrb[0].mxu0
        %v4059 = vadd.f32 0.0, %v4058
        %v4060 = vpop.f32.mrb[0].mxu0
        %v4061 = vpop.f32.mrb[0].mxu0
        %v4062 = vadd.f32 0.0, %v4061
        %v4063 = vpop.f32.mrb[0].mxu0
        %4064 = vmatprep.mubr.bf16.mxu0 0
        %4065 = vmatmul.mubr.bf16.gmra.mrb[0].mxu0 %v3942
        %v4066 = vpop.f32.mrb[0].mxu0
        %v4067 = vadd.f32 0.0, %v4066
        %v4068 = vpop.f32.mrb[0].mxu0
        %v4069 = vpop.f32.mrb[0].mxu0
        %v4070 = vadd.f32 0.0, %v4069
        %v4071 = vpop.f32.mrb[0].mxu0
        %4072 = vmatprep.mubr.bf16.mxu0 0
        %4073 = vmatmul.mubr.bf16.gmra.mrb[0].mxu0 %v3945
        %v4074 = vpop.f32.mrb[0].mxu0
        %v4075 = vadd.f32 0.0, %v4074
        %v4076 = vpop.f32.mrb[0].mxu0
        %v4077 = vpop.f32.mrb[0].mxu0
        %v4078 = vadd.f32 0.0, %v4077
        %v4079 = vpop.f32.mrb[0].mxu0
        %4080 = vmatprep.mubr.bf16.mxu0 0
        %4081 = vmatmul.mubr.bf16.gmra.mrb[0].mxu0 %v3948
        %v4082 = vpop.f32.mrb[0].mxu0
        %v4083 = vadd.f32 0.0, %v4082
        %v4084 = vpop.f32.mrb[0].mxu0
        %v4085 = vpop.f32.mrb[0].mxu0
        %v4086 = vadd.f32 0.0, %v4085
        %v4087 = vpop.f32.mrb[0].mxu0
        %4088 = vmatprep.mubr.bf16.mxu0 0
        %4089 = vmatmul.mubr.bf16.gmra.mrb[0].mxu0 %v3951
        %v4090 = vpop.f32.mrb[0].mxu0
        %v4091 = vadd.f32 0.0, %v4090
        %v4092 = vpop.f32.mrb[0].mxu0
        %v4093 = vpop.f32.mrb[0].mxu0
        %v4094 = vadd.f32 0.0, %v4093
        %v4095 = vpop.f32.mrb[0].mxu0
        %4096 = vmatprep.mubr.bf16.mxu0 0
        %4097 = vmatmul.mubr.bf16.gmra.mrb[0].mxu0 %v3954
        %v4098 = vpop.f32.mrb[0].mxu0
        %v4099 = vadd.f32 0.0, %v4098
        %v4100 = vpop.f32.mrb[0].mxu0
        %v4101 = vpop.f32.mrb[0].mxu0
        %v4102 = vadd.f32 0.0, %v4101
        %v4103 = vpop.f32.mrb[0].mxu0
        %4104 = vmatprep.mubr.bf16.mxu0 0
        %4105 = vmatmul.mubr.bf16.gmra.mrb[0].mxu0 %v3957
        %v4106 = vpop.f32.mrb[0].mxu0
        %v4107 = vadd.f32 0.0, %v4106
        %v4108 = vpop.f32.mrb[0].mxu0
        %v4109 = vpop.f32.mrb[0].mxu0
        %v4110 = vadd.f32 0.0, %v4109
        %v4111 = vpop.f32.mrb[0].mxu0
        %4112 = vmatprep.mubr.bf16.mxu0 0
        %4113 = vmatmul.mubr.bf16.gmra.mrb[0].mxu0 %v3960
        %v4114 = vpop.f32.mrb[0].mxu0
        %v4115 = vadd.f32 0.0, %v4114
        %v4116 = vpop.f32.mrb[0].mxu0
        %v4117 = vpop.f32.mrb[0].mxu0
        %v4118 = vadd.f32 0.0, %v4117
        %v4119 = vpop.f32.mrb[0].mxu0
        %4120 = vmatprep.mubr.bf16.mxu0 0
        %4121 = vmatmul.mubr.bf16.gmra.mrb[0].mxu0 %v3963
        %v4122 = vpop.f32.mrb[0].mxu0
        %v4123 = vadd.f32 0.0, %v4122
        %v4124 = vpop.f32.mrb[0].mxu0
        %v4125 = vpop.f32.mrb[0].mxu0
        %v4126 = vadd.f32 0.0, %v4125
        %v4127 = vpop.f32.mrb[0].mxu0
        %4128 = vmatprep.mubr.bf16.mxu0 0
        %4129 = vmatmul.mubr.bf16.gmra.mrb[0].mxu0 %v3966
        %v4130 = vpop.f32.mrb[0].mxu0
        %v4131 = vadd.f32 0.0, %v4130
        %v4132 = vpop.f32.mrb[0].mxu0
        %v4133 = vpop.f32.mrb[0].mxu0
        %v4134 = vadd.f32 0.0, %v4133
        %v4135 = vpop.f32.mrb[0].mxu0
        %4136 = vmatprep.mubr.bf16.mxu0 0
        %4137 = vmatmul.mubr.bf16.gmra.mrb[0].mxu0 %v3969
        %v4138 = vpop.f32.mrb[0].mxu0
        %v4139 = vadd.f32 0.0, %v4138
        %v4140 = vpop.f32.mrb[0].mxu0
        %v4141 = vpop.f32.mrb[0].mxu0
        %v4142 = vadd.f32 0.0, %v4141
        %v4143 = vpop.f32.mrb[0].mxu0
        %4144 = vmatprep.mubr.bf16.mxu0 0
        %4145 = vmatmul.mubr.bf16.gmra.mrb[0].mxu0 %v3972
        %v4146 = vpop.f32.mrb[0].mxu0
        %v4147 = vadd.f32 0.0, %v4146
        %v4148 = vpop.f32.mrb[0].mxu0
        %v4149 = vpop.f32.mrb[0].mxu0
        %v4150 = vadd.f32 0.0, %v4149
        %v4151 = vpop.f32.mrb[0].mxu0
        %4152 = vmatprep.mubr.bf16.mxu0 0
        %4153 = vmatmul.mubr.bf16.gmra.mrb[0].mxu0 %v3975
        %v4154 = vpop.f32.mrb[0].mxu0
        %v4155 = vadd.f32 0.0, %v4154
        %v4156 = vpop.f32.mrb[0].mxu0
        %v4157 = vpop.f32.mrb[0].mxu0
        %v4158 = vadd.f32 0.0, %v4157
        %v4159 = vpop.f32.mrb[0].mxu0
        %4160 = vmatprep.mubr.bf16.mxu0 0
        %4161 = vmatmul.mubr.bf16.gmra.mrb[0].mxu0 %v3978
        %v4162 = vpop.f32.mrb[0].mxu0
        %v4163 = vadd.f32 0.0, %v4162
        %v4164 = vpop.f32.mrb[0].mxu0
        %v4165 = vpop.f32.mrb[0].mxu0
        %v4166 = vadd.f32 0.0, %v4165
        %v4167 = vpop.f32.mrb[0].mxu0
        %4168 = vmatprep.mubr.bf16.mxu0 0
        %4169 = vmatmul.mubr.bf16.gmra.mrb[0].mxu0 %v3981
        %v4170 = vpop.f32.mrb[0].mxu0
        %v4171 = vadd.f32 0.0, %v4170
        %v4172 = vpop.f32.mrb[0].mxu0
        %v4173 = vpop.f32.mrb[0].mxu0
        %v4174 = vadd.f32 0.0, %v4173
        %v4175 = vpop.f32.mrb[0].mxu0
        %4176 = vmatprep.mubr.bf16.mxu0 0
        %4177 = vmatmul.mubr.bf16.gmra.mrb[0].mxu0 %v3984
        %v4178 = vpop.f32.mrb[0].mxu0
        %v4179 = vadd.f32 0.0, %v4178
        %v4180 = vpop.f32.mrb[0].mxu0
        %v4181 = vpop.f32.mrb[0].mxu0
        %v4182 = vadd.f32 0.0, %v4181
        %v4183 = vpop.f32.mrb[0].mxu0
        %4184 = vmatprep.mubr.bf16.mxu0 0
        %4185 = vmatmul.mubr.bf16.gmra.mrb[0].mxu0 %v3987
        %v4186 = vpop.f32.mrb[0].mxu0
        %v4187 = vadd.f32 0.0, %v4186
        %v4188 = vpop.f32.mrb[0].mxu0
        %v4189 = vpop.f32.mrb[0].mxu0
        %v4190 = vadd.f32 0.0, %v4189
        %v4191 = vpop.f32.mrb[0].mxu0
        %4192 = vmatprep.mubr.bf16.mxu0 0
        %4193 = vmatmul.mubr.bf16.gmra.mrb[0].mxu0 %v3990
        %v4194 = vpop.f32.mrb[0].mxu0
        %v4195 = vadd.f32 0.0, %v4194
        %v4196 = vpop.f32.mrb[0].mxu0
        %v4197 = vpop.f32.mrb[0].mxu0
        %v4198 = vpop.f32.mrb[0].mxu0
        %4199 = vdwg.mxu0
        %v4200 = vadd.f32 %v3675, %v4027
        %v4201 = vadd.f32 %v3676, %v4030
        %v4202 = vadd.f32 %v3677, %v4035
        %v4203 = vadd.f32 %v3678, %v4038
        %v4204 = vadd.f32 %v3679, %v4043
        %v4205 = vadd.f32 %v3680, %v4046
        %v4206 = vadd.f32 %v3681, %v4051
        %v4207 = vadd.f32 %v3682, %v4054
        %v4208 = vadd.f32 %v3683, %v4059
        %v4209 = vadd.f32 %v3684, %v4062
        %v4210 = vadd.f32 %v3685, %v4067
        %v4211 = vadd.f32 %v3686, %v4070
        %v4212 = vadd.f32 %v3687, %v4075
        %v4213 = vadd.f32 %v3688, %v4078
        %v4214 = vadd.f32 %v3689, %v4083
        %v4215 = vadd.f32 %v3690, %v4086
        %v4216 = vadd.f32 %v3691, %v4091
        %v4217 = vadd.f32 %v3692, %v4094
        %v4218 = vadd.f32 %v3693, %v4099
        %v4219 = vadd.f32 %v3694, %v4102
        %v4220 = vadd.f32 %v3695, %v4107
        %v4221 = vadd.f32 %v3696, %v4110
        %v4222 = vadd.f32 %v3697, %v4115
        %v4223 = vadd.f32 %v3698, %v4118
        %v4224 = vadd.f32 %v3699, %v4123
        %v4225 = vadd.f32 %v3700, %v4126
        %v4226 = vadd.f32 %v3701, %v4131
        %v4227 = vadd.f32 %v3702, %v4134
        %v4228 = vadd.f32 %v3703, %v4139
        %v4229 = vadd.f32 %v3704, %v4142
        %v4230 = vadd.f32 %v3705, %v4147
        %v4231 = vadd.f32 %v3706, %v4150
        %v4232 = vadd.f32 %v3707, %v4155
        %v4233 = vadd.f32 %v3708, %v4158
        %v4234 = vadd.f32 %v3709, %v4163
        %v4235 = vadd.f32 %v3710, %v4166
        %v4236 = vadd.f32 %v3711, %v4171
        %v4237 = vadd.f32 %v3712, %v4174
        %v4238 = vadd.f32 %v3713, %v4179
        %v4239 = vadd.f32 %v3714, %v4182
        %v4240 = vadd.f32 %v3715, %v4187
        %v4241 = vadd.f32 %v3716, %v4190
        %v4242 = vadd.f32 %v3717, %v4195
        %v4243 = vld [vmem:[#allocation4 + $0x8] sm:$0xf8]
        %s4244 = scalar_lea.vmem %s3, 40
        %v4245 = vld [vmem:[%s4244] sm:$0xf]
        %v4246 = vld [vmem:[%s4244 + $0x4] sm:$0xf]
        %vm4249 = vcmask 1044480
        %v4250 = vrot.slane %v4243, 3
        %v4251 = vrot.slane %v3305, 3
        %v4252 = vsel %vm4249, %v4250, %v4251
        %v4253 = vrot.slane %v3306, 3
        %v4254 = vsel %vm4249, %v4251, %v4253
        %v4255 = vrot.slane %v3307, 3
        %v4256 = vsel %vm4249, %v4253, %v4255
        %v4257 = vrot.slane %v3308, 3
        %v4258 = vsel %vm4249, %v4255, %v4257
        %v4259 = vrot.slane %v3309, 3
        %v4260 = vsel %vm4249, %v4257, %v4259
        %v4261 = vrot.slane %v3310, 3
        %v4262 = vsel %vm4249, %v4259, %v4261
        %v4263 = vrot.slane %v3311, 3
        %v4264 = vsel %vm4249, %v4261, %v4263
        %v4265 = vrot.slane %v3312, 3
        %v4266 = vsel %vm4249, %v4263, %v4265
        %v4267 = vrot.slane %v3313, 3
        %v4268 = vsel %vm4249, %v4265, %v4267
        %v4269 = vrot.slane %v3314, 3
        %v4270 = vsel %vm4249, %v4267, %v4269
        %v4271 = vrot.slane %v3315, 3
        %v4272 = vsel %vm4249, %v4269, %v4271
        %v4273 = vrot.slane %v3316, 3
        %v4274 = vsel %vm4249, %v4271, %v4273
        %v4275 = vrot.slane %v3317, 3
        %v4276 = vsel %vm4249, %v4273, %v4275
        %v4277 = vrot.slane %v3318, 3
        %v4278 = vsel %vm4249, %v4275, %v4277
        %v4279 = vrot.slane %v3319, 3
        %v4280 = vsel %vm4249, %v4277, %v4279
        %v4281 = vrot.slane %v3320, 3
        %v4282 = vsel %vm4249, %v4279, %v4281
        %v4283 = vrot.slane %v3321, 3
        %v4284 = vsel %vm4249, %v4281, %v4283
        %v4285 = vrot.slane %v3322, 3
        %v4286 = vsel %vm4249, %v4283, %v4285
        %v4287 = vrot.slane %v3323, 3
        %v4288 = vsel %vm4249, %v4285, %v4287
        %v4289 = vrot.slane %v3324, 3
        %v4290 = vsel %vm4249, %v4287, %v4289
        %v4291 = vrot.slane %v3718, 3
        %v4292 = vsel %vm4249, %v4289, %v4291
        %v4295 = vunpack.c.l.b16 %v4245
        %v4296 = vunpack.c.l.b16 %v4246
        %v4297 = vpack.c.b16 %v4296, %v4295
        %v4300 = vsel %vm688, %v4252, 0
        %v4303 = vsel %vm688, %v4254, 0
        %v4306 = vsel %vm688, %v4256, 0
        %v4309 = vsel %vm688, %v4258, 0
        %v4312 = vsel %vm688, %v4260, 0
        %v4315 = vsel %vm688, %v4262, 0
        %v4318 = vsel %vm688, %v4264, 0
        %v4321 = vsel %vm688, %v4266, 0
        %v4324 = vsel %vm688, %v4268, 0
        %v4327 = vsel %vm688, %v4270, 0
        %v4330 = vsel %vm688, %v4272, 0
        %v4333 = vsel %vm688, %v4274, 0
        %v4336 = vsel %vm688, %v4276, 0
        %v4339 = vsel %vm688, %v4278, 0
        %v4342 = vsel %vm688, %v4280, 0
        %v4345 = vsel %vm688, %v4282, 0
        %v4348 = vsel %vm688, %v4284, 0
        %v4351 = vsel %vm688, %v4286, 0
        %v4354 = vsel %vm688, %v4288, 0
        %v4357 = vsel %vm688, %v4290, 0
        %v4360 = vsel %vm688, %v4292, 0
        %v4363 = vsel %vm688, %v4291, 0
        %4365 = vmatprep.subr.bf16.mxu0 0
        %4366 = vmatpush1.bf16.msra.mxu0 %v4297
        %4367 = vmatprep.subr.bf16.mxu0 0
        %4368 = vmatpush1.bf16.msra.mxu0 0
        %4369 = vmatprep.subr.bf16.mxu0 0
        %4370 = vmatpush1.bf16.msra.mxu0 0
        %4371 = vmatprep.subr.bf16.mxu0 0
        %4372 = vmatpush1.bf16.msra.mxu0 0
        %4373 = vmatprep.subr.bf16.mxu0 0
        %4374 = vmatpush1.bf16.msra.mxu0 0
        %4375 = vmatprep.subr.bf16.mxu0 0
        %4376 = vmatpush1.bf16.msra.mxu0 0
        %4377 = vmatprep.subr.bf16.mxu0 0
        %4378 = vmatpush1.bf16.msra.mxu0 0
        %4379 = vmatprep.subr.bf16.mxu0 0
        %4380 = vmatpush1.bf16.msra.mxu0 0
        %4381 = vmatprep.subr.bf16.mxu0 0
        %4382 = vmatpush1.bf16.msra.mxu0 0
        %4383 = vmatprep.subr.bf16.mxu0 0
        %4384 = vmatpush1.bf16.msra.mxu0 0
        %4385 = vmatprep.subr.bf16.mxu0 0
        %4386 = vmatpush1.bf16.msra.mxu0 0
        %4387 = vmatprep.subr.bf16.mxu0 0
        %4388 = vmatpush1.bf16.msra.mxu0 0
        %4389 = vmatprep.subr.bf16.mxu0 0
        %4390 = vmatpush1.bf16.msra.mxu0 0
        %4391 = vmatprep.subr.bf16.mxu0 0
        %4392 = vmatpush1.bf16.msra.mxu0 0
        %4393 = vmatprep.subr.bf16.mxu0 0
        %4394 = vmatpush1.bf16.msra.mxu0 0
        %4395 = vmatprep.subr.bf16.mxu0 0
        %4396 = vmatpush1.bf16.msra.mxu0 0
        %4397 = vmatprep.mubr.bf16.mxu0 0
        %4398 = vmatmul.mubr.bf16.gmra.mrb[0].mxu0 %v4300
        %v4399 = vpop.f32.mrb[0].mxu0
        %v4400 = vadd.f32 0.0, %v4399
        %v4401 = vpop.f32.mrb[0].mxu0
        %v4402 = vpop.f32.mrb[0].mxu0
        %v4403 = vadd.f32 0.0, %v4402
        %v4404 = vpop.f32.mrb[0].mxu0
        %4405 = vmatprep.mubr.bf16.mxu0 0
        %4406 = vmatmul.mubr.bf16.gmra.mrb[0].mxu0 %v4303
        %v4407 = vpop.f32.mrb[0].mxu0
        %v4408 = vadd.f32 0.0, %v4407
        %v4409 = vpop.f32.mrb[0].mxu0
        %v4410 = vpop.f32.mrb[0].mxu0
        %v4411 = vadd.f32 0.0, %v4410
        %v4412 = vpop.f32.mrb[0].mxu0
        %4413 = vmatprep.mubr.bf16.mxu0 0
        %4414 = vmatmul.mubr.bf16.gmra.mrb[0].mxu0 %v4306
        %v4415 = vpop.f32.mrb[0].mxu0
        %v4416 = vadd.f32 0.0, %v4415
        %v4417 = vpop.f32.mrb[0].mxu0
        %v4418 = vpop.f32.mrb[0].mxu0
        %v4419 = vadd.f32 0.0, %v4418
        %v4420 = vpop.f32.mrb[0].mxu0
        %4421 = vmatprep.mubr.bf16.mxu0 0
        %4422 = vmatmul.mubr.bf16.gmra.mrb[0].mxu0 %v4309
        %v4423 = vpop.f32.mrb[0].mxu0
        %v4424 = vadd.f32 0.0, %v4423
        %v4425 = vpop.f32.mrb[0].mxu0
        %v4426 = vpop.f32.mrb[0].mxu0
        %v4427 = vadd.f32 0.0, %v4426
        %v4428 = vpop.f32.mrb[0].mxu0
        %4429 = vmatprep.mubr.bf16.mxu0 0
        %4430 = vmatmul.mubr.bf16.gmra.mrb[0].mxu0 %v4312
        %v4431 = vpop.f32.mrb[0].mxu0
        %v4432 = vadd.f32 0.0, %v4431
        %v4433 = vpop.f32.mrb[0].mxu0
        %v4434 = vpop.f32.mrb[0].mxu0
        %v4435 = vadd.f32 0.0, %v4434
        %v4436 = vpop.f32.mrb[0].mxu0
        %4437 = vmatprep.mubr.bf16.mxu0 0
        %4438 = vmatmul.mubr.bf16.gmra.mrb[0].mxu0 %v4315
        %v4439 = vpop.f32.mrb[0].mxu0
        %v4440 = vadd.f32 0.0, %v4439
        %v4441 = vpop.f32.mrb[0].mxu0
        %v4442 = vpop.f32.mrb[0].mxu0
        %v4443 = vadd.f32 0.0, %v4442
        %v4444 = vpop.f32.mrb[0].mxu0
        %4445 = vmatprep.mubr.bf16.mxu0 0
        %4446 = vmatmul.mubr.bf16.gmra.mrb[0].mxu0 %v4318
        %v4447 = vpop.f32.mrb[0].mxu0
        %v4448 = vadd.f32 0.0, %v4447
        %v4449 = vpop.f32.mrb[0].mxu0
        %v4450 = vpop.f32.mrb[0].mxu0
        %v4451 = vadd.f32 0.0, %v4450
        %v4452 = vpop.f32.mrb[0].mxu0
        %4453 = vmatprep.mubr.bf16.mxu0 0
        %4454 = vmatmul.mubr.bf16.gmra.mrb[0].mxu0 %v4321
        %v4455 = vpop.f32.mrb[0].mxu0
        %v4456 = vadd.f32 0.0, %v4455
        %v4457 = vpop.f32.mrb[0].mxu0
        %v4458 = vpop.f32.mrb[0].mxu0
        %v4459 = vadd.f32 0.0, %v4458
        %v4460 = vpop.f32.mrb[0].mxu0
        %4461 = vmatprep.mubr.bf16.mxu0 0
        %4462 = vmatmul.mubr.bf16.gmra.mrb[0].mxu0 %v4324
        %v4463 = vpop.f32.mrb[0].mxu0
        %v4464 = vadd.f32 0.0, %v4463
        %v4465 = vpop.f32.mrb[0].mxu0
        %v4466 = vpop.f32.mrb[0].mxu0
        %v4467 = vadd.f32 0.0, %v4466
        %v4468 = vpop.f32.mrb[0].mxu0
        %4469 = vmatprep.mubr.bf16.mxu0 0
        %4470 = vmatmul.mubr.bf16.gmra.mrb[0].mxu0 %v4327
        %v4471 = vpop.f32.mrb[0].mxu0
        %v4472 = vadd.f32 0.0, %v4471
        %v4473 = vpop.f32.mrb[0].mxu0
        %v4474 = vpop.f32.mrb[0].mxu0
        %v4475 = vadd.f32 0.0, %v4474
        %v4476 = vpop.f32.mrb[0].mxu0
        %4477 = vmatprep.mubr.bf16.mxu0 0
        %4478 = vmatmul.mubr.bf16.gmra.mrb[0].mxu0 %v4330
        %v4479 = vpop.f32.mrb[0].mxu0
        %v4480 = vadd.f32 0.0, %v4479
        %v4481 = vpop.f32.mrb[0].mxu0
        %v4482 = vpop.f32.mrb[0].mxu0
        %v4483 = vadd.f32 0.0, %v4482
        %v4484 = vpop.f32.mrb[0].mxu0
        %4485 = vmatprep.mubr.bf16.mxu0 0
        %4486 = vmatmul.mubr.bf16.gmra.mrb[0].mxu0 %v4333
        %v4487 = vpop.f32.mrb[0].mxu0
        %v4488 = vadd.f32 0.0, %v4487
        %v4489 = vpop.f32.mrb[0].mxu0
        %v4490 = vpop.f32.mrb[0].mxu0
        %v4491 = vadd.f32 0.0, %v4490
        %v4492 = vpop.f32.mrb[0].mxu0
        %4493 = vmatprep.mubr.bf16.mxu0 0
        %4494 = vmatmul.mubr.bf16.gmra.mrb[0].mxu0 %v4336
        %v4495 = vpop.f32.mrb[0].mxu0
        %v4496 = vadd.f32 0.0, %v4495
        %v4497 = vpop.f32.mrb[0].mxu0
        %v4498 = vpop.f32.mrb[0].mxu0
        %v4499 = vadd.f32 0.0, %v4498
        %v4500 = vpop.f32.mrb[0].mxu0
        %4501 = vmatprep.mubr.bf16.mxu0 0
        %4502 = vmatmul.mubr.bf16.gmra.mrb[0].mxu0 %v4339
        %v4503 = vpop.f32.mrb[0].mxu0
        %v4504 = vadd.f32 0.0, %v4503
        %v4505 = vpop.f32.mrb[0].mxu0
        %v4506 = vpop.f32.mrb[0].mxu0
        %v4507 = vadd.f32 0.0, %v4506
        %v4508 = vpop.f32.mrb[0].mxu0
        %4509 = vmatprep.mubr.bf16.mxu0 0
        %4510 = vmatmul.mubr.bf16.gmra.mrb[0].mxu0 %v4342
        %v4511 = vpop.f32.mrb[0].mxu0
        %v4512 = vadd.f32 0.0, %v4511
        %v4513 = vpop.f32.mrb[0].mxu0
        %v4514 = vpop.f32.mrb[0].mxu0
        %v4515 = vadd.f32 0.0, %v4514
        %v4516 = vpop.f32.mrb[0].mxu0
        %4517 = vmatprep.mubr.bf16.mxu0 0
        %4518 = vmatmul.mubr.bf16.gmra.mrb[0].mxu0 %v4345
        %v4519 = vpop.f32.mrb[0].mxu0
        %v4520 = vadd.f32 0.0, %v4519
        %v4521 = vpop.f32.mrb[0].mxu0
        %v4522 = vpop.f32.mrb[0].mxu0
        %v4523 = vadd.f32 0.0, %v4522
        %v4524 = vpop.f32.mrb[0].mxu0
        %4525 = vmatprep.mubr.bf16.mxu0 0
        %4526 = vmatmul.mubr.bf16.gmra.mrb[0].mxu0 %v4348
        %v4527 = vpop.f32.mrb[0].mxu0
        %v4528 = vadd.f32 0.0, %v4527
        %v4529 = vpop.f32.mrb[0].mxu0
        %v4530 = vpop.f32.mrb[0].mxu0
        %v4531 = vadd.f32 0.0, %v4530
        %v4532 = vpop.f32.mrb[0].mxu0
        %4533 = vmatprep.mubr.bf16.mxu0 0
        %4534 = vmatmul.mubr.bf16.gmra.mrb[0].mxu0 %v4351
        %v4535 = vpop.f32.mrb[0].mxu0
        %v4536 = vadd.f32 0.0, %v4535
        %v4537 = vpop.f32.mrb[0].mxu0
        %v4538 = vpop.f32.mrb[0].mxu0
        %v4539 = vadd.f32 0.0, %v4538
        %v4540 = vpop.f32.mrb[0].mxu0
        %4541 = vmatprep.mubr.bf16.mxu0 0
        %4542 = vmatmul.mubr.bf16.gmra.mrb[0].mxu0 %v4354
        %v4543 = vpop.f32.mrb[0].mxu0
        %v4544 = vadd.f32 0.0, %v4543
        %v4545 = vpop.f32.mrb[0].mxu0
        %v4546 = vpop.f32.mrb[0].mxu0
        %v4547 = vadd.f32 0.0, %v4546
        %v4548 = vpop.f32.mrb[0].mxu0
        %4549 = vmatprep.mubr.bf16.mxu0 0
        %4550 = vmatmul.mubr.bf16.gmra.mrb[0].mxu0 %v4357
        %v4551 = vpop.f32.mrb[0].mxu0
        %v4552 = vadd.f32 0.0, %v4551
        %v4553 = vpop.f32.mrb[0].mxu0
        %v4554 = vpop.f32.mrb[0].mxu0
        %v4555 = vadd.f32 0.0, %v4554
        %v4556 = vpop.f32.mrb[0].mxu0
        %4557 = vmatprep.mubr.bf16.mxu0 0
        %4558 = vmatmul.mubr.bf16.gmra.mrb[0].mxu0 %v4360
        %v4559 = vpop.f32.mrb[0].mxu0
        %v4560 = vadd.f32 0.0, %v4559
        %v4561 = vpop.f32.mrb[0].mxu0
        %v4562 = vpop.f32.mrb[0].mxu0
        %v4563 = vadd.f32 0.0, %v4562
        %v4564 = vpop.f32.mrb[0].mxu0
        %4565 = vmatprep.mubr.bf16.mxu0 0
        %4566 = vmatmul.mubr.bf16.gmra.mrb[0].mxu0 %v4363
        %v4567 = vpop.f32.mrb[0].mxu0
        %v4568 = vadd.f32 0.0, %v4567
        %v4569 = vpop.f32.mrb[0].mxu0
        %v4570 = vpop.f32.mrb[0].mxu0
        %v4571 = vpop.f32.mrb[0].mxu0
        %4572 = vdwg.mxu0
        %v4573 = vadd.f32 %v4200, %v4400
        %v4574 = vadd.f32 %v4201, %v4403
        %v4575 = vadd.f32 %v4202, %v4408
        %v4576 = vadd.f32 %v4203, %v4411
        %v4577 = vadd.f32 %v4204, %v4416
        %v4578 = vadd.f32 %v4205, %v4419
        %v4579 = vadd.f32 %v4206, %v4424
        %v4580 = vadd.f32 %v4207, %v4427
        %v4581 = vadd.f32 %v4208, %v4432
        %v4582 = vadd.f32 %v4209, %v4435
        %v4583 = vadd.f32 %v4210, %v4440
        %v4584 = vadd.f32 %v4211, %v4443
        %v4585 = vadd.f32 %v4212, %v4448
        %v4586 = vadd.f32 %v4213, %v4451
        %v4587 = vadd.f32 %v4214, %v4456
        %v4588 = vadd.f32 %v4215, %v4459
        %v4589 = vadd.f32 %v4216, %v4464
        %v4590 = vadd.f32 %v4217, %v4467
        %v4591 = vadd.f32 %v4218, %v4472
        %v4592 = vadd.f32 %v4219, %v4475
        %v4593 = vadd.f32 %v4220, %v4480
        %v4594 = vadd.f32 %v4221, %v4483
        %v4595 = vadd.f32 %v4222, %v4488
        %v4596 = vadd.f32 %v4223, %v4491
        %v4597 = vadd.f32 %v4224, %v4496
        %v4598 = vadd.f32 %v4225, %v4499
        %v4599 = vadd.f32 %v4226, %v4504
        %v4600 = vadd.f32 %v4227, %v4507
        %v4601 = vadd.f32 %v4228, %v4512
        %v4602 = vadd.f32 %v4229, %v4515
        %v4603 = vadd.f32 %v4230, %v4520
        %v4604 = vadd.f32 %v4231, %v4523
        %v4605 = vadd.f32 %v4232, %v4528
        %v4606 = vadd.f32 %v4233, %v4531
        %v4607 = vadd.f32 %v4234, %v4536
        %v4608 = vadd.f32 %v4235, %v4539
        %v4609 = vadd.f32 %v4236, %v4544
        %v4610 = vadd.f32 %v4237, %v4547
        %v4611 = vadd.f32 %v4238, %v4552
        %v4612 = vadd.f32 %v4239, %v4555
        %v4613 = vadd.f32 %v4240, %v4560
        %v4614 = vadd.f32 %v4241, %v4563
        %v4615 = vadd.f32 %v4242, %v4568
        %v4616 = vld [vmem:[#allocation4 + $0x10] sm:$0xf0]
        %v4617 = vld [vmem:[#allocation4 + $0x18] sm:$0xff]
        %v4618 = vld [vmem:[#allocation4 + $0x20] sm:$0xff]
        %v4619 = vld [vmem:[#allocation4 + $0x28] sm:$0xff]
        %v4620 = vld [vmem:[#allocation4 + $0x30] sm:$0xff]
        %v4621 = vld [vmem:[#allocation4 + $0x38] sm:$0xff]
        %v4622 = vld [vmem:[#allocation4 + $0x40] sm:$0xff]
        %v4623 = vld [vmem:[#allocation4 + $0x48] sm:$0xff]
        %v4624 = vld [vmem:[#allocation4 + $0x50] sm:$0xff]
        %v4625 = vld [vmem:[#allocation4 + $0x58] sm:$0xff]
        %v4626 = vld [vmem:[#allocation4 + $0x60] sm:$0xff]
        %v4627 = vld [vmem:[#allocation4 + $0x68] sm:$0xff]
        %v4628 = vld [vmem:[#allocation4 + $0x70] sm:$0xff]
        %v4629 = vld [vmem:[#allocation4 + $0x78] sm:$0xff]
        %v4630 = vld [vmem:[#allocation4 + $0x80] sm:$0xff]
        %v4631 = vld [vmem:[#allocation4 + $0x88] sm:$0xff]
        %v4632 = vld [vmem:[#allocation4 + $0x90] sm:$0xff]
        %v4633 = vld [vmem:[#allocation4 + $0x98] sm:$0xff]
        %v4634 = vld [vmem:[#allocation4 + $0xa0] sm:$0xff]
        %v4635 = vld [vmem:[#allocation4 + $0xa8] sm:$0xff]
        %v4636 = vld [vmem:[#allocation4 + $0xb0] sm:$0xff]
        %v4637 = vld [vmem:[#allocation4 + $0xb8] sm:$0x3f]
        %s4638 = scalar_lea.vmem %s3, 48
        %v4639 = vld [vmem:[%s4638] sm:$0xf]
        %v4640 = vld [vmem:[%s4638 + $0x4] sm:$0xf]
        %vm4663 = vcmask 1043456
        %v4664 = vrot.slane %v4616, 4
        %v4665 = vrot.slane %v4617, 4
        %v4666 = vsel %vm4663, %v4664, %v4665
        %v4667 = vrot.slane %v4618, 4
        %v4668 = vsel %vm4663, %v4665, %v4667
        %v4669 = vrot.slane %v4619, 4
        %v4670 = vsel %vm4663, %v4667, %v4669
        %v4671 = vrot.slane %v4620, 4
        %v4672 = vsel %vm4663, %v4669, %v4671
        %v4673 = vrot.slane %v4621, 4
        %v4674 = vsel %vm4663, %v4671, %v4673
        %v4675 = vrot.slane %v4622, 4
        %v4676 = vsel %vm4663, %v4673, %v4675
        %v4677 = vrot.slane %v4623, 4
        %v4678 = vsel %vm4663, %v4675, %v4677
        %v4679 = vrot.slane %v4624, 4
        %v4680 = vsel %vm4663, %v4677, %v4679
        %v4681 = vrot.slane %v4625, 4
        %v4682 = vsel %vm4663, %v4679, %v4681
        %v4683 = vrot.slane %v4626, 4
        %v4684 = vsel %vm4663, %v4681, %v4683
        %v4685 = vrot.slane %v4627, 4
        %v4686 = vsel %vm4663, %v4683, %v4685
        %v4687 = vrot.slane %v4628, 4
        %v4688 = vsel %vm4663, %v4685, %v4687
        %v4689 = vrot.slane %v4629, 4
        %v4690 = vsel %vm4663, %v4687, %v4689
        %v4691 = vrot.slane %v4630, 4
        %v4692 = vsel %vm4663, %v4689, %v4691
        %v4693 = vrot.slane %v4631, 4
        %v4694 = vsel %vm4663, %v4691, %v4693
        %v4695 = vrot.slane %v4632, 4
        %v4696 = vsel %vm4663, %v4693, %v4695
        %v4697 = vrot.slane %v4633, 4
        %v4698 = vsel %vm4663, %v4695, %v4697
        %v4699 = vrot.slane %v4634, 4
        %v4700 = vsel %vm4663, %v4697, %v4699
        %v4701 = vrot.slane %v4635, 4
        %v4702 = vsel %vm4663, %v4699, %v4701
        %v4703 = vrot.slane %v4636, 4
        %v4704 = vsel %vm4663, %v4701, %v4703
        %v4705 = vrot.slane %v4637, 4
        %v4706 = vsel %vm4663, %v4703, %v4705
        %v4709 = vunpack.c.l.b16 %v4639
        %v4710 = vunpack.c.l.b16 %v4640
        %v4711 = vpack.c.b16 %v4710, %v4709
        %v4714 = vsel %vm688, %v4666, 0
        %v4717 = vsel %vm688, %v4668, 0
        %v4720 = vsel %vm688, %v4670, 0
        %v4723 = vsel %vm688, %v4672, 0
        %v4726 = vsel %vm688, %v4674, 0
        %v4729 = vsel %vm688, %v4676, 0
        %v4732 = vsel %vm688, %v4678, 0
        %v4735 = vsel %vm688, %v4680, 0
        %v4738 = vsel %vm688, %v4682, 0
        %v4741 = vsel %vm688, %v4684, 0
        %v4744 = vsel %vm688, %v4686, 0
        %v4747 = vsel %vm688, %v4688, 0
        %v4750 = vsel %vm688, %v4690, 0
        %v4753 = vsel %vm688, %v4692, 0
        %v4756 = vsel %vm688, %v4694, 0
        %v4759 = vsel %vm688, %v4696, 0
        %v4762 = vsel %vm688, %v4698, 0
        %v4765 = vsel %vm688, %v4700, 0
        %v4768 = vsel %vm688, %v4702, 0
        %v4771 = vsel %vm688, %v4704, 0
        %v4774 = vsel %vm688, %v4706, 0
        %v4777 = vsel %vm688, %v4705, 0
        %4779 = vmatprep.subr.bf16.mxu0 0
        %4780 = vmatpush1.bf16.msra.mxu0 %v4711
        %4781 = vmatprep.subr.bf16.mxu0 0
        %4782 = vmatpush1.bf16.msra.mxu0 0
        %4783 = vmatprep.subr.bf16.mxu0 0
        %4784 = vmatpush1.bf16.msra.mxu0 0
        %4785 = vmatprep.subr.bf16.mxu0 0
        %4786 = vmatpush1.bf16.msra.mxu0 0
        %4787 = vmatprep.subr.bf16.mxu0 0
        %4788 = vmatpush1.bf16.msra.mxu0 0
        %4789 = vmatprep.subr.bf16.mxu0 0
        %4790 = vmatpush1.bf16.msra.mxu0 0
        %4791 = vmatprep.subr.bf16.mxu0 0
        %4792 = vmatpush1.bf16.msra.mxu0 0
        %4793 = vmatprep.subr.bf16.mxu0 0
        %4794 = vmatpush1.bf16.msra.mxu0 0
        %4795 = vmatprep.subr.bf16.mxu0 0
        %4796 = vmatpush1.bf16.msra.mxu0 0
        %4797 = vmatprep.subr.bf16.mxu0 0
        %4798 = vmatpush1.bf16.msra.mxu0 0
        %4799 = vmatprep.subr.bf16.mxu0 0
        %4800 = vmatpush1.bf16.msra.mxu0 0
        %4801 = vmatprep.subr.bf16.mxu0 0
        %4802 = vmatpush1.bf16.msra.mxu0 0
        %4803 = vmatprep.subr.bf16.mxu0 0
        %4804 = vmatpush1.bf16.msra.mxu0 0
        %4805 = vmatprep.subr.bf16.mxu0 0
        %4806 = vmatpush1.bf16.msra.mxu0 0
        %4807 = vmatprep.subr.bf16.mxu0 0
        %4808 = vmatpush1.bf16.msra.mxu0 0
        %4809 = vmatprep.subr.bf16.mxu0 0
        %4810 = vmatpush1.bf16.msra.mxu0 0
        %4811 = vmatprep.mubr.bf16.mxu0 0
        %4812 = vmatmul.mubr.bf16.gmra.mrb[0].mxu0 %v4714
        %v4813 = vpop.f32.mrb[0].mxu0
        %v4814 = vadd.f32 0.0, %v4813
        %v4815 = vpop.f32.mrb[0].mxu0
        %v4816 = vpop.f32.mrb[0].mxu0
        %v4817 = vadd.f32 0.0, %v4816
        %v4818 = vpop.f32.mrb[0].mxu0
        %4819 = vmatprep.mubr.bf16.mxu0 0
        %4820 = vmatmul.mubr.bf16.gmra.mrb[0].mxu0 %v4717
        %v4821 = vpop.f32.mrb[0].mxu0
        %v4822 = vadd.f32 0.0, %v4821
        %v4823 = vpop.f32.mrb[0].mxu0
        %v4824 = vpop.f32.mrb[0].mxu0
        %v4825 = vadd.f32 0.0, %v4824
        %v4826 = vpop.f32.mrb[0].mxu0
        %4827 = vmatprep.mubr.bf16.mxu0 0
        %4828 = vmatmul.mubr.bf16.gmra.mrb[0].mxu0 %v4720
        %v4829 = vpop.f32.mrb[0].mxu0
        %v4830 = vadd.f32 0.0, %v4829
        %v4831 = vpop.f32.mrb[0].mxu0
        %v4832 = vpop.f32.mrb[0].mxu0
        %v4833 = vadd.f32 0.0, %v4832
        %v4834 = vpop.f32.mrb[0].mxu0
        %4835 = vmatprep.mubr.bf16.mxu0 0
        %4836 = vmatmul.mubr.bf16.gmra.mrb[0].mxu0 %v4723
        %v4837 = vpop.f32.mrb[0].mxu0
        %v4838 = vadd.f32 0.0, %v4837
        %v4839 = vpop.f32.mrb[0].mxu0
        %v4840 = vpop.f32.mrb[0].mxu0
        %v4841 = vadd.f32 0.0, %v4840
        %v4842 = vpop.f32.mrb[0].mxu0
        %4843 = vmatprep.mubr.bf16.mxu0 0
        %4844 = vmatmul.mubr.bf16.gmra.mrb[0].mxu0 %v4726
        %v4845 = vpop.f32.mrb[0].mxu0
        %v4846 = vadd.f32 0.0, %v4845
        %v4847 = vpop.f32.mrb[0].mxu0
        %v4848 = vpop.f32.mrb[0].mxu0
        %v4849 = vadd.f32 0.0, %v4848
        %v4850 = vpop.f32.mrb[0].mxu0
        %4851 = vmatprep.mubr.bf16.mxu0 0
        %4852 = vmatmul.mubr.bf16.gmra.mrb[0].mxu0 %v4729
        %v4853 = vpop.f32.mrb[0].mxu0
        %v4854 = vadd.f32 0.0, %v4853
        %v4855 = vpop.f32.mrb[0].mxu0
        %v4856 = vpop.f32.mrb[0].mxu0
        %v4857 = vadd.f32 0.0, %v4856
        %v4858 = vpop.f32.mrb[0].mxu0
        %4859 = vmatprep.mubr.bf16.mxu0 0
        %4860 = vmatmul.mubr.bf16.gmra.mrb[0].mxu0 %v4732
        %v4861 = vpop.f32.mrb[0].mxu0
        %v4862 = vadd.f32 0.0, %v4861
        %v4863 = vpop.f32.mrb[0].mxu0
        %v4864 = vpop.f32.mrb[0].mxu0
        %v4865 = vadd.f32 0.0, %v4864
        %v4866 = vpop.f32.mrb[0].mxu0
        %4867 = vmatprep.mubr.bf16.mxu0 0
        %4868 = vmatmul.mubr.bf16.gmra.mrb[0].mxu0 %v4735
        %v4869 = vpop.f32.mrb[0].mxu0
        %v4870 = vadd.f32 0.0, %v4869
        %v4871 = vpop.f32.mrb[0].mxu0
        %v4872 = vpop.f32.mrb[0].mxu0
        %v4873 = vadd.f32 0.0, %v4872
        %v4874 = vpop.f32.mrb[0].mxu0
        %4875 = vmatprep.mubr.bf16.mxu0 0
        %4876 = vmatmul.mubr.bf16.gmra.mrb[0].mxu0 %v4738
        %v4877 = vpop.f32.mrb[0].mxu0
        %v4878 = vadd.f32 0.0, %v4877
        %v4879 = vpop.f32.mrb[0].mxu0
        %v4880 = vpop.f32.mrb[0].mxu0
        %v4881 = vadd.f32 0.0, %v4880
        %v4882 = vpop.f32.mrb[0].mxu0
        %4883 = vmatprep.mubr.bf16.mxu0 0
        %4884 = vmatmul.mubr.bf16.gmra.mrb[0].mxu0 %v4741
        %v4885 = vpop.f32.mrb[0].mxu0
        %v4886 = vadd.f32 0.0, %v4885
        %v4887 = vpop.f32.mrb[0].mxu0
        %v4888 = vpop.f32.mrb[0].mxu0
        %v4889 = vadd.f32 0.0, %v4888
        %v4890 = vpop.f32.mrb[0].mxu0
        %4891 = vmatprep.mubr.bf16.mxu0 0
        %4892 = vmatmul.mubr.bf16.gmra.mrb[0].mxu0 %v4744
        %v4893 = vpop.f32.mrb[0].mxu0
        %v4894 = vadd.f32 0.0, %v4893
        %v4895 = vpop.f32.mrb[0].mxu0
        %v4896 = vpop.f32.mrb[0].mxu0
        %v4897 = vadd.f32 0.0, %v4896
        %v4898 = vpop.f32.mrb[0].mxu0
        %4899 = vmatprep.mubr.bf16.mxu0 0
        %4900 = vmatmul.mubr.bf16.gmra.mrb[0].mxu0 %v4747
        %v4901 = vpop.f32.mrb[0].mxu0
        %v4902 = vadd.f32 0.0, %v4901
        %v4903 = vpop.f32.mrb[0].mxu0
        %v4904 = vpop.f32.mrb[0].mxu0
        %v4905 = vadd.f32 0.0, %v4904
        %v4906 = vpop.f32.mrb[0].mxu0
        %4907 = vmatprep.mubr.bf16.mxu0 0
        %4908 = vmatmul.mubr.bf16.gmra.mrb[0].mxu0 %v4750
        %v4909 = vpop.f32.mrb[0].mxu0
        %v4910 = vadd.f32 0.0, %v4909
        %v4911 = vpop.f32.mrb[0].mxu0
        %v4912 = vpop.f32.mrb[0].mxu0
        %v4913 = vadd.f32 0.0, %v4912
        %v4914 = vpop.f32.mrb[0].mxu0
        %4915 = vmatprep.mubr.bf16.mxu0 0
        %4916 = vmatmul.mubr.bf16.gmra.mrb[0].mxu0 %v4753
        %v4917 = vpop.f32.mrb[0].mxu0
        %v4918 = vadd.f32 0.0, %v4917
        %v4919 = vpop.f32.mrb[0].mxu0
        %v4920 = vpop.f32.mrb[0].mxu0
        %v4921 = vadd.f32 0.0, %v4920
        %v4922 = vpop.f32.mrb[0].mxu0
        %4923 = vmatprep.mubr.bf16.mxu0 0
        %4924 = vmatmul.mubr.bf16.gmra.mrb[0].mxu0 %v4756
        %v4925 = vpop.f32.mrb[0].mxu0
        %v4926 = vadd.f32 0.0, %v4925
        %v4927 = vpop.f32.mrb[0].mxu0
        %v4928 = vpop.f32.mrb[0].mxu0
        %v4929 = vadd.f32 0.0, %v4928
        %v4930 = vpop.f32.mrb[0].mxu0
        %4931 = vmatprep.mubr.bf16.mxu0 0
        %4932 = vmatmul.mubr.bf16.gmra.mrb[0].mxu0 %v4759
        %v4933 = vpop.f32.mrb[0].mxu0
        %v4934 = vadd.f32 0.0, %v4933
        %v4935 = vpop.f32.mrb[0].mxu0
        %v4936 = vpop.f32.mrb[0].mxu0
        %v4937 = vadd.f32 0.0, %v4936
        %v4938 = vpop.f32.mrb[0].mxu0
        %4939 = vmatprep.mubr.bf16.mxu0 0
        %4940 = vmatmul.mubr.bf16.gmra.mrb[0].mxu0 %v4762
        %v4941 = vpop.f32.mrb[0].mxu0
        %v4942 = vadd.f32 0.0, %v4941
        %v4943 = vpop.f32.mrb[0].mxu0
        %v4944 = vpop.f32.mrb[0].mxu0
        %v4945 = vadd.f32 0.0, %v4944
        %v4946 = vpop.f32.mrb[0].mxu0
        %4947 = vmatprep.mubr.bf16.mxu0 0
        %4948 = vmatmul.mubr.bf16.gmra.mrb[0].mxu0 %v4765
        %v4949 = vpop.f32.mrb[0].mxu0
        %v4950 = vadd.f32 0.0, %v4949
        %v4951 = vpop.f32.mrb[0].mxu0
        %v4952 = vpop.f32.mrb[0].mxu0
        %v4953 = vadd.f32 0.0, %v4952
        %v4954 = vpop.f32.mrb[0].mxu0
        %4955 = vmatprep.mubr.bf16.mxu0 0
        %4956 = vmatmul.mubr.bf16.gmra.mrb[0].mxu0 %v4768
        %v4957 = vpop.f32.mrb[0].mxu0
        %v4958 = vadd.f32 0.0, %v4957
        %v4959 = vpop.f32.mrb[0].mxu0
        %v4960 = vpop.f32.mrb[0].mxu0
        %v4961 = vadd.f32 0.0, %v4960
        %v4962 = vpop.f32.mrb[0].mxu0
        %4963 = vmatprep.mubr.bf16.mxu0 0
        %4964 = vmatmul.mubr.bf16.gmra.mrb[0].mxu0 %v4771
        %v4965 = vpop.f32.mrb[0].mxu0
        %v4966 = vadd.f32 0.0, %v4965
        %v4967 = vpop.f32.mrb[0].mxu0
        %v4968 = vpop.f32.mrb[0].mxu0
        %v4969 = vadd.f32 0.0, %v4968
        %v4970 = vpop.f32.mrb[0].mxu0
        %4971 = vmatprep.mubr.bf16.mxu0 0
        %4972 = vmatmul.mubr.bf16.gmra.mrb[0].mxu0 %v4774
        %v4973 = vpop.f32.mrb[0].mxu0
        %v4974 = vadd.f32 0.0, %v4973
        %v4975 = vpop.f32.mrb[0].mxu0
        %v4976 = vpop.f32.mrb[0].mxu0
        %v4977 = vadd.f32 0.0, %v4976
        %v4978 = vpop.f32.mrb[0].mxu0
        %4979 = vmatprep.mubr.bf16.mxu0 0
        %4980 = vmatmul.mubr.bf16.gmra.mrb[0].mxu0 %v4777
        %v4981 = vpop.f32.mrb[0].mxu0
        %v4982 = vadd.f32 0.0, %v4981
        %v4983 = vpop.f32.mrb[0].mxu0
        %v4984 = vpop.f32.mrb[0].mxu0
        %v4985 = vpop.f32.mrb[0].mxu0
        %4986 = vdwg.mxu0
        %v4987 = vadd.f32 %v4573, %v4814
        %v4988 = vadd.f32 %v4574, %v4817
        %v4989 = vadd.f32 %v4575, %v4822
        %v4990 = vadd.f32 %v4576, %v4825
        %v4991 = vadd.f32 %v4577, %v4830
        %v4992 = vadd.f32 %v4578, %v4833
        %v4993 = vadd.f32 %v4579, %v4838
        %v4994 = vadd.f32 %v4580, %v4841
        %v4995 = vadd.f32 %v4581, %v4846
        %v4996 = vadd.f32 %v4582, %v4849
        %v4997 = vadd.f32 %v4583, %v4854
        %v4998 = vadd.f32 %v4584, %v4857
        %v4999 = vadd.f32 %v4585, %v4862
        %v5000 = vadd.f32 %v4586, %v4865
        %v5001 = vadd.f32 %v4587, %v4870
        %v5002 = vadd.f32 %v4588, %v4873
        %v5003 = vadd.f32 %v4589, %v4878
        %v5004 = vadd.f32 %v4590, %v4881
        %v5005 = vadd.f32 %v4591, %v4886
        %v5006 = vadd.f32 %v4592, %v4889
        %v5007 = vadd.f32 %v4593, %v4894
        %v5008 = vadd.f32 %v4594, %v4897
        %v5009 = vadd.f32 %v4595, %v4902
        %v5010 = vadd.f32 %v4596, %v4905
        %v5011 = vadd.f32 %v4597, %v4910
        %v5012 = vadd.f32 %v4598, %v4913
        %v5013 = vadd.f32 %v4599, %v4918
        %v5014 = vadd.f32 %v4600, %v4921
        %v5015 = vadd.f32 %v4601, %v4926
        %v5016 = vadd.f32 %v4602, %v4929
        %v5017 = vadd.f32 %v4603, %v4934
        %v5018 = vadd.f32 %v4604, %v4937
        %v5019 = vadd.f32 %v4605, %v4942
        %v5020 = vadd.f32 %v4606, %v4945
        %v5021 = vadd.f32 %v4607, %v4950
        %v5022 = vadd.f32 %v4608, %v4953
        %v5023 = vadd.f32 %v4609, %v4958
        %v5024 = vadd.f32 %v4610, %v4961
        %v5025 = vadd.f32 %v4611, %v4966
        %v5026 = vadd.f32 %v4612, %v4969
        %v5027 = vadd.f32 %v4613, %v4974
        %v5028 = vadd.f32 %v4614, %v4977
        %v5029 = vadd.f32 %v4615, %v4982
        %v5030 = vld [vmem:[#allocation4 + $0xb8] sm:$0x7f]
        %s5031 = scalar_lea.vmem %s3, 56
        %v5032 = vld [vmem:[%s5031] sm:$0xf]
        %v5033 = vld [vmem:[%s5031 + $0x4] sm:$0xf]
        %vm5034 = vsmask.f32 3328
        %v5036 = vshrl.u32 %v4616, 16
        %v5038 = vrot.slane %v5036, 4
        %v5039 = vshll.u32 %v4616, 16
        %v5041 = vrot.slane %v5039, 5
        %v5042 = vor.u32 %v5038, %v5041
        %v5044 = vshrl.u32 %v4617, 16
        %v5046 = vrot.slane %v5044, 4
        %v5047 = vshll.u32 %v4617, 16
        %v5049 = vrot.slane %v5047, 5
        %v5050 = vor.u32 %v5046, %v5049
        %v5051 = vsel %vm5034, %v5042, %v5050
        %v5053 = vshrl.u32 %v4618, 16
        %v5055 = vrot.slane %v5053, 4
        %v5056 = vshll.u32 %v4618, 16
        %v5058 = vrot.slane %v5056, 5
        %v5059 = vor.u32 %v5055, %v5058
        %v5060 = vsel %vm5034, %v5050, %v5059
        %v5062 = vshrl.u32 %v4619, 16
        %v5064 = vrot.slane %v5062, 4
        %v5065 = vshll.u32 %v4619, 16
        %v5067 = vrot.slane %v5065, 5
        %v5068 = vor.u32 %v5064, %v5067
        %v5069 = vsel %vm5034, %v5059, %v5068
        %v5071 = vshrl.u32 %v4620, 16
        %v5073 = vrot.slane %v5071, 4
        %v5074 = vshll.u32 %v4620, 16
        %v5076 = vrot.slane %v5074, 5
        %v5077 = vor.u32 %v5073, %v5076
        %v5078 = vsel %vm5034, %v5068, %v5077
        %v5080 = vshrl.u32 %v4621, 16
        %v5082 = vrot.slane %v5080, 4
        %v5083 = vshll.u32 %v4621, 16
        %v5085 = vrot.slane %v5083, 5
        %v5086 = vor.u32 %v5082, %v5085
        %v5087 = vsel %vm5034, %v5077, %v5086
        %v5089 = vshrl.u32 %v4622, 16
        %v5091 = vrot.slane %v5089, 4
        %v5092 = vshll.u32 %v4622, 16
        %v5094 = vrot.slane %v5092, 5
        %v5095 = vor.u32 %v5091, %v5094
        %v5096 = vsel %vm5034, %v5086, %v5095
        %v5098 = vshrl.u32 %v4623, 16
        %v5100 = vrot.slane %v5098, 4
        %v5101 = vshll.u32 %v4623, 16
        %v5103 = vrot.slane %v5101, 5
        %v5104 = vor.u32 %v5100, %v5103
        %v5105 = vsel %vm5034, %v5095, %v5104
        %v5107 = vshrl.u32 %v4624, 16
        %v5109 = vrot.slane %v5107, 4
        %v5110 = vshll.u32 %v4624, 16
        %v5112 = vrot.slane %v5110, 5
        %v5113 = vor.u32 %v5109, %v5112
        %v5114 = vsel %vm5034, %v5104, %v5113
        %v5116 = vshrl.u32 %v4625, 16
        %v5118 = vrot.slane %v5116, 4
        %v5119 = vshll.u32 %v4625, 16
        %v5121 = vrot.slane %v5119, 5
        %v5122 = vor.u32 %v5118, %v5121
        %v5123 = vsel %vm5034, %v5113, %v5122
        %v5125 = vshrl.u32 %v4626, 16
        %v5127 = vrot.slane %v5125, 4
        %v5128 = vshll.u32 %v4626, 16
        %v5130 = vrot.slane %v5128, 5
        %v5131 = vor.u32 %v5127, %v5130
        %v5132 = vsel %vm5034, %v5122, %v5131
        %v5134 = vshrl.u32 %v4627, 16
        %v5136 = vrot.slane %v5134, 4
        %v5137 = vshll.u32 %v4627, 16
        %v5139 = vrot.slane %v5137, 5
        %v5140 = vor.u32 %v5136, %v5139
        %v5141 = vsel %vm5034, %v5131, %v5140
        %v5143 = vshrl.u32 %v4628, 16
        %v5145 = vrot.slane %v5143, 4
        %v5146 = vshll.u32 %v4628, 16
        %v5148 = vrot.slane %v5146, 5
        %v5149 = vor.u32 %v5145, %v5148
        %v5150 = vsel %vm5034, %v5140, %v5149
        %v5152 = vshrl.u32 %v4629, 16
        %v5154 = vrot.slane %v5152, 4
        %v5155 = vshll.u32 %v4629, 16
        %v5157 = vrot.slane %v5155, 5
        %v5158 = vor.u32 %v5154, %v5157
        %v5159 = vsel %vm5034, %v5149, %v5158
        %v5161 = vshrl.u32 %v4630, 16
        %v5163 = vrot.slane %v5161, 4
        %v5164 = vshll.u32 %v4630, 16
        %v5166 = vrot.slane %v5164, 5
        %v5167 = vor.u32 %v5163, %v5166
        %v5168 = vsel %vm5034, %v5158, %v5167
        %v5170 = vshrl.u32 %v4631, 16
        %v5172 = vrot.slane %v5170, 4
        %v5173 = vshll.u32 %v4631, 16
        %v5175 = vrot.slane %v5173, 5
        %v5176 = vor.u32 %v5172, %v5175
        %v5177 = vsel %vm5034, %v5167, %v5176
        %v5179 = vshrl.u32 %v4632, 16
        %v5181 = vrot.slane %v5179, 4
        %v5182 = vshll.u32 %v4632, 16
        %v5184 = vrot.slane %v5182, 5
        %v5185 = vor.u32 %v5181, %v5184
        %v5186 = vsel %vm5034, %v5176, %v5185
        %v5188 = vshrl.u32 %v4633, 16
        %v5190 = vrot.slane %v5188, 4
        %v5191 = vshll.u32 %v4633, 16
        %v5193 = vrot.slane %v5191, 5
        %v5194 = vor.u32 %v5190, %v5193
        %v5195 = vsel %vm5034, %v5185, %v5194
        %v5197 = vshrl.u32 %v4634, 16
        %v5199 = vrot.slane %v5197, 4
        %v5200 = vshll.u32 %v4634, 16
        %v5202 = vrot.slane %v5200, 5
        %v5203 = vor.u32 %v5199, %v5202
        %v5204 = vsel %vm5034, %v5194, %v5203
        %v5206 = vshrl.u32 %v4635, 16
        %v5208 = vrot.slane %v5206, 4
        %v5209 = vshll.u32 %v4635, 16
        %v5211 = vrot.slane %v5209, 5
        %v5212 = vor.u32 %v5208, %v5211
        %v5213 = vsel %vm5034, %v5203, %v5212
        %v5215 = vshrl.u32 %v4636, 16
        %v5217 = vrot.slane %v5215, 4
        %v5218 = vshll.u32 %v4636, 16
        %v5220 = vrot.slane %v5218, 5
        %v5221 = vor.u32 %v5217, %v5220
        %v5222 = vsel %vm5034, %v5212, %v5221
        %v5224 = vshrl.u32 %v5030, 16
        %v5226 = vrot.slane %v5224, 4
        %v5227 = vshll.u32 %v5030, 16
        %v5229 = vrot.slane %v5227, 5
        %v5230 = vor.u32 %v5226, %v5229
        %v5231 = vsel %vm5034, %v5221, %v5230
        %v5234 = vunpack.c.l.b16 %v5032
        %v5235 = vunpack.c.l.b16 %v5033
        %v5236 = vpack.c.b16 %v5235, %v5234
        %v5239 = vsel %vm688, %v5051, 0
        %v5242 = vsel %vm688, %v5060, 0
        %v5245 = vsel %vm688, %v5069, 0
        %v5248 = vsel %vm688, %v5078, 0
        %v5251 = vsel %vm688, %v5087, 0
        %v5254 = vsel %vm688, %v5096, 0
        %v5257 = vsel %vm688, %v5105, 0
        %v5260 = vsel %vm688, %v5114, 0
        %v5263 = vsel %vm688, %v5123, 0
        %v5266 = vsel %vm688, %v5132, 0
        %v5269 = vsel %vm688, %v5141, 0
        %v5272 = vsel %vm688, %v5150, 0
        %v5275 = vsel %vm688, %v5159, 0
        %v5278 = vsel %vm688, %v5168, 0
        %v5281 = vsel %vm688, %v5177, 0
        %v5284 = vsel %vm688, %v5186, 0
        %v5287 = vsel %vm688, %v5195, 0
        %v5290 = vsel %vm688, %v5204, 0
        %v5293 = vsel %vm688, %v5213, 0
        %v5296 = vsel %vm688, %v5222, 0
        %v5299 = vsel %vm688, %v5231, 0
        %v5302 = vsel %vm688, %v5230, 0
        %5304 = vmatprep.subr.bf16.mxu0 0
        %5305 = vmatpush1.bf16.msra.mxu0 %v5236
        %5306 = vmatprep.subr.bf16.mxu0 0
        %5307 = vmatpush1.bf16.msra.mxu0 0
        %5308 = vmatprep.subr.bf16.mxu0 0
        %5309 = vmatpush1.bf16.msra.mxu0 0
        %5310 = vmatprep.subr.bf16.mxu0 0
        %5311 = vmatpush1.bf16.msra.mxu0 0
        %5312 = vmatprep.subr.bf16.mxu0 0
        %5313 = vmatpush1.bf16.msra.mxu0 0
        %5314 = vmatprep.subr.bf16.mxu0 0
        %5315 = vmatpush1.bf16.msra.mxu0 0
        %5316 = vmatprep.subr.bf16.mxu0 0
        %5317 = vmatpush1.bf16.msra.mxu0 0
        %5318 = vmatprep.subr.bf16.mxu0 0
        %5319 = vmatpush1.bf16.msra.mxu0 0
        %5320 = vmatprep.subr.bf16.mxu0 0
        %5321 = vmatpush1.bf16.msra.mxu0 0
        %5322 = vmatprep.subr.bf16.mxu0 0
        %5323 = vmatpush1.bf16.msra.mxu0 0
        %5324 = vmatprep.subr.bf16.mxu0 0
        %5325 = vmatpush1.bf16.msra.mxu0 0
        %5326 = vmatprep.subr.bf16.mxu0 0
        %5327 = vmatpush1.bf16.msra.mxu0 0
        %5328 = vmatprep.subr.bf16.mxu0 0
        %5329 = vmatpush1.bf16.msra.mxu0 0
        %5330 = vmatprep.subr.bf16.mxu0 0
        %5331 = vmatpush1.bf16.msra.mxu0 0
        %5332 = vmatprep.subr.bf16.mxu0 0
        %5333 = vmatpush1.bf16.msra.mxu0 0
        %5334 = vmatprep.subr.bf16.mxu0 0
        %5335 = vmatpush1.bf16.msra.mxu0 0
        %5336 = vmatprep.mubr.bf16.mxu0 0
        %5337 = vmatmul.mubr.bf16.gmra.mrb[0].mxu0 %v5239
        %v5338 = vpop.f32.mrb[0].mxu0
        %v5339 = vadd.f32 0.0, %v5338
        %v5340 = vpop.f32.mrb[0].mxu0
        %v5341 = vpop.f32.mrb[0].mxu0
        %v5342 = vadd.f32 0.0, %v5341
        %v5343 = vpop.f32.mrb[0].mxu0
        %5344 = vmatprep.mubr.bf16.mxu0 0
        %5345 = vmatmul.mubr.bf16.gmra.mrb[0].mxu0 %v5242
        %v5346 = vpop.f32.mrb[0].mxu0
        %v5347 = vadd.f32 0.0, %v5346
        %v5348 = vpop.f32.mrb[0].mxu0
        %v5349 = vpop.f32.mrb[0].mxu0
        %v5350 = vadd.f32 0.0, %v5349
        %v5351 = vpop.f32.mrb[0].mxu0
        %5352 = vmatprep.mubr.bf16.mxu0 0
        %5353 = vmatmul.mubr.bf16.gmra.mrb[0].mxu0 %v5245
        %v5354 = vpop.f32.mrb[0].mxu0
        %v5355 = vadd.f32 0.0, %v5354
        %v5356 = vpop.f32.mrb[0].mxu0
        %v5357 = vpop.f32.mrb[0].mxu0
        %v5358 = vadd.f32 0.0, %v5357
        %v5359 = vpop.f32.mrb[0].mxu0
        %5360 = vmatprep.mubr.bf16.mxu0 0
        %5361 = vmatmul.mubr.bf16.gmra.mrb[0].mxu0 %v5248
        %v5362 = vpop.f32.mrb[0].mxu0
        %v5363 = vadd.f32 0.0, %v5362
        %v5364 = vpop.f32.mrb[0].mxu0
        %v5365 = vpop.f32.mrb[0].mxu0
        %v5366 = vadd.f32 0.0, %v5365
        %v5367 = vpop.f32.mrb[0].mxu0
        %5368 = vmatprep.mubr.bf16.mxu0 0
        %5369 = vmatmul.mubr.bf16.gmra.mrb[0].mxu0 %v5251
        %v5370 = vpop.f32.mrb[0].mxu0
        %v5371 = vadd.f32 0.0, %v5370
        %v5372 = vpop.f32.mrb[0].mxu0
        %v5373 = vpop.f32.mrb[0].mxu0
        %v5374 = vadd.f32 0.0, %v5373
        %v5375 = vpop.f32.mrb[0].mxu0
        %5376 = vmatprep.mubr.bf16.mxu0 0
        %5377 = vmatmul.mubr.bf16.gmra.mrb[0].mxu0 %v5254
        %v5378 = vpop.f32.mrb[0].mxu0
        %v5379 = vadd.f32 0.0, %v5378
        %v5380 = vpop.f32.mrb[0].mxu0
        %v5381 = vpop.f32.mrb[0].mxu0
        %v5382 = vadd.f32 0.0, %v5381
        %v5383 = vpop.f32.mrb[0].mxu0
        %5384 = vmatprep.mubr.bf16.mxu0 0
        %5385 = vmatmul.mubr.bf16.gmra.mrb[0].mxu0 %v5257
        %v5386 = vpop.f32.mrb[0].mxu0
        %v5387 = vadd.f32 0.0, %v5386
        %v5388 = vpop.f32.mrb[0].mxu0
        %v5389 = vpop.f32.mrb[0].mxu0
        %v5390 = vadd.f32 0.0, %v5389
        %v5391 = vpop.f32.mrb[0].mxu0
        %5392 = vmatprep.mubr.bf16.mxu0 0
        %5393 = vmatmul.mubr.bf16.gmra.mrb[0].mxu0 %v5260
        %v5394 = vpop.f32.mrb[0].mxu0
        %v5395 = vadd.f32 0.0, %v5394
        %v5396 = vpop.f32.mrb[0].mxu0
        %v5397 = vpop.f32.mrb[0].mxu0
        %v5398 = vadd.f32 0.0, %v5397
        %v5399 = vpop.f32.mrb[0].mxu0
        %5400 = vmatprep.mubr.bf16.mxu0 0
        %5401 = vmatmul.mubr.bf16.gmra.mrb[0].mxu0 %v5263
        %v5402 = vpop.f32.mrb[0].mxu0
        %v5403 = vadd.f32 0.0, %v5402
        %v5404 = vpop.f32.mrb[0].mxu0
        %v5405 = vpop.f32.mrb[0].mxu0
        %v5406 = vadd.f32 0.0, %v5405
        %v5407 = vpop.f32.mrb[0].mxu0
        %5408 = vmatprep.mubr.bf16.mxu0 0
        %5409 = vmatmul.mubr.bf16.gmra.mrb[0].mxu0 %v5266
        %v5410 = vpop.f32.mrb[0].mxu0
        %v5411 = vadd.f32 0.0, %v5410
        %v5412 = vpop.f32.mrb[0].mxu0
        %v5413 = vpop.f32.mrb[0].mxu0
        %v5414 = vadd.f32 0.0, %v5413
        %v5415 = vpop.f32.mrb[0].mxu0
        %5416 = vmatprep.mubr.bf16.mxu0 0
        %5417 = vmatmul.mubr.bf16.gmra.mrb[0].mxu0 %v5269
        %v5418 = vpop.f32.mrb[0].mxu0
        %v5419 = vadd.f32 0.0, %v5418
        %v5420 = vpop.f32.mrb[0].mxu0
        %v5421 = vpop.f32.mrb[0].mxu0
        %v5422 = vadd.f32 0.0, %v5421
        %v5423 = vpop.f32.mrb[0].mxu0
        %5424 = vmatprep.mubr.bf16.mxu0 0
        %5425 = vmatmul.mubr.bf16.gmra.mrb[0].mxu0 %v5272
        %v5426 = vpop.f32.mrb[0].mxu0
        %v5427 = vadd.f32 0.0, %v5426
        %v5428 = vpop.f32.mrb[0].mxu0
        %v5429 = vpop.f32.mrb[0].mxu0
        %v5430 = vadd.f32 0.0, %v5429
        %v5431 = vpop.f32.mrb[0].mxu0
        %5432 = vmatprep.mubr.bf16.mxu0 0
        %5433 = vmatmul.mubr.bf16.gmra.mrb[0].mxu0 %v5275
        %v5434 = vpop.f32.mrb[0].mxu0
        %v5435 = vadd.f32 0.0, %v5434
        %v5436 = vpop.f32.mrb[0].mxu0
        %v5437 = vpop.f32.mrb[0].mxu0
        %v5438 = vadd.f32 0.0, %v5437
        %v5439 = vpop.f32.mrb[0].mxu0
        %5440 = vmatprep.mubr.bf16.mxu0 0
        %5441 = vmatmul.mubr.bf16.gmra.mrb[0].mxu0 %v5278
        %v5442 = vpop.f32.mrb[0].mxu0
        %v5443 = vadd.f32 0.0, %v5442
        %v5444 = vpop.f32.mrb[0].mxu0
        %v5445 = vpop.f32.mrb[0].mxu0
        %v5446 = vadd.f32 0.0, %v5445
        %v5447 = vpop.f32.mrb[0].mxu0
        %5448 = vmatprep.mubr.bf16.mxu0 0
        %5449 = vmatmul.mubr.bf16.gmra.mrb[0].mxu0 %v5281
        %v5450 = vpop.f32.mrb[0].mxu0
        %v5451 = vadd.f32 0.0, %v5450
        %v5452 = vpop.f32.mrb[0].mxu0
        %v5453 = vpop.f32.mrb[0].mxu0
        %v5454 = vadd.f32 0.0, %v5453
        %v5455 = vpop.f32.mrb[0].mxu0
        %5456 = vmatprep.mubr.bf16.mxu0 0
        %5457 = vmatmul.mubr.bf16.gmra.mrb[0].mxu0 %v5284
        %v5458 = vpop.f32.mrb[0].mxu0
        %v5459 = vadd.f32 0.0, %v5458
        %v5460 = vpop.f32.mrb[0].mxu0
        %v5461 = vpop.f32.mrb[0].mxu0
        %v5462 = vadd.f32 0.0, %v5461
        %v5463 = vpop.f32.mrb[0].mxu0
        %5464 = vmatprep.mubr.bf16.mxu0 0
        %5465 = vmatmul.mubr.bf16.gmra.mrb[0].mxu0 %v5287
        %v5466 = vpop.f32.mrb[0].mxu0
        %v5467 = vadd.f32 0.0, %v5466
        %v5468 = vpop.f32.mrb[0].mxu0
        %v5469 = vpop.f32.mrb[0].mxu0
        %v5470 = vadd.f32 0.0, %v5469
        %v5471 = vpop.f32.mrb[0].mxu0
        %5472 = vmatprep.mubr.bf16.mxu0 0
        %5473 = vmatmul.mubr.bf16.gmra.mrb[0].mxu0 %v5290
        %v5474 = vpop.f32.mrb[0].mxu0
        %v5475 = vadd.f32 0.0, %v5474
        %v5476 = vpop.f32.mrb[0].mxu0
        %v5477 = vpop.f32.mrb[0].mxu0
        %v5478 = vadd.f32 0.0, %v5477
        %v5479 = vpop.f32.mrb[0].mxu0
        %5480 = vmatprep.mubr.bf16.mxu0 0
        %5481 = vmatmul.mubr.bf16.gmra.mrb[0].mxu0 %v5293
        %v5482 = vpop.f32.mrb[0].mxu0
        %v5483 = vadd.f32 0.0, %v5482
        %v5484 = vpop.f32.mrb[0].mxu0
        %v5485 = vpop.f32.mrb[0].mxu0
        %v5486 = vadd.f32 0.0, %v5485
        %v5487 = vpop.f32.mrb[0].mxu0
        %5488 = vmatprep.mubr.bf16.mxu0 0
        %5489 = vmatmul.mubr.bf16.gmra.mrb[0].mxu0 %v5296
        %v5490 = vpop.f32.mrb[0].mxu0
        %v5491 = vadd.f32 0.0, %v5490
        %v5492 = vpop.f32.mrb[0].mxu0
        %v5493 = vpop.f32.mrb[0].mxu0
        %v5494 = vadd.f32 0.0, %v5493
        %v5495 = vpop.f32.mrb[0].mxu0
        %5496 = vmatprep.mubr.bf16.mxu0 0
        %5497 = vmatmul.mubr.bf16.gmra.mrb[0].mxu0 %v5299
        %v5498 = vpop.f32.mrb[0].mxu0
        %v5499 = vadd.f32 0.0, %v5498
        %v5500 = vpop.f32.mrb[0].mxu0
        %v5501 = vpop.f32.mrb[0].mxu0
        %v5502 = vadd.f32 0.0, %v5501
        %v5503 = vpop.f32.mrb[0].mxu0
        %5504 = vmatprep.mubr.bf16.mxu0 0
        %5505 = vmatmul.mubr.bf16.gmra.mrb[0].mxu0 %v5302
        %v5506 = vpop.f32.mrb[0].mxu0
        %v5507 = vadd.f32 0.0, %v5506
        %v5508 = vpop.f32.mrb[0].mxu0
        %v5509 = vpop.f32.mrb[0].mxu0
        %v5510 = vpop.f32.mrb[0].mxu0
        %5511 = vdwg.mxu0
        %v5512 = vadd.f32 %v4987, %v5339
        %v5513 = vadd.f32 %v4988, %v5342
        %v5514 = vadd.f32 %v4989, %v5347
        %v5515 = vadd.f32 %v4990, %v5350
        %v5516 = vadd.f32 %v4991, %v5355
        %v5517 = vadd.f32 %v4992, %v5358
        %v5518 = vadd.f32 %v4993, %v5363
        %v5519 = vadd.f32 %v4994, %v5366
        %v5520 = vadd.f32 %v4995, %v5371
        %v5521 = vadd.f32 %v4996, %v5374
        %v5522 = vadd.f32 %v4997, %v5379
        %v5523 = vadd.f32 %v4998, %v5382
        %v5524 = vadd.f32 %v4999, %v5387
        %v5525 = vadd.f32 %v5000, %v5390
        %v5526 = vadd.f32 %v5001, %v5395
        %v5527 = vadd.f32 %v5002, %v5398
        %v5528 = vadd.f32 %v5003, %v5403
        %v5529 = vadd.f32 %v5004, %v5406
        %v5530 = vadd.f32 %v5005, %v5411
        %v5531 = vadd.f32 %v5006, %v5414
        %v5532 = vadd.f32 %v5007, %v5419
        %v5533 = vadd.f32 %v5008, %v5422
        %v5534 = vadd.f32 %v5009, %v5427
        %v5535 = vadd.f32 %v5010, %v5430
        %v5536 = vadd.f32 %v5011, %v5435
        %v5537 = vadd.f32 %v5012, %v5438
        %v5538 = vadd.f32 %v5013, %v5443
        %v5539 = vadd.f32 %v5014, %v5446
        %v5540 = vadd.f32 %v5015, %v5451
        %v5541 = vadd.f32 %v5016, %v5454
        %v5542 = vadd.f32 %v5017, %v5459
        %v5543 = vadd.f32 %v5018, %v5462
        %v5544 = vadd.f32 %v5019, %v5467
        %v5545 = vadd.f32 %v5020, %v5470
        %v5546 = vadd.f32 %v5021, %v5475
        %v5547 = vadd.f32 %v5022, %v5478
        %v5548 = vadd.f32 %v5023, %v5483
        %v5549 = vadd.f32 %v5024, %v5486
        %v5550 = vadd.f32 %v5025, %v5491
        %v5551 = vadd.f32 %v5026, %v5494
        %v5552 = vadd.f32 %v5027, %v5499
        %v5553 = vadd.f32 %v5028, %v5502
        %v5554 = vadd.f32 %v5029, %v5507
        %v5555 = vld [vmem:[#allocation4 + $0x10] sm:$0xe0]
        %s5556 = scalar_lea.vmem %s3, 64
        %v5557 = vld [vmem:[%s5556] sm:$0xf]
        %v5558 = vld [vmem:[%s5556 + $0x4] sm:$0xf]
        %vm5561 = vcmask 1042432
        %v5562 = vrot.slane %v5555, 5
        %v5563 = vrot.slane %v4617, 5
        %v5564 = vsel %vm5561, %v5562, %v5563
        %v5565 = vrot.slane %v4618, 5
        %v5566 = vsel %vm5561, %v5563, %v5565
        %v5567 = vrot.slane %v4619, 5
        %v5568 = vsel %vm5561, %v5565, %v5567
        %v5569 = vrot.slane %v4620, 5
        %v5570 = vsel %vm5561, %v5567, %v5569
        %v5571 = vrot.slane %v4621, 5
        %v5572 = vsel %vm5561, %v5569, %v5571
        %v5573 = vrot.slane %v4622, 5
        %v5574 = vsel %vm5561, %v5571, %v5573
        %v5575 = vrot.slane %v4623, 5
        %v5576 = vsel %vm5561, %v5573, %v5575
        %v5577 = vrot.slane %v4624, 5
        %v5578 = vsel %vm5561, %v5575, %v5577
        %v5579 = vrot.slane %v4625, 5
        %v5580 = vsel %vm5561, %v5577, %v5579
        %v5581 = vrot.slane %v4626, 5
        %v5582 = vsel %vm5561, %v5579, %v5581
        %v5583 = vrot.slane %v4627, 5
        %v5584 = vsel %vm5561, %v5581, %v5583
        %v5585 = vrot.slane %v4628, 5
        %v5586 = vsel %vm5561, %v5583, %v5585
        %v5587 = vrot.slane %v4629, 5
        %v5588 = vsel %vm5561, %v5585, %v5587
        %v5589 = vrot.slane %v4630, 5
        %v5590 = vsel %vm5561, %v5587, %v5589
        %v5591 = vrot.slane %v4631, 5
        %v5592 = vsel %vm5561, %v5589, %v5591
        %v5593 = vrot.slane %v4632, 5
        %v5594 = vsel %vm5561, %v5591, %v5593
        %v5595 = vrot.slane %v4633, 5
        %v5596 = vsel %vm5561, %v5593, %v5595
        %v5597 = vrot.slane %v4634, 5
        %v5598 = vsel %vm5561, %v5595, %v5597
        %v5599 = vrot.slane %v4635, 5
        %v5600 = vsel %vm5561, %v5597, %v5599
        %v5601 = vrot.slane %v4636, 5
        %v5602 = vsel %vm5561, %v5599, %v5601
        %v5603 = vrot.slane %v5030, 5
        %v5604 = vsel %vm5561, %v5601, %v5603
        %v5607 = vunpack.c.l.b16 %v5557
        %v5608 = vunpack.c.l.b16 %v5558
        %v5609 = vpack.c.b16 %v5608, %v5607
        %v5612 = vsel %vm688, %v5564, 0
        %v5615 = vsel %vm688, %v5566, 0
        %v5618 = vsel %vm688, %v5568, 0
        %v5621 = vsel %vm688, %v5570, 0
        %v5624 = vsel %vm688, %v5572, 0
        %v5627 = vsel %vm688, %v5574, 0
        %v5630 = vsel %vm688, %v5576, 0
        %v5633 = vsel %vm688, %v5578, 0
        %v5636 = vsel %vm688, %v5580, 0
        %v5639 = vsel %vm688, %v5582, 0
        %v5642 = vsel %vm688, %v5584, 0
        %v5645 = vsel %vm688, %v5586, 0
        %v5648 = vsel %vm688, %v5588, 0
        %v5651 = vsel %vm688, %v5590, 0
        %v5654 = vsel %vm688, %v5592, 0
        %v5657 = vsel %vm688, %v5594, 0
        %v5660 = vsel %vm688, %v5596, 0
        %v5663 = vsel %vm688, %v5598, 0
        %v5666 = vsel %vm688, %v5600, 0
        %v5669 = vsel %vm688, %v5602, 0
        %v5672 = vsel %vm688, %v5604, 0
        %v5675 = vsel %vm688, %v5603, 0
        %5677 = vmatprep.subr.bf16.mxu0 0
        %5678 = vmatpush1.bf16.msra.mxu0 %v5609
        %5679 = vmatprep.subr.bf16.mxu0 0
        %5680 = vmatpush1.bf16.msra.mxu0 0
        %5681 = vmatprep.subr.bf16.mxu0 0
        %5682 = vmatpush1.bf16.msra.mxu0 0
        %5683 = vmatprep.subr.bf16.mxu0 0
        %5684 = vmatpush1.bf16.msra.mxu0 0
        %5685 = vmatprep.subr.bf16.mxu0 0
        %5686 = vmatpush1.bf16.msra.mxu0 0
        %5687 = vmatprep.subr.bf16.mxu0 0
        %5688 = vmatpush1.bf16.msra.mxu0 0
        %5689 = vmatprep.subr.bf16.mxu0 0
        %5690 = vmatpush1.bf16.msra.mxu0 0
        %5691 = vmatprep.subr.bf16.mxu0 0
        %5692 = vmatpush1.bf16.msra.mxu0 0
        %5693 = vmatprep.subr.bf16.mxu0 0
        %5694 = vmatpush1.bf16.msra.mxu0 0
        %5695 = vmatprep.subr.bf16.mxu0 0
        %5696 = vmatpush1.bf16.msra.mxu0 0
        %5697 = vmatprep.subr.bf16.mxu0 0
        %5698 = vmatpush1.bf16.msra.mxu0 0
        %5699 = vmatprep.subr.bf16.mxu0 0
        %5700 = vmatpush1.bf16.msra.mxu0 0
        %5701 = vmatprep.subr.bf16.mxu0 0
        %5702 = vmatpush1.bf16.msra.mxu0 0
        %5703 = vmatprep.subr.bf16.mxu0 0
        %5704 = vmatpush1.bf16.msra.mxu0 0
        %5705 = vmatprep.subr.bf16.mxu0 0
        %5706 = vmatpush1.bf16.msra.mxu0 0
        %5707 = vmatprep.subr.bf16.mxu0 0
        %5708 = vmatpush1.bf16.msra.mxu0 0
        %5709 = vmatprep.mubr.bf16.mxu0 0
        %5710 = vmatmul.mubr.bf16.gmra.mrb[0].mxu0 %v5612
        %v5711 = vpop.f32.mrb[0].mxu0
        %v5712 = vadd.f32 0.0, %v5711
        %v5713 = vpop.f32.mrb[0].mxu0
        %v5714 = vpop.f32.mrb[0].mxu0
        %v5715 = vadd.f32 0.0, %v5714
        %v5716 = vpop.f32.mrb[0].mxu0
        %5717 = vmatprep.mubr.bf16.mxu0 0
        %5718 = vmatmul.mubr.bf16.gmra.mrb[0].mxu0 %v5615
        %v5719 = vpop.f32.mrb[0].mxu0
        %v5720 = vadd.f32 0.0, %v5719
        %v5721 = vpop.f32.mrb[0].mxu0
        %v5722 = vpop.f32.mrb[0].mxu0
        %v5723 = vadd.f32 0.0, %v5722
        %v5724 = vpop.f32.mrb[0].mxu0
        %5725 = vmatprep.mubr.bf16.mxu0 0
        %5726 = vmatmul.mubr.bf16.gmra.mrb[0].mxu0 %v5618
        %v5727 = vpop.f32.mrb[0].mxu0
        %v5728 = vadd.f32 0.0, %v5727
        %v5729 = vpop.f32.mrb[0].mxu0
        %v5730 = vpop.f32.mrb[0].mxu0
        %v5731 = vadd.f32 0.0, %v5730
        %v5732 = vpop.f32.mrb[0].mxu0
        %5733 = vmatprep.mubr.bf16.mxu0 0
        %5734 = vmatmul.mubr.bf16.gmra.mrb[0].mxu0 %v5621
        %v5735 = vpop.f32.mrb[0].mxu0
        %v5736 = vadd.f32 0.0, %v5735
        %v5737 = vpop.f32.mrb[0].mxu0
        %v5738 = vpop.f32.mrb[0].mxu0
        %v5739 = vadd.f32 0.0, %v5738
        %v5740 = vpop.f32.mrb[0].mxu0
        %5741 = vmatprep.mubr.bf16.mxu0 0
        %5742 = vmatmul.mubr.bf16.gmra.mrb[0].mxu0 %v5624
        %v5743 = vpop.f32.mrb[0].mxu0
        %v5744 = vadd.f32 0.0, %v5743
        %v5745 = vpop.f32.mrb[0].mxu0
        %v5746 = vpop.f32.mrb[0].mxu0
        %v5747 = vadd.f32 0.0, %v5746
        %v5748 = vpop.f32.mrb[0].mxu0
        %5749 = vmatprep.mubr.bf16.mxu0 0
        %5750 = vmatmul.mubr.bf16.gmra.mrb[0].mxu0 %v5627
        %v5751 = vpop.f32.mrb[0].mxu0
        %v5752 = vadd.f32 0.0, %v5751
        %v5753 = vpop.f32.mrb[0].mxu0
        %v5754 = vpop.f32.mrb[0].mxu0
        %v5755 = vadd.f32 0.0, %v5754
        %v5756 = vpop.f32.mrb[0].mxu0
        %5757 = vmatprep.mubr.bf16.mxu0 0
        %5758 = vmatmul.mubr.bf16.gmra.mrb[0].mxu0 %v5630
        %v5759 = vpop.f32.mrb[0].mxu0
        %v5760 = vadd.f32 0.0, %v5759
        %v5761 = vpop.f32.mrb[0].mxu0
        %v5762 = vpop.f32.mrb[0].mxu0
        %v5763 = vadd.f32 0.0, %v5762
        %v5764 = vpop.f32.mrb[0].mxu0
        %5765 = vmatprep.mubr.bf16.mxu0 0
        %5766 = vmatmul.mubr.bf16.gmra.mrb[0].mxu0 %v5633
        %v5767 = vpop.f32.mrb[0].mxu0
        %v5768 = vadd.f32 0.0, %v5767
        %v5769 = vpop.f32.mrb[0].mxu0
        %v5770 = vpop.f32.mrb[0].mxu0
        %v5771 = vadd.f32 0.0, %v5770
        %v5772 = vpop.f32.mrb[0].mxu0
        %5773 = vmatprep.mubr.bf16.mxu0 0
        %5774 = vmatmul.mubr.bf16.gmra.mrb[0].mxu0 %v5636
        %v5775 = vpop.f32.mrb[0].mxu0
        %v5776 = vadd.f32 0.0, %v5775
        %v5777 = vpop.f32.mrb[0].mxu0
        %v5778 = vpop.f32.mrb[0].mxu0
        %v5779 = vadd.f32 0.0, %v5778
        %v5780 = vpop.f32.mrb[0].mxu0
        %5781 = vmatprep.mubr.bf16.mxu0 0
        %5782 = vmatmul.mubr.bf16.gmra.mrb[0].mxu0 %v5639
        %v5783 = vpop.f32.mrb[0].mxu0
        %v5784 = vadd.f32 0.0, %v5783
        %v5785 = vpop.f32.mrb[0].mxu0
        %v5786 = vpop.f32.mrb[0].mxu0
        %v5787 = vadd.f32 0.0, %v5786
        %v5788 = vpop.f32.mrb[0].mxu0
        %5789 = vmatprep.mubr.bf16.mxu0 0
        %5790 = vmatmul.mubr.bf16.gmra.mrb[0].mxu0 %v5642
        %v5791 = vpop.f32.mrb[0].mxu0
        %v5792 = vadd.f32 0.0, %v5791
        %v5793 = vpop.f32.mrb[0].mxu0
        %v5794 = vpop.f32.mrb[0].mxu0
        %v5795 = vadd.f32 0.0, %v5794
        %v5796 = vpop.f32.mrb[0].mxu0
        %5797 = vmatprep.mubr.bf16.mxu0 0
        %5798 = vmatmul.mubr.bf16.gmra.mrb[0].mxu0 %v5645
        %v5799 = vpop.f32.mrb[0].mxu0
        %v5800 = vadd.f32 0.0, %v5799
        %v5801 = vpop.f32.mrb[0].mxu0
        %v5802 = vpop.f32.mrb[0].mxu0
        %v5803 = vadd.f32 0.0, %v5802
        %v5804 = vpop.f32.mrb[0].mxu0
        %5805 = vmatprep.mubr.bf16.mxu0 0
        %5806 = vmatmul.mubr.bf16.gmra.mrb[0].mxu0 %v5648
        %v5807 = vpop.f32.mrb[0].mxu0
        %v5808 = vadd.f32 0.0, %v5807
        %v5809 = vpop.f32.mrb[0].mxu0
        %v5810 = vpop.f32.mrb[0].mxu0
        %v5811 = vadd.f32 0.0, %v5810
        %v5812 = vpop.f32.mrb[0].mxu0
        %5813 = vmatprep.mubr.bf16.mxu0 0
        %5814 = vmatmul.mubr.bf16.gmra.mrb[0].mxu0 %v5651
        %v5815 = vpop.f32.mrb[0].mxu0
        %v5816 = vadd.f32 0.0, %v5815
        %v5817 = vpop.f32.mrb[0].mxu0
        %v5818 = vpop.f32.mrb[0].mxu0
        %v5819 = vadd.f32 0.0, %v5818
        %v5820 = vpop.f32.mrb[0].mxu0
        %5821 = vmatprep.mubr.bf16.mxu0 0
        %5822 = vmatmul.mubr.bf16.gmra.mrb[0].mxu0 %v5654
        %v5823 = vpop.f32.mrb[0].mxu0
        %v5824 = vadd.f32 0.0, %v5823
        %v5825 = vpop.f32.mrb[0].mxu0
        %v5826 = vpop.f32.mrb[0].mxu0
        %v5827 = vadd.f32 0.0, %v5826
        %v5828 = vpop.f32.mrb[0].mxu0
        %5829 = vmatprep.mubr.bf16.mxu0 0
        %5830 = vmatmul.mubr.bf16.gmra.mrb[0].mxu0 %v5657
        %v5831 = vpop.f32.mrb[0].mxu0
        %v5832 = vadd.f32 0.0, %v5831
        %v5833 = vpop.f32.mrb[0].mxu0
        %v5834 = vpop.f32.mrb[0].mxu0
        %v5835 = vadd.f32 0.0, %v5834
        %v5836 = vpop.f32.mrb[0].mxu0
        %5837 = vmatprep.mubr.bf16.mxu0 0
        %5838 = vmatmul.mubr.bf16.gmra.mrb[0].mxu0 %v5660
        %v5839 = vpop.f32.mrb[0].mxu0
        %v5840 = vadd.f32 0.0, %v5839
        %v5841 = vpop.f32.mrb[0].mxu0
        %v5842 = vpop.f32.mrb[0].mxu0
        %v5843 = vadd.f32 0.0, %v5842
        %v5844 = vpop.f32.mrb[0].mxu0
        %5845 = vmatprep.mubr.bf16.mxu0 0
        %5846 = vmatmul.mubr.bf16.gmra.mrb[0].mxu0 %v5663
        %v5847 = vpop.f32.mrb[0].mxu0
        %v5848 = vadd.f32 0.0, %v5847
        %v5849 = vpop.f32.mrb[0].mxu0
        %v5850 = vpop.f32.mrb[0].mxu0
        %v5851 = vadd.f32 0.0, %v5850
        %v5852 = vpop.f32.mrb[0].mxu0
        %5853 = vmatprep.mubr.bf16.mxu0 0
        %5854 = vmatmul.mubr.bf16.gmra.mrb[0].mxu0 %v5666
        %v5855 = vpop.f32.mrb[0].mxu0
        %v5856 = vadd.f32 0.0, %v5855
        %v5857 = vpop.f32.mrb[0].mxu0
        %v5858 = vpop.f32.mrb[0].mxu0
        %v5859 = vadd.f32 0.0, %v5858
        %v5860 = vpop.f32.mrb[0].mxu0
        %5861 = vmatprep.mubr.bf16.mxu0 0
        %5862 = vmatmul.mubr.bf16.gmra.mrb[0].mxu0 %v5669
        %v5863 = vpop.f32.mrb[0].mxu0
        %v5864 = vadd.f32 0.0, %v5863
        %v5865 = vpop.f32.mrb[0].mxu0
        %v5866 = vpop.f32.mrb[0].mxu0
        %v5867 = vadd.f32 0.0, %v5866
        %v5868 = vpop.f32.mrb[0].mxu0
        %5869 = vmatprep.mubr.bf16.mxu0 0
        %5870 = vmatmul.mubr.bf16.gmra.mrb[0].mxu0 %v5672
        %v5871 = vpop.f32.mrb[0].mxu0
        %v5872 = vadd.f32 0.0, %v5871
        %v5873 = vpop.f32.mrb[0].mxu0
        %v5874 = vpop.f32.mrb[0].mxu0
        %v5875 = vadd.f32 0.0, %v5874
        %v5876 = vpop.f32.mrb[0].mxu0
        %5877 = vmatprep.mubr.bf16.mxu0 0
        %5878 = vmatmul.mubr.bf16.gmra.mrb[0].mxu0 %v5675
        %v5879 = vpop.f32.mrb[0].mxu0
        %v5880 = vadd.f32 0.0, %v5879
        %v5881 = vpop.f32.mrb[0].mxu0
        %v5882 = vpop.f32.mrb[0].mxu0
        %v5883 = vpop.f32.mrb[0].mxu0
        %5884 = vdwg.mxu0
        %v5885 = vadd.f32 %v5512, %v5712
        %v5886 = vadd.f32 %v5513, %v5715
        %v5887 = vadd.f32 %v5514, %v5720
        %v5888 = vadd.f32 %v5515, %v5723
        %v5889 = vadd.f32 %v5516, %v5728
        %v5890 = vadd.f32 %v5517, %v5731
        %v5891 = vadd.f32 %v5518, %v5736
        %v5892 = vadd.f32 %v5519, %v5739
        %v5893 = vadd.f32 %v5520, %v5744
        %v5894 = vadd.f32 %v5521, %v5747
        %v5895 = vadd.f32 %v5522, %v5752
        %v5896 = vadd.f32 %v5523, %v5755
        %v5897 = vadd.f32 %v5524, %v5760
        %v5898 = vadd.f32 %v5525, %v5763
        %v5899 = vadd.f32 %v5526, %v5768
        %v5900 = vadd.f32 %v5527, %v5771
        %v5901 = vadd.f32 %v5528, %v5776
        %v5902 = vadd.f32 %v5529, %v5779
        %v5903 = vadd.f32 %v5530, %v5784
        %v5904 = vadd.f32 %v5531, %v5787
        %v5905 = vadd.f32 %v5532, %v5792
        %v5906 = vadd.f32 %v5533, %v5795
        %v5907 = vadd.f32 %v5534, %v5800
        %v5908 = vadd.f32 %v5535, %v5803
        %v5909 = vadd.f32 %v5536, %v5808
        %v5910 = vadd.f32 %v5537, %v5811
        %v5911 = vadd.f32 %v5538, %v5816
        %v5912 = vadd.f32 %v5539, %v5819
        %v5913 = vadd.f32 %v5540, %v5824
        %v5914 = vadd.f32 %v5541, %v5827
        %v5915 = vadd.f32 %v5542, %v5832
        %v5916 = vadd.f32 %v5543, %v5835
        %v5917 = vadd.f32 %v5544, %v5840
        %v5918 = vadd.f32 %v5545, %v5843
        %v5919 = vadd.f32 %v5546, %v5848
        %v5920 = vadd.f32 %v5547, %v5851
        %v5921 = vadd.f32 %v5548, %v5856
        %v5922 = vadd.f32 %v5549, %v5859
        %v5923 = vadd.f32 %v5550, %v5864
        %v5924 = vadd.f32 %v5551, %v5867
        %v5925 = vadd.f32 %v5552, %v5872
        %v5926 = vadd.f32 %v5553, %v5875
        %v5927 = vadd.f32 %v5554, %v5880
        %v5928 = vld [vmem:[%s4] sm:$0x1]
        %v5930 = vlaneseq
        %v5931 = vshrl.u32 %v5930, 7
        %v5932 = vsub.s32 0, %v5931
        %v5933 = vrot.slane %v5928, %v5932
        %v5935 = vadd.f32 %v5885, %v5933
        %v5936 = vadd.f32 %v5886, %v5933
        %v5937 = vadd.f32 %v5887, %v5933
        %v5938 = vadd.f32 %v5888, %v5933
        %v5939 = vadd.f32 %v5889, %v5933
        %v5940 = vadd.f32 %v5890, %v5933
        %v5941 = vadd.f32 %v5891, %v5933
        %v5942 = vadd.f32 %v5892, %v5933
        %v5943 = vadd.f32 %v5893, %v5933
        %v5944 = vadd.f32 %v5894, %v5933
        %v5945 = vadd.f32 %v5895, %v5933
        %v5946 = vadd.f32 %v5896, %v5933
        %v5947 = vadd.f32 %v5897, %v5933
        %v5948 = vadd.f32 %v5898, %v5933
        %v5949 = vadd.f32 %v5899, %v5933
        %v5950 = vadd.f32 %v5900, %v5933
        %v5951 = vadd.f32 %v5901, %v5933
        %v5952 = vadd.f32 %v5902, %v5933
        %v5953 = vadd.f32 %v5903, %v5933
        %v5954 = vadd.f32 %v5904, %v5933
        %v5955 = vadd.f32 %v5905, %v5933
        %v5956 = vadd.f32 %v5906, %v5933
        %v5957 = vadd.f32 %v5907, %v5933
        %v5958 = vadd.f32 %v5908, %v5933
        %v5959 = vadd.f32 %v5909, %v5933
        %v5960 = vadd.f32 %v5910, %v5933
        %v5961 = vadd.f32 %v5911, %v5933
        %v5962 = vadd.f32 %v5912, %v5933
        %v5963 = vadd.f32 %v5913, %v5933
        %v5964 = vadd.f32 %v5914, %v5933
        %v5965 = vadd.f32 %v5915, %v5933
        %v5966 = vadd.f32 %v5916, %v5933
        %v5967 = vadd.f32 %v5917, %v5933
        %v5968 = vadd.f32 %v5918, %v5933
        %v5969 = vadd.f32 %v5919, %v5933
        %v5970 = vadd.f32 %v5920, %v5933
        %v5971 = vadd.f32 %v5921, %v5933
        %v5972 = vadd.f32 %v5922, %v5933
        %v5973 = vadd.f32 %v5923, %v5933
        %v5974 = vadd.f32 %v5924, %v5933
        %v5975 = vadd.f32 %v5925, %v5933
        %v5976 = vadd.f32 %v5926, %v5933
        %v5977 = vadd.f32 %v5927, %v5933
        %v5978 = vmax.f32 %v5935, 0.0
        %v5979 = vmax.f32 %v5936, 0.0
        %v5980 = vmax.f32 %v5937, 0.0
        %v5981 = vmax.f32 %v5938, 0.0
        %v5982 = vmax.f32 %v5939, 0.0
        %v5983 = vmax.f32 %v5940, 0.0
        %v5984 = vmax.f32 %v5941, 0.0
        %v5985 = vmax.f32 %v5942, 0.0
        %v5986 = vmax.f32 %v5943, 0.0
        %v5987 = vmax.f32 %v5944, 0.0
        %v5988 = vmax.f32 %v5945, 0.0
        %v5989 = vmax.f32 %v5946, 0.0
        %v5990 = vmax.f32 %v5947, 0.0
        %v5991 = vmax.f32 %v5948, 0.0
        %v5992 = vmax.f32 %v5949, 0.0
        %v5993 = vmax.f32 %v5950, 0.0
        %v5994 = vmax.f32 %v5951, 0.0
        %v5995 = vmax.f32 %v5952, 0.0
        %v5996 = vmax.f32 %v5953, 0.0
        %v5997 = vmax.f32 %v5954, 0.0
        %v5998 = vmax.f32 %v5955, 0.0
        %v5999 = vmax.f32 %v5956, 0.0
        %v6000 = vmax.f32 %v5957, 0.0
        %v6001 = vmax.f32 %v5958, 0.0
        %v6002 = vmax.f32 %v5959, 0.0
        %v6003 = vmax.f32 %v5960, 0.0
        %v6004 = vmax.f32 %v5961, 0.0
        %v6005 = vmax.f32 %v5962, 0.0
        %v6006 = vmax.f32 %v5963, 0.0
        %v6007 = vmax.f32 %v5964, 0.0
        %v6008 = vmax.f32 %v5965, 0.0
        %v6009 = vmax.f32 %v5966, 0.0
        %v6010 = vmax.f32 %v5967, 0.0
        %v6011 = vmax.f32 %v5968, 0.0
        %v6012 = vmax.f32 %v5969, 0.0
        %v6013 = vmax.f32 %v5970, 0.0
        %v6014 = vmax.f32 %v5971, 0.0
        %v6015 = vmax.f32 %v5972, 0.0
        %v6016 = vmax.f32 %v5973, 0.0
        %v6017 = vmax.f32 %v5974, 0.0
        %v6018 = vmax.f32 %v5975, 0.0
        %v6019 = vmax.f32 %v5976, 0.0
        %v6020 = vmax.f32 %v5977, 0.0
        %vm6021 = vcmask 261120
        %6022 = vst.msk [vmem:[#allocation5] sm:$0xff] %vm6021, %v5978
        %6023 = vst.msk [vmem:[#allocation5 + $0x8] sm:$0xff] %vm6021, %v5979
        %6024 = vst.msk [vmem:[#allocation5 + $0x10] sm:$0xff] %vm6021, %v5980
        %6025 = vst.msk [vmem:[#allocation5 + $0x18] sm:$0xff] %vm6021, %v5981
        %6026 = vst.msk [vmem:[#allocation5 + $0x20] sm:$0xff] %vm6021, %v5982
        %6027 = vst.msk [vmem:[#allocation5 + $0x28] sm:$0xff] %vm6021, %v5983
        %6028 = vst.msk [vmem:[#allocation5 + $0x30] sm:$0xff] %vm6021, %v5984
        %6029 = vst.msk [vmem:[#allocation5 + $0x38] sm:$0xff] %vm6021, %v5985
        %6030 = vst.msk [vmem:[#allocation5 + $0x40] sm:$0xff] %vm6021, %v5986
        %6031 = vst.msk [vmem:[#allocation5 + $0x48] sm:$0xff] %vm6021, %v5987
        %6032 = vst.msk [vmem:[#allocation5 + $0x50] sm:$0xff] %vm6021, %v5988
        %6033 = vst.msk [vmem:[#allocation5 + $0x58] sm:$0xff] %vm6021, %v5989
        %6034 = vst.msk [vmem:[#allocation5 + $0x60] sm:$0xff] %vm6021, %v5990
        %6035 = vst.msk [vmem:[#allocation5 + $0x68] sm:$0xff] %vm6021, %v5991
        %6036 = vst.msk [vmem:[#allocation5 + $0x70] sm:$0xff] %vm6021, %v5992
        %6037 = vst.msk [vmem:[#allocation5 + $0x78] sm:$0xff] %vm6021, %v5993
        %6038 = vst.msk [vmem:[#allocation5 + $0x80] sm:$0xff] %vm6021, %v5994
        %6039 = vst.msk [vmem:[#allocation5 + $0x88] sm:$0xff] %vm6021, %v5995
        %6040 = vst.msk [vmem:[#allocation5 + $0x90] sm:$0xff] %vm6021, %v5996
        %6041 = vst.msk [vmem:[#allocation5 + $0x98] sm:$0xff] %vm6021, %v5997
        %6042 = vst.msk [vmem:[#allocation5 + $0xa0] sm:$0xff] %vm6021, %v5998
        %6043 = vst.msk [vmem:[#allocation5 + $0xa8] sm:$0xff] %vm6021, %v5999
        %6044 = vst.msk [vmem:[#allocation5 + $0xb0] sm:$0xff] %vm6021, %v6000
        %6045 = vst.msk [vmem:[#allocation5 + $0xb8] sm:$0xff] %vm6021, %v6001
        %6046 = vst.msk [vmem:[#allocation5 + $0xc0] sm:$0xff] %vm6021, %v6002
        %6047 = vst.msk [vmem:[#allocation5 + $0xc8] sm:$0xff] %vm6021, %v6003
        %6048 = vst.msk [vmem:[#allocation5 + $0xd0] sm:$0xff] %vm6021, %v6004
        %6049 = vst.msk [vmem:[#allocation5 + $0xd8] sm:$0xff] %vm6021, %v6005
        %6050 = vst.msk [vmem:[#allocation5 + $0xe0] sm:$0xff] %vm6021, %v6006
        %6051 = vst.msk [vmem:[#allocation5 + $0xe8] sm:$0xff] %vm6021, %v6007
        %6052 = vst.msk [vmem:[#allocation5 + $0xf0] sm:$0xff] %vm6021, %v6008
        %6053 = vst.msk [vmem:[#allocation5 + $0xf8] sm:$0xff] %vm6021, %v6009
        %6054 = vst.msk [vmem:[#allocation5 + $0x100] sm:$0xff] %vm6021, %v6010
        %6055 = vst.msk [vmem:[#allocation5 + $0x108] sm:$0xff] %vm6021, %v6011
        %6056 = vst.msk [vmem:[#allocation5 + $0x110] sm:$0xff] %vm6021, %v6012
        %6057 = vst.msk [vmem:[#allocation5 + $0x118] sm:$0xff] %vm6021, %v6013
        %6058 = vst.msk [vmem:[#allocation5 + $0x120] sm:$0xff] %vm6021, %v6014
        %6059 = vst.msk [vmem:[#allocation5 + $0x128] sm:$0xff] %vm6021, %v6015
        %6060 = vst.msk [vmem:[#allocation5 + $0x130] sm:$0xff] %vm6021, %v6016
        %6061 = vst.msk [vmem:[#allocation5 + $0x138] sm:$0xff] %vm6021, %v6017
        %6062 = vst.msk [vmem:[#allocation5 + $0x140] sm:$0xff] %vm6021, %v6018
        %6063 = vst.msk [vmem:[#allocation5 + $0x148] sm:$0xff] %vm6021, %v6019
        %vm6064 = vcmask 257024
        %6065 = vst.msk [vmem:[#allocation5 + $0x150] sm:$0xf] %vm6064, %v6020
        %v6066 = vld [vmem:[#allocation5] ss:$2 sm:$0xff]
        %s6067 = scalar_lea.vmem [#allocation5], 16
        %v6068 = vld [vmem:[%s6067] ss:$2 sm:$0xff]
        %s6069 = scalar_lea.vmem [#allocation5], 32
        %v6070 = vld [vmem:[%s6069] ss:$2 sm:$0xff]
        %s6071 = scalar_lea.vmem [#allocation5], 48
        %v6072 = vld [vmem:[%s6071] ss:$2 sm:$0xff]
        %s6073 = scalar_lea.vmem [#allocation5], 64
        %v6074 = vld [vmem:[%s6073] ss:$2 sm:$0xff]
        %s6075 = scalar_lea.vmem [#allocation5], 80
        %v6076 = vld [vmem:[%s6075] ss:$2 sm:$0xff]
        %s6077 = scalar_lea.vmem [#allocation5], 96
        %v6078 = vld [vmem:[%s6077] ss:$2 sm:$0xff]
        %s6079 = scalar_lea.vmem [#allocation5], 112
        %v6080 = vld [vmem:[%s6079] ss:$2 sm:$0xff]
        %s6081 = scalar_lea.vmem [#allocation5], 128
        %v6082 = vld [vmem:[%s6081] ss:$2 sm:$0xff]
        %s6083 = scalar_lea.vmem [#allocation5], 144
        %v6084 = vld [vmem:[%s6083] ss:$2 sm:$0xff]
        %s6085 = scalar_lea.vmem [#allocation5], 160
        %v6086 = vld [vmem:[%s6085] ss:$2 sm:$0xff]
        %s6087 = scalar_lea.vmem [#allocation5], 176
        %v6088 = vld [vmem:[%s6087] ss:$2 sm:$0xff]
        %s6089 = scalar_lea.vmem [#allocation5], 192
        %v6090 = vld [vmem:[%s6089] ss:$2 sm:$0xff]
        %s6091 = scalar_lea.vmem [#allocation5], 208
        %v6092 = vld [vmem:[%s6091] ss:$2 sm:$0xff]
        %s6093 = scalar_lea.vmem [#allocation5], 224
        %v6094 = vld [vmem:[%s6093] ss:$2 sm:$0xff]
        %s6095 = scalar_lea.vmem [#allocation5], 240
        %v6096 = vld [vmem:[%s6095] ss:$2 sm:$0xff]
        %s6097 = scalar_lea.vmem [#allocation5], 256
        %v6098 = vld [vmem:[%s6097] ss:$2 sm:$0xff]
        %s6099 = scalar_lea.vmem [#allocation5], 272
        %v6100 = vld [vmem:[%s6099] ss:$2 sm:$0xff]
        %s6101 = scalar_lea.vmem [#allocation5], 288
        %v6102 = vld [vmem:[%s6101] ss:$2 sm:$0xff]
        %s6103 = scalar_lea.vmem [#allocation5], 304
        %v6104 = vld [vmem:[%s6103] ss:$2 sm:$0xff]
        %s6105 = scalar_lea.vmem [#allocation5], 320
        %v6106 = vld [vmem:[%s6105] ss:$2 sm:$0xff]
        %s6107 = scalar_lea.vmem [#allocation5], 336
        %v6108 = vld [vmem:[%s6107] ss:$2 sm:$0x3]
        %s6109 = scalar_lea.vmem [#allocation5], 1
        %v6110 = vld [vmem:[%s6109] ss:$2 sm:$0xff]
        %s6111 = scalar_lea.vmem [#allocation5], 17
        %v6112 = vld [vmem:[%s6111] ss:$2 sm:$0xff]
        %s6113 = scalar_lea.vmem [#allocation5], 33
        %v6114 = vld [vmem:[%s6113] ss:$2 sm:$0xff]
        %s6115 = scalar_lea.vmem [#allocation5], 49
        %v6116 = vld [vmem:[%s6115] ss:$2 sm:$0xff]
        %s6117 = scalar_lea.vmem [#allocation5], 65
        %v6118 = vld [vmem:[%s6117] ss:$2 sm:$0xff]
        %s6119 = scalar_lea.vmem [#allocation5], 81
        %v6120 = vld [vmem:[%s6119] ss:$2 sm:$0xff]
        %s6121 = scalar_lea.vmem [#allocation5], 97
        %v6122 = vld [vmem:[%s6121] ss:$2 sm:$0xff]
        %s6123 = scalar_lea.vmem [#allocation5], 113
        %v6124 = vld [vmem:[%s6123] ss:$2 sm:$0xff]
        %s6125 = scalar_lea.vmem [#allocation5], 129
        %v6126 = vld [vmem:[%s6125] ss:$2 sm:$0xff]
        %s6127 = scalar_lea.vmem [#allocation5], 145
        %v6128 = vld [vmem:[%s6127] ss:$2 sm:$0xff]
        %s6129 = scalar_lea.vmem [#allocation5], 161
        %v6130 = vld [vmem:[%s6129] ss:$2 sm:$0xff]
        %s6131 = scalar_lea.vmem [#allocation5], 177
        %v6132 = vld [vmem:[%s6131] ss:$2 sm:$0xff]
        %s6133 = scalar_lea.vmem [#allocation5], 193
        %v6134 = vld [vmem:[%s6133] ss:$2 sm:$0xff]
        %s6135 = scalar_lea.vmem [#allocation5], 209
        %v6136 = vld [vmem:[%s6135] ss:$2 sm:$0xff]
        %s6137 = scalar_lea.vmem [#allocation5], 225
        %v6138 = vld [vmem:[%s6137] ss:$2 sm:$0xff]
        %s6139 = scalar_lea.vmem [#allocation5], 241
        %v6140 = vld [vmem:[%s6139] ss:$2 sm:$0xff]
        %s6141 = scalar_lea.vmem [#allocation5], 257
        %v6142 = vld [vmem:[%s6141] ss:$2 sm:$0xff]
        %s6143 = scalar_lea.vmem [#allocation5], 273
        %v6144 = vld [vmem:[%s6143] ss:$2 sm:$0xff]
        %s6145 = scalar_lea.vmem [#allocation5], 289
        %v6146 = vld [vmem:[%s6145] ss:$2 sm:$0xff]
        %s6147 = scalar_lea.vmem [#allocation5], 305
        %v6148 = vld [vmem:[%s6147] ss:$2 sm:$0xff]
        %s6149 = scalar_lea.vmem [#allocation5], 321
        %v6150 = vld [vmem:[%s6149] ss:$2 sm:$0xff]
        %s6151 = scalar_lea.vmem [#allocation5], 337
        %v6152 = vld [vmem:[%s6151] ss:$2 sm:$0x3]
        %v6153 = vmax.f32 %v6066, %v6110
        %v6154 = vmax.f32 %v6068, %v6112
        %v6155 = vmax.f32 %v6070, %v6114
        %v6156 = vmax.f32 %v6072, %v6116
        %v6157 = vmax.f32 %v6074, %v6118
        %v6158 = vmax.f32 %v6076, %v6120
        %v6159 = vmax.f32 %v6078, %v6122
        %v6160 = vmax.f32 %v6080, %v6124
        %v6161 = vmax.f32 %v6082, %v6126
        %v6162 = vmax.f32 %v6084, %v6128
        %v6163 = vmax.f32 %v6086, %v6130
        %v6164 = vmax.f32 %v6088, %v6132
        %v6165 = vmax.f32 %v6090, %v6134
        %v6166 = vmax.f32 %v6092, %v6136
        %v6167 = vmax.f32 %v6094, %v6138
        %v6168 = vmax.f32 %v6096, %v6140
        %v6169 = vmax.f32 %v6098, %v6142
        %v6170 = vmax.f32 %v6100, %v6144
        %v6171 = vmax.f32 %v6102, %v6146
        %v6172 = vmax.f32 %v6104, %v6148
        %v6173 = vmax.f32 %v6106, %v6150
        %v6174 = vmax.f32 %v6108, %v6152
        %6175 = vst.msk [vmem:[#allocation6] sm:$0xff] %vm6021, %v6153
        %6176 = vst.msk [vmem:[#allocation6 + $0x8] sm:$0xff] %vm6021, %v6154
        %6177 = vst.msk [vmem:[#allocation6 + $0x10] sm:$0xff] %vm6021, %v6155
        %6178 = vst.msk [vmem:[#allocation6 + $0x18] sm:$0xff] %vm6021, %v6156
        %6179 = vst.msk [vmem:[#allocation6 + $0x20] sm:$0xff] %vm6021, %v6157
        %6180 = vst.msk [vmem:[#allocation6 + $0x28] sm:$0xff] %vm6021, %v6158
        %6181 = vst.msk [vmem:[#allocation6 + $0x30] sm:$0xff] %vm6021, %v6159
        %6182 = vst.msk [vmem:[#allocation6 + $0x38] sm:$0xff] %vm6021, %v6160
        %6183 = vst.msk [vmem:[#allocation6 + $0x40] sm:$0xff] %vm6021, %v6161
        %6184 = vst.msk [vmem:[#allocation6 + $0x48] sm:$0xff] %vm6021, %v6162
        %6185 = vst.msk [vmem:[#allocation6 + $0x50] sm:$0xff] %vm6021, %v6163
        %6186 = vst.msk [vmem:[#allocation6 + $0x58] sm:$0xff] %vm6021, %v6164
        %6187 = vst.msk [vmem:[#allocation6 + $0x60] sm:$0xff] %vm6021, %v6165
        %6188 = vst.msk [vmem:[#allocation6 + $0x68] sm:$0xff] %vm6021, %v6166
        %6189 = vst.msk [vmem:[#allocation6 + $0x70] sm:$0xff] %vm6021, %v6167
        %6190 = vst.msk [vmem:[#allocation6 + $0x78] sm:$0xff] %vm6021, %v6168
        %6191 = vst.msk [vmem:[#allocation6 + $0x80] sm:$0xff] %vm6021, %v6169
        %6192 = vst.msk [vmem:[#allocation6 + $0x88] sm:$0xff] %vm6021, %v6170
        %6193 = vst.msk [vmem:[#allocation6 + $0x90] sm:$0xff] %vm6021, %v6171
        %6194 = vst.msk [vmem:[#allocation6 + $0x98] sm:$0xff] %vm6021, %v6172
        %6195 = vst.msk [vmem:[#allocation6 + $0xa0] sm:$0xff] %vm6021, %v6173
        %vm6196 = vcmask 254976
        %6197 = vst.msk [vmem:[#allocation6 + $0xa8] sm:$0x3] %vm6196, %v6174
        %v6198 = vld [vmem:[#allocation6] sm:$0xff]
        %v6199 = vld [vmem:[#allocation6 + $0xa] sm:$0xff]
        %v6200 = vmax.f32 %v6198, %v6199
        %6201 = vst.msk [vmem:[#allocation7] sm:$0xff] %vm6021, %v6200
        %v6202 = vld [vmem:[#allocation6 + $0x14] sm:$0xff]
        %v6203 = vld [vmem:[#allocation6 + $0x1e] sm:$0xff]
        %v6204 = vmax.f32 %v6202, %v6203
        %6205 = vst.msk [vmem:[#allocation7 + $0x8] sm:$0xff] %vm6021, %v6204
        %v6206 = vld [vmem:[#allocation6 + $0x28] sm:$0xff]
        %v6207 = vld [vmem:[#allocation6 + $0x32] sm:$0xff]
        %v6208 = vmax.f32 %v6206, %v6207
        %6209 = vst.msk [vmem:[#allocation7 + $0x10] sm:$0xff] %vm6021, %v6208
        %v6210 = vld [vmem:[#allocation6 + $0x3c] sm:$0xff]
        %v6211 = vld [vmem:[#allocation6 + $0x46] sm:$0xff]
        %v6212 = vmax.f32 %v6210, %v6211
        %6213 = vst.msk [vmem:[#allocation7 + $0x18] sm:$0xff] %vm6021, %v6212
        %v6214 = vld [vmem:[#allocation6 + $0x50] sm:$0xff]
        %v6215 = vld [vmem:[#allocation6 + $0x5a] sm:$0xff]
        %v6216 = vmax.f32 %v6214, %v6215
        %6217 = vst.msk [vmem:[#allocation7 + $0x20] sm:$0xff] %vm6021, %v6216
        %v6218 = vld [vmem:[#allocation6 + $0x64] sm:$0xff]
        %v6219 = vld [vmem:[#allocation6 + $0x6e] sm:$0xff]
        %v6220 = vmax.f32 %v6218, %v6219
        %6221 = vst.msk [vmem:[#allocation7 + $0x28] sm:$0xff] %vm6021, %v6220
        %v6222 = vld [vmem:[#allocation6 + $0x78] sm:$0xff]
        %v6223 = vld [vmem:[#allocation6 + $0x82] sm:$0xff]
        %v6224 = vmax.f32 %v6222, %v6223
        %6225 = vst.msk [vmem:[#allocation7 + $0x30] sm:$0xff] %vm6021, %v6224
        %v6226 = vld [vmem:[#allocation6 + $0x8c] sm:$0xff]
        %v6227 = vld [vmem:[#allocation6 + $0x96] sm:$0xff]
        %v6228 = vmax.f32 %v6226, %v6227
        %6229 = vst.msk [vmem:[#allocation7 + $0x38] sm:$0xff] %vm6021, %v6228
        %v6230 = vld [vmem:[#allocation7] sm:$0xff]
        %v6231 = vld [vmem:[#allocation7 + $0x8] sm:$0xff]
        %v6232 = vld [vmem:[#allocation7 + $0x10] sm:$0xff]
        %v6233 = vld [vmem:[#allocation7 + $0x18] sm:$0xff]
        %v6234 = vld [vmem:[#allocation7 + $0x20] sm:$0xff]
        %v6235 = vld [vmem:[#allocation7 + $0x28] sm:$0xff]
        %v6236 = vld [vmem:[#allocation7 + $0x30] sm:$0xff]
        %v6237 = vld [vmem:[#allocation7 + $0x38] sm:$0xff]
        %v6238 = vld [vmem:[%s5] sm:$0xff]
        %v6239 = vld [vmem:[%s5 + $0x8] sm:$0xff]
        %v6240 = vld [vmem:[%s5 + $0x10] sm:$0xff]
        %v6241 = vld [vmem:[%s5 + $0x18] sm:$0xff]
        %v6242 = vld [vmem:[%s5 + $0x20] sm:$0xff]
        %v6243 = vld [vmem:[%s5 + $0x28] sm:$0xff]
        %v6244 = vld [vmem:[%s5 + $0x30] sm:$0xff]
        %v6245 = vld [vmem:[%s5 + $0x38] sm:$0xff]
        %6247 = vset.pattern.permute.xlu0 0
        %6248 = vperm.xlu0 %6247, %v6230
        %v6249 = vpop.permute.xlu0 %6248
        %6252 = vset.pattern.permute.xlu0 0
        %6253 = vperm.xlu0 %6252, %v6231
        %v6254 = vpop.permute.xlu0 %6253
        %6257 = vset.pattern.permute.xlu0 0
        %6258 = vperm.xlu0 %6257, %v6232
        %v6259 = vpop.permute.xlu0 %6258
        %6262 = vset.pattern.permute.xlu0 0
        %6263 = vperm.xlu0 %6262, %v6233
        %v6264 = vpop.permute.xlu0 %6263
        %6267 = vset.pattern.permute.xlu0 0
        %6268 = vperm.xlu0 %6267, %v6234
        %v6269 = vpop.permute.xlu0 %6268
        %6272 = vset.pattern.permute.xlu0 0
        %6273 = vperm.xlu0 %6272, %v6235
        %v6274 = vpop.permute.xlu0 %6273
        %6277 = vset.pattern.permute.xlu0 0
        %6278 = vperm.xlu0 %6277, %v6236
        %v6279 = vpop.permute.xlu0 %6278
        %6282 = vset.pattern.permute.xlu0 0
        %6283 = vperm.xlu0 %6282, %v6237
        %v6284 = vpop.permute.xlu0 %6283
        %v6286 = vmul.f32 %v6249, %v6238
        %v6287 = vmul.f32 %v6254, %v6239
        %v6288 = vmul.f32 %v6259, %v6240
        %v6289 = vmul.f32 %v6264, %v6241
        %v6290 = vmul.f32 %v6269, %v6242
        %v6291 = vmul.f32 %v6274, %v6243
        %v6292 = vmul.f32 %v6279, %v6244
        %v6293 = vmul.f32 %v6284, %v6245
        %v6294 = vadd.f32 %v6286, 0.0
        %v6295 = vadd.f32 %v6287, 0.0
        %v6296 = vadd.f32 %v6288, 0.0
        %v6297 = vadd.f32 %v6289, 0.0
        %v6298 = vadd.f32 %v6290, 0.0
        %v6299 = vadd.f32 %v6291, 0.0
        %v6300 = vadd.f32 %v6292, 0.0
        %v6301 = vadd.f32 %v6293, 0.0
        %s6302 = scalar_lea.vmem %s5, 64
        %v6303 = vld [vmem:[%s6302] sm:$0xff]
        %v6304 = vld [vmem:[%s6302 + $0x8] sm:$0xff]
        %v6305 = vld [vmem:[%s6302 + $0x10] sm:$0xff]
        %v6306 = vld [vmem:[%s6302 + $0x18] sm:$0xff]
        %v6307 = vld [vmem:[%s6302 + $0x20] sm:$0xff]
        %v6308 = vld [vmem:[%s6302 + $0x28] sm:$0xff]
        %v6309 = vld [vmem:[%s6302 + $0x30] sm:$0xff]
        %v6310 = vld [vmem:[%s6302 + $0x38] sm:$0xff]
        %6311 = vset.pattern.permute.xlu0 1
        %6312 = vperm.xlu0 %6311, %v6230
        %v6313 = vpop.permute.xlu0 %6312
        %6315 = vset.pattern.permute.xlu0 1
        %6316 = vperm.xlu0 %6315, %v6231
        %v6317 = vpop.permute.xlu0 %6316
        %6319 = vset.pattern.permute.xlu0 1
        %6320 = vperm.xlu0 %6319, %v6232
        %v6321 = vpop.permute.xlu0 %6320
        %6323 = vset.pattern.permute.xlu0 1
        %6324 = vperm.xlu0 %6323, %v6233
        %v6325 = vpop.permute.xlu0 %6324
        %6327 = vset.pattern.permute.xlu0 1
        %6328 = vperm.xlu0 %6327, %v6234
        %v6329 = vpop.permute.xlu0 %6328
        %6331 = vset.pattern.permute.xlu0 1
        %6332 = vperm.xlu0 %6331, %v6235
        %v6333 = vpop.permute.xlu0 %6332
        %6335 = vset.pattern.permute.xlu0 1
        %6336 = vperm.xlu0 %6335, %v6236
        %v6337 = vpop.permute.xlu0 %6336
        %6339 = vset.pattern.permute.xlu0 1
        %6340 = vperm.xlu0 %6339, %v6237
        %v6341 = vpop.permute.xlu0 %6340
        %v6343 = vmul.f32 %v6313, %v6303
        %v6344 = vmul.f32 %v6317, %v6304
        %v6345 = vmul.f32 %v6321, %v6305
        %v6346 = vmul.f32 %v6325, %v6306
        %v6347 = vmul.f32 %v6329, %v6307
        %v6348 = vmul.f32 %v6333, %v6308
        %v6349 = vmul.f32 %v6337, %v6309
        %v6350 = vmul.f32 %v6341, %v6310
        %v6351 = vadd.f32 %v6294, %v6343
        %v6352 = vadd.f32 %v6295, %v6344
        %v6353 = vadd.f32 %v6296, %v6345
        %v6354 = vadd.f32 %v6297, %v6346
        %v6355 = vadd.f32 %v6298, %v6347
        %v6356 = vadd.f32 %v6299, %v6348
        %v6357 = vadd.f32 %v6300, %v6349
        %v6358 = vadd.f32 %v6301, %v6350
        %s6359 = scalar_lea.vmem %s5, 128
        %v6360 = vld [vmem:[%s6359] sm:$0xff]
        %v6361 = vld [vmem:[%s6359 + $0x8] sm:$0xff]
        %v6362 = vld [vmem:[%s6359 + $0x10] sm:$0xff]
        %v6363 = vld [vmem:[%s6359 + $0x18] sm:$0xff]
        %v6364 = vld [vmem:[%s6359 + $0x20] sm:$0xff]
        %v6365 = vld [vmem:[%s6359 + $0x28] sm:$0xff]
        %v6366 = vld [vmem:[%s6359 + $0x30] sm:$0xff]
        %v6367 = vld [vmem:[%s6359 + $0x38] sm:$0xff]
        %6368 = vset.pattern.permute.xlu0 2
        %6369 = vperm.xlu0 %6368, %v6230
        %v6370 = vpop.permute.xlu0 %6369
        %6372 = vset.pattern.permute.xlu0 2
        %6373 = vperm.xlu0 %6372, %v6231
        %v6374 = vpop.permute.xlu0 %6373
        %6376 = vset.pattern.permute.xlu0 2
        %6377 = vperm.xlu0 %6376, %v6232
        %v6378 = vpop.permute.xlu0 %6377
        %6380 = vset.pattern.permute.xlu0 2
        %6381 = vperm.xlu0 %6380, %v6233
        %v6382 = vpop.permute.xlu0 %6381
        %6384 = vset.pattern.permute.xlu0 2
        %6385 = vperm.xlu0 %6384, %v6234
        %v6386 = vpop.permute.xlu0 %6385
        %6388 = vset.pattern.permute.xlu0 2
        %6389 = vperm.xlu0 %6388, %v6235
        %v6390 = vpop.permute.xlu0 %6389
        %6392 = vset.pattern.permute.xlu0 2
        %6393 = vperm.xlu0 %6392, %v6236
        %v6394 = vpop.permute.xlu0 %6393
        %6396 = vset.pattern.permute.xlu0 2
        %6397 = vperm.xlu0 %6396, %v6237
        %v6398 = vpop.permute.xlu0 %6397
        %v6400 = vmul.f32 %v6370, %v6360
        %v6401 = vmul.f32 %v6374, %v6361
        %v6402 = vmul.f32 %v6378, %v6362
        %v6403 = vmul.f32 %v6382, %v6363
        %v6404 = vmul.f32 %v6386, %v6364
        %v6405 = vmul.f32 %v6390, %v6365
        %v6406 = vmul.f32 %v6394, %v6366
        %v6407 = vmul.f32 %v6398, %v6367
        %v6408 = vadd.f32 %v6351, %v6400
        %v6409 = vadd.f32 %v6352, %v6401
        %v6410 = vadd.f32 %v6353, %v6402
        %v6411 = vadd.f32 %v6354, %v6403
        %v6412 = vadd.f32 %v6355, %v6404
        %v6413 = vadd.f32 %v6356, %v6405
        %v6414 = vadd.f32 %v6357, %v6406
        %v6415 = vadd.f32 %v6358, %v6407
        %s6416 = scalar_lea.vmem %s5, 192
        %v6417 = vld [vmem:[%s6416] sm:$0xff]
        %v6418 = vld [vmem:[%s6416 + $0x8] sm:$0xff]
        %v6419 = vld [vmem:[%s6416 + $0x10] sm:$0xff]
        %v6420 = vld [vmem:[%s6416 + $0x18] sm:$0xff]
        %v6421 = vld [vmem:[%s6416 + $0x20] sm:$0xff]
        %v6422 = vld [vmem:[%s6416 + $0x28] sm:$0xff]
        %v6423 = vld [vmem:[%s6416 + $0x30] sm:$0xff]
        %v6424 = vld [vmem:[%s6416 + $0x38] sm:$0xff]
        %6425 = vset.pattern.permute.xlu0 3
        %6426 = vperm.xlu0 %6425, %v6230
        %v6427 = vpop.permute.xlu0 %6426
        %6429 = vset.pattern.permute.xlu0 3
        %6430 = vperm.xlu0 %6429, %v6231
        %v6431 = vpop.permute.xlu0 %6430
        %6433 = vset.pattern.permute.xlu0 3
        %6434 = vperm.xlu0 %6433, %v6232
        %v6435 = vpop.permute.xlu0 %6434
        %6437 = vset.pattern.permute.xlu0 3
        %6438 = vperm.xlu0 %6437, %v6233
        %v6439 = vpop.permute.xlu0 %6438
        %6441 = vset.pattern.permute.xlu0 3
        %6442 = vperm.xlu0 %6441, %v6234
        %v6443 = vpop.permute.xlu0 %6442
        %6445 = vset.pattern.permute.xlu0 3
        %6446 = vperm.xlu0 %6445, %v6235
        %v6447 = vpop.permute.xlu0 %6446
        %6449 = vset.pattern.permute.xlu0 3
        %6450 = vperm.xlu0 %6449, %v6236
        %v6451 = vpop.permute.xlu0 %6450
        %6453 = vset.pattern.permute.xlu0 3
        %6454 = vperm.xlu0 %6453, %v6237
        %v6455 = vpop.permute.xlu0 %6454
        %v6457 = vmul.f32 %v6427, %v6417
        %v6458 = vmul.f32 %v6431, %v6418
        %v6459 = vmul.f32 %v6435, %v6419
        %v6460 = vmul.f32 %v6439, %v6420
        %v6461 = vmul.f32 %v6443, %v6421
        %v6462 = vmul.f32 %v6447, %v6422
        %v6463 = vmul.f32 %v6451, %v6423
        %v6464 = vmul.f32 %v6455, %v6424
        %v6465 = vadd.f32 %v6408, %v6457
        %v6466 = vadd.f32 %v6409, %v6458
        %v6467 = vadd.f32 %v6410, %v6459
        %v6468 = vadd.f32 %v6411, %v6460
        %v6469 = vadd.f32 %v6412, %v6461
        %v6470 = vadd.f32 %v6413, %v6462
        %v6471 = vadd.f32 %v6414, %v6463
        %v6472 = vadd.f32 %v6415, %v6464
        %s6473 = scalar_lea.vmem %s5, 256
        %v6474 = vld [vmem:[%s6473] sm:$0xff]
        %v6475 = vld [vmem:[%s6473 + $0x8] sm:$0xff]
        %v6476 = vld [vmem:[%s6473 + $0x10] sm:$0xff]
        %v6477 = vld [vmem:[%s6473 + $0x18] sm:$0xff]
        %v6478 = vld [vmem:[%s6473 + $0x20] sm:$0xff]
        %v6479 = vld [vmem:[%s6473 + $0x28] sm:$0xff]
        %v6480 = vld [vmem:[%s6473 + $0x30] sm:$0xff]
        %v6481 = vld [vmem:[%s6473 + $0x38] sm:$0xff]
        %6482 = vset.pattern.permute.xlu0 4
        %6483 = vperm.xlu0 %6482, %v6230
        %v6484 = vpop.permute.xlu0 %6483
        %6486 = vset.pattern.permute.xlu0 4
        %6487 = vperm.xlu0 %6486, %v6231
        %v6488 = vpop.permute.xlu0 %6487
        %6490 = vset.pattern.permute.xlu0 4
        %6491 = vperm.xlu0 %6490, %v6232
        %v6492 = vpop.permute.xlu0 %6491
        %6494 = vset.pattern.permute.xlu0 4
        %6495 = vperm.xlu0 %6494, %v6233
        %v6496 = vpop.permute.xlu0 %6495
        %6498 = vset.pattern.permute.xlu0 4
        %6499 = vperm.xlu0 %6498, %v6234
        %v6500 = vpop.permute.xlu0 %6499
        %6502 = vset.pattern.permute.xlu0 4
        %6503 = vperm.xlu0 %6502, %v6235
        %v6504 = vpop.permute.xlu0 %6503
        %6506 = vset.pattern.permute.xlu0 4
        %6507 = vperm.xlu0 %6506, %v6236
        %v6508 = vpop.permute.xlu0 %6507
        %6510 = vset.pattern.permute.xlu0 4
        %6511 = vperm.xlu0 %6510, %v6237
        %v6512 = vpop.permute.xlu0 %6511
        %v6514 = vmul.f32 %v6484, %v6474
        %v6515 = vmul.f32 %v6488, %v6475
        %v6516 = vmul.f32 %v6492, %v6476
        %v6517 = vmul.f32 %v6496, %v6477
        %v6518 = vmul.f32 %v6500, %v6478
        %v6519 = vmul.f32 %v6504, %v6479
        %v6520 = vmul.f32 %v6508, %v6480
        %v6521 = vmul.f32 %v6512, %v6481
        %v6522 = vadd.f32 %v6465, %v6514
        %v6523 = vadd.f32 %v6466, %v6515
        %v6524 = vadd.f32 %v6467, %v6516
        %v6525 = vadd.f32 %v6468, %v6517
        %v6526 = vadd.f32 %v6469, %v6518
        %v6527 = vadd.f32 %v6470, %v6519
        %v6528 = vadd.f32 %v6471, %v6520
        %v6529 = vadd.f32 %v6472, %v6521
        %s6530 = scalar_lea.vmem %s5, 320
        %v6531 = vld [vmem:[%s6530] sm:$0xff]
        %v6532 = vld [vmem:[%s6530 + $0x8] sm:$0xff]
        %v6533 = vld [vmem:[%s6530 + $0x10] sm:$0xff]
        %v6534 = vld [vmem:[%s6530 + $0x18] sm:$0xff]
        %v6535 = vld [vmem:[%s6530 + $0x20] sm:$0xff]
        %v6536 = vld [vmem:[%s6530 + $0x28] sm:$0xff]
        %v6537 = vld [vmem:[%s6530 + $0x30] sm:$0xff]
        %v6538 = vld [vmem:[%s6530 + $0x38] sm:$0xff]
        %6539 = vset.pattern.permute.xlu0 5
        %6540 = vperm.xlu0 %6539, %v6230
        %v6541 = vpop.permute.xlu0 %6540
        %6543 = vset.pattern.permute.xlu0 5
        %6544 = vperm.xlu0 %6543, %v6231
        %v6545 = vpop.permute.xlu0 %6544
        %6547 = vset.pattern.permute.xlu0 5
        %6548 = vperm.xlu0 %6547, %v6232
        %v6549 = vpop.permute.xlu0 %6548
        %6551 = vset.pattern.permute.xlu0 5
        %6552 = vperm.xlu0 %6551, %v6233
        %v6553 = vpop.permute.xlu0 %6552
        %6555 = vset.pattern.permute.xlu0 5
        %6556 = vperm.xlu0 %6555, %v6234
        %v6557 = vpop.permute.xlu0 %6556
        %6559 = vset.pattern.permute.xlu0 5
        %6560 = vperm.xlu0 %6559, %v6235
        %v6561 = vpop.permute.xlu0 %6560
        %6563 = vset.pattern.permute.xlu0 5
        %6564 = vperm.xlu0 %6563, %v6236
        %v6565 = vpop.permute.xlu0 %6564
        %6567 = vset.pattern.permute.xlu0 5
        %6568 = vperm.xlu0 %6567, %v6237
        %v6569 = vpop.permute.xlu0 %6568
        %v6571 = vmul.f32 %v6541, %v6531
        %v6572 = vmul.f32 %v6545, %v6532
        %v6573 = vmul.f32 %v6549, %v6533
        %v6574 = vmul.f32 %v6553, %v6534
        %v6575 = vmul.f32 %v6557, %v6535
        %v6576 = vmul.f32 %v6561, %v6536
        %v6577 = vmul.f32 %v6565, %v6537
        %v6578 = vmul.f32 %v6569, %v6538
        %v6579 = vadd.f32 %v6522, %v6571
        %v6580 = vadd.f32 %v6523, %v6572
        %v6581 = vadd.f32 %v6524, %v6573
        %v6582 = vadd.f32 %v6525, %v6574
        %v6583 = vadd.f32 %v6526, %v6575
        %v6584 = vadd.f32 %v6527, %v6576
        %v6585 = vadd.f32 %v6528, %v6577
        %v6586 = vadd.f32 %v6529, %v6578
        %s6587 = scalar_lea.vmem %s5, 384
        %v6588 = vld [vmem:[%s6587] sm:$0xff]
        %v6589 = vld [vmem:[%s6587 + $0x8] sm:$0xff]
        %v6590 = vld [vmem:[%s6587 + $0x10] sm:$0xff]
        %v6591 = vld [vmem:[%s6587 + $0x18] sm:$0xff]
        %v6592 = vld [vmem:[%s6587 + $0x20] sm:$0xff]
        %v6593 = vld [vmem:[%s6587 + $0x28] sm:$0xff]
        %v6594 = vld [vmem:[%s6587 + $0x30] sm:$0xff]
        %v6595 = vld [vmem:[%s6587 + $0x38] sm:$0xff]
        %6596 = vset.pattern.permute.xlu0 6
        %6597 = vperm.xlu0 %6596, %v6230
        %v6598 = vpop.permute.xlu0 %6597
        %6600 = vset.pattern.permute.xlu0 6
        %6601 = vperm.xlu0 %6600, %v6231
        %v6602 = vpop.permute.xlu0 %6601
        %6604 = vset.pattern.permute.xlu0 6
        %6605 = vperm.xlu0 %6604, %v6232
        %v6606 = vpop.permute.xlu0 %6605
        %6608 = vset.pattern.permute.xlu0 6
        %6609 = vperm.xlu0 %6608, %v6233
        %v6610 = vpop.permute.xlu0 %6609
        %6612 = vset.pattern.permute.xlu0 6
        %6613 = vperm.xlu0 %6612, %v6234
        %v6614 = vpop.permute.xlu0 %6613
        %6616 = vset.pattern.permute.xlu0 6
        %6617 = vperm.xlu0 %6616, %v6235
        %v6618 = vpop.permute.xlu0 %6617
        %6620 = vset.pattern.permute.xlu0 6
        %6621 = vperm.xlu0 %6620, %v6236
        %v6622 = vpop.permute.xlu0 %6621
        %6624 = vset.pattern.permute.xlu0 6
        %6625 = vperm.xlu0 %6624, %v6237
        %v6626 = vpop.permute.xlu0 %6625
        %v6628 = vmul.f32 %v6598, %v6588
        %v6629 = vmul.f32 %v6602, %v6589
        %v6630 = vmul.f32 %v6606, %v6590
        %v6631 = vmul.f32 %v6610, %v6591
        %v6632 = vmul.f32 %v6614, %v6592
        %v6633 = vmul.f32 %v6618, %v6593
        %v6634 = vmul.f32 %v6622, %v6594
        %v6635 = vmul.f32 %v6626, %v6595
        %v6636 = vadd.f32 %v6579, %v6628
        %v6637 = vadd.f32 %v6580, %v6629
        %v6638 = vadd.f32 %v6581, %v6630
        %v6639 = vadd.f32 %v6582, %v6631
        %v6640 = vadd.f32 %v6583, %v6632
        %v6641 = vadd.f32 %v6584, %v6633
        %v6642 = vadd.f32 %v6585, %v6634
        %v6643 = vadd.f32 %v6586, %v6635
        %s6644 = scalar_lea.vmem %s5, 448
        %v6645 = vld [vmem:[%s6644] sm:$0xff]
        %v6646 = vld [vmem:[%s6644 + $0x8] sm:$0xff]
        %v6647 = vld [vmem:[%s6644 + $0x10] sm:$0xff]
        %v6648 = vld [vmem:[%s6644 + $0x18] sm:$0xff]
        %v6649 = vld [vmem:[%s6644 + $0x20] sm:$0xff]
        %v6650 = vld [vmem:[%s6644 + $0x28] sm:$0xff]
        %v6651 = vld [vmem:[%s6644 + $0x30] sm:$0xff]
        %v6652 = vld [vmem:[%s6644 + $0x38] sm:$0xff]
        %6653 = vset.pattern.permute.xlu0 7
        %6654 = vperm.xlu0 %6653, %v6230
        %v6655 = vpop.permute.xlu0 %6654
        %6657 = vset.pattern.permute.xlu0 7
        %6658 = vperm.xlu0 %6657, %v6231
        %v6659 = vpop.permute.xlu0 %6658
        %6661 = vset.pattern.permute.xlu0 7
        %6662 = vperm.xlu0 %6661, %v6232
        %v6663 = vpop.permute.xlu0 %6662
        %6665 = vset.pattern.permute.xlu0 7
        %6666 = vperm.xlu0 %6665, %v6233
        %v6667 = vpop.permute.xlu0 %6666
        %6669 = vset.pattern.permute.xlu0 7
        %6670 = vperm.xlu0 %6669, %v6234
        %v6671 = vpop.permute.xlu0 %6670
        %6673 = vset.pattern.permute.xlu0 7
        %6674 = vperm.xlu0 %6673, %v6235
        %v6675 = vpop.permute.xlu0 %6674
        %6677 = vset.pattern.permute.xlu0 7
        %6678 = vperm.xlu0 %6677, %v6236
        %v6679 = vpop.permute.xlu0 %6678
        %6681 = vset.pattern.permute.xlu0 7
        %6682 = vperm.xlu0 %6681, %v6237
        %v6683 = vpop.permute.xlu0 %6682
        %v6685 = vmul.f32 %v6655, %v6645
        %v6686 = vmul.f32 %v6659, %v6646
        %v6687 = vmul.f32 %v6663, %v6647
        %v6688 = vmul.f32 %v6667, %v6648
        %v6689 = vmul.f32 %v6671, %v6649
        %v6690 = vmul.f32 %v6675, %v6650
        %v6691 = vmul.f32 %v6679, %v6651
        %v6692 = vmul.f32 %v6683, %v6652
        %v6693 = vadd.f32 %v6636, %v6685
        %v6694 = vadd.f32 %v6637, %v6686
        %v6695 = vadd.f32 %v6638, %v6687
        %v6696 = vadd.f32 %v6639, %v6688
        %v6697 = vadd.f32 %v6640, %v6689
        %v6698 = vadd.f32 %v6641, %v6690
        %v6699 = vadd.f32 %v6642, %v6691
        %v6700 = vadd.f32 %v6643, %v6692
        %s6701 = scalar_lea.vmem %s5, 512
        %v6702 = vld [vmem:[%s6701] sm:$0xff]
        %v6703 = vld [vmem:[%s6701 + $0x8] sm:$0xff]
        %v6704 = vld [vmem:[%s6701 + $0x10] sm:$0xff]
        %v6705 = vld [vmem:[%s6701 + $0x18] sm:$0xff]
        %v6706 = vld [vmem:[%s6701 + $0x20] sm:$0xff]
        %v6707 = vld [vmem:[%s6701 + $0x28] sm:$0xff]
        %v6708 = vld [vmem:[%s6701 + $0x30] sm:$0xff]
        %v6709 = vld [vmem:[%s6701 + $0x38] sm:$0xff]
        %6710 = vset.pattern.permute.xlu0 8
        %6711 = vperm.xlu0 %6710, %v6230
        %v6712 = vpop.permute.xlu0 %6711
        %6714 = vset.pattern.permute.xlu0 8
        %6715 = vperm.xlu0 %6714, %v6231
        %v6716 = vpop.permute.xlu0 %6715
        %6718 = vset.pattern.permute.xlu0 8
        %6719 = vperm.xlu0 %6718, %v6232
        %v6720 = vpop.permute.xlu0 %6719
        %6722 = vset.pattern.permute.xlu0 8
        %6723 = vperm.xlu0 %6722, %v6233
        %v6724 = vpop.permute.xlu0 %6723
        %6726 = vset.pattern.permute.xlu0 8
        %6727 = vperm.xlu0 %6726, %v6234
        %v6728 = vpop.permute.xlu0 %6727
        %6730 = vset.pattern.permute.xlu0 8
        %6731 = vperm.xlu0 %6730, %v6235
        %v6732 = vpop.permute.xlu0 %6731
        %6734 = vset.pattern.permute.xlu0 8
        %6735 = vperm.xlu0 %6734, %v6236
        %v6736 = vpop.permute.xlu0 %6735
        %6738 = vset.pattern.permute.xlu0 8
        %6739 = vperm.xlu0 %6738, %v6237
        %v6740 = vpop.permute.xlu0 %6739
        %v6742 = vmul.f32 %v6712, %v6702
        %v6743 = vmul.f32 %v6716, %v6703
        %v6744 = vmul.f32 %v6720, %v6704
        %v6745 = vmul.f32 %v6724, %v6705
        %v6746 = vmul.f32 %v6728, %v6706
        %v6747 = vmul.f32 %v6732, %v6707
        %v6748 = vmul.f32 %v6736, %v6708
        %v6749 = vmul.f32 %v6740, %v6709
        %v6750 = vadd.f32 %v6693, %v6742
        %v6751 = vadd.f32 %v6694, %v6743
        %v6752 = vadd.f32 %v6695, %v6744
        %v6753 = vadd.f32 %v6696, %v6745
        %v6754 = vadd.f32 %v6697, %v6746
        %v6755 = vadd.f32 %v6698, %v6747
        %v6756 = vadd.f32 %v6699, %v6748
        %v6757 = vadd.f32 %v6700, %v6749
        %s6758 = scalar_lea.vmem %s5, 576
        %v6759 = vld [vmem:[%s6758] sm:$0xff]
        %v6760 = vld [vmem:[%s6758 + $0x8] sm:$0xff]
        %v6761 = vld [vmem:[%s6758 + $0x10] sm:$0xff]
        %v6762 = vld [vmem:[%s6758 + $0x18] sm:$0xff]
        %v6763 = vld [vmem:[%s6758 + $0x20] sm:$0xff]
        %v6764 = vld [vmem:[%s6758 + $0x28] sm:$0xff]
        %v6765 = vld [vmem:[%s6758 + $0x30] sm:$0xff]
        %v6766 = vld [vmem:[%s6758 + $0x38] sm:$0xff]
        %6767 = vset.pattern.permute.xlu0 9
        %6768 = vperm.xlu0 %6767, %v6230
        %v6769 = vpop.permute.xlu0 %6768
        %6771 = vset.pattern.permute.xlu0 9
        %6772 = vperm.xlu0 %6771, %v6231
        %v6773 = vpop.permute.xlu0 %6772
        %6775 = vset.pattern.permute.xlu0 9
        %6776 = vperm.xlu0 %6775, %v6232
        %v6777 = vpop.permute.xlu0 %6776
        %6779 = vset.pattern.permute.xlu0 9
        %6780 = vperm.xlu0 %6779, %v6233
        %v6781 = vpop.permute.xlu0 %6780
        %6783 = vset.pattern.permute.xlu0 9
        %6784 = vperm.xlu0 %6783, %v6234
        %v6785 = vpop.permute.xlu0 %6784
        %6787 = vset.pattern.permute.xlu0 9
        %6788 = vperm.xlu0 %6787, %v6235
        %v6789 = vpop.permute.xlu0 %6788
        %6791 = vset.pattern.permute.xlu0 9
        %6792 = vperm.xlu0 %6791, %v6236
        %v6793 = vpop.permute.xlu0 %6792
        %6795 = vset.pattern.permute.xlu0 9
        %6796 = vperm.xlu0 %6795, %v6237
        %v6797 = vpop.permute.xlu0 %6796
        %v6799 = vmul.f32 %v6769, %v6759
        %v6800 = vmul.f32 %v6773, %v6760
        %v6801 = vmul.f32 %v6777, %v6761
        %v6802 = vmul.f32 %v6781, %v6762
        %v6803 = vmul.f32 %v6785, %v6763
        %v6804 = vmul.f32 %v6789, %v6764
        %v6805 = vmul.f32 %v6793, %v6765
        %v6806 = vmul.f32 %v6797, %v6766
        %v6807 = vadd.f32 %v6750, %v6799
        %v6808 = vadd.f32 %v6751, %v6800
        %v6809 = vadd.f32 %v6752, %v6801
        %v6810 = vadd.f32 %v6753, %v6802
        %v6811 = vadd.f32 %v6754, %v6803
        %v6812 = vadd.f32 %v6755, %v6804
        %v6813 = vadd.f32 %v6756, %v6805
        %v6814 = vadd.f32 %v6757, %v6806
        %s6815 = scalar_lea.vmem %s5, 640
        %v6816 = vld [vmem:[%s6815] sm:$0xff]
        %v6817 = vld [vmem:[%s6815 + $0x8] sm:$0xff]
        %v6818 = vld [vmem:[%s6815 + $0x10] sm:$0xff]
        %v6819 = vld [vmem:[%s6815 + $0x18] sm:$0xff]
        %v6820 = vld [vmem:[%s6815 + $0x20] sm:$0xff]
        %v6821 = vld [vmem:[%s6815 + $0x28] sm:$0xff]
        %v6822 = vld [vmem:[%s6815 + $0x30] sm:$0xff]
        %v6823 = vld [vmem:[%s6815 + $0x38] sm:$0xff]
        %6824 = vset.pattern.permute.xlu0 10
        %6825 = vperm.xlu0 %6824, %v6230
        %v6826 = vpop.permute.xlu0 %6825
        %6828 = vset.pattern.permute.xlu0 10
        %6829 = vperm.xlu0 %6828, %v6231
        %v6830 = vpop.permute.xlu0 %6829
        %6832 = vset.pattern.permute.xlu0 10
        %6833 = vperm.xlu0 %6832, %v6232
        %v6834 = vpop.permute.xlu0 %6833
        %6836 = vset.pattern.permute.xlu0 10
        %6837 = vperm.xlu0 %6836, %v6233
        %v6838 = vpop.permute.xlu0 %6837
        %6840 = vset.pattern.permute.xlu0 10
        %6841 = vperm.xlu0 %6840, %v6234
        %v6842 = vpop.permute.xlu0 %6841
        %6844 = vset.pattern.permute.xlu0 10
        %6845 = vperm.xlu0 %6844, %v6235
        %v6846 = vpop.permute.xlu0 %6845
        %6848 = vset.pattern.permute.xlu0 10
        %6849 = vperm.xlu0 %6848, %v6236
        %v6850 = vpop.permute.xlu0 %6849
        %6852 = vset.pattern.permute.xlu0 10
        %6853 = vperm.xlu0 %6852, %v6237
        %v6854 = vpop.permute.xlu0 %6853
        %v6856 = vmul.f32 %v6826, %v6816
        %v6857 = vmul.f32 %v6830, %v6817
        %v6858 = vmul.f32 %v6834, %v6818
        %v6859 = vmul.f32 %v6838, %v6819
        %v6860 = vmul.f32 %v6842, %v6820
        %v6861 = vmul.f32 %v6846, %v6821
        %v6862 = vmul.f32 %v6850, %v6822
        %v6863 = vmul.f32 %v6854, %v6823
        %v6864 = vadd.f32 %v6807, %v6856
        %v6865 = vadd.f32 %v6808, %v6857
        %v6866 = vadd.f32 %v6809, %v6858
        %v6867 = vadd.f32 %v6810, %v6859
        %v6868 = vadd.f32 %v6811, %v6860
        %v6869 = vadd.f32 %v6812, %v6861
        %v6870 = vadd.f32 %v6813, %v6862
        %v6871 = vadd.f32 %v6814, %v6863
        %s6872 = scalar_lea.vmem %s5, 704
        %v6873 = vld [vmem:[%s6872] sm:$0xff]
        %v6874 = vld [vmem:[%s6872 + $0x8] sm:$0xff]
        %v6875 = vld [vmem:[%s6872 + $0x10] sm:$0xff]
        %v6876 = vld [vmem:[%s6872 + $0x18] sm:$0xff]
        %v6877 = vld [vmem:[%s6872 + $0x20] sm:$0xff]
        %v6878 = vld [vmem:[%s6872 + $0x28] sm:$0xff]
        %v6879 = vld [vmem:[%s6872 + $0x30] sm:$0xff]
        %v6880 = vld [vmem:[%s6872 + $0x38] sm:$0xff]
        %6881 = vset.pattern.permute.xlu0 11
        %6882 = vperm.xlu0 %6881, %v6230
        %v6883 = vpop.permute.xlu0 %6882
        %6885 = vset.pattern.permute.xlu0 11
        %6886 = vperm.xlu0 %6885, %v6231
        %v6887 = vpop.permute.xlu0 %6886
        %6889 = vset.pattern.permute.xlu0 11
        %6890 = vperm.xlu0 %6889, %v6232
        %v6891 = vpop.permute.xlu0 %6890
        %6893 = vset.pattern.permute.xlu0 11
        %6894 = vperm.xlu0 %6893, %v6233
        %v6895 = vpop.permute.xlu0 %6894
        %6897 = vset.pattern.permute.xlu0 11
        %6898 = vperm.xlu0 %6897, %v6234
        %v6899 = vpop.permute.xlu0 %6898
        %6901 = vset.pattern.permute.xlu0 11
        %6902 = vperm.xlu0 %6901, %v6235
        %v6903 = vpop.permute.xlu0 %6902
        %6905 = vset.pattern.permute.xlu0 11
        %6906 = vperm.xlu0 %6905, %v6236
        %v6907 = vpop.permute.xlu0 %6906
        %6909 = vset.pattern.permute.xlu0 11
        %6910 = vperm.xlu0 %6909, %v6237
        %v6911 = vpop.permute.xlu0 %6910
        %v6913 = vmul.f32 %v6883, %v6873
        %v6914 = vmul.f32 %v6887, %v6874
        %v6915 = vmul.f32 %v6891, %v6875
        %v6916 = vmul.f32 %v6895, %v6876
        %v6917 = vmul.f32 %v6899, %v6877
        %v6918 = vmul.f32 %v6903, %v6878
        %v6919 = vmul.f32 %v6907, %v6879
        %v6920 = vmul.f32 %v6911, %v6880
        %v6921 = vadd.f32 %v6864, %v6913
        %v6922 = vadd.f32 %v6865, %v6914
        %v6923 = vadd.f32 %v6866, %v6915
        %v6924 = vadd.f32 %v6867, %v6916
        %v6925 = vadd.f32 %v6868, %v6917
        %v6926 = vadd.f32 %v6869, %v6918
        %v6927 = vadd.f32 %v6870, %v6919
        %v6928 = vadd.f32 %v6871, %v6920
        %s6929 = scalar_lea.vmem %s5, 768
        %v6930 = vld [vmem:[%s6929] sm:$0xff]
        %v6931 = vld [vmem:[%s6929 + $0x8] sm:$0xff]
        %v6932 = vld [vmem:[%s6929 + $0x10] sm:$0xff]
        %v6933 = vld [vmem:[%s6929 + $0x18] sm:$0xff]
        %v6934 = vld [vmem:[%s6929 + $0x20] sm:$0xff]
        %v6935 = vld [vmem:[%s6929 + $0x28] sm:$0xff]
        %v6936 = vld [vmem:[%s6929 + $0x30] sm:$0xff]
        %v6937 = vld [vmem:[%s6929 + $0x38] sm:$0xff]
        %6938 = vset.pattern.permute.xlu0 12
        %6939 = vperm.xlu0 %6938, %v6230
        %v6940 = vpop.permute.xlu0 %6939
        %6942 = vset.pattern.permute.xlu0 12
        %6943 = vperm.xlu0 %6942, %v6231
        %v6944 = vpop.permute.xlu0 %6943
        %6946 = vset.pattern.permute.xlu0 12
        %6947 = vperm.xlu0 %6946, %v6232
        %v6948 = vpop.permute.xlu0 %6947
        %6950 = vset.pattern.permute.xlu0 12
        %6951 = vperm.xlu0 %6950, %v6233
        %v6952 = vpop.permute.xlu0 %6951
        %6954 = vset.pattern.permute.xlu0 12
        %6955 = vperm.xlu0 %6954, %v6234
        %v6956 = vpop.permute.xlu0 %6955
        %6958 = vset.pattern.permute.xlu0 12
        %6959 = vperm.xlu0 %6958, %v6235
        %v6960 = vpop.permute.xlu0 %6959
        %6962 = vset.pattern.permute.xlu0 12
        %6963 = vperm.xlu0 %6962, %v6236
        %v6964 = vpop.permute.xlu0 %6963
        %6966 = vset.pattern.permute.xlu0 12
        %6967 = vperm.xlu0 %6966, %v6237
        %v6968 = vpop.permute.xlu0 %6967
        %v6970 = vmul.f32 %v6940, %v6930
        %v6971 = vmul.f32 %v6944, %v6931
        %v6972 = vmul.f32 %v6948, %v6932
        %v6973 = vmul.f32 %v6952, %v6933
        %v6974 = vmul.f32 %v6956, %v6934
        %v6975 = vmul.f32 %v6960, %v6935
        %v6976 = vmul.f32 %v6964, %v6936
        %v6977 = vmul.f32 %v6968, %v6937
        %v6978 = vadd.f32 %v6921, %v6970
        %v6979 = vadd.f32 %v6922, %v6971
        %v6980 = vadd.f32 %v6923, %v6972
        %v6981 = vadd.f32 %v6924, %v6973
        %v6982 = vadd.f32 %v6925, %v6974
        %v6983 = vadd.f32 %v6926, %v6975
        %v6984 = vadd.f32 %v6927, %v6976
        %v6985 = vadd.f32 %v6928, %v6977
        %s6986 = scalar_lea.vmem %s5, 832
        %v6987 = vld [vmem:[%s6986] sm:$0xff]
        %v6988 = vld [vmem:[%s6986 + $0x8] sm:$0xff]
        %v6989 = vld [vmem:[%s6986 + $0x10] sm:$0xff]
        %v6990 = vld [vmem:[%s6986 + $0x18] sm:$0xff]
        %v6991 = vld [vmem:[%s6986 + $0x20] sm:$0xff]
        %v6992 = vld [vmem:[%s6986 + $0x28] sm:$0xff]
        %v6993 = vld [vmem:[%s6986 + $0x30] sm:$0xff]
        %v6994 = vld [vmem:[%s6986 + $0x38] sm:$0xff]
        %6995 = vset.pattern.permute.xlu0 13
        %6996 = vperm.xlu0 %6995, %v6230
        %v6997 = vpop.permute.xlu0 %6996
        %6999 = vset.pattern.permute.xlu0 13
        %7000 = vperm.xlu0 %6999, %v6231
        %v7001 = vpop.permute.xlu0 %7000
        %7003 = vset.pattern.permute.xlu0 13
        %7004 = vperm.xlu0 %7003, %v6232
        %v7005 = vpop.permute.xlu0 %7004
        %7007 = vset.pattern.permute.xlu0 13
        %7008 = vperm.xlu0 %7007, %v6233
        %v7009 = vpop.permute.xlu0 %7008
        %7011 = vset.pattern.permute.xlu0 13
        %7012 = vperm.xlu0 %7011, %v6234
        %v7013 = vpop.permute.xlu0 %7012
        %7015 = vset.pattern.permute.xlu0 13
        %7016 = vperm.xlu0 %7015, %v6235
        %v7017 = vpop.permute.xlu0 %7016
        %7019 = vset.pattern.permute.xlu0 13
        %7020 = vperm.xlu0 %7019, %v6236
        %v7021 = vpop.permute.xlu0 %7020
        %7023 = vset.pattern.permute.xlu0 13
        %7024 = vperm.xlu0 %7023, %v6237
        %v7025 = vpop.permute.xlu0 %7024
        %v7027 = vmul.f32 %v6997, %v6987
        %v7028 = vmul.f32 %v7001, %v6988
        %v7029 = vmul.f32 %v7005, %v6989
        %v7030 = vmul.f32 %v7009, %v6990
        %v7031 = vmul.f32 %v7013, %v6991
        %v7032 = vmul.f32 %v7017, %v6992
        %v7033 = vmul.f32 %v7021, %v6993
        %v7034 = vmul.f32 %v7025, %v6994
        %v7035 = vadd.f32 %v6978, %v7027
        %v7036 = vadd.f32 %v6979, %v7028
        %v7037 = vadd.f32 %v6980, %v7029
        %v7038 = vadd.f32 %v6981, %v7030
        %v7039 = vadd.f32 %v6982, %v7031
        %v7040 = vadd.f32 %v6983, %v7032
        %v7041 = vadd.f32 %v6984, %v7033
        %v7042 = vadd.f32 %v6985, %v7034
        %s7043 = scalar_lea.vmem %s5, 896
        %v7044 = vld [vmem:[%s7043] sm:$0xff]
        %v7045 = vld [vmem:[%s7043 + $0x8] sm:$0xff]
        %v7046 = vld [vmem:[%s7043 + $0x10] sm:$0xff]
        %v7047 = vld [vmem:[%s7043 + $0x18] sm:$0xff]
        %v7048 = vld [vmem:[%s7043 + $0x20] sm:$0xff]
        %v7049 = vld [vmem:[%s7043 + $0x28] sm:$0xff]
        %v7050 = vld [vmem:[%s7043 + $0x30] sm:$0xff]
        %v7051 = vld [vmem:[%s7043 + $0x38] sm:$0xff]
        %7052 = vset.pattern.permute.xlu0 14
        %7053 = vperm.xlu0 %7052, %v6230
        %v7054 = vpop.permute.xlu0 %7053
        %7056 = vset.pattern.permute.xlu0 14
        %7057 = vperm.xlu0 %7056, %v6231
        %v7058 = vpop.permute.xlu0 %7057
        %7060 = vset.pattern.permute.xlu0 14
        %7061 = vperm.xlu0 %7060, %v6232
        %v7062 = vpop.permute.xlu0 %7061
        %7064 = vset.pattern.permute.xlu0 14
        %7065 = vperm.xlu0 %7064, %v6233
        %v7066 = vpop.permute.xlu0 %7065
        %7068 = vset.pattern.permute.xlu0 14
        %7069 = vperm.xlu0 %7068, %v6234
        %v7070 = vpop.permute.xlu0 %7069
        %7072 = vset.pattern.permute.xlu0 14
        %7073 = vperm.xlu0 %7072, %v6235
        %v7074 = vpop.permute.xlu0 %7073
        %7076 = vset.pattern.permute.xlu0 14
        %7077 = vperm.xlu0 %7076, %v6236
        %v7078 = vpop.permute.xlu0 %7077
        %7080 = vset.pattern.permute.xlu0 14
        %7081 = vperm.xlu0 %7080, %v6237
        %v7082 = vpop.permute.xlu0 %7081
        %v7084 = vmul.f32 %v7054, %v7044
        %v7085 = vmul.f32 %v7058, %v7045
        %v7086 = vmul.f32 %v7062, %v7046
        %v7087 = vmul.f32 %v7066, %v7047
        %v7088 = vmul.f32 %v7070, %v7048
        %v7089 = vmul.f32 %v7074, %v7049
        %v7090 = vmul.f32 %v7078, %v7050
        %v7091 = vmul.f32 %v7082, %v7051
        %v7092 = vadd.f32 %v7035, %v7084
        %v7093 = vadd.f32 %v7036, %v7085
        %v7094 = vadd.f32 %v7037, %v7086
        %v7095 = vadd.f32 %v7038, %v7087
        %v7096 = vadd.f32 %v7039, %v7088
        %v7097 = vadd.f32 %v7040, %v7089
        %v7098 = vadd.f32 %v7041, %v7090
        %v7099 = vadd.f32 %v7042, %v7091
        %s7100 = scalar_lea.vmem %s5, 960
        %v7101 = vld [vmem:[%s7100] sm:$0xff]
        %v7102 = vld [vmem:[%s7100 + $0x8] sm:$0xff]
        %v7103 = vld [vmem:[%s7100 + $0x10] sm:$0xff]
        %v7104 = vld [vmem:[%s7100 + $0x18] sm:$0xff]
        %v7105 = vld [vmem:[%s7100 + $0x20] sm:$0xff]
        %v7106 = vld [vmem:[%s7100 + $0x28] sm:$0xff]
        %v7107 = vld [vmem:[%s7100 + $0x30] sm:$0xff]
        %v7108 = vld [vmem:[%s7100 + $0x38] sm:$0xff]
        %7109 = vset.pattern.permute.xlu0 15
        %7110 = vperm.xlu0 %7109, %v6230
        %v7111 = vpop.permute.xlu0 %7110
        %7113 = vset.pattern.permute.xlu0 15
        %7114 = vperm.xlu0 %7113, %v6231
        %v7115 = vpop.permute.xlu0 %7114
        %7117 = vset.pattern.permute.xlu0 15
        %7118 = vperm.xlu0 %7117, %v6232
        %v7119 = vpop.permute.xlu0 %7118
        %7121 = vset.pattern.permute.xlu0 15
        %7122 = vperm.xlu0 %7121, %v6233
        %v7123 = vpop.permute.xlu0 %7122
        %7125 = vset.pattern.permute.xlu0 15
        %7126 = vperm.xlu0 %7125, %v6234
        %v7127 = vpop.permute.xlu0 %7126
        %7129 = vset.pattern.permute.xlu0 15
        %7130 = vperm.xlu0 %7129, %v6235
        %v7131 = vpop.permute.xlu0 %7130
        %7133 = vset.pattern.permute.xlu0 15
        %7134 = vperm.xlu0 %7133, %v6236
        %v7135 = vpop.permute.xlu0 %7134
        %7137 = vset.pattern.permute.xlu0 15
        %7138 = vperm.xlu0 %7137, %v6237
        %v7139 = vpop.permute.xlu0 %7138
        %v7141 = vmul.f32 %v7111, %v7101
        %v7142 = vmul.f32 %v7115, %v7102
        %v7143 = vmul.f32 %v7119, %v7103
        %v7144 = vmul.f32 %v7123, %v7104
        %v7145 = vmul.f32 %v7127, %v7105
        %v7146 = vmul.f32 %v7131, %v7106
        %v7147 = vmul.f32 %v7135, %v7107
        %v7148 = vmul.f32 %v7139, %v7108
        %v7149 = vadd.f32 %v7092, %v7141
        %v7150 = vadd.f32 %v7093, %v7142
        %v7151 = vadd.f32 %v7094, %v7143
        %v7152 = vadd.f32 %v7095, %v7144
        %v7153 = vadd.f32 %v7096, %v7145
        %v7154 = vadd.f32 %v7097, %v7146
        %v7155 = vadd.f32 %v7098, %v7147
        %v7156 = vadd.f32 %v7099, %v7148
        %s7157 = scalar_lea.vmem %s5, 1024
        %v7158 = vld [vmem:[%s7157] sm:$0xff]
        %v7159 = vld [vmem:[%s7157 + $0x8] sm:$0xff]
        %v7160 = vld [vmem:[%s7157 + $0x10] sm:$0xff]
        %v7161 = vld [vmem:[%s7157 + $0x18] sm:$0xff]
        %v7162 = vld [vmem:[%s7157 + $0x20] sm:$0xff]
        %v7163 = vld [vmem:[%s7157 + $0x28] sm:$0xff]
        %v7164 = vld [vmem:[%s7157 + $0x30] sm:$0xff]
        %v7165 = vld [vmem:[%s7157 + $0x38] sm:$0xff]
        %7166 = vset.pattern.permute.xlu0 16
        %7167 = vperm.xlu0 %7166, %v6230
        %v7168 = vpop.permute.xlu0 %7167
        %7170 = vset.pattern.permute.xlu0 16
        %7171 = vperm.xlu0 %7170, %v6231
        %v7172 = vpop.permute.xlu0 %7171
        %7174 = vset.pattern.permute.xlu0 16
        %7175 = vperm.xlu0 %7174, %v6232
        %v7176 = vpop.permute.xlu0 %7175
        %7178 = vset.pattern.permute.xlu0 16
        %7179 = vperm.xlu0 %7178, %v6233
        %v7180 = vpop.permute.xlu0 %7179
        %7182 = vset.pattern.permute.xlu0 16
        %7183 = vperm.xlu0 %7182, %v6234
        %v7184 = vpop.permute.xlu0 %7183
        %7186 = vset.pattern.permute.xlu0 16
        %7187 = vperm.xlu0 %7186, %v6235
        %v7188 = vpop.permute.xlu0 %7187
        %7190 = vset.pattern.permute.xlu0 16
        %7191 = vperm.xlu0 %7190, %v6236
        %v7192 = vpop.permute.xlu0 %7191
        %7194 = vset.pattern.permute.xlu0 16
        %7195 = vperm.xlu0 %7194, %v6237
        %v7196 = vpop.permute.xlu0 %7195
        %v7198 = vmul.f32 %v7168, %v7158
        %v7199 = vmul.f32 %v7172, %v7159
        %v7200 = vmul.f32 %v7176, %v7160
        %v7201 = vmul.f32 %v7180, %v7161
        %v7202 = vmul.f32 %v7184, %v7162
        %v7203 = vmul.f32 %v7188, %v7163
        %v7204 = vmul.f32 %v7192, %v7164
        %v7205 = vmul.f32 %v7196, %v7165
        %v7206 = vadd.f32 %v7149, %v7198
        %v7207 = vadd.f32 %v7150, %v7199
        %v7208 = vadd.f32 %v7151, %v7200
        %v7209 = vadd.f32 %v7152, %v7201
        %v7210 = vadd.f32 %v7153, %v7202
        %v7211 = vadd.f32 %v7154, %v7203
        %v7212 = vadd.f32 %v7155, %v7204
        %v7213 = vadd.f32 %v7156, %v7205
        %s7214 = scalar_lea.vmem %s5, 1088
        %v7215 = vld [vmem:[%s7214] sm:$0xff]
        %v7216 = vld [vmem:[%s7214 + $0x8] sm:$0xff]
        %v7217 = vld [vmem:[%s7214 + $0x10] sm:$0xff]
        %v7218 = vld [vmem:[%s7214 + $0x18] sm:$0xff]
        %v7219 = vld [vmem:[%s7214 + $0x20] sm:$0xff]
        %v7220 = vld [vmem:[%s7214 + $0x28] sm:$0xff]
        %v7221 = vld [vmem:[%s7214 + $0x30] sm:$0xff]
        %v7222 = vld [vmem:[%s7214 + $0x38] sm:$0xff]
        %7223 = vset.pattern.permute.xlu0 17
        %7224 = vperm.xlu0 %7223, %v6230
        %v7225 = vpop.permute.xlu0 %7224
        %7227 = vset.pattern.permute.xlu0 17
        %7228 = vperm.xlu0 %7227, %v6231
        %v7229 = vpop.permute.xlu0 %7228
        %7231 = vset.pattern.permute.xlu0 17
        %7232 = vperm.xlu0 %7231, %v6232
        %v7233 = vpop.permute.xlu0 %7232
        %7235 = vset.pattern.permute.xlu0 17
        %7236 = vperm.xlu0 %7235, %v6233
        %v7237 = vpop.permute.xlu0 %7236
        %7239 = vset.pattern.permute.xlu0 17
        %7240 = vperm.xlu0 %7239, %v6234
        %v7241 = vpop.permute.xlu0 %7240
        %7243 = vset.pattern.permute.xlu0 17
        %7244 = vperm.xlu0 %7243, %v6235
        %v7245 = vpop.permute.xlu0 %7244
        %7247 = vset.pattern.permute.xlu0 17
        %7248 = vperm.xlu0 %7247, %v6236
        %v7249 = vpop.permute.xlu0 %7248
        %7251 = vset.pattern.permute.xlu0 17
        %7252 = vperm.xlu0 %7251, %v6237
        %v7253 = vpop.permute.xlu0 %7252
        %v7255 = vmul.f32 %v7225, %v7215
        %v7256 = vmul.f32 %v7229, %v7216
        %v7257 = vmul.f32 %v7233, %v7217
        %v7258 = vmul.f32 %v7237, %v7218
        %v7259 = vmul.f32 %v7241, %v7219
        %v7260 = vmul.f32 %v7245, %v7220
        %v7261 = vmul.f32 %v7249, %v7221
        %v7262 = vmul.f32 %v7253, %v7222
        %v7263 = vadd.f32 %v7206, %v7255
        %v7264 = vadd.f32 %v7207, %v7256
        %v7265 = vadd.f32 %v7208, %v7257
        %v7266 = vadd.f32 %v7209, %v7258
        %v7267 = vadd.f32 %v7210, %v7259
        %v7268 = vadd.f32 %v7211, %v7260
        %v7269 = vadd.f32 %v7212, %v7261
        %v7270 = vadd.f32 %v7213, %v7262
        %s7271 = scalar_lea.vmem %s5, 1152
        %v7272 = vld [vmem:[%s7271] sm:$0xff]
        %v7273 = vld [vmem:[%s7271 + $0x8] sm:$0xff]
        %v7274 = vld [vmem:[%s7271 + $0x10] sm:$0xff]
        %v7275 = vld [vmem:[%s7271 + $0x18] sm:$0xff]
        %v7276 = vld [vmem:[%s7271 + $0x20] sm:$0xff]
        %v7277 = vld [vmem:[%s7271 + $0x28] sm:$0xff]
        %v7278 = vld [vmem:[%s7271 + $0x30] sm:$0xff]
        %v7279 = vld [vmem:[%s7271 + $0x38] sm:$0xff]
        %7280 = vset.pattern.permute.xlu0 18
        %7281 = vperm.xlu0 %7280, %v6230
        %v7282 = vpop.permute.xlu0 %7281
        %7284 = vset.pattern.permute.xlu0 18
        %7285 = vperm.xlu0 %7284, %v6231
        %v7286 = vpop.permute.xlu0 %7285
        %7288 = vset.pattern.permute.xlu0 18
        %7289 = vperm.xlu0 %7288, %v6232
        %v7290 = vpop.permute.xlu0 %7289
        %7292 = vset.pattern.permute.xlu0 18
        %7293 = vperm.xlu0 %7292, %v6233
        %v7294 = vpop.permute.xlu0 %7293
        %7296 = vset.pattern.permute.xlu0 18
        %7297 = vperm.xlu0 %7296, %v6234
        %v7298 = vpop.permute.xlu0 %7297
        %7300 = vset.pattern.permute.xlu0 18
        %7301 = vperm.xlu0 %7300, %v6235
        %v7302 = vpop.permute.xlu0 %7301
        %7304 = vset.pattern.permute.xlu0 18
        %7305 = vperm.xlu0 %7304, %v6236
        %v7306 = vpop.permute.xlu0 %7305
        %7308 = vset.pattern.permute.xlu0 18
        %7309 = vperm.xlu0 %7308, %v6237
        %v7310 = vpop.permute.xlu0 %7309
        %v7312 = vmul.f32 %v7282, %v7272
        %v7313 = vmul.f32 %v7286, %v7273
        %v7314 = vmul.f32 %v7290, %v7274
        %v7315 = vmul.f32 %v7294, %v7275
        %v7316 = vmul.f32 %v7298, %v7276
        %v7317 = vmul.f32 %v7302, %v7277
        %v7318 = vmul.f32 %v7306, %v7278
        %v7319 = vmul.f32 %v7310, %v7279
        %v7320 = vadd.f32 %v7263, %v7312
        %v7321 = vadd.f32 %v7264, %v7313
        %v7322 = vadd.f32 %v7265, %v7314
        %v7323 = vadd.f32 %v7266, %v7315
        %v7324 = vadd.f32 %v7267, %v7316
        %v7325 = vadd.f32 %v7268, %v7317
        %v7326 = vadd.f32 %v7269, %v7318
        %v7327 = vadd.f32 %v7270, %v7319
        %s7328 = scalar_lea.vmem %s5, 1216
        %v7329 = vld [vmem:[%s7328] sm:$0xff]
        %v7330 = vld [vmem:[%s7328 + $0x8] sm:$0xff]
        %v7331 = vld [vmem:[%s7328 + $0x10] sm:$0xff]
        %v7332 = vld [vmem:[%s7328 + $0x18] sm:$0xff]
        %v7333 = vld [vmem:[%s7328 + $0x20] sm:$0xff]
        %v7334 = vld [vmem:[%s7328 + $0x28] sm:$0xff]
        %v7335 = vld [vmem:[%s7328 + $0x30] sm:$0xff]
        %v7336 = vld [vmem:[%s7328 + $0x38] sm:$0xff]
        %7337 = vset.pattern.permute.xlu0 19
        %7338 = vperm.xlu0 %7337, %v6230
        %v7339 = vpop.permute.xlu0 %7338
        %7341 = vset.pattern.permute.xlu0 19
        %7342 = vperm.xlu0 %7341, %v6231
        %v7343 = vpop.permute.xlu0 %7342
        %7345 = vset.pattern.permute.xlu0 19
        %7346 = vperm.xlu0 %7345, %v6232
        %v7347 = vpop.permute.xlu0 %7346
        %7349 = vset.pattern.permute.xlu0 19
        %7350 = vperm.xlu0 %7349, %v6233
        %v7351 = vpop.permute.xlu0 %7350
        %7353 = vset.pattern.permute.xlu0 19
        %7354 = vperm.xlu0 %7353, %v6234
        %v7355 = vpop.permute.xlu0 %7354
        %7357 = vset.pattern.permute.xlu0 19
        %7358 = vperm.xlu0 %7357, %v6235
        %v7359 = vpop.permute.xlu0 %7358
        %7361 = vset.pattern.permute.xlu0 19
        %7362 = vperm.xlu0 %7361, %v6236
        %v7363 = vpop.permute.xlu0 %7362
        %7365 = vset.pattern.permute.xlu0 19
        %7366 = vperm.xlu0 %7365, %v6237
        %v7367 = vpop.permute.xlu0 %7366
        %v7369 = vmul.f32 %v7339, %v7329
        %v7370 = vmul.f32 %v7343, %v7330
        %v7371 = vmul.f32 %v7347, %v7331
        %v7372 = vmul.f32 %v7351, %v7332
        %v7373 = vmul.f32 %v7355, %v7333
        %v7374 = vmul.f32 %v7359, %v7334
        %v7375 = vmul.f32 %v7363, %v7335
        %v7376 = vmul.f32 %v7367, %v7336
        %v7377 = vadd.f32 %v7320, %v7369
        %v7378 = vadd.f32 %v7321, %v7370
        %v7379 = vadd.f32 %v7322, %v7371
        %v7380 = vadd.f32 %v7323, %v7372
        %v7381 = vadd.f32 %v7324, %v7373
        %v7382 = vadd.f32 %v7325, %v7374
        %v7383 = vadd.f32 %v7326, %v7375
        %v7384 = vadd.f32 %v7327, %v7376
        %s7385 = scalar_lea.vmem %s5, 1280
        %v7386 = vld [vmem:[%s7385] sm:$0xff]
        %v7387 = vld [vmem:[%s7385 + $0x8] sm:$0xff]
        %v7388 = vld [vmem:[%s7385 + $0x10] sm:$0xff]
        %v7389 = vld [vmem:[%s7385 + $0x18] sm:$0xff]
        %v7390 = vld [vmem:[%s7385 + $0x20] sm:$0xff]
        %v7391 = vld [vmem:[%s7385 + $0x28] sm:$0xff]
        %v7392 = vld [vmem:[%s7385 + $0x30] sm:$0xff]
        %v7393 = vld [vmem:[%s7385 + $0x38] sm:$0xff]
        %7394 = vset.pattern.permute.xlu0 20
        %7395 = vperm.xlu0 %7394, %v6230
        %v7396 = vpop.permute.xlu0 %7395
        %7398 = vset.pattern.permute.xlu0 20
        %7399 = vperm.xlu0 %7398, %v6231
        %v7400 = vpop.permute.xlu0 %7399
        %7402 = vset.pattern.permute.xlu0 20
        %7403 = vperm.xlu0 %7402, %v6232
        %v7404 = vpop.permute.xlu0 %7403
        %7406 = vset.pattern.permute.xlu0 20
        %7407 = vperm.xlu0 %7406, %v6233
        %v7408 = vpop.permute.xlu0 %7407
        %7410 = vset.pattern.permute.xlu0 20
        %7411 = vperm.xlu0 %7410, %v6234
        %v7412 = vpop.permute.xlu0 %7411
        %7414 = vset.pattern.permute.xlu0 20
        %7415 = vperm.xlu0 %7414, %v6235
        %v7416 = vpop.permute.xlu0 %7415
        %7418 = vset.pattern.permute.xlu0 20
        %7419 = vperm.xlu0 %7418, %v6236
        %v7420 = vpop.permute.xlu0 %7419
        %7422 = vset.pattern.permute.xlu0 20
        %7423 = vperm.xlu0 %7422, %v6237
        %v7424 = vpop.permute.xlu0 %7423
        %v7426 = vmul.f32 %v7396, %v7386
        %v7427 = vmul.f32 %v7400, %v7387
        %v7428 = vmul.f32 %v7404, %v7388
        %v7429 = vmul.f32 %v7408, %v7389
        %v7430 = vmul.f32 %v7412, %v7390
        %v7431 = vmul.f32 %v7416, %v7391
        %v7432 = vmul.f32 %v7420, %v7392
        %v7433 = vmul.f32 %v7424, %v7393
        %v7434 = vadd.f32 %v7377, %v7426
        %v7435 = vadd.f32 %v7378, %v7427
        %v7436 = vadd.f32 %v7379, %v7428
        %v7437 = vadd.f32 %v7380, %v7429
        %v7438 = vadd.f32 %v7381, %v7430
        %v7439 = vadd.f32 %v7382, %v7431
        %v7440 = vadd.f32 %v7383, %v7432
        %v7441 = vadd.f32 %v7384, %v7433
        %s7442 = scalar_lea.vmem %s5, 1344
        %v7443 = vld [vmem:[%s7442] sm:$0xff]
        %v7444 = vld [vmem:[%s7442 + $0x8] sm:$0xff]
        %v7445 = vld [vmem:[%s7442 + $0x10] sm:$0xff]
        %v7446 = vld [vmem:[%s7442 + $0x18] sm:$0xff]
        %v7447 = vld [vmem:[%s7442 + $0x20] sm:$0xff]
        %v7448 = vld [vmem:[%s7442 + $0x28] sm:$0xff]
        %v7449 = vld [vmem:[%s7442 + $0x30] sm:$0xff]
        %v7450 = vld [vmem:[%s7442 + $0x38] sm:$0xff]
        %7451 = vset.pattern.permute.xlu0 21
        %7452 = vperm.xlu0 %7451, %v6230
        %v7453 = vpop.permute.xlu0 %7452
        %7455 = vset.pattern.permute.xlu0 21
        %7456 = vperm.xlu0 %7455, %v6231
        %v7457 = vpop.permute.xlu0 %7456
        %7459 = vset.pattern.permute.xlu0 21
        %7460 = vperm.xlu0 %7459, %v6232
        %v7461 = vpop.permute.xlu0 %7460
        %7463 = vset.pattern.permute.xlu0 21
        %7464 = vperm.xlu0 %7463, %v6233
        %v7465 = vpop.permute.xlu0 %7464
        %7467 = vset.pattern.permute.xlu0 21
        %7468 = vperm.xlu0 %7467, %v6234
        %v7469 = vpop.permute.xlu0 %7468
        %7471 = vset.pattern.permute.xlu0 21
        %7472 = vperm.xlu0 %7471, %v6235
        %v7473 = vpop.permute.xlu0 %7472
        %7475 = vset.pattern.permute.xlu0 21
        %7476 = vperm.xlu0 %7475, %v6236
        %v7477 = vpop.permute.xlu0 %7476
        %7479 = vset.pattern.permute.xlu0 21
        %7480 = vperm.xlu0 %7479, %v6237
        %v7481 = vpop.permute.xlu0 %7480
        %v7483 = vmul.f32 %v7453, %v7443
        %v7484 = vmul.f32 %v7457, %v7444
        %v7485 = vmul.f32 %v7461, %v7445
        %v7486 = vmul.f32 %v7465, %v7446
        %v7487 = vmul.f32 %v7469, %v7447
        %v7488 = vmul.f32 %v7473, %v7448
        %v7489 = vmul.f32 %v7477, %v7449
        %v7490 = vmul.f32 %v7481, %v7450
        %v7491 = vadd.f32 %v7434, %v7483
        %v7492 = vadd.f32 %v7435, %v7484
        %v7493 = vadd.f32 %v7436, %v7485
        %v7494 = vadd.f32 %v7437, %v7486
        %v7495 = vadd.f32 %v7438, %v7487
        %v7496 = vadd.f32 %v7439, %v7488
        %v7497 = vadd.f32 %v7440, %v7489
        %v7498 = vadd.f32 %v7441, %v7490
        %s7499 = scalar_lea.vmem %s5, 1408
        %v7500 = vld [vmem:[%s7499] sm:$0xff]
        %v7501 = vld [vmem:[%s7499 + $0x8] sm:$0xff]
        %v7502 = vld [vmem:[%s7499 + $0x10] sm:$0xff]
        %v7503 = vld [vmem:[%s7499 + $0x18] sm:$0xff]
        %v7504 = vld [vmem:[%s7499 + $0x20] sm:$0xff]
        %v7505 = vld [vmem:[%s7499 + $0x28] sm:$0xff]
        %v7506 = vld [vmem:[%s7499 + $0x30] sm:$0xff]
        %v7507 = vld [vmem:[%s7499 + $0x38] sm:$0xff]
        %7508 = vset.pattern.permute.xlu0 22
        %7509 = vperm.xlu0 %7508, %v6230
        %v7510 = vpop.permute.xlu0 %7509
        %7512 = vset.pattern.permute.xlu0 22
        %7513 = vperm.xlu0 %7512, %v6231
        %v7514 = vpop.permute.xlu0 %7513
        %7516 = vset.pattern.permute.xlu0 22
        %7517 = vperm.xlu0 %7516, %v6232
        %v7518 = vpop.permute.xlu0 %7517
        %7520 = vset.pattern.permute.xlu0 22
        %7521 = vperm.xlu0 %7520, %v6233
        %v7522 = vpop.permute.xlu0 %7521
        %7524 = vset.pattern.permute.xlu0 22
        %7525 = vperm.xlu0 %7524, %v6234
        %v7526 = vpop.permute.xlu0 %7525
        %7528 = vset.pattern.permute.xlu0 22
        %7529 = vperm.xlu0 %7528, %v6235
        %v7530 = vpop.permute.xlu0 %7529
        %7532 = vset.pattern.permute.xlu0 22
        %7533 = vperm.xlu0 %7532, %v6236
        %v7534 = vpop.permute.xlu0 %7533
        %7536 = vset.pattern.permute.xlu0 22
        %7537 = vperm.xlu0 %7536, %v6237
        %v7538 = vpop.permute.xlu0 %7537
        %v7540 = vmul.f32 %v7510, %v7500
        %v7541 = vmul.f32 %v7514, %v7501
        %v7542 = vmul.f32 %v7518, %v7502
        %v7543 = vmul.f32 %v7522, %v7503
        %v7544 = vmul.f32 %v7526, %v7504
        %v7545 = vmul.f32 %v7530, %v7505
        %v7546 = vmul.f32 %v7534, %v7506
        %v7547 = vmul.f32 %v7538, %v7507
        %v7548 = vadd.f32 %v7491, %v7540
        %v7549 = vadd.f32 %v7492, %v7541
        %v7550 = vadd.f32 %v7493, %v7542
        %v7551 = vadd.f32 %v7494, %v7543
        %v7552 = vadd.f32 %v7495, %v7544
        %v7553 = vadd.f32 %v7496, %v7545
        %v7554 = vadd.f32 %v7497, %v7546
        %v7555 = vadd.f32 %v7498, %v7547
        %s7556 = scalar_lea.vmem %s5, 1472
        %v7557 = vld [vmem:[%s7556] sm:$0xff]
        %v7558 = vld [vmem:[%s7556 + $0x8] sm:$0xff]
        %v7559 = vld [vmem:[%s7556 + $0x10] sm:$0xff]
        %v7560 = vld [vmem:[%s7556 + $0x18] sm:$0xff]
        %v7561 = vld [vmem:[%s7556 + $0x20] sm:$0xff]
        %v7562 = vld [vmem:[%s7556 + $0x28] sm:$0xff]
        %v7563 = vld [vmem:[%s7556 + $0x30] sm:$0xff]
        %v7564 = vld [vmem:[%s7556 + $0x38] sm:$0xff]
        %7565 = vset.pattern.permute.xlu0 23
        %7566 = vperm.xlu0 %7565, %v6230
        %v7567 = vpop.permute.xlu0 %7566
        %7569 = vset.pattern.permute.xlu0 23
        %7570 = vperm.xlu0 %7569, %v6231
        %v7571 = vpop.permute.xlu0 %7570
        %7573 = vset.pattern.permute.xlu0 23
        %7574 = vperm.xlu0 %7573, %v6232
        %v7575 = vpop.permute.xlu0 %7574
        %7577 = vset.pattern.permute.xlu0 23
        %7578 = vperm.xlu0 %7577, %v6233
        %v7579 = vpop.permute.xlu0 %7578
        %7581 = vset.pattern.permute.xlu0 23
        %7582 = vperm.xlu0 %7581, %v6234
        %v7583 = vpop.permute.xlu0 %7582
        %7585 = vset.pattern.permute.xlu0 23
        %7586 = vperm.xlu0 %7585, %v6235
        %v7587 = vpop.permute.xlu0 %7586
        %7589 = vset.pattern.permute.xlu0 23
        %7590 = vperm.xlu0 %7589, %v6236
        %v7591 = vpop.permute.xlu0 %7590
        %7593 = vset.pattern.permute.xlu0 23
        %7594 = vperm.xlu0 %7593, %v6237
        %v7595 = vpop.permute.xlu0 %7594
        %v7597 = vmul.f32 %v7567, %v7557
        %v7598 = vmul.f32 %v7571, %v7558
        %v7599 = vmul.f32 %v7575, %v7559
        %v7600 = vmul.f32 %v7579, %v7560
        %v7601 = vmul.f32 %v7583, %v7561
        %v7602 = vmul.f32 %v7587, %v7562
        %v7603 = vmul.f32 %v7591, %v7563
        %v7604 = vmul.f32 %v7595, %v7564
        %v7605 = vadd.f32 %v7548, %v7597
        %v7606 = vadd.f32 %v7549, %v7598
        %v7607 = vadd.f32 %v7550, %v7599
        %v7608 = vadd.f32 %v7551, %v7600
        %v7609 = vadd.f32 %v7552, %v7601
        %v7610 = vadd.f32 %v7553, %v7602
        %v7611 = vadd.f32 %v7554, %v7603
        %v7612 = vadd.f32 %v7555, %v7604
        %s7613 = scalar_lea.vmem %s5, 1536
        %v7614 = vld [vmem:[%s7613] sm:$0xff]
        %v7615 = vld [vmem:[%s7613 + $0x8] sm:$0xff]
        %v7616 = vld [vmem:[%s7613 + $0x10] sm:$0xff]
        %v7617 = vld [vmem:[%s7613 + $0x18] sm:$0xff]
        %v7618 = vld [vmem:[%s7613 + $0x20] sm:$0xff]
        %v7619 = vld [vmem:[%s7613 + $0x28] sm:$0xff]
        %v7620 = vld [vmem:[%s7613 + $0x30] sm:$0xff]
        %v7621 = vld [vmem:[%s7613 + $0x38] sm:$0xff]
        %7622 = vset.pattern.permute.xlu0 24
        %7623 = vperm.xlu0 %7622, %v6230
        %v7624 = vpop.permute.xlu0 %7623
        %7626 = vset.pattern.permute.xlu0 24
        %7627 = vperm.xlu0 %7626, %v6231
        %v7628 = vpop.permute.xlu0 %7627
        %7630 = vset.pattern.permute.xlu0 24
        %7631 = vperm.xlu0 %7630, %v6232
        %v7632 = vpop.permute.xlu0 %7631
        %7634 = vset.pattern.permute.xlu0 24
        %7635 = vperm.xlu0 %7634, %v6233
        %v7636 = vpop.permute.xlu0 %7635
        %7638 = vset.pattern.permute.xlu0 24
        %7639 = vperm.xlu0 %7638, %v6234
        %v7640 = vpop.permute.xlu0 %7639
        %7642 = vset.pattern.permute.xlu0 24
        %7643 = vperm.xlu0 %7642, %v6235
        %v7644 = vpop.permute.xlu0 %7643
        %7646 = vset.pattern.permute.xlu0 24
        %7647 = vperm.xlu0 %7646, %v6236
        %v7648 = vpop.permute.xlu0 %7647
        %7650 = vset.pattern.permute.xlu0 24
        %7651 = vperm.xlu0 %7650, %v6237
        %v7652 = vpop.permute.xlu0 %7651
        %v7654 = vmul.f32 %v7624, %v7614
        %v7655 = vmul.f32 %v7628, %v7615
        %v7656 = vmul.f32 %v7632, %v7616
        %v7657 = vmul.f32 %v7636, %v7617
        %v7658 = vmul.f32 %v7640, %v7618
        %v7659 = vmul.f32 %v7644, %v7619
        %v7660 = vmul.f32 %v7648, %v7620
        %v7661 = vmul.f32 %v7652, %v7621
        %v7662 = vadd.f32 %v7605, %v7654
        %v7663 = vadd.f32 %v7606, %v7655
        %v7664 = vadd.f32 %v7607, %v7656
        %v7665 = vadd.f32 %v7608, %v7657
        %v7666 = vadd.f32 %v7609, %v7658
        %v7667 = vadd.f32 %v7610, %v7659
        %v7668 = vadd.f32 %v7611, %v7660
        %v7669 = vadd.f32 %v7612, %v7661
        %s7670 = scalar_lea.vmem %s5, 1600
        %v7671 = vld [vmem:[%s7670] sm:$0xff]
        %v7672 = vld [vmem:[%s7670 + $0x8] sm:$0xff]
        %v7673 = vld [vmem:[%s7670 + $0x10] sm:$0xff]
        %v7674 = vld [vmem:[%s7670 + $0x18] sm:$0xff]
        %v7675 = vld [vmem:[%s7670 + $0x20] sm:$0xff]
        %v7676 = vld [vmem:[%s7670 + $0x28] sm:$0xff]
        %v7677 = vld [vmem:[%s7670 + $0x30] sm:$0xff]
        %v7678 = vld [vmem:[%s7670 + $0x38] sm:$0xff]
        %7679 = vset.pattern.permute.xlu0 25
        %7680 = vperm.xlu0 %7679, %v6230
        %v7681 = vpop.permute.xlu0 %7680
        %7683 = vset.pattern.permute.xlu0 25
        %7684 = vperm.xlu0 %7683, %v6231
        %v7685 = vpop.permute.xlu0 %7684
        %7687 = vset.pattern.permute.xlu0 25
        %7688 = vperm.xlu0 %7687, %v6232
        %v7689 = vpop.permute.xlu0 %7688
        %7691 = vset.pattern.permute.xlu0 25
        %7692 = vperm.xlu0 %7691, %v6233
        %v7693 = vpop.permute.xlu0 %7692
        %7695 = vset.pattern.permute.xlu0 25
        %7696 = vperm.xlu0 %7695, %v6234
        %v7697 = vpop.permute.xlu0 %7696
        %7699 = vset.pattern.permute.xlu0 25
        %7700 = vperm.xlu0 %7699, %v6235
        %v7701 = vpop.permute.xlu0 %7700
        %7703 = vset.pattern.permute.xlu0 25
        %7704 = vperm.xlu0 %7703, %v6236
        %v7705 = vpop.permute.xlu0 %7704
        %7707 = vset.pattern.permute.xlu0 25
        %7708 = vperm.xlu0 %7707, %v6237
        %v7709 = vpop.permute.xlu0 %7708
        %v7711 = vmul.f32 %v7681, %v7671
        %v7712 = vmul.f32 %v7685, %v7672
        %v7713 = vmul.f32 %v7689, %v7673
        %v7714 = vmul.f32 %v7693, %v7674
        %v7715 = vmul.f32 %v7697, %v7675
        %v7716 = vmul.f32 %v7701, %v7676
        %v7717 = vmul.f32 %v7705, %v7677
        %v7718 = vmul.f32 %v7709, %v7678
        %v7719 = vadd.f32 %v7662, %v7711
        %v7720 = vadd.f32 %v7663, %v7712
        %v7721 = vadd.f32 %v7664, %v7713
        %v7722 = vadd.f32 %v7665, %v7714
        %v7723 = vadd.f32 %v7666, %v7715
        %v7724 = vadd.f32 %v7667, %v7716
        %v7725 = vadd.f32 %v7668, %v7717
        %v7726 = vadd.f32 %v7669, %v7718
        %s7727 = scalar_lea.vmem %s5, 1664
        %v7728 = vld [vmem:[%s7727] sm:$0xff]
        %v7729 = vld [vmem:[%s7727 + $0x8] sm:$0xff]
        %v7730 = vld [vmem:[%s7727 + $0x10] sm:$0xff]
        %v7731 = vld [vmem:[%s7727 + $0x18] sm:$0xff]
        %v7732 = vld [vmem:[%s7727 + $0x20] sm:$0xff]
        %v7733 = vld [vmem:[%s7727 + $0x28] sm:$0xff]
        %v7734 = vld [vmem:[%s7727 + $0x30] sm:$0xff]
        %v7735 = vld [vmem:[%s7727 + $0x38] sm:$0xff]
        %7736 = vset.pattern.permute.xlu0 26
        %7737 = vperm.xlu0 %7736, %v6230
        %v7738 = vpop.permute.xlu0 %7737
        %7740 = vset.pattern.permute.xlu0 26
        %7741 = vperm.xlu0 %7740, %v6231
        %v7742 = vpop.permute.xlu0 %7741
        %7744 = vset.pattern.permute.xlu0 26
        %7745 = vperm.xlu0 %7744, %v6232
        %v7746 = vpop.permute.xlu0 %7745
        %7748 = vset.pattern.permute.xlu0 26
        %7749 = vperm.xlu0 %7748, %v6233
        %v7750 = vpop.permute.xlu0 %7749
        %7752 = vset.pattern.permute.xlu0 26
        %7753 = vperm.xlu0 %7752, %v6234
        %v7754 = vpop.permute.xlu0 %7753
        %7756 = vset.pattern.permute.xlu0 26
        %7757 = vperm.xlu0 %7756, %v6235
        %v7758 = vpop.permute.xlu0 %7757
        %7760 = vset.pattern.permute.xlu0 26
        %7761 = vperm.xlu0 %7760, %v6236
        %v7762 = vpop.permute.xlu0 %7761
        %7764 = vset.pattern.permute.xlu0 26
        %7765 = vperm.xlu0 %7764, %v6237
        %v7766 = vpop.permute.xlu0 %7765
        %v7768 = vmul.f32 %v7738, %v7728
        %v7769 = vmul.f32 %v7742, %v7729
        %v7770 = vmul.f32 %v7746, %v7730
        %v7771 = vmul.f32 %v7750, %v7731
        %v7772 = vmul.f32 %v7754, %v7732
        %v7773 = vmul.f32 %v7758, %v7733
        %v7774 = vmul.f32 %v7762, %v7734
        %v7775 = vmul.f32 %v7766, %v7735
        %v7776 = vadd.f32 %v7719, %v7768
        %v7777 = vadd.f32 %v7720, %v7769
        %v7778 = vadd.f32 %v7721, %v7770
        %v7779 = vadd.f32 %v7722, %v7771
        %v7780 = vadd.f32 %v7723, %v7772
        %v7781 = vadd.f32 %v7724, %v7773
        %v7782 = vadd.f32 %v7725, %v7774
        %v7783 = vadd.f32 %v7726, %v7775
        %s7784 = scalar_lea.vmem %s5, 1728
        %v7785 = vld [vmem:[%s7784] sm:$0xff]
        %v7786 = vld [vmem:[%s7784 + $0x8] sm:$0xff]
        %v7787 = vld [vmem:[%s7784 + $0x10] sm:$0xff]
        %v7788 = vld [vmem:[%s7784 + $0x18] sm:$0xff]
        %v7789 = vld [vmem:[%s7784 + $0x20] sm:$0xff]
        %v7790 = vld [vmem:[%s7784 + $0x28] sm:$0xff]
        %v7791 = vld [vmem:[%s7784 + $0x30] sm:$0xff]
        %v7792 = vld [vmem:[%s7784 + $0x38] sm:$0xff]
        %7793 = vset.pattern.permute.xlu0 27
        %7794 = vperm.xlu0 %7793, %v6230
        %v7795 = vpop.permute.xlu0 %7794
        %7797 = vset.pattern.permute.xlu0 27
        %7798 = vperm.xlu0 %7797, %v6231
        %v7799 = vpop.permute.xlu0 %7798
        %7801 = vset.pattern.permute.xlu0 27
        %7802 = vperm.xlu0 %7801, %v6232
        %v7803 = vpop.permute.xlu0 %7802
        %7805 = vset.pattern.permute.xlu0 27
        %7806 = vperm.xlu0 %7805, %v6233
        %v7807 = vpop.permute.xlu0 %7806
        %7809 = vset.pattern.permute.xlu0 27
        %7810 = vperm.xlu0 %7809, %v6234
        %v7811 = vpop.permute.xlu0 %7810
        %7813 = vset.pattern.permute.xlu0 27
        %7814 = vperm.xlu0 %7813, %v6235
        %v7815 = vpop.permute.xlu0 %7814
        %7817 = vset.pattern.permute.xlu0 27
        %7818 = vperm.xlu0 %7817, %v6236
        %v7819 = vpop.permute.xlu0 %7818
        %7821 = vset.pattern.permute.xlu0 27
        %7822 = vperm.xlu0 %7821, %v6237
        %v7823 = vpop.permute.xlu0 %7822
        %v7825 = vmul.f32 %v7795, %v7785
        %v7826 = vmul.f32 %v7799, %v7786
        %v7827 = vmul.f32 %v7803, %v7787
        %v7828 = vmul.f32 %v7807, %v7788
        %v7829 = vmul.f32 %v7811, %v7789
        %v7830 = vmul.f32 %v7815, %v7790
        %v7831 = vmul.f32 %v7819, %v7791
        %v7832 = vmul.f32 %v7823, %v7792
        %v7833 = vadd.f32 %v7776, %v7825
        %v7834 = vadd.f32 %v7777, %v7826
        %v7835 = vadd.f32 %v7778, %v7827
        %v7836 = vadd.f32 %v7779, %v7828
        %v7837 = vadd.f32 %v7780, %v7829
        %v7838 = vadd.f32 %v7781, %v7830
        %v7839 = vadd.f32 %v7782, %v7831
        %v7840 = vadd.f32 %v7783, %v7832
        %s7841 = scalar_lea.vmem %s5, 1792
        %v7842 = vld [vmem:[%s7841] sm:$0xff]
        %v7843 = vld [vmem:[%s7841 + $0x8] sm:$0xff]
        %v7844 = vld [vmem:[%s7841 + $0x10] sm:$0xff]
        %v7845 = vld [vmem:[%s7841 + $0x18] sm:$0xff]
        %v7846 = vld [vmem:[%s7841 + $0x20] sm:$0xff]
        %v7847 = vld [vmem:[%s7841 + $0x28] sm:$0xff]
        %v7848 = vld [vmem:[%s7841 + $0x30] sm:$0xff]
        %v7849 = vld [vmem:[%s7841 + $0x38] sm:$0xff]
        %7850 = vset.pattern.permute.xlu0 28
        %7851 = vperm.xlu0 %7850, %v6230
        %v7852 = vpop.permute.xlu0 %7851
        %7854 = vset.pattern.permute.xlu0 28
        %7855 = vperm.xlu0 %7854, %v6231
        %v7856 = vpop.permute.xlu0 %7855
        %7858 = vset.pattern.permute.xlu0 28
        %7859 = vperm.xlu0 %7858, %v6232
        %v7860 = vpop.permute.xlu0 %7859
        %7862 = vset.pattern.permute.xlu0 28
        %7863 = vperm.xlu0 %7862, %v6233
        %v7864 = vpop.permute.xlu0 %7863
        %7866 = vset.pattern.permute.xlu0 28
        %7867 = vperm.xlu0 %7866, %v6234
        %v7868 = vpop.permute.xlu0 %7867
        %7870 = vset.pattern.permute.xlu0 28
        %7871 = vperm.xlu0 %7870, %v6235
        %v7872 = vpop.permute.xlu0 %7871
        %7874 = vset.pattern.permute.xlu0 28
        %7875 = vperm.xlu0 %7874, %v6236
        %v7876 = vpop.permute.xlu0 %7875
        %7878 = vset.pattern.permute.xlu0 28
        %7879 = vperm.xlu0 %7878, %v6237
        %v7880 = vpop.permute.xlu0 %7879
        %v7882 = vmul.f32 %v7852, %v7842
        %v7883 = vmul.f32 %v7856, %v7843
        %v7884 = vmul.f32 %v7860, %v7844
        %v7885 = vmul.f32 %v7864, %v7845
        %v7886 = vmul.f32 %v7868, %v7846
        %v7887 = vmul.f32 %v7872, %v7847
        %v7888 = vmul.f32 %v7876, %v7848
        %v7889 = vmul.f32 %v7880, %v7849
        %v7890 = vadd.f32 %v7833, %v7882
        %v7891 = vadd.f32 %v7834, %v7883
        %v7892 = vadd.f32 %v7835, %v7884
        %v7893 = vadd.f32 %v7836, %v7885
        %v7894 = vadd.f32 %v7837, %v7886
        %v7895 = vadd.f32 %v7838, %v7887
        %v7896 = vadd.f32 %v7839, %v7888
        %v7897 = vadd.f32 %v7840, %v7889
        %s7898 = scalar_lea.vmem %s5, 1856
        %v7899 = vld [vmem:[%s7898] sm:$0xff]
        %v7900 = vld [vmem:[%s7898 + $0x8] sm:$0xff]
        %v7901 = vld [vmem:[%s7898 + $0x10] sm:$0xff]
        %v7902 = vld [vmem:[%s7898 + $0x18] sm:$0xff]
        %v7903 = vld [vmem:[%s7898 + $0x20] sm:$0xff]
        %v7904 = vld [vmem:[%s7898 + $0x28] sm:$0xff]
        %v7905 = vld [vmem:[%s7898 + $0x30] sm:$0xff]
        %v7906 = vld [vmem:[%s7898 + $0x38] sm:$0xff]
        %7907 = vset.pattern.permute.xlu0 29
        %7908 = vperm.xlu0 %7907, %v6230
        %v7909 = vpop.permute.xlu0 %7908
        %7911 = vset.pattern.permute.xlu0 29
        %7912 = vperm.xlu0 %7911, %v6231
        %v7913 = vpop.permute.xlu0 %7912
        %7915 = vset.pattern.permute.xlu0 29
        %7916 = vperm.xlu0 %7915, %v6232
        %v7917 = vpop.permute.xlu0 %7916
        %7919 = vset.pattern.permute.xlu0 29
        %7920 = vperm.xlu0 %7919, %v6233
        %v7921 = vpop.permute.xlu0 %7920
        %7923 = vset.pattern.permute.xlu0 29
        %7924 = vperm.xlu0 %7923, %v6234
        %v7925 = vpop.permute.xlu0 %7924
        %7927 = vset.pattern.permute.xlu0 29
        %7928 = vperm.xlu0 %7927, %v6235
        %v7929 = vpop.permute.xlu0 %7928
        %7931 = vset.pattern.permute.xlu0 29
        %7932 = vperm.xlu0 %7931, %v6236
        %v7933 = vpop.permute.xlu0 %7932
        %7935 = vset.pattern.permute.xlu0 29
        %7936 = vperm.xlu0 %7935, %v6237
        %v7937 = vpop.permute.xlu0 %7936
        %v7939 = vmul.f32 %v7909, %v7899
        %v7940 = vmul.f32 %v7913, %v7900
        %v7941 = vmul.f32 %v7917, %v7901
        %v7942 = vmul.f32 %v7921, %v7902
        %v7943 = vmul.f32 %v7925, %v7903
        %v7944 = vmul.f32 %v7929, %v7904
        %v7945 = vmul.f32 %v7933, %v7905
        %v7946 = vmul.f32 %v7937, %v7906
        %v7947 = vadd.f32 %v7890, %v7939
        %v7948 = vadd.f32 %v7891, %v7940
        %v7949 = vadd.f32 %v7892, %v7941
        %v7950 = vadd.f32 %v7893, %v7942
        %v7951 = vadd.f32 %v7894, %v7943
        %v7952 = vadd.f32 %v7895, %v7944
        %v7953 = vadd.f32 %v7896, %v7945
        %v7954 = vadd.f32 %v7897, %v7946
        %s7955 = scalar_lea.vmem %s5, 1920
        %v7956 = vld [vmem:[%s7955] sm:$0xff]
        %v7957 = vld [vmem:[%s7955 + $0x8] sm:$0xff]
        %v7958 = vld [vmem:[%s7955 + $0x10] sm:$0xff]
        %v7959 = vld [vmem:[%s7955 + $0x18] sm:$0xff]
        %v7960 = vld [vmem:[%s7955 + $0x20] sm:$0xff]
        %v7961 = vld [vmem:[%s7955 + $0x28] sm:$0xff]
        %v7962 = vld [vmem:[%s7955 + $0x30] sm:$0xff]
        %v7963 = vld [vmem:[%s7955 + $0x38] sm:$0xff]
        %7964 = vset.pattern.permute.xlu0 30
        %7965 = vperm.xlu0 %7964, %v6230
        %v7966 = vpop.permute.xlu0 %7965
        %7968 = vset.pattern.permute.xlu0 30
        %7969 = vperm.xlu0 %7968, %v6231
        %v7970 = vpop.permute.xlu0 %7969
        %7972 = vset.pattern.permute.xlu0 30
        %7973 = vperm.xlu0 %7972, %v6232
        %v7974 = vpop.permute.xlu0 %7973
        %7976 = vset.pattern.permute.xlu0 30
        %7977 = vperm.xlu0 %7976, %v6233
        %v7978 = vpop.permute.xlu0 %7977
        %7980 = vset.pattern.permute.xlu0 30
        %7981 = vperm.xlu0 %7980, %v6234
        %v7982 = vpop.permute.xlu0 %7981
        %7984 = vset.pattern.permute.xlu0 30
        %7985 = vperm.xlu0 %7984, %v6235
        %v7986 = vpop.permute.xlu0 %7985
        %7988 = vset.pattern.permute.xlu0 30
        %7989 = vperm.xlu0 %7988, %v6236
        %v7990 = vpop.permute.xlu0 %7989
        %7992 = vset.pattern.permute.xlu0 30
        %7993 = vperm.xlu0 %7992, %v6237
        %v7994 = vpop.permute.xlu0 %7993
        %v7996 = vmul.f32 %v7966, %v7956
        %v7997 = vmul.f32 %v7970, %v7957
        %v7998 = vmul.f32 %v7974, %v7958
        %v7999 = vmul.f32 %v7978, %v7959
        %v8000 = vmul.f32 %v7982, %v7960
        %v8001 = vmul.f32 %v7986, %v7961
        %v8002 = vmul.f32 %v7990, %v7962
        %v8003 = vmul.f32 %v7994, %v7963
        %v8004 = vadd.f32 %v7947, %v7996
        %v8005 = vadd.f32 %v7948, %v7997
        %v8006 = vadd.f32 %v7949, %v7998
        %v8007 = vadd.f32 %v7950, %v7999
        %v8008 = vadd.f32 %v7951, %v8000
        %v8009 = vadd.f32 %v7952, %v8001
        %v8010 = vadd.f32 %v7953, %v8002
        %v8011 = vadd.f32 %v7954, %v8003
        %s8012 = scalar_lea.vmem %s5, 1984
        %v8013 = vld [vmem:[%s8012] sm:$0xff]
        %v8014 = vld [vmem:[%s8012 + $0x8] sm:$0xff]
        %v8015 = vld [vmem:[%s8012 + $0x10] sm:$0xff]
        %v8016 = vld [vmem:[%s8012 + $0x18] sm:$0xff]
        %v8017 = vld [vmem:[%s8012 + $0x20] sm:$0xff]
        %v8018 = vld [vmem:[%s8012 + $0x28] sm:$0xff]
        %v8019 = vld [vmem:[%s8012 + $0x30] sm:$0xff]
        %v8020 = vld [vmem:[%s8012 + $0x38] sm:$0xff]
        %8021 = vset.pattern.permute.xlu0 31
        %8022 = vperm.xlu0 %8021, %v6230
        %v8023 = vpop.permute.xlu0 %8022
        %8025 = vset.pattern.permute.xlu0 31
        %8026 = vperm.xlu0 %8025, %v6231
        %v8027 = vpop.permute.xlu0 %8026
        %8029 = vset.pattern.permute.xlu0 31
        %8030 = vperm.xlu0 %8029, %v6232
        %v8031 = vpop.permute.xlu0 %8030
        %8033 = vset.pattern.permute.xlu0 31
        %8034 = vperm.xlu0 %8033, %v6233
        %v8035 = vpop.permute.xlu0 %8034
        %8037 = vset.pattern.permute.xlu0 31
        %8038 = vperm.xlu0 %8037, %v6234
        %v8039 = vpop.permute.xlu0 %8038
        %8041 = vset.pattern.permute.xlu0 31
        %8042 = vperm.xlu0 %8041, %v6235
        %v8043 = vpop.permute.xlu0 %8042
        %8045 = vset.pattern.permute.xlu0 31
        %8046 = vperm.xlu0 %8045, %v6236
        %v8047 = vpop.permute.xlu0 %8046
        %8049 = vset.pattern.permute.xlu0 31
        %8050 = vperm.xlu0 %8049, %v6237
        %v8051 = vpop.permute.xlu0 %8050
        %v8053 = vmul.f32 %v8023, %v8013
        %v8054 = vmul.f32 %v8027, %v8014
        %v8055 = vmul.f32 %v8031, %v8015
        %v8056 = vmul.f32 %v8035, %v8016
        %v8057 = vmul.f32 %v8039, %v8017
        %v8058 = vmul.f32 %v8043, %v8018
        %v8059 = vmul.f32 %v8047, %v8019
        %v8060 = vmul.f32 %v8051, %v8020
        %v8061 = vadd.f32 %v8004, %v8053
        %v8062 = vadd.f32 %v8005, %v8054
        %v8063 = vadd.f32 %v8006, %v8055
        %v8064 = vadd.f32 %v8007, %v8056
        %v8065 = vadd.f32 %v8008, %v8057
        %v8066 = vadd.f32 %v8009, %v8058
        %v8067 = vadd.f32 %v8010, %v8059
        %v8068 = vadd.f32 %v8011, %v8060
        %v8069 = vadd.f32 %v8061, %v8062
        %v8070 = vadd.f32 %v8069, %v8063
        %v8071 = vadd.f32 %v8070, %v8064
        %v8072 = vadd.f32 %v8071, %v8065
        %v8073 = vadd.f32 %v8072, %v8066
        %v8074 = vadd.f32 %v8073, %v8067
        %v8075 = vadd.f32 %v8074, %v8068
        %v8076 = vrot.slane %v8075, 4
        %v8077 = vadd.f32 %v8075, %v8076
        %v8078 = vrot.slane %v8077, 2
        %v8079 = vadd.f32 %v8077, %v8078
        %v8080 = vrot.slane %v8079, 1
        %v8081 = vadd.f32 %v8079, %v8080
        %v8082 = vld [vmem:[%s6] sm:$0x1]
        %v8083 = vadd.f32 %v8081, %v8082
        %8084 = vst [vmem:[%s270] sm:$0x1] %v8083
        %s8085 = sand.u32 %s181, 1
        %s8086 = scalar_lea.sflag [#allocation9], %s8085
        %s8087 = sand.u32 %s181, 1
        %s8088 = scalar_lea.vmem [#allocation8], %s8087
        // Predicated region
        $region49: #{convnet_forward.1} parent=47 // pred_check
          %p8089 = pneg %p191
        $region50: #{convnet_forward.1} parent=47 // pred_check_branch
          %8091 = sbr.rel (%p8089) target = $region52
        $region51: #{convnet_forward.1} parent=47 // pred_region
          %s8093 = ssub.s32 16, 16
          %8094 = vsyncadd %s8086, %s8093
          %s8095 = smul.addr %s21, 16
          %s8096 = scalar_lea.hbm %s7, %s8095
          %s8098 = sshll.u32 %s8088, 4
          %s8099 = int_to_ptr.vmem [resolvable:$true] %s8098
          %8101 = dma.vmem_to_hbm [thread:$0]  %s8099, 16, %s8096, %s8086
        $region52: #{convnet_forward.1} parent=47 // pred_fallthru
          _
      $region48: #{convnet_forward.1} parent=5 // pred_fallthru
        _
      %p8102 = scmp.le.s32.totalorder 2, %s16
      // Predicated region
      $region53: #{convnet_forward.1} parent=5 // pred_check
        %p8103 = pneg %p8102
      $region54: #{convnet_forward.1} parent=5 // pred_check_branch
        %8105 = sbr.rel (%p8103) target = $region56
      $region55: #{convnet_forward.1} parent=5 // pred_region
        %s8106 = ssub.s32 %s16, 2
        // Predicated region
        $region57: #{convnet_forward.1} parent=55 // pred_check
          %p8107 = pneg %p197
        $region58: #{convnet_forward.1} parent=55 // pred_check_branch
          %8109 = sbr.rel (%p8107) target = $region60
        $region59: #{convnet_forward.1} parent=55 // pred_region
          %s8110 = sand.u32 %s182, 1
          %s8111 = scalar_lea.sflag [#allocation9], %s8110
          %s8112 = sand.u32 %s182, 1
          %s8113 = scalar_lea.vmem [#allocation8], %s8112
          %8114 = dma.done %s8111, 16
        $region60: #{convnet_forward.1} parent=55 // pred_fallthru
          _
      $region56: #{convnet_forward.1} parent=5 // pred_fallthru
        _
    $region6: #{convnet_forward.1} parent=1 // loop_footer
      %s20 = sadd.s32 1, %s16
    $region7: #{convnet_forward.1} parent=1 // loop_footer_branch
      %15 = sbr.rel target = $region3
    $region8: #{convnet_forward.1} parent=1 // loop_exit
      _
    %8115 = vsyncpa [#allocation9], 1
    %s8116 = scalar_lea.sflag [#allocation9], 1
    %8117 = vsyncpa %s8116, 1

</llo_original>
